<compile_context>
chip_gen: v6e
topology: v6e:2x2x1
jax: 0.10.0
libtpu: 0.0.40
codegen_flags: <defaults>
</compile_context>

<pallas_src>
import jax
import jax.numpy as jnp
from jax.experimental import pallas as pl
from jax.experimental.pallas import tpu as pltpu

# -------------------- small config (consistent with the module) --------------------
BATCH = 2
INPUT_SIZE = 160          # "sampling points" (module default 4000), divisible by patch
PATCH_SIZE = 20
EMBED_DIM = 20
MLP_SIZE = 64             # module default 256, scaled down
NUM_LAYERS = 3
NUM_HEADS = 4
HEAD_DIM = EMBED_DIM // NUM_HEADS
NUM_CLASSES = 2
NUM_PATCHES = INPUT_SIZE // PATCH_SIZE
SEQ = NUM_PATCHES + 1     # +1 class token
ROWS = SEQ * BATCH        # folded (batch, seq) rows; row r = s*BATCH + b
LN_EPS = 1e-5

POOL_SPECS = ((5, 2), (13, 6), (7, 3))      # (kernel, padding) for the AvgPool1d chain
_SQRT1_2 = 0.7071067811865476


# -------------------- in-kernel helpers --------------------
def _layer_norm(z, w, b):
    m = jnp.mean(z, axis=-1, keepdims=True)
    v = jnp.mean((z - m) ** 2, axis=-1, keepdims=True)
    return (z - m) * jax.lax.rsqrt(v + LN_EPS) * w + b


def _erf(x):
    # Abramowitz & Stegun 7.1.26 polynomial (|err| < 1.5e-7) — exp/mul/add/select only.
    a1, a2, a3, a4, a5 = 0.254829592, -0.284496736, 1.421413741, -1.453152027, 1.061405429
    pp = 0.3275911
    sgn = jnp.where(x >= 0.0, 1.0, -1.0)
    ax = jnp.abs(x)
    t = 1.0 / (1.0 + pp * ax)
    poly = ((((a5 * t + a4) * t + a3) * t + a2) * t + a1) * t
    return sgn * (1.0 - poly * jnp.exp(-ax * ax))


def _gelu(x):
    # exact (erf-based) GELU, matching F.gelu(approximate='none')
    return 0.5 * x * (1.0 + _erf(x * _SQRT1_2))


# -------------------- host-side structural constants --------------------
def _pool_matrix(L):
    """Composed AvgPool1d(5,2)->(13,6)->(7,3) as one (L, L) matrix: y = x @ M."""
    idx = jnp.arange(L)
    m = jnp.eye(L, dtype=jnp.float32)
    for k, p in POOL_SPECS:
        band = (jnp.abs(idx[:, None] - idx[None, :]) <= p).astype(jnp.float32) / float(k)
        m = m @ band
    return m


def _batch_mask(batch, seq):
    """(ROWS, ROWS) additive bias: 0 within a batch element, -1e30 across batches."""
    r = jnp.arange(batch * seq)
    same = (r[:, None] % batch) == (r[None, :] % batch)
    return jnp.where(same, 0.0, -1e30).astype(jnp.float32)


# -------------------- the fused forward kernel --------------------
def fused_forward_kernel(
    x_ref, pool_ref, pre_lnw_ref, pre_lnb_ref,
    patch_wbig_ref, tok_bias_ref, mask_ref,
    ln1w_ref, ln1b_ref, wqkv_ref, bqkv_ref, wo_ref, bo_ref,
    ln2w_ref, ln2b_ref, w1_ref, b1_ref, w2_ref, b2_ref,
    hlnw_ref, hlnb_ref, hw_ref, hb_ref,
    o_ref,
    flat_ref, emb_ref, tok_ref, qkv_ref, ctx_ref,
):
    D, hd = EMBED_DIM, HEAD_DIM

    # ---- PreBlock: composed AvgPool chain as one matmul + LayerNorm(L) ----
    pooled = jnp.dot(x_ref[...], pool_ref[...], preferred_element_type=jnp.float32)   # (B, L)
    flat_ref[...] = _layer_norm(pooled, pre_lnw_ref[...], pre_lnb_ref[...])

    # ---- Patch embedding (Conv1d k=stride=P) as ONE matmul against the
    #      block-diagonal patch matrix; (B, L) @ (L, N*D) -> (B, N*D) ----
    emb_ref[...] = jnp.dot(flat_ref[...], patch_wbig_ref[...],
                           preferred_element_type=jnp.float32)

    # token row layout: r = s*B + b -> cls rows 0..B-1, patch n rows (n+1)*B..(n+2)*B-1.
    # cls/positional/conv-bias terms are all in tok_bias (folded host-side), so the
    # scatter here is plain VMEM slice traffic (no per-patch matmuls / adds).
    tok_ref[0:BATCH, :] = jnp.zeros((BATCH, D), jnp.float32)
    for n in range(NUM_PATCHES):
        tok_ref[(n + 1) * BATCH:(n + 2) * BATCH, :] = emb_ref[:, n * D:(n + 1) * D]

    # embedding_dropout: identity in eval mode
    x = tok_ref[...] + tok_bias_ref[...]                                               # (R, D)
    mask_bias = mask_ref[...]                                                          # (R, R)

    # ---- Transformer encoder layers (norm_first, gelu), unrolled ----
    for li in range(NUM_LAYERS):
        h = _layer_norm(x, ln1w_ref[li], ln1b_ref[li])
        # 1/sqrt(hd) already folded into the Q columns of wqkv/bqkv.
        qkv_ref[...] = (jnp.dot(h, wqkv_ref[li], preferred_element_type=jnp.float32)
                        + bqkv_ref[li])                                                # (R, 3D)
        for hh in range(NUM_HEADS):
            lo = hh * hd
            q = qkv_ref[:, lo:lo + hd]                                                 # (R, hd)
            k = qkv_ref[:, D + lo:D + lo + hd]
            v = qkv_ref[:, 2 * D + lo:2 * D + lo + hd]
            s = jnp.einsum('id,jd->ij', q, k, preferred_element_type=jnp.float32)
            s = s + mask_bias                                                          # block-diag per batch
            s = s - jnp.max(s, axis=-1, keepdims=True)
            p = jnp.exp(s)
            p = p * pl.reciprocal(jnp.sum(p, axis=-1, keepdims=True), approx=True)
            ctx_ref[:, lo:lo + hd] = jnp.dot(p, v, preferred_element_type=jnp.float32)
        attn = (jnp.dot(ctx_ref[...], wo_ref[li], preferred_element_type=jnp.float32)
                + bo_ref[li])                                                          # (R, D)
        x = x + attn

        h2 = _layer_norm(x, ln2w_ref[li], ln2b_ref[li])
        ff = _gelu(jnp.dot(h2, w1_ref[li], preferred_element_type=jnp.float32) + b1_ref[li])
        ff = jnp.dot(ff, w2_ref[li], preferred_element_type=jnp.float32) + b2_ref[li]
        x = x + ff

    # ---- MLP head on the cls rows (rows 0..B-1, batch order) ----
    cls_tok = x[0:BATCH, :]                                                            # (B, D)
    hcls = _layer_norm(cls_tok, hlnw_ref[...], hlnb_ref[...])
    o_ref[...] = jnp.dot(hcls, hw_ref[...], preferred_element_type=jnp.float32) + hb_ref[...]


# -------------------- wrapper --------------------
def forward(x, params):
    B, _, L = x.shape
    x2 = x.reshape(B, L)            # squeeze(dim=1), C == 1
    args = (
        x2, params["pool_m"], params["pre_ln_w"], params["pre_ln_b"],
        params["patch_wbig"], params["tok_bias"], params["attn_mask"],
        params["ln1_w"], params["ln1_b"], params["wqkv"], params["bqkv"],
        params["wo"], params["bo"], params["ln2_w"], params["ln2_b"],
        params["w1"], params["b1"], params["w2"], params["b2"],
        params["head_ln_w"], params["head_ln_b"], params["head_w"], params["head_b"],
    )
    # Single invocation (no grid): everything fits VMEM; only the logits hit HBM.
    # TODO(synk): on v7x one of the two TensorCores idles at this tiny size; a
    # size-B "parallel" grid axis would use both if BATCH/INPUT_SIZE scale up.
    return pl.pallas_call(
        fused_forward_kernel,
        out_shape=jax.ShapeDtypeStruct((B, NUM_CLASSES), jnp.float32),
        scratch_shapes=[
            pltpu.VMEM((B, INPUT_SIZE), jnp.float32),               # pooled + LayerNorm signal
            pltpu.VMEM((B, NUM_PATCHES * EMBED_DIM), jnp.float32),  # all patch embeddings
            pltpu.VMEM((ROWS, EMBED_DIM), jnp.float32),             # tokens (B*S, D)
            pltpu.VMEM((ROWS, 3 * EMBED_DIM), jnp.float32),         # fused QKV
            pltpu.VMEM((ROWS, EMBED_DIM), jnp.float32),             # concatenated head contexts
        ],
    )(*args)


# -------------------- deterministic synthetic parameters --------------------
def init_params(key):
    def nrm(k, shape, scale=0.1):
        return (scale * jax.random.normal(k, shape)).astype(jnp.float32)

    keys = iter(jax.random.split(key, 8 + 12 * NUM_LAYERS))
    D, hd, F, L, P = EMBED_DIM, HEAD_DIM, MLP_SIZE, INPUT_SIZE, PATCH_SIZE
    p = {}

    # structural constants (not learned)
    p["pool_m"] = _pool_matrix(L)                         # (L, L) composed pool matrix
    p["attn_mask"] = _batch_mask(BATCH, SEQ)              # (ROWS, ROWS) block mask

    # PreBlock LayerNorm(INPUT_SIZE): weight=1, bias=0 (PyTorch default init)
    p["pre_ln_w"] = jnp.ones((1, L), jnp.float32)
    p["pre_ln_b"] = jnp.zeros((1, L), jnp.float32)

    # PatchEmbedding Conv1d(1, D, kernel=stride=PATCH): weight (D, 1, P), bias (D,)
    conv_w = nrm(next(keys), (D, 1, P))
    conv_b = nrm(next(keys), (D,))
    patch_w = conv_w[:, 0, :].T                           # (P, D)
    # block-diagonal (L, N*D) patch matrix: one matmul embeds all patches at once
    wbig = jnp.zeros((L, NUM_PATCHES * D), jnp.float32)
    for n in range(NUM_PATCHES):
        wbig = wbig.at[n * P:(n + 1) * P, n * D:(n + 1) * D].set(patch_w)
    p["patch_wbig"] = wbig

    # class token (1,1,D) and positional embedding (1, S, D), folded with conv bias
    # into one (ROWS, D) token-bias slab matching the r = s*B + b row layout.
    cls = nrm(next(keys), (1, 1, D))[0, 0]                # (D,)
    pos = nrm(next(keys), (1, SEQ, D))[0]                 # (S, D)
    bias_rows = []
    for s in range(SEQ):
        base = cls + pos[0] if s == 0 else conv_b + pos[s]
        bias_rows.append(jnp.broadcast_to(base, (BATCH, D)))
    p["tok_bias"] = jnp.concatenate(bias_rows, axis=0).astype(jnp.float32)  # (ROWS, D)

    q_scale = float(hd) ** -0.5
    ln1_w, ln1_b, ln2_w, ln2_b = [], [], [], []
    wqkv, bqkv, wo, bo = [], [], [], []
    w1, b1, w2, b2 = [], [], [], []
    for _ in range(NUM_LAYERS):
        in_proj_w = nrm(next(keys), (3 * D, D))           # MHA in_proj_weight [q;k;v]
        in_proj_b = nrm(next(keys), (3 * D,))
        out_proj_w = nrm(next(keys), (D, D))
        out_proj_b = nrm(next(keys), (D,))
        lin1_w = nrm(next(keys), (F, D))
        lin1_b = nrm(next(keys), (F,))
        lin2_w = nrm(next(keys), (D, F))
        lin2_b = nrm(next(keys), (D,))
        ln1_w.append(jnp.ones((1, D), jnp.float32)); ln1_b.append(jnp.zeros((1, D), jnp.float32))
        ln2_w.append(jnp.ones((1, D), jnp.float32)); ln2_b.append(jnp.zeros((1, D), jnp.float32))
        # x @ W_in^T, with the 1/sqrt(hd) attention scale folded into the Q columns
        w_in = in_proj_w.T                                # (D, 3D)
        w_in = w_in.at[:, :D].multiply(q_scale)
        b_in = in_proj_b.at[:D].multiply(q_scale)
        wqkv.append(w_in)
        bqkv.append(b_in.reshape(1, 3 * D))
        wo.append(out_proj_w.T)                           # (D, D)
        bo.append(out_proj_b.reshape(1, D))
        w1.append(lin1_w.T); b1.append(lin1_b.reshape(1, F))
        w2.append(lin2_w.T); b2.append(lin2_b.reshape(1, D))

    # stacked per-layer weights: one contiguous array per tensor kind
    p["ln1_w"] = jnp.stack(ln1_w); p["ln1_b"] = jnp.stack(ln1_b)
    p["ln2_w"] = jnp.stack(ln2_w); p["ln2_b"] = jnp.stack(ln2_b)
    p["wqkv"] = jnp.stack(wqkv);   p["bqkv"] = jnp.stack(bqkv)
    p["wo"] = jnp.stack(wo);       p["bo"] = jnp.stack(bo)
    p["w1"] = jnp.stack(w1);       p["b1"] = jnp.stack(b1)
    p["w2"] = jnp.stack(w2);       p["b2"] = jnp.stack(b2)

    # mlp_head: LayerNorm(D) + Linear(D, num_classes)
    head_w = nrm(next(keys), (NUM_CLASSES, D))
    head_b = nrm(next(keys), (NUM_CLASSES,))
    p["head_ln_w"] = jnp.ones((1, D), jnp.float32)
    p["head_ln_b"] = jnp.zeros((1, D), jnp.float32)
    p["head_w"] = head_w.T                                # (D, C)
    p["head_b"] = head_b.reshape(1, NUM_CLASSES)
    return p


if __name__ == "__main__":
    key = jax.random.PRNGKey(0)
    kx, kp = jax.random.split(key)
    x = jax.random.normal(kx, (BATCH, 1, INPUT_SIZE), dtype=jnp.float32)
    params = init_params(kp)

    out = forward(x, params)
    out = jax.block_until_ready(out)
    assert out.shape == (BATCH, NUM_CLASSES) and out.dtype == jnp.float32
    print("KERNEL_OK")
</pallas_src>

<mosaic_0001>
module attributes {stable_mosaic.version = 11 : i64} {
  func.func @fused_forward_kernel(%arg0: memref<2x160xf32, #tpu.memory_space<vmem>>, %arg1: memref<160x160xf32, #tpu.memory_space<vmem>>, %arg2: memref<1x160xf32, #tpu.memory_space<vmem>>, %arg3: memref<1x160xf32, #tpu.memory_space<vmem>>, %arg4: memref<160x160xf32, #tpu.memory_space<vmem>>, %arg5: memref<18x20xf32, #tpu.memory_space<vmem>>, %arg6: memref<18x18xf32, #tpu.memory_space<vmem>>, %arg7: memref<3x1x20xf32, #tpu.memory_space<vmem>>, %arg8: memref<3x1x20xf32, #tpu.memory_space<vmem>>, %arg9: memref<3x20x60xf32, #tpu.memory_space<vmem>>, %arg10: memref<3x1x60xf32, #tpu.memory_space<vmem>>, %arg11: memref<3x20x20xf32, #tpu.memory_space<vmem>>, %arg12: memref<3x1x20xf32, #tpu.memory_space<vmem>>, %arg13: memref<3x1x20xf32, #tpu.memory_space<vmem>>, %arg14: memref<3x1x20xf32, #tpu.memory_space<vmem>>, %arg15: memref<3x20x64xf32, #tpu.memory_space<vmem>>, %arg16: memref<3x1x64xf32, #tpu.memory_space<vmem>>, %arg17: memref<3x64x20xf32, #tpu.memory_space<vmem>>, %arg18: memref<3x1x20xf32, #tpu.memory_space<vmem>>, %arg19: memref<1x20xf32, #tpu.memory_space<vmem>>, %arg20: memref<1x20xf32, #tpu.memory_space<vmem>>, %arg21: memref<20x2xf32, #tpu.memory_space<vmem>>, %arg22: memref<1x2xf32, #tpu.memory_space<vmem>>, %arg23: memref<2x2xf32, #tpu.memory_space<vmem>>, %arg24: memref<2x160xf32, #tpu.memory_space<vmem>>, %arg25: memref<2x160xf32, #tpu.memory_space<vmem>>, %arg26: memref<18x20xf32, #tpu.memory_space<vmem>>, %arg27: memref<18x60xf32, #tpu.memory_space<vmem>>, %arg28: memref<18x20xf32, #tpu.memory_space<vmem>>) attributes {dimension_semantics = [], scalar_prefetch = 0 : i64, scratch_operands = 5 : i64, tpu.core_type = #tpu.core_type<tc>} {
    %c0 = arith.constant 0 : index
    %c0_0 = arith.constant 0 : index
    %0 = vector.load %arg0[%c0, %c0_0] : memref<2x160xf32, #tpu.memory_space<vmem>>, vector<2x160xf32>
    %c0_1 = arith.constant 0 : index
    %c0_2 = arith.constant 0 : index
    %1 = vector.load %arg1[%c0_1, %c0_2] : memref<160x160xf32, #tpu.memory_space<vmem>>, vector<160x160xf32>
    %cst = arith.constant dense<0.000000e+00> : vector<2x160xf32>
    %2 = tpu.matmul %0, %1, %cst {dimension_numbers = #tpu.dot_dimension_numbers<[1], [0], [0], [1], [0, 0, 1, 1], [], []>} : vector<2x160xf32>, vector<160x160xf32>, vector<2x160xf32> -> vector<2x160xf32>
    %c0_3 = arith.constant 0 : index
    %c0_4 = arith.constant 0 : index
    %3 = vector.load %arg2[%c0_3, %c0_4] : memref<1x160xf32, #tpu.memory_space<vmem>>, vector<1x160xf32>
    %c0_5 = arith.constant 0 : index
    %c0_6 = arith.constant 0 : index
    %4 = vector.load %arg3[%c0_5, %c0_6] : memref<1x160xf32, #tpu.memory_space<vmem>>, vector<1x160xf32>
    %cst_7 = arith.constant dense<0.000000e+00> : vector<2xf32>
    %5 = vector.multi_reduction <add>, %2, %cst_7 [1] : vector<2x160xf32> to vector<2xf32>
    %6 = vector.shape_cast %5 : vector<2xf32> to vector<2x1xf32>
    %cst_8 = arith.constant 1.600000e+02 : f32
    %7 = vector.broadcast %cst_8 : f32 to vector<2x1xf32>
    %8 = arith.divf %6, %7 : vector<2x1xf32>
    %9 = vector.broadcast %8 : vector<2x1xf32> to vector<2x160xf32>
    %10 = arith.subf %2, %9 : vector<2x160xf32>
    %11 = arith.mulf %10, %10 : vector<2x160xf32>
    %cst_9 = arith.constant dense<0.000000e+00> : vector<2xf32>
    %12 = vector.multi_reduction <add>, %11, %cst_9 [1] : vector<2x160xf32> to vector<2xf32>
    %13 = vector.shape_cast %12 : vector<2xf32> to vector<2x1xf32>
    %cst_10 = arith.constant 1.600000e+02 : f32
    %14 = vector.broadcast %cst_10 : f32 to vector<2x1xf32>
    %15 = arith.divf %13, %14 : vector<2x1xf32>
    %16 = vector.broadcast %8 : vector<2x1xf32> to vector<2x160xf32>
    %17 = arith.subf %2, %16 : vector<2x160xf32>
    %cst_11 = arith.constant 9.99999974E-6 : f32
    %18 = vector.broadcast %cst_11 : f32 to vector<2x1xf32>
    %19 = arith.addf %15, %18 : vector<2x1xf32>
    %20 = math.rsqrt %19 : vector<2x1xf32>
    %21 = vector.broadcast %20 : vector<2x1xf32> to vector<2x160xf32>
    %22 = arith.mulf %17, %21 : vector<2x160xf32>
    %23 = vector.broadcast %3 : vector<1x160xf32> to vector<2x160xf32>
    %24 = arith.mulf %22, %23 : vector<2x160xf32>
    %25 = vector.broadcast %4 : vector<1x160xf32> to vector<2x160xf32>
    %26 = arith.addf %24, %25 : vector<2x160xf32>
    %c0_12 = arith.constant 0 : index
    %c0_13 = arith.constant 0 : index
    %27 = vector.load %arg24[%c0_12, %c0_13] : memref<2x160xf32, #tpu.memory_space<vmem>>, vector<2x160xf32>
    tpu.vector_store %arg24[%c0_12, %c0_13], %26 {strides = array<i32>} : memref<2x160xf32, #tpu.memory_space<vmem>>, vector<2x160xf32>,
    %c0_14 = arith.constant 0 : index
    %c0_15 = arith.constant 0 : index
    %28 = vector.load %arg24[%c0_14, %c0_15] : memref<2x160xf32, #tpu.memory_space<vmem>>, vector<2x160xf32>
    %c0_16 = arith.constant 0 : index
    %c0_17 = arith.constant 0 : index
    %29 = vector.load %arg4[%c0_16, %c0_17] : memref<160x160xf32, #tpu.memory_space<vmem>>, vector<160x160xf32>
    %cst_18 = arith.constant dense<0.000000e+00> : vector<2x160xf32>
    %30 = tpu.matmul %28, %29, %cst_18 {dimension_numbers = #tpu.dot_dimension_numbers<[1], [0], [0], [1], [0, 0, 1, 1], [], []>} : vector<2x160xf32>, vector<160x160xf32>, vector<2x160xf32> -> vector<2x160xf32>
    %c0_19 = arith.constant 0 : index
    %c0_20 = arith.constant 0 : index
    %31 = vector.load %arg25[%c0_19, %c0_20] : memref<2x160xf32, #tpu.memory_space<vmem>>, vector<2x160xf32>
    tpu.vector_store %arg25[%c0_19, %c0_20], %30 {strides = array<i32>} : memref<2x160xf32, #tpu.memory_space<vmem>>, vector<2x160xf32>,
    %cst_21 = arith.constant 0.000000e+00 : f32
    %32 = vector.broadcast %cst_21 : f32 to vector<2x20xf32>
    %c0_22 = arith.constant 0 : index
    %c0_23 = arith.constant 0 : index
    %33 = vector.load %arg26[%c0_22, %c0_23] : memref<18x20xf32, #tpu.memory_space<vmem>>, vector<2x20xf32>
    tpu.vector_store %arg26[%c0_22, %c0_23], %32 {strides = array<i32>} : memref<18x20xf32, #tpu.memory_space<vmem>>, vector<2x20xf32>,
    %c0_24 = arith.constant 0 : index
    %c0_25 = arith.constant 0 : index
    %34 = vector.load %arg25[%c0_24, %c0_25] : memref<2x160xf32, #tpu.memory_space<vmem>>, vector<2x20xf32>
    %c2 = arith.constant 2 : index
    %c0_26 = arith.constant 0 : index
    %35 = vector.load %arg26[%c2, %c0_26] : memref<18x20xf32, #tpu.memory_space<vmem>>, vector<2x20xf32>
    tpu.vector_store %arg26[%c2, %c0_26], %34 {strides = array<i32>} : memref<18x20xf32, #tpu.memory_space<vmem>>, vector<2x20xf32>,
    %c0_27 = arith.constant 0 : index
    %c20 = arith.constant 20 : index
    %36 = vector.load %arg25[%c0_27, %c20] : memref<2x160xf32, #tpu.memory_space<vmem>>, vector<2x20xf32>
    %c4 = arith.constant 4 : index
    %c0_28 = arith.constant 0 : index
    %37 = vector.load %arg26[%c4, %c0_28] : memref<18x20xf32, #tpu.memory_space<vmem>>, vector<2x20xf32>
    tpu.vector_store %arg26[%c4, %c0_28], %36 {strides = array<i32>} : memref<18x20xf32, #tpu.memory_space<vmem>>, vector<2x20xf32>,
    %c0_29 = arith.constant 0 : index
    %c40 = arith.constant 40 : index
    %38 = vector.load %arg25[%c0_29, %c40] : memref<2x160xf32, #tpu.memory_space<vmem>>, vector<2x20xf32>
    %c6 = arith.constant 6 : index
    %c0_30 = arith.constant 0 : index
    %39 = vector.load %arg26[%c6, %c0_30] : memref<18x20xf32, #tpu.memory_space<vmem>>, vector<2x20xf32>
    tpu.vector_store %arg26[%c6, %c0_30], %38 {strides = array<i32>} : memref<18x20xf32, #tpu.memory_space<vmem>>, vector<2x20xf32>,
    %c0_31 = arith.constant 0 : index
    %c60 = arith.constant 60 : index
    %40 = vector.load %arg25[%c0_31, %c60] : memref<2x160xf32, #tpu.memory_space<vmem>>, vector<2x20xf32>
    %c8 = arith.constant 8 : index
    %c0_32 = arith.constant 0 : index
    %41 = vector.load %arg26[%c8, %c0_32] : memref<18x20xf32, #tpu.memory_space<vmem>>, vector<2x20xf32>
    tpu.vector_store %arg26[%c8, %c0_32], %40 {strides = array<i32>} : memref<18x20xf32, #tpu.memory_space<vmem>>, vector<2x20xf32>,
    %c0_33 = arith.constant 0 : index
    %c80 = arith.constant 80 : index
    %42 = vector.load %arg25[%c0_33, %c80] : memref<2x160xf32, #tpu.memory_space<vmem>>, vector<2x20xf32>
    %c10 = arith.constant 10 : index
    %c0_34 = arith.constant 0 : index
    %43 = vector.load %arg26[%c10, %c0_34] : memref<18x20xf32, #tpu.memory_space<vmem>>, vector<2x20xf32>
    tpu.vector_store %arg26[%c10, %c0_34], %42 {strides = array<i32>} : memref<18x20xf32, #tpu.memory_space<vmem>>, vector<2x20xf32>,
    %c0_35 = arith.constant 0 : index
    %c100 = arith.constant 100 : index
    %44 = vector.load %arg25[%c0_35, %c100] : memref<2x160xf32, #tpu.memory_space<vmem>>, vector<2x20xf32>
    %c12 = arith.constant 12 : index
    %c0_36 = arith.constant 0 : index
    %45 = vector.load %arg26[%c12, %c0_36] : memref<18x20xf32, #tpu.memory_space<vmem>>, vector<2x20xf32>
    tpu.vector_store %arg26[%c12, %c0_36], %44 {strides = array<i32>} : memref<18x20xf32, #tpu.memory_space<vmem>>, vector<2x20xf32>,
    %c0_37 = arith.constant 0 : index
    %c120 = arith.constant 120 : index
    %46 = vector.load %arg25[%c0_37, %c120] : memref<2x160xf32, #tpu.memory_space<vmem>>, vector<2x20xf32>
    %c14 = arith.constant 14 : index
    %c0_38 = arith.constant 0 : index
    %47 = vector.load %arg26[%c14, %c0_38] : memref<18x20xf32, #tpu.memory_space<vmem>>, vector<2x20xf32>
    tpu.vector_store %arg26[%c14, %c0_38], %46 {strides = array<i32>} : memref<18x20xf32, #tpu.memory_space<vmem>>, vector<2x20xf32>,
    %c0_39 = arith.constant 0 : index
    %c140 = arith.constant 140 : index
    %48 = vector.load %arg25[%c0_39, %c140] : memref<2x160xf32, #tpu.memory_space<vmem>>, vector<2x20xf32>
    %c16 = arith.constant 16 : index
    %c0_40 = arith.constant 0 : index
    %49 = vector.load %arg26[%c16, %c0_40] : memref<18x20xf32, #tpu.memory_space<vmem>>, vector<2x20xf32>
    tpu.vector_store %arg26[%c16, %c0_40], %48 {strides = array<i32>} : memref<18x20xf32, #tpu.memory_space<vmem>>, vector<2x20xf32>,
    %c0_41 = arith.constant 0 : index
    %c0_42 = arith.constant 0 : index
    %50 = vector.load %arg26[%c0_41, %c0_42] : memref<18x20xf32, #tpu.memory_space<vmem>>, vector<18x20xf32>
    %c0_43 = arith.constant 0 : index
    %c0_44 = arith.constant 0 : index
    %51 = vector.load %arg5[%c0_43, %c0_44] : memref<18x20xf32, #tpu.memory_space<vmem>>, vector<18x20xf32>
    %52 = arith.addf %50, %51 : vector<18x20xf32>
    %c0_45 = arith.constant 0 : index
    %c0_46 = arith.constant 0 : index
    %53 = vector.load %arg6[%c0_45, %c0_46] : memref<18x18xf32, #tpu.memory_space<vmem>>, vector<18x18xf32>
    %c0_47 = arith.constant 0 : index
    %c0_48 = arith.constant 0 : index
    %c0_49 = arith.constant 0 : index
    %54 = vector.load %arg7[%c0_47, %c0_48, %c0_49] : memref<3x1x20xf32, #tpu.memory_space<vmem>>, vector<1x1x20xf32>
    %55 = vector.shape_cast %54 : vector<1x1x20xf32> to vector<1x20xf32>
    %c0_50 = arith.constant 0 : index
    %c0_51 = arith.constant 0 : index
    %c0_52 = arith.constant 0 : index
    %56 = vector.load %arg8[%c0_50, %c0_51, %c0_52] : memref<3x1x20xf32, #tpu.memory_space<vmem>>, vector<1x1x20xf32>
    %57 = vector.shape_cast %56 : vector<1x1x20xf32> to vector<1x20xf32>
    %cst_53 = arith.constant dense<0.000000e+00> : vector<18xf32>
    %58 = vector.multi_reduction <add>, %52, %cst_53 [1] : vector<18x20xf32> to vector<18xf32>
    %59 = vector.shape_cast %58 : vector<18xf32> to vector<18x1xf32>
    %cst_54 = arith.constant 2.000000e+01 : f32
    %60 = vector.broadcast %cst_54 : f32 to vector<18x1xf32>
    %61 = arith.divf %59, %60 : vector<18x1xf32>
    %62 = vector.broadcast %61 : vector<18x1xf32> to vector<18x20xf32>
    %63 = arith.subf %52, %62 : vector<18x20xf32>
    %64 = arith.mulf %63, %63 : vector<18x20xf32>
    %cst_55 = arith.constant dense<0.000000e+00> : vector<18xf32>
    %65 = vector.multi_reduction <add>, %64, %cst_55 [1] : vector<18x20xf32> to vector<18xf32>
    %66 = vector.shape_cast %65 : vector<18xf32> to vector<18x1xf32>
    %cst_56 = arith.constant 2.000000e+01 : f32
    %67 = vector.broadcast %cst_56 : f32 to vector<18x1xf32>
    %68 = arith.divf %66, %67 : vector<18x1xf32>
    %69 = vector.broadcast %61 : vector<18x1xf32> to vector<18x20xf32>
    %70 = arith.subf %52, %69 : vector<18x20xf32>
    %cst_57 = arith.constant 9.99999974E-6 : f32
    %71 = vector.broadcast %cst_57 : f32 to vector<18x1xf32>
    %72 = arith.addf %68, %71 : vector<18x1xf32>
    %73 = math.rsqrt %72 : vector<18x1xf32>
    %74 = vector.broadcast %73 : vector<18x1xf32> to vector<18x20xf32>
    %75 = arith.mulf %70, %74 : vector<18x20xf32>
    %76 = vector.broadcast %55 : vector<1x20xf32> to vector<18x20xf32>
    %77 = arith.mulf %75, %76 : vector<18x20xf32>
    %78 = vector.broadcast %57 : vector<1x20xf32> to vector<18x20xf32>
    %79 = arith.addf %77, %78 : vector<18x20xf32>
    %c0_58 = arith.constant 0 : index
    %c0_59 = arith.constant 0 : index
    %c0_60 = arith.constant 0 : index
    %80 = vector.load %arg9[%c0_58, %c0_59, %c0_60] : memref<3x20x60xf32, #tpu.memory_space<vmem>>, vector<1x20x60xf32>
    %81 = vector.shape_cast %80 : vector<1x20x60xf32> to vector<20x60xf32>
    %cst_61 = arith.constant dense<0.000000e+00> : vector<18x60xf32>
    %82 = tpu.matmul %79, %81, %cst_61 {dimension_numbers = #tpu.dot_dimension_numbers<[1], [0], [0], [1], [0, 0, 1, 1], [], []>} : vector<18x20xf32>, vector<20x60xf32>, vector<18x60xf32> -> vector<18x60xf32>
    %c0_62 = arith.constant 0 : index
    %c0_63 = arith.constant 0 : index
    %c0_64 = arith.constant 0 : index
    %83 = vector.load %arg10[%c0_62, %c0_63, %c0_64] : memref<3x1x60xf32, #tpu.memory_space<vmem>>, vector<1x1x60xf32>
    %84 = vector.shape_cast %83 : vector<1x1x60xf32> to vector<1x60xf32>
    %85 = vector.broadcast %84 : vector<1x60xf32> to vector<18x60xf32>
    %86 = arith.addf %82, %85 : vector<18x60xf32>
    %c0_65 = arith.constant 0 : index
    %c0_66 = arith.constant 0 : index
    %87 = vector.load %arg27[%c0_65, %c0_66] : memref<18x60xf32, #tpu.memory_space<vmem>>, vector<18x60xf32>
    tpu.vector_store %arg27[%c0_65, %c0_66], %86 {strides = array<i32>} : memref<18x60xf32, #tpu.memory_space<vmem>>, vector<18x60xf32>,
    %c0_67 = arith.constant 0 : index
    %c0_68 = arith.constant 0 : index
    %88 = vector.load %arg27[%c0_67, %c0_68] : memref<18x60xf32, #tpu.memory_space<vmem>>, vector<18x5xf32>
    %c0_69 = arith.constant 0 : index
    %c20_70 = arith.constant 20 : index
    %89 = vector.load %arg27[%c0_69, %c20_70] : memref<18x60xf32, #tpu.memory_space<vmem>>, vector<18x5xf32>
    %c0_71 = arith.constant 0 : index
    %c40_72 = arith.constant 40 : index
    %90 = vector.load %arg27[%c0_71, %c40_72] : memref<18x60xf32, #tpu.memory_space<vmem>>, vector<18x5xf32>
    "tpu.trace_start"() <{level = 10 : i32, message = "id,jd->ij"}> : () -> ()
    %cst_73 = arith.constant dense<0.000000e+00> : vector<18x18xf32>
    %91 = tpu.matmul %88, %89, %cst_73 {dimension_numbers = #tpu.dot_dimension_numbers<[1], [1], [0], [0], [0, 0, 1, 0], [], []>} : vector<18x5xf32>, vector<18x5xf32>, vector<18x18xf32> -> vector<18x18xf32>
    "tpu.trace_stop"() : () -> ()
    %92 = arith.addf %91, %53 : vector<18x18xf32>
    %cst_74 = arith.constant dense<0xFF800000> : vector<18xf32>
    %93 = vector.multi_reduction <maximumf>, %92, %cst_74 [1] : vector<18x18xf32> to vector<18xf32>
    %94 = vector.shape_cast %93 : vector<18xf32> to vector<18x1xf32>
    %95 = vector.broadcast %94 : vector<18x1xf32> to vector<18x18xf32>
    %96 = arith.subf %92, %95 : vector<18x18xf32>
    %97 = math.exp %96 : vector<18x18xf32>
    %cst_75 = arith.constant dense<0.000000e+00> : vector<18xf32>
    %98 = vector.multi_reduction <add>, %97, %cst_75 [1] : vector<18x18xf32> to vector<18xf32>
    %99 = vector.shape_cast %98 : vector<18xf32> to vector<18x1xf32>
    %100 = tpu.reciprocal %99 {approx = true} : vector<18x1xf32> -> vector<18x1xf32>
    %101 = vector.broadcast %100 : vector<18x1xf32> to vector<18x18xf32>
    %102 = arith.mulf %97, %101 : vector<18x18xf32>
    %cst_76 = arith.constant dense<0.000000e+00> : vector<18x5xf32>
    %103 = tpu.matmul %102, %90, %cst_76 {dimension_numbers = #tpu.dot_dimension_numbers<[1], [0], [0], [1], [0, 0, 1, 1], [], []>} : vector<18x18xf32>, vector<18x5xf32>, vector<18x5xf32> -> vector<18x5xf32>
    %c0_77 = arith.constant 0 : index
    %c0_78 = arith.constant 0 : index
    %104 = vector.load %arg28[%c0_77, %c0_78] : memref<18x20xf32, #tpu.memory_space<vmem>>, vector<18x5xf32>
    tpu.vector_store %arg28[%c0_77, %c0_78], %103 {strides = array<i32>} : memref<18x20xf32, #tpu.memory_space<vmem>>, vector<18x5xf32>,
    %c0_79 = arith.constant 0 : index
    %c5 = arith.constant 5 : index
    %105 = vector.load %arg27[%c0_79, %c5] : memref<18x60xf32, #tpu.memory_space<vmem>>, vector<18x5xf32>
    %c0_80 = arith.constant 0 : index
    %c25 = arith.constant 25 : index
    %106 = vector.load %arg27[%c0_80, %c25] : memref<18x60xf32, #tpu.memory_space<vmem>>, vector<18x5xf32>
    %c0_81 = arith.constant 0 : index
    %c45 = arith.constant 45 : index
    %107 = vector.load %arg27[%c0_81, %c45] : memref<18x60xf32, #tpu.memory_space<vmem>>, vector<18x5xf32>
    "tpu.trace_start"() <{level = 10 : i32, message = "id,jd->ij"}> : () -> ()
    %cst_82 = arith.constant dense<0.000000e+00> : vector<18x18xf32>
    %108 = tpu.matmul %105, %106, %cst_82 {dimension_numbers = #tpu.dot_dimension_numbers<[1], [1], [0], [0], [0, 0, 1, 0], [], []>} : vector<18x5xf32>, vector<18x5xf32>, vector<18x18xf32> -> vector<18x18xf32>
    "tpu.trace_stop"() : () -> ()
    %109 = arith.addf %108, %53 : vector<18x18xf32>
    %cst_83 = arith.constant dense<0xFF800000> : vector<18xf32>
    %110 = vector.multi_reduction <maximumf>, %109, %cst_83 [1] : vector<18x18xf32> to vector<18xf32>
    %111 = vector.shape_cast %110 : vector<18xf32> to vector<18x1xf32>
    %112 = vector.broadcast %111 : vector<18x1xf32> to vector<18x18xf32>
    %113 = arith.subf %109, %112 : vector<18x18xf32>
    %114 = math.exp %113 : vector<18x18xf32>
    %cst_84 = arith.constant dense<0.000000e+00> : vector<18xf32>
    %115 = vector.multi_reduction <add>, %114, %cst_84 [1] : vector<18x18xf32> to vector<18xf32>
    %116 = vector.shape_cast %115 : vector<18xf32> to vector<18x1xf32>
    %117 = tpu.reciprocal %116 {approx = true} : vector<18x1xf32> -> vector<18x1xf32>
    %118 = vector.broadcast %117 : vector<18x1xf32> to vector<18x18xf32>
    %119 = arith.mulf %114, %118 : vector<18x18xf32>
    %cst_85 = arith.constant dense<0.000000e+00> : vector<18x5xf32>
    %120 = tpu.matmul %119, %107, %cst_85 {dimension_numbers = #tpu.dot_dimension_numbers<[1], [0], [0], [1], [0, 0, 1, 1], [], []>} : vector<18x18xf32>, vector<18x5xf32>, vector<18x5xf32> -> vector<18x5xf32>
    %c0_86 = arith.constant 0 : index
    %c5_87 = arith.constant 5 : index
    %121 = vector.load %arg28[%c0_86, %c5_87] : memref<18x20xf32, #tpu.memory_space<vmem>>, vector<18x5xf32>
    tpu.vector_store %arg28[%c0_86, %c5_87], %120 {strides = array<i32>} : memref<18x20xf32, #tpu.memory_space<vmem>>, vector<18x5xf32>,
    %c0_88 = arith.constant 0 : index
    %c10_89 = arith.constant 10 : index
    %122 = vector.load %arg27[%c0_88, %c10_89] : memref<18x60xf32, #tpu.memory_space<vmem>>, vector<18x5xf32>
    %c0_90 = arith.constant 0 : index
    %c30 = arith.constant 30 : index
    %123 = vector.load %arg27[%c0_90, %c30] : memref<18x60xf32, #tpu.memory_space<vmem>>, vector<18x5xf32>
    %c0_91 = arith.constant 0 : index
    %c50 = arith.constant 50 : index
    %124 = vector.load %arg27[%c0_91, %c50] : memref<18x60xf32, #tpu.memory_space<vmem>>, vector<18x5xf32>
    "tpu.trace_start"() <{level = 10 : i32, message = "id,jd->ij"}> : () -> ()
    %cst_92 = arith.constant dense<0.000000e+00> : vector<18x18xf32>
    %125 = tpu.matmul %122, %123, %cst_92 {dimension_numbers = #tpu.dot_dimension_numbers<[1], [1], [0], [0], [0, 0, 1, 0], [], []>} : vector<18x5xf32>, vector<18x5xf32>, vector<18x18xf32> -> vector<18x18xf32>
    "tpu.trace_stop"() : () -> ()
    %126 = arith.addf %125, %53 : vector<18x18xf32>
    %cst_93 = arith.constant dense<0xFF800000> : vector<18xf32>
    %127 = vector.multi_reduction <maximumf>, %126, %cst_93 [1] : vector<18x18xf32> to vector<18xf32>
    %128 = vector.shape_cast %127 : vector<18xf32> to vector<18x1xf32>
    %129 = vector.broadcast %128 : vector<18x1xf32> to vector<18x18xf32>
    %130 = arith.subf %126, %129 : vector<18x18xf32>
    %131 = math.exp %130 : vector<18x18xf32>
    %cst_94 = arith.constant dense<0.000000e+00> : vector<18xf32>
    %132 = vector.multi_reduction <add>, %131, %cst_94 [1] : vector<18x18xf32> to vector<18xf32>
    %133 = vector.shape_cast %132 : vector<18xf32> to vector<18x1xf32>
    %134 = tpu.reciprocal %133 {approx = true} : vector<18x1xf32> -> vector<18x1xf32>
    %135 = vector.broadcast %134 : vector<18x1xf32> to vector<18x18xf32>
    %136 = arith.mulf %131, %135 : vector<18x18xf32>
    %cst_95 = arith.constant dense<0.000000e+00> : vector<18x5xf32>
    %137 = tpu.matmul %136, %124, %cst_95 {dimension_numbers = #tpu.dot_dimension_numbers<[1], [0], [0], [1], [0, 0, 1, 1], [], []>} : vector<18x18xf32>, vector<18x5xf32>, vector<18x5xf32> -> vector<18x5xf32>
    %c0_96 = arith.constant 0 : index
    %c10_97 = arith.constant 10 : index
    %138 = vector.load %arg28[%c0_96, %c10_97] : memref<18x20xf32, #tpu.memory_space<vmem>>, vector<18x5xf32>
    tpu.vector_store %arg28[%c0_96, %c10_97], %137 {strides = array<i32>} : memref<18x20xf32, #tpu.memory_space<vmem>>, vector<18x5xf32>,
    %c0_98 = arith.constant 0 : index
    %c15 = arith.constant 15 : index
    %139 = vector.load %arg27[%c0_98, %c15] : memref<18x60xf32, #tpu.memory_space<vmem>>, vector<18x5xf32>
    %c0_99 = arith.constant 0 : index
    %c35 = arith.constant 35 : index
    %140 = vector.load %arg27[%c0_99, %c35] : memref<18x60xf32, #tpu.memory_space<vmem>>, vector<18x5xf32>
    %c0_100 = arith.constant 0 : index
    %c55 = arith.constant 55 : index
    %141 = vector.load %arg27[%c0_100, %c55] : memref<18x60xf32, #tpu.memory_space<vmem>>, vector<18x5xf32>
    "tpu.trace_start"() <{level = 10 : i32, message = "id,jd->ij"}> : () -> ()
    %cst_101 = arith.constant dense<0.000000e+00> : vector<18x18xf32>
    %142 = tpu.matmul %139, %140, %cst_101 {dimension_numbers = #tpu.dot_dimension_numbers<[1], [1], [0], [0], [0, 0, 1, 0], [], []>} : vector<18x5xf32>, vector<18x5xf32>, vector<18x18xf32> -> vector<18x18xf32>
    "tpu.trace_stop"() : () -> ()
    %143 = arith.addf %142, %53 : vector<18x18xf32>
    %cst_102 = arith.constant dense<0xFF800000> : vector<18xf32>
    %144 = vector.multi_reduction <maximumf>, %143, %cst_102 [1] : vector<18x18xf32> to vector<18xf32>
    %145 = vector.shape_cast %144 : vector<18xf32> to vector<18x1xf32>
    %146 = vector.broadcast %145 : vector<18x1xf32> to vector<18x18xf32>
    %147 = arith.subf %143, %146 : vector<18x18xf32>
    %148 = math.exp %147 : vector<18x18xf32>
    %cst_103 = arith.constant dense<0.000000e+00> : vector<18xf32>
    %149 = vector.multi_reduction <add>, %148, %cst_103 [1] : vector<18x18xf32> to vector<18xf32>
    %150 = vector.shape_cast %149 : vector<18xf32> to vector<18x1xf32>
    %151 = tpu.reciprocal %150 {approx = true} : vector<18x1xf32> -> vector<18x1xf32>
    %152 = vector.broadcast %151 : vector<18x1xf32> to vector<18x18xf32>
    %153 = arith.mulf %148, %152 : vector<18x18xf32>
    %cst_104 = arith.constant dense<0.000000e+00> : vector<18x5xf32>
    %154 = tpu.matmul %153, %141, %cst_104 {dimension_numbers = #tpu.dot_dimension_numbers<[1], [0], [0], [1], [0, 0, 1, 1], [], []>} : vector<18x18xf32>, vector<18x5xf32>, vector<18x5xf32> -> vector<18x5xf32>
    %c0_105 = arith.constant 0 : index
    %c15_106 = arith.constant 15 : index
    %155 = vector.load %arg28[%c0_105, %c15_106] : memref<18x20xf32, #tpu.memory_space<vmem>>, vector<18x5xf32>
    tpu.vector_store %arg28[%c0_105, %c15_106], %154 {strides = array<i32>} : memref<18x20xf32, #tpu.memory_space<vmem>>, vector<18x5xf32>,
    %c0_107 = arith.constant 0 : index
    %c0_108 = arith.constant 0 : index
    %156 = vector.load %arg28[%c0_107, %c0_108] : memref<18x20xf32, #tpu.memory_space<vmem>>, vector<18x20xf32>
    %c0_109 = arith.constant 0 : index
    %c0_110 = arith.constant 0 : index
    %c0_111 = arith.constant 0 : index
    %157 = vector.load %arg11[%c0_109, %c0_110, %c0_111] : memref<3x20x20xf32, #tpu.memory_space<vmem>>, vector<1x20x20xf32>
    %158 = vector.shape_cast %157 : vector<1x20x20xf32> to vector<20x20xf32>
    %cst_112 = arith.constant dense<0.000000e+00> : vector<18x20xf32>
    %159 = tpu.matmul %156, %158, %cst_112 {dimension_numbers = #tpu.dot_dimension_numbers<[1], [0], [0], [1], [0, 0, 1, 1], [], []>} : vector<18x20xf32>, vector<20x20xf32>, vector<18x20xf32> -> vector<18x20xf32>
    %c0_113 = arith.constant 0 : index
    %c0_114 = arith.constant 0 : index
    %c0_115 = arith.constant 0 : index
    %160 = vector.load %arg12[%c0_113, %c0_114, %c0_115] : memref<3x1x20xf32, #tpu.memory_space<vmem>>, vector<1x1x20xf32>
    %161 = vector.shape_cast %160 : vector<1x1x20xf32> to vector<1x20xf32>
    %162 = vector.broadcast %161 : vector<1x20xf32> to vector<18x20xf32>
    %163 = arith.addf %159, %162 : vector<18x20xf32>
    %164 = arith.addf %52, %163 : vector<18x20xf32>
    %c0_116 = arith.constant 0 : index
    %c0_117 = arith.constant 0 : index
    %c0_118 = arith.constant 0 : index
    %165 = vector.load %arg13[%c0_116, %c0_117, %c0_118] : memref<3x1x20xf32, #tpu.memory_space<vmem>>, vector<1x1x20xf32>
    %166 = vector.shape_cast %165 : vector<1x1x20xf32> to vector<1x20xf32>
    %c0_119 = arith.constant 0 : index
    %c0_120 = arith.constant 0 : index
    %c0_121 = arith.constant 0 : index
    %167 = vector.load %arg14[%c0_119, %c0_120, %c0_121] : memref<3x1x20xf32, #tpu.memory_space<vmem>>, vector<1x1x20xf32>
    %168 = vector.shape_cast %167 : vector<1x1x20xf32> to vector<1x20xf32>
    %cst_122 = arith.constant dense<0.000000e+00> : vector<18xf32>
    %169 = vector.multi_reduction <add>, %164, %cst_122 [1] : vector<18x20xf32> to vector<18xf32>
    %170 = vector.shape_cast %169 : vector<18xf32> to vector<18x1xf32>
    %cst_123 = arith.constant 2.000000e+01 : f32
    %171 = vector.broadcast %cst_123 : f32 to vector<18x1xf32>
    %172 = arith.divf %170, %171 : vector<18x1xf32>
    %173 = vector.broadcast %172 : vector<18x1xf32> to vector<18x20xf32>
    %174 = arith.subf %164, %173 : vector<18x20xf32>
    %175 = arith.mulf %174, %174 : vector<18x20xf32>
    %cst_124 = arith.constant dense<0.000000e+00> : vector<18xf32>
    %176 = vector.multi_reduction <add>, %175, %cst_124 [1] : vector<18x20xf32> to vector<18xf32>
    %177 = vector.shape_cast %176 : vector<18xf32> to vector<18x1xf32>
    %cst_125 = arith.constant 2.000000e+01 : f32
    %178 = vector.broadcast %cst_125 : f32 to vector<18x1xf32>
    %179 = arith.divf %177, %178 : vector<18x1xf32>
    %180 = vector.broadcast %172 : vector<18x1xf32> to vector<18x20xf32>
    %181 = arith.subf %164, %180 : vector<18x20xf32>
    %cst_126 = arith.constant 9.99999974E-6 : f32
    %182 = vector.broadcast %cst_126 : f32 to vector<18x1xf32>
    %183 = arith.addf %179, %182 : vector<18x1xf32>
    %184 = math.rsqrt %183 : vector<18x1xf32>
    %185 = vector.broadcast %184 : vector<18x1xf32> to vector<18x20xf32>
    %186 = arith.mulf %181, %185 : vector<18x20xf32>
    %187 = vector.broadcast %166 : vector<1x20xf32> to vector<18x20xf32>
    %188 = arith.mulf %186, %187 : vector<18x20xf32>
    %189 = vector.broadcast %168 : vector<1x20xf32> to vector<18x20xf32>
    %190 = arith.addf %188, %189 : vector<18x20xf32>
    %c0_127 = arith.constant 0 : index
    %c0_128 = arith.constant 0 : index
    %c0_129 = arith.constant 0 : index
    %191 = vector.load %arg15[%c0_127, %c0_128, %c0_129] : memref<3x20x64xf32, #tpu.memory_space<vmem>>, vector<1x20x64xf32>
    %192 = vector.shape_cast %191 : vector<1x20x64xf32> to vector<20x64xf32>
    %cst_130 = arith.constant dense<0.000000e+00> : vector<18x64xf32>
    %193 = tpu.matmul %190, %192, %cst_130 {dimension_numbers = #tpu.dot_dimension_numbers<[1], [0], [0], [1], [0, 0, 1, 1], [], []>} : vector<18x20xf32>, vector<20x64xf32>, vector<18x64xf32> -> vector<18x64xf32>
    %c0_131 = arith.constant 0 : index
    %c0_132 = arith.constant 0 : index
    %c0_133 = arith.constant 0 : index
    %194 = vector.load %arg16[%c0_131, %c0_132, %c0_133] : memref<3x1x64xf32, #tpu.memory_space<vmem>>, vector<1x1x64xf32>
    %195 = vector.shape_cast %194 : vector<1x1x64xf32> to vector<1x64xf32>
    %196 = vector.broadcast %195 : vector<1x64xf32> to vector<18x64xf32>
    %197 = arith.addf %193, %196 : vector<18x64xf32>
    %cst_134 = arith.constant 5.000000e-01 : f32
    %198 = vector.broadcast %cst_134 : f32 to vector<18x64xf32>
    %199 = arith.mulf %198, %197 : vector<18x64xf32>
    %cst_135 = arith.constant 0.707106769 : f32
    %200 = vector.broadcast %cst_135 : f32 to vector<18x64xf32>
    %201 = arith.mulf %197, %200 : vector<18x64xf32>
    %cst_136 = arith.constant 0.000000e+00 : f32
    %202 = vector.broadcast %cst_136 : f32 to vector<18x64xf32>
    %203 = arith.cmpf oge, %201, %202 : vector<18x64xf32>
    %cst_137 = arith.constant 1.000000e+00 : f32
    %cst_138 = arith.constant -1.000000e+00 : f32
    %204 = vector.broadcast %cst_137 : f32 to vector<18x64xf32>
    %205 = vector.broadcast %cst_138 : f32 to vector<18x64xf32>
    %206 = arith.select %203, %204, %205 : vector<18x64xi1>, vector<18x64xf32>
    %207 = math.absf %201 : vector<18x64xf32>
    %cst_139 = arith.constant 0.327591091 : f32
    %208 = vector.broadcast %cst_139 : f32 to vector<18x64xf32>
    %209 = arith.mulf %208, %207 : vector<18x64xf32>
    %cst_140 = arith.constant 1.000000e+00 : f32
    %210 = vector.broadcast %cst_140 : f32 to vector<18x64xf32>
    %211 = arith.addf %210, %209 : vector<18x64xf32>
    %cst_141 = arith.constant 1.000000e+00 : f32
    %212 = vector.broadcast %cst_141 : f32 to vector<18x64xf32>
    %213 = arith.divf %212, %211 : vector<18x64xf32>
    %cst_142 = arith.constant 1.06140542 : f32
    %214 = vector.broadcast %cst_142 : f32 to vector<18x64xf32>
    %215 = arith.mulf %214, %213 : vector<18x64xf32>
    %cst_143 = arith.constant -1.45315206 : f32
    %216 = vector.broadcast %cst_143 : f32 to vector<18x64xf32>
    %217 = arith.addf %215, %216 : vector<18x64xf32>
    %218 = arith.mulf %217, %213 : vector<18x64xf32>
    %cst_144 = arith.constant 1.42141378 : f32
    %219 = vector.broadcast %cst_144 : f32 to vector<18x64xf32>
    %220 = arith.addf %218, %219 : vector<18x64xf32>
    %221 = arith.mulf %220, %213 : vector<18x64xf32>
    %cst_145 = arith.constant -0.284496725 : f32
    %222 = vector.broadcast %cst_145 : f32 to vector<18x64xf32>
    %223 = arith.addf %221, %222 : vector<18x64xf32>
    %224 = arith.mulf %223, %213 : vector<18x64xf32>
    %cst_146 = arith.constant 0.254829586 : f32
    %225 = vector.broadcast %cst_146 : f32 to vector<18x64xf32>
    %226 = arith.addf %224, %225 : vector<18x64xf32>
    %227 = arith.mulf %226, %213 : vector<18x64xf32>
    %cst_147 = arith.constant 0.000000e+00 : f32
    %228 = vector.broadcast %cst_147 : f32 to vector<18x64xf32>
    %229 = arith.subf %228, %207 : vector<18x64xf32>
    %230 = arith.mulf %229, %207 : vector<18x64xf32>
    %231 = math.exp %230 : vector<18x64xf32>
    %232 = arith.mulf %227, %231 : vector<18x64xf32>
    %cst_148 = arith.constant 1.000000e+00 : f32
    %233 = vector.broadcast %cst_148 : f32 to vector<18x64xf32>
    %234 = arith.subf %233, %232 : vector<18x64xf32>
    %235 = arith.mulf %206, %234 : vector<18x64xf32>
    %cst_149 = arith.constant 1.000000e+00 : f32
    %236 = vector.broadcast %cst_149 : f32 to vector<18x64xf32>
    %237 = arith.addf %236, %235 : vector<18x64xf32>
    %238 = arith.mulf %199, %237 : vector<18x64xf32>
    %c0_150 = arith.constant 0 : index
    %c0_151 = arith.constant 0 : index
    %c0_152 = arith.constant 0 : index
    %239 = vector.load %arg17[%c0_150, %c0_151, %c0_152] : memref<3x64x20xf32, #tpu.memory_space<vmem>>, vector<1x64x20xf32>
    %240 = vector.shape_cast %239 : vector<1x64x20xf32> to vector<64x20xf32>
    %cst_153 = arith.constant dense<0.000000e+00> : vector<18x20xf32>
    %241 = tpu.matmul %238, %240, %cst_153 {dimension_numbers = #tpu.dot_dimension_numbers<[1], [0], [0], [1], [0, 0, 1, 1], [], []>} : vector<18x64xf32>, vector<64x20xf32>, vector<18x20xf32> -> vector<18x20xf32>
    %c0_154 = arith.constant 0 : index
    %c0_155 = arith.constant 0 : index
    %c0_156 = arith.constant 0 : index
    %242 = vector.load %arg18[%c0_154, %c0_155, %c0_156] : memref<3x1x20xf32, #tpu.memory_space<vmem>>, vector<1x1x20xf32>
    %243 = vector.shape_cast %242 : vector<1x1x20xf32> to vector<1x20xf32>
    %244 = vector.broadcast %243 : vector<1x20xf32> to vector<18x20xf32>
    %245 = arith.addf %241, %244 : vector<18x20xf32>
    %246 = arith.addf %164, %245 : vector<18x20xf32>
    %c1 = arith.constant 1 : index
    %c0_157 = arith.constant 0 : index
    %c0_158 = arith.constant 0 : index
    %247 = vector.load %arg7[%c1, %c0_157, %c0_158] : memref<3x1x20xf32, #tpu.memory_space<vmem>>, vector<1x1x20xf32>
    %248 = vector.shape_cast %247 : vector<1x1x20xf32> to vector<1x20xf32>
    %c1_159 = arith.constant 1 : index
    %c0_160 = arith.constant 0 : index
    %c0_161 = arith.constant 0 : index
    %249 = vector.load %arg8[%c1_159, %c0_160, %c0_161] : memref<3x1x20xf32, #tpu.memory_space<vmem>>, vector<1x1x20xf32>
    %250 = vector.shape_cast %249 : vector<1x1x20xf32> to vector<1x20xf32>
    %cst_162 = arith.constant dense<0.000000e+00> : vector<18xf32>
    %251 = vector.multi_reduction <add>, %246, %cst_162 [1] : vector<18x20xf32> to vector<18xf32>
    %252 = vector.shape_cast %251 : vector<18xf32> to vector<18x1xf32>
    %cst_163 = arith.constant 2.000000e+01 : f32
    %253 = vector.broadcast %cst_163 : f32 to vector<18x1xf32>
    %254 = arith.divf %252, %253 : vector<18x1xf32>
    %255 = vector.broadcast %254 : vector<18x1xf32> to vector<18x20xf32>
    %256 = arith.subf %246, %255 : vector<18x20xf32>
    %257 = arith.mulf %256, %256 : vector<18x20xf32>
    %cst_164 = arith.constant dense<0.000000e+00> : vector<18xf32>
    %258 = vector.multi_reduction <add>, %257, %cst_164 [1] : vector<18x20xf32> to vector<18xf32>
    %259 = vector.shape_cast %258 : vector<18xf32> to vector<18x1xf32>
    %cst_165 = arith.constant 2.000000e+01 : f32
    %260 = vector.broadcast %cst_165 : f32 to vector<18x1xf32>
    %261 = arith.divf %259, %260 : vector<18x1xf32>
    %262 = vector.broadcast %254 : vector<18x1xf32> to vector<18x20xf32>
    %263 = arith.subf %246, %262 : vector<18x20xf32>
    %cst_166 = arith.constant 9.99999974E-6 : f32
    %264 = vector.broadcast %cst_166 : f32 to vector<18x1xf32>
    %265 = arith.addf %261, %264 : vector<18x1xf32>
    %266 = math.rsqrt %265 : vector<18x1xf32>
    %267 = vector.broadcast %266 : vector<18x1xf32> to vector<18x20xf32>
    %268 = arith.mulf %263, %267 : vector<18x20xf32>
    %269 = vector.broadcast %248 : vector<1x20xf32> to vector<18x20xf32>
    %270 = arith.mulf %268, %269 : vector<18x20xf32>
    %271 = vector.broadcast %250 : vector<1x20xf32> to vector<18x20xf32>
    %272 = arith.addf %270, %271 : vector<18x20xf32>
    %c1_167 = arith.constant 1 : index
    %c0_168 = arith.constant 0 : index
    %c0_169 = arith.constant 0 : index
    %273 = vector.load %arg9[%c1_167, %c0_168, %c0_169] : memref<3x20x60xf32, #tpu.memory_space<vmem>>, vector<1x20x60xf32>
    %274 = vector.shape_cast %273 : vector<1x20x60xf32> to vector<20x60xf32>
    %cst_170 = arith.constant dense<0.000000e+00> : vector<18x60xf32>
    %275 = tpu.matmul %272, %274, %cst_170 {dimension_numbers = #tpu.dot_dimension_numbers<[1], [0], [0], [1], [0, 0, 1, 1], [], []>} : vector<18x20xf32>, vector<20x60xf32>, vector<18x60xf32> -> vector<18x60xf32>
    %c1_171 = arith.constant 1 : index
    %c0_172 = arith.constant 0 : index
    %c0_173 = arith.constant 0 : index
    %276 = vector.load %arg10[%c1_171, %c0_172, %c0_173] : memref<3x1x60xf32, #tpu.memory_space<vmem>>, vector<1x1x60xf32>
    %277 = vector.shape_cast %276 : vector<1x1x60xf32> to vector<1x60xf32>
    %278 = vector.broadcast %277 : vector<1x60xf32> to vector<18x60xf32>
    %279 = arith.addf %275, %278 : vector<18x60xf32>
    %c0_174 = arith.constant 0 : index
    %c0_175 = arith.constant 0 : index
    %280 = vector.load %arg27[%c0_174, %c0_175] : memref<18x60xf32, #tpu.memory_space<vmem>>, vector<18x60xf32>
    tpu.vector_store %arg27[%c0_174, %c0_175], %279 {strides = array<i32>} : memref<18x60xf32, #tpu.memory_space<vmem>>, vector<18x60xf32>,
    %c0_176 = arith.constant 0 : index
    %c0_177 = arith.constant 0 : index
    %281 = vector.load %arg27[%c0_176, %c0_177] : memref<18x60xf32, #tpu.memory_space<vmem>>, vector<18x5xf32>
    %c0_178 = arith.constant 0 : index
    %c20_179 = arith.constant 20 : index
    %282 = vector.load %arg27[%c0_178, %c20_179] : memref<18x60xf32, #tpu.memory_space<vmem>>, vector<18x5xf32>
    %c0_180 = arith.constant 0 : index
    %c40_181 = arith.constant 40 : index
    %283 = vector.load %arg27[%c0_180, %c40_181] : memref<18x60xf32, #tpu.memory_space<vmem>>, vector<18x5xf32>
    "tpu.trace_start"() <{level = 10 : i32, message = "id,jd->ij"}> : () -> ()
    %cst_182 = arith.constant dense<0.000000e+00> : vector<18x18xf32>
    %284 = tpu.matmul %281, %282, %cst_182 {dimension_numbers = #tpu.dot_dimension_numbers<[1], [1], [0], [0], [0, 0, 1, 0], [], []>} : vector<18x5xf32>, vector<18x5xf32>, vector<18x18xf32> -> vector<18x18xf32>
    "tpu.trace_stop"() : () -> ()
    %285 = arith.addf %284, %53 : vector<18x18xf32>
    %cst_183 = arith.constant dense<0xFF800000> : vector<18xf32>
    %286 = vector.multi_reduction <maximumf>, %285, %cst_183 [1] : vector<18x18xf32> to vector<18xf32>
    %287 = vector.shape_cast %286 : vector<18xf32> to vector<18x1xf32>
    %288 = vector.broadcast %287 : vector<18x1xf32> to vector<18x18xf32>
    %289 = arith.subf %285, %288 : vector<18x18xf32>
    %290 = math.exp %289 : vector<18x18xf32>
    %cst_184 = arith.constant dense<0.000000e+00> : vector<18xf32>
    %291 = vector.multi_reduction <add>, %290, %cst_184 [1] : vector<18x18xf32> to vector<18xf32>
    %292 = vector.shape_cast %291 : vector<18xf32> to vector<18x1xf32>
    %293 = tpu.reciprocal %292 {approx = true} : vector<18x1xf32> -> vector<18x1xf32>
    %294 = vector.broadcast %293 : vector<18x1xf32> to vector<18x18xf32>
    %295 = arith.mulf %290, %294 : vector<18x18xf32>
    %cst_185 = arith.constant dense<0.000000e+00> : vector<18x5xf32>
    %296 = tpu.matmul %295, %283, %cst_185 {dimension_numbers = #tpu.dot_dimension_numbers<[1], [0], [0], [1], [0, 0, 1, 1], [], []>} : vector<18x18xf32>, vector<18x5xf32>, vector<18x5xf32> -> vector<18x5xf32>
    %c0_186 = arith.constant 0 : index
    %c0_187 = arith.constant 0 : index
    %297 = vector.load %arg28[%c0_186, %c0_187] : memref<18x20xf32, #tpu.memory_space<vmem>>, vector<18x5xf32>
    tpu.vector_store %arg28[%c0_186, %c0_187], %296 {strides = array<i32>} : memref<18x20xf32, #tpu.memory_space<vmem>>, vector<18x5xf32>,
    %c0_188 = arith.constant 0 : index
    %c5_189 = arith.constant 5 : index
    %298 = vector.load %arg27[%c0_188, %c5_189] : memref<18x60xf32, #tpu.memory_space<vmem>>, vector<18x5xf32>
    %c0_190 = arith.constant 0 : index
    %c25_191 = arith.constant 25 : index
    %299 = vector.load %arg27[%c0_190, %c25_191] : memref<18x60xf32, #tpu.memory_space<vmem>>, vector<18x5xf32>
    %c0_192 = arith.constant 0 : index
    %c45_193 = arith.constant 45 : index
    %300 = vector.load %arg27[%c0_192, %c45_193] : memref<18x60xf32, #tpu.memory_space<vmem>>, vector<18x5xf32>
    "tpu.trace_start"() <{level = 10 : i32, message = "id,jd->ij"}> : () -> ()
    %cst_194 = arith.constant dense<0.000000e+00> : vector<18x18xf32>
    %301 = tpu.matmul %298, %299, %cst_194 {dimension_numbers = #tpu.dot_dimension_numbers<[1], [1], [0], [0], [0, 0, 1, 0], [], []>} : vector<18x5xf32>, vector<18x5xf32>, vector<18x18xf32> -> vector<18x18xf32>
    "tpu.trace_stop"() : () -> ()
    %302 = arith.addf %301, %53 : vector<18x18xf32>
    %cst_195 = arith.constant dense<0xFF800000> : vector<18xf32>
    %303 = vector.multi_reduction <maximumf>, %302, %cst_195 [1] : vector<18x18xf32> to vector<18xf32>
    %304 = vector.shape_cast %303 : vector<18xf32> to vector<18x1xf32>
    %305 = vector.broadcast %304 : vector<18x1xf32> to vector<18x18xf32>
    %306 = arith.subf %302, %305 : vector<18x18xf32>
    %307 = math.exp %306 : vector<18x18xf32>
    %cst_196 = arith.constant dense<0.000000e+00> : vector<18xf32>
    %308 = vector.multi_reduction <add>, %307, %cst_196 [1] : vector<18x18xf32> to vector<18xf32>
    %309 = vector.shape_cast %308 : vector<18xf32> to vector<18x1xf32>
    %310 = tpu.reciprocal %309 {approx = true} : vector<18x1xf32> -> vector<18x1xf32>
    %311 = vector.broadcast %310 : vector<18x1xf32> to vector<18x18xf32>
    %312 = arith.mulf %307, %311 : vector<18x18xf32>
    %cst_197 = arith.constant dense<0.000000e+00> : vector<18x5xf32>
    %313 = tpu.matmul %312, %300, %cst_197 {dimension_numbers = #tpu.dot_dimension_numbers<[1], [0], [0], [1], [0, 0, 1, 1], [], []>} : vector<18x18xf32>, vector<18x5xf32>, vector<18x5xf32> -> vector<18x5xf32>
    %c0_198 = arith.constant 0 : index
    %c5_199 = arith.constant 5 : index
    %314 = vector.load %arg28[%c0_198, %c5_199] : memref<18x20xf32, #tpu.memory_space<vmem>>, vector<18x5xf32>
    tpu.vector_store %arg28[%c0_198, %c5_199], %313 {strides = array<i32>} : memref<18x20xf32, #tpu.memory_space<vmem>>, vector<18x5xf32>,
    %c0_200 = arith.constant 0 : index
    %c10_201 = arith.constant 10 : index
    %315 = vector.load %arg27[%c0_200, %c10_201] : memref<18x60xf32, #tpu.memory_space<vmem>>, vector<18x5xf32>
    %c0_202 = arith.constant 0 : index
    %c30_203 = arith.constant 30 : index
    %316 = vector.load %arg27[%c0_202, %c30_203] : memref<18x60xf32, #tpu.memory_space<vmem>>, vector<18x5xf32>
    %c0_204 = arith.constant 0 : index
    %c50_205 = arith.constant 50 : index
    %317 = vector.load %arg27[%c0_204, %c50_205] : memref<18x60xf32, #tpu.memory_space<vmem>>, vector<18x5xf32>
    "tpu.trace_start"() <{level = 10 : i32, message = "id,jd->ij"}> : () -> ()
    %cst_206 = arith.constant dense<0.000000e+00> : vector<18x18xf32>
    %318 = tpu.matmul %315, %316, %cst_206 {dimension_numbers = #tpu.dot_dimension_numbers<[1], [1], [0], [0], [0, 0, 1, 0], [], []>} : vector<18x5xf32>, vector<18x5xf32>, vector<18x18xf32> -> vector<18x18xf32>
    "tpu.trace_stop"() : () -> ()
    %319 = arith.addf %318, %53 : vector<18x18xf32>
    %cst_207 = arith.constant dense<0xFF800000> : vector<18xf32>
    %320 = vector.multi_reduction <maximumf>, %319, %cst_207 [1] : vector<18x18xf32> to vector<18xf32>
    %321 = vector.shape_cast %320 : vector<18xf32> to vector<18x1xf32>
    %322 = vector.broadcast %321 : vector<18x1xf32> to vector<18x18xf32>
    %323 = arith.subf %319, %322 : vector<18x18xf32>
    %324 = math.exp %323 : vector<18x18xf32>
    %cst_208 = arith.constant dense<0.000000e+00> : vector<18xf32>
    %325 = vector.multi_reduction <add>, %324, %cst_208 [1] : vector<18x18xf32> to vector<18xf32>
    %326 = vector.shape_cast %325 : vector<18xf32> to vector<18x1xf32>
    %327 = tpu.reciprocal %326 {approx = true} : vector<18x1xf32> -> vector<18x1xf32>
    %328 = vector.broadcast %327 : vector<18x1xf32> to vector<18x18xf32>
    %329 = arith.mulf %324, %328 : vector<18x18xf32>
    %cst_209 = arith.constant dense<0.000000e+00> : vector<18x5xf32>
    %330 = tpu.matmul %329, %317, %cst_209 {dimension_numbers = #tpu.dot_dimension_numbers<[1], [0], [0], [1], [0, 0, 1, 1], [], []>} : vector<18x18xf32>, vector<18x5xf32>, vector<18x5xf32> -> vector<18x5xf32>
    %c0_210 = arith.constant 0 : index
    %c10_211 = arith.constant 10 : index
    %331 = vector.load %arg28[%c0_210, %c10_211] : memref<18x20xf32, #tpu.memory_space<vmem>>, vector<18x5xf32>
    tpu.vector_store %arg28[%c0_210, %c10_211], %330 {strides = array<i32>} : memref<18x20xf32, #tpu.memory_space<vmem>>, vector<18x5xf32>,
    %c0_212 = arith.constant 0 : index
    %c15_213 = arith.constant 15 : index
    %332 = vector.load %arg27[%c0_212, %c15_213] : memref<18x60xf32, #tpu.memory_space<vmem>>, vector<18x5xf32>
    %c0_214 = arith.constant 0 : index
    %c35_215 = arith.constant 35 : index
    %333 = vector.load %arg27[%c0_214, %c35_215] : memref<18x60xf32, #tpu.memory_space<vmem>>, vector<18x5xf32>
    %c0_216 = arith.constant 0 : index
    %c55_217 = arith.constant 55 : index
    %334 = vector.load %arg27[%c0_216, %c55_217] : memref<18x60xf32, #tpu.memory_space<vmem>>, vector<18x5xf32>
    "tpu.trace_start"() <{level = 10 : i32, message = "id,jd->ij"}> : () -> ()
    %cst_218 = arith.constant dense<0.000000e+00> : vector<18x18xf32>
    %335 = tpu.matmul %332, %333, %cst_218 {dimension_numbers = #tpu.dot_dimension_numbers<[1], [1], [0], [0], [0, 0, 1, 0], [], []>} : vector<18x5xf32>, vector<18x5xf32>, vector<18x18xf32> -> vector<18x18xf32>
    "tpu.trace_stop"() : () -> ()
    %336 = arith.addf %335, %53 : vector<18x18xf32>
    %cst_219 = arith.constant dense<0xFF800000> : vector<18xf32>
    %337 = vector.multi_reduction <maximumf>, %336, %cst_219 [1] : vector<18x18xf32> to vector<18xf32>
    %338 = vector.shape_cast %337 : vector<18xf32> to vector<18x1xf32>
    %339 = vector.broadcast %338 : vector<18x1xf32> to vector<18x18xf32>
    %340 = arith.subf %336, %339 : vector<18x18xf32>
    %341 = math.exp %340 : vector<18x18xf32>
    %cst_220 = arith.constant dense<0.000000e+00> : vector<18xf32>
    %342 = vector.multi_reduction <add>, %341, %cst_220 [1] : vector<18x18xf32> to vector<18xf32>
    %343 = vector.shape_cast %342 : vector<18xf32> to vector<18x1xf32>
    %344 = tpu.reciprocal %343 {approx = true} : vector<18x1xf32> -> vector<18x1xf32>
    %345 = vector.broadcast %344 : vector<18x1xf32> to vector<18x18xf32>
    %346 = arith.mulf %341, %345 : vector<18x18xf32>
    %cst_221 = arith.constant dense<0.000000e+00> : vector<18x5xf32>
    %347 = tpu.matmul %346, %334, %cst_221 {dimension_numbers = #tpu.dot_dimension_numbers<[1], [0], [0], [1], [0, 0, 1, 1], [], []>} : vector<18x18xf32>, vector<18x5xf32>, vector<18x5xf32> -> vector<18x5xf32>
    %c0_222 = arith.constant 0 : index
    %c15_223 = arith.constant 15 : index
    %348 = vector.load %arg28[%c0_222, %c15_223] : memref<18x20xf32, #tpu.memory_space<vmem>>, vector<18x5xf32>
    tpu.vector_store %arg28[%c0_222, %c15_223], %347 {strides = array<i32>} : memref<18x20xf32, #tpu.memory_space<vmem>>, vector<18x5xf32>,
    %c0_224 = arith.constant 0 : index
    %c0_225 = arith.constant 0 : index
    %349 = vector.load %arg28[%c0_224, %c0_225] : memref<18x20xf32, #tpu.memory_space<vmem>>, vector<18x20xf32>
    %c1_226 = arith.constant 1 : index
    %c0_227 = arith.constant 0 : index
    %c0_228 = arith.constant 0 : index
    %350 = vector.load %arg11[%c1_226, %c0_227, %c0_228] : memref<3x20x20xf32, #tpu.memory_space<vmem>>, vector<1x20x20xf32>
    %351 = vector.shape_cast %350 : vector<1x20x20xf32> to vector<20x20xf32>
    %cst_229 = arith.constant dense<0.000000e+00> : vector<18x20xf32>
    %352 = tpu.matmul %349, %351, %cst_229 {dimension_numbers = #tpu.dot_dimension_numbers<[1], [0], [0], [1], [0, 0, 1, 1], [], []>} : vector<18x20xf32>, vector<20x20xf32>, vector<18x20xf32> -> vector<18x20xf32>
    %c1_230 = arith.constant 1 : index
    %c0_231 = arith.constant 0 : index
    %c0_232 = arith.constant 0 : index
    %353 = vector.load %arg12[%c1_230, %c0_231, %c0_232] : memref<3x1x20xf32, #tpu.memory_space<vmem>>, vector<1x1x20xf32>
    %354 = vector.shape_cast %353 : vector<1x1x20xf32> to vector<1x20xf32>
    %355 = vector.broadcast %354 : vector<1x20xf32> to vector<18x20xf32>
    %356 = arith.addf %352, %355 : vector<18x20xf32>
    %357 = arith.addf %246, %356 : vector<18x20xf32>
    %c1_233 = arith.constant 1 : index
    %c0_234 = arith.constant 0 : index
    %c0_235 = arith.constant 0 : index
    %358 = vector.load %arg13[%c1_233, %c0_234, %c0_235] : memref<3x1x20xf32, #tpu.memory_space<vmem>>, vector<1x1x20xf32>
    %359 = vector.shape_cast %358 : vector<1x1x20xf32> to vector<1x20xf32>
    %c1_236 = arith.constant 1 : index
    %c0_237 = arith.constant 0 : index
    %c0_238 = arith.constant 0 : index
    %360 = vector.load %arg14[%c1_236, %c0_237, %c0_238] : memref<3x1x20xf32, #tpu.memory_space<vmem>>, vector<1x1x20xf32>
    %361 = vector.shape_cast %360 : vector<1x1x20xf32> to vector<1x20xf32>
    %cst_239 = arith.constant dense<0.000000e+00> : vector<18xf32>
    %362 = vector.multi_reduction <add>, %357, %cst_239 [1] : vector<18x20xf32> to vector<18xf32>
    %363 = vector.shape_cast %362 : vector<18xf32> to vector<18x1xf32>
    %cst_240 = arith.constant 2.000000e+01 : f32
    %364 = vector.broadcast %cst_240 : f32 to vector<18x1xf32>
    %365 = arith.divf %363, %364 : vector<18x1xf32>
    %366 = vector.broadcast %365 : vector<18x1xf32> to vector<18x20xf32>
    %367 = arith.subf %357, %366 : vector<18x20xf32>
    %368 = arith.mulf %367, %367 : vector<18x20xf32>
    %cst_241 = arith.constant dense<0.000000e+00> : vector<18xf32>
    %369 = vector.multi_reduction <add>, %368, %cst_241 [1] : vector<18x20xf32> to vector<18xf32>
    %370 = vector.shape_cast %369 : vector<18xf32> to vector<18x1xf32>
    %cst_242 = arith.constant 2.000000e+01 : f32
    %371 = vector.broadcast %cst_242 : f32 to vector<18x1xf32>
    %372 = arith.divf %370, %371 : vector<18x1xf32>
    %373 = vector.broadcast %365 : vector<18x1xf32> to vector<18x20xf32>
    %374 = arith.subf %357, %373 : vector<18x20xf32>
    %cst_243 = arith.constant 9.99999974E-6 : f32
    %375 = vector.broadcast %cst_243 : f32 to vector<18x1xf32>
    %376 = arith.addf %372, %375 : vector<18x1xf32>
    %377 = math.rsqrt %376 : vector<18x1xf32>
    %378 = vector.broadcast %377 : vector<18x1xf32> to vector<18x20xf32>
    %379 = arith.mulf %374, %378 : vector<18x20xf32>
    %380 = vector.broadcast %359 : vector<1x20xf32> to vector<18x20xf32>
    %381 = arith.mulf %379, %380 : vector<18x20xf32>
    %382 = vector.broadcast %361 : vector<1x20xf32> to vector<18x20xf32>
    %383 = arith.addf %381, %382 : vector<18x20xf32>
    %c1_244 = arith.constant 1 : index
    %c0_245 = arith.constant 0 : index
    %c0_246 = arith.constant 0 : index
    %384 = vector.load %arg15[%c1_244, %c0_245, %c0_246] : memref<3x20x64xf32, #tpu.memory_space<vmem>>, vector<1x20x64xf32>
    %385 = vector.shape_cast %384 : vector<1x20x64xf32> to vector<20x64xf32>
    %cst_247 = arith.constant dense<0.000000e+00> : vector<18x64xf32>
    %386 = tpu.matmul %383, %385, %cst_247 {dimension_numbers = #tpu.dot_dimension_numbers<[1], [0], [0], [1], [0, 0, 1, 1], [], []>} : vector<18x20xf32>, vector<20x64xf32>, vector<18x64xf32> -> vector<18x64xf32>
    %c1_248 = arith.constant 1 : index
    %c0_249 = arith.constant 0 : index
    %c0_250 = arith.constant 0 : index
    %387 = vector.load %arg16[%c1_248, %c0_249, %c0_250] : memref<3x1x64xf32, #tpu.memory_space<vmem>>, vector<1x1x64xf32>
    %388 = vector.shape_cast %387 : vector<1x1x64xf32> to vector<1x64xf32>
    %389 = vector.broadcast %388 : vector<1x64xf32> to vector<18x64xf32>
    %390 = arith.addf %386, %389 : vector<18x64xf32>
    %cst_251 = arith.constant 5.000000e-01 : f32
    %391 = vector.broadcast %cst_251 : f32 to vector<18x64xf32>
    %392 = arith.mulf %391, %390 : vector<18x64xf32>
    %cst_252 = arith.constant 0.707106769 : f32
    %393 = vector.broadcast %cst_252 : f32 to vector<18x64xf32>
    %394 = arith.mulf %390, %393 : vector<18x64xf32>
    %cst_253 = arith.constant 0.000000e+00 : f32
    %395 = vector.broadcast %cst_253 : f32 to vector<18x64xf32>
    %396 = arith.cmpf oge, %394, %395 : vector<18x64xf32>
    %cst_254 = arith.constant 1.000000e+00 : f32
    %cst_255 = arith.constant -1.000000e+00 : f32
    %397 = vector.broadcast %cst_254 : f32 to vector<18x64xf32>
    %398 = vector.broadcast %cst_255 : f32 to vector<18x64xf32>
    %399 = arith.select %396, %397, %398 : vector<18x64xi1>, vector<18x64xf32>
    %400 = math.absf %394 : vector<18x64xf32>
    %cst_256 = arith.constant 0.327591091 : f32
    %401 = vector.broadcast %cst_256 : f32 to vector<18x64xf32>
    %402 = arith.mulf %401, %400 : vector<18x64xf32>
    %cst_257 = arith.constant 1.000000e+00 : f32
    %403 = vector.broadcast %cst_257 : f32 to vector<18x64xf32>
    %404 = arith.addf %403, %402 : vector<18x64xf32>
    %cst_258 = arith.constant 1.000000e+00 : f32
    %405 = vector.broadcast %cst_258 : f32 to vector<18x64xf32>
    %406 = arith.divf %405, %404 : vector<18x64xf32>
    %cst_259 = arith.constant 1.06140542 : f32
    %407 = vector.broadcast %cst_259 : f32 to vector<18x64xf32>
    %408 = arith.mulf %407, %406 : vector<18x64xf32>
    %cst_260 = arith.constant -1.45315206 : f32
    %409 = vector.broadcast %cst_260 : f32 to vector<18x64xf32>
    %410 = arith.addf %408, %409 : vector<18x64xf32>
    %411 = arith.mulf %410, %406 : vector<18x64xf32>
    %cst_261 = arith.constant 1.42141378 : f32
    %412 = vector.broadcast %cst_261 : f32 to vector<18x64xf32>
    %413 = arith.addf %411, %412 : vector<18x64xf32>
    %414 = arith.mulf %413, %406 : vector<18x64xf32>
    %cst_262 = arith.constant -0.284496725 : f32
    %415 = vector.broadcast %cst_262 : f32 to vector<18x64xf32>
    %416 = arith.addf %414, %415 : vector<18x64xf32>
    %417 = arith.mulf %416, %406 : vector<18x64xf32>
    %cst_263 = arith.constant 0.254829586 : f32
    %418 = vector.broadcast %cst_263 : f32 to vector<18x64xf32>
    %419 = arith.addf %417, %418 : vector<18x64xf32>
    %420 = arith.mulf %419, %406 : vector<18x64xf32>
    %cst_264 = arith.constant 0.000000e+00 : f32
    %421 = vector.broadcast %cst_264 : f32 to vector<18x64xf32>
    %422 = arith.subf %421, %400 : vector<18x64xf32>
    %423 = arith.mulf %422, %400 : vector<18x64xf32>
    %424 = math.exp %423 : vector<18x64xf32>
    %425 = arith.mulf %420, %424 : vector<18x64xf32>
    %cst_265 = arith.constant 1.000000e+00 : f32
    %426 = vector.broadcast %cst_265 : f32 to vector<18x64xf32>
    %427 = arith.subf %426, %425 : vector<18x64xf32>
    %428 = arith.mulf %399, %427 : vector<18x64xf32>
    %cst_266 = arith.constant 1.000000e+00 : f32
    %429 = vector.broadcast %cst_266 : f32 to vector<18x64xf32>
    %430 = arith.addf %429, %428 : vector<18x64xf32>
    %431 = arith.mulf %392, %430 : vector<18x64xf32>
    %c1_267 = arith.constant 1 : index
    %c0_268 = arith.constant 0 : index
    %c0_269 = arith.constant 0 : index
    %432 = vector.load %arg17[%c1_267, %c0_268, %c0_269] : memref<3x64x20xf32, #tpu.memory_space<vmem>>, vector<1x64x20xf32>
    %433 = vector.shape_cast %432 : vector<1x64x20xf32> to vector<64x20xf32>
    %cst_270 = arith.constant dense<0.000000e+00> : vector<18x20xf32>
    %434 = tpu.matmul %431, %433, %cst_270 {dimension_numbers = #tpu.dot_dimension_numbers<[1], [0], [0], [1], [0, 0, 1, 1], [], []>} : vector<18x64xf32>, vector<64x20xf32>, vector<18x20xf32> -> vector<18x20xf32>
    %c1_271 = arith.constant 1 : index
    %c0_272 = arith.constant 0 : index
    %c0_273 = arith.constant 0 : index
    %435 = vector.load %arg18[%c1_271, %c0_272, %c0_273] : memref<3x1x20xf32, #tpu.memory_space<vmem>>, vector<1x1x20xf32>
    %436 = vector.shape_cast %435 : vector<1x1x20xf32> to vector<1x20xf32>
    %437 = vector.broadcast %436 : vector<1x20xf32> to vector<18x20xf32>
    %438 = arith.addf %434, %437 : vector<18x20xf32>
    %439 = arith.addf %357, %438 : vector<18x20xf32>
    %c2_274 = arith.constant 2 : index
    %c0_275 = arith.constant 0 : index
    %c0_276 = arith.constant 0 : index
    %440 = vector.load %arg7[%c2_274, %c0_275, %c0_276] : memref<3x1x20xf32, #tpu.memory_space<vmem>>, vector<1x1x20xf32>
    %441 = vector.shape_cast %440 : vector<1x1x20xf32> to vector<1x20xf32>
    %c2_277 = arith.constant 2 : index
    %c0_278 = arith.constant 0 : index
    %c0_279 = arith.constant 0 : index
    %442 = vector.load %arg8[%c2_277, %c0_278, %c0_279] : memref<3x1x20xf32, #tpu.memory_space<vmem>>, vector<1x1x20xf32>
    %443 = vector.shape_cast %442 : vector<1x1x20xf32> to vector<1x20xf32>
    %cst_280 = arith.constant dense<0.000000e+00> : vector<18xf32>
    %444 = vector.multi_reduction <add>, %439, %cst_280 [1] : vector<18x20xf32> to vector<18xf32>
    %445 = vector.shape_cast %444 : vector<18xf32> to vector<18x1xf32>
    %cst_281 = arith.constant 2.000000e+01 : f32
    %446 = vector.broadcast %cst_281 : f32 to vector<18x1xf32>
    %447 = arith.divf %445, %446 : vector<18x1xf32>
    %448 = vector.broadcast %447 : vector<18x1xf32> to vector<18x20xf32>
    %449 = arith.subf %439, %448 : vector<18x20xf32>
    %450 = arith.mulf %449, %449 : vector<18x20xf32>
    %cst_282 = arith.constant dense<0.000000e+00> : vector<18xf32>
    %451 = vector.multi_reduction <add>, %450, %cst_282 [1] : vector<18x20xf32> to vector<18xf32>
    %452 = vector.shape_cast %451 : vector<18xf32> to vector<18x1xf32>
    %cst_283 = arith.constant 2.000000e+01 : f32
    %453 = vector.broadcast %cst_283 : f32 to vector<18x1xf32>
    %454 = arith.divf %452, %453 : vector<18x1xf32>
    %455 = vector.broadcast %447 : vector<18x1xf32> to vector<18x20xf32>
    %456 = arith.subf %439, %455 : vector<18x20xf32>
    %cst_284 = arith.constant 9.99999974E-6 : f32
    %457 = vector.broadcast %cst_284 : f32 to vector<18x1xf32>
    %458 = arith.addf %454, %457 : vector<18x1xf32>
    %459 = math.rsqrt %458 : vector<18x1xf32>
    %460 = vector.broadcast %459 : vector<18x1xf32> to vector<18x20xf32>
    %461 = arith.mulf %456, %460 : vector<18x20xf32>
    %462 = vector.broadcast %441 : vector<1x20xf32> to vector<18x20xf32>
    %463 = arith.mulf %461, %462 : vector<18x20xf32>
    %464 = vector.broadcast %443 : vector<1x20xf32> to vector<18x20xf32>
    %465 = arith.addf %463, %464 : vector<18x20xf32>
    %c2_285 = arith.constant 2 : index
    %c0_286 = arith.constant 0 : index
    %c0_287 = arith.constant 0 : index
    %466 = vector.load %arg9[%c2_285, %c0_286, %c0_287] : memref<3x20x60xf32, #tpu.memory_space<vmem>>, vector<1x20x60xf32>
    %467 = vector.shape_cast %466 : vector<1x20x60xf32> to vector<20x60xf32>
    %cst_288 = arith.constant dense<0.000000e+00> : vector<18x60xf32>
    %468 = tpu.matmul %465, %467, %cst_288 {dimension_numbers = #tpu.dot_dimension_numbers<[1], [0], [0], [1], [0, 0, 1, 1], [], []>} : vector<18x20xf32>, vector<20x60xf32>, vector<18x60xf32> -> vector<18x60xf32>
    %c2_289 = arith.constant 2 : index
    %c0_290 = arith.constant 0 : index
    %c0_291 = arith.constant 0 : index
    %469 = vector.load %arg10[%c2_289, %c0_290, %c0_291] : memref<3x1x60xf32, #tpu.memory_space<vmem>>, vector<1x1x60xf32>
    %470 = vector.shape_cast %469 : vector<1x1x60xf32> to vector<1x60xf32>
    %471 = vector.broadcast %470 : vector<1x60xf32> to vector<18x60xf32>
    %472 = arith.addf %468, %471 : vector<18x60xf32>
    %c0_292 = arith.constant 0 : index
    %c0_293 = arith.constant 0 : index
    %473 = vector.load %arg27[%c0_292, %c0_293] : memref<18x60xf32, #tpu.memory_space<vmem>>, vector<18x60xf32>
    tpu.vector_store %arg27[%c0_292, %c0_293], %472 {strides = array<i32>} : memref<18x60xf32, #tpu.memory_space<vmem>>, vector<18x60xf32>,
    %c0_294 = arith.constant 0 : index
    %c0_295 = arith.constant 0 : index
    %474 = vector.load %arg27[%c0_294, %c0_295] : memref<18x60xf32, #tpu.memory_space<vmem>>, vector<18x5xf32>
    %c0_296 = arith.constant 0 : index
    %c20_297 = arith.constant 20 : index
    %475 = vector.load %arg27[%c0_296, %c20_297] : memref<18x60xf32, #tpu.memory_space<vmem>>, vector<18x5xf32>
    %c0_298 = arith.constant 0 : index
    %c40_299 = arith.constant 40 : index
    %476 = vector.load %arg27[%c0_298, %c40_299] : memref<18x60xf32, #tpu.memory_space<vmem>>, vector<18x5xf32>
    "tpu.trace_start"() <{level = 10 : i32, message = "id,jd->ij"}> : () -> ()
    %cst_300 = arith.constant dense<0.000000e+00> : vector<18x18xf32>
    %477 = tpu.matmul %474, %475, %cst_300 {dimension_numbers = #tpu.dot_dimension_numbers<[1], [1], [0], [0], [0, 0, 1, 0], [], []>} : vector<18x5xf32>, vector<18x5xf32>, vector<18x18xf32> -> vector<18x18xf32>
    "tpu.trace_stop"() : () -> ()
    %478 = arith.addf %477, %53 : vector<18x18xf32>
    %cst_301 = arith.constant dense<0xFF800000> : vector<18xf32>
    %479 = vector.multi_reduction <maximumf>, %478, %cst_301 [1] : vector<18x18xf32> to vector<18xf32>
    %480 = vector.shape_cast %479 : vector<18xf32> to vector<18x1xf32>
    %481 = vector.broadcast %480 : vector<18x1xf32> to vector<18x18xf32>
    %482 = arith.subf %478, %481 : vector<18x18xf32>
    %483 = math.exp %482 : vector<18x18xf32>
    %cst_302 = arith.constant dense<0.000000e+00> : vector<18xf32>
    %484 = vector.multi_reduction <add>, %483, %cst_302 [1] : vector<18x18xf32> to vector<18xf32>
    %485 = vector.shape_cast %484 : vector<18xf32> to vector<18x1xf32>
    %486 = tpu.reciprocal %485 {approx = true} : vector<18x1xf32> -> vector<18x1xf32>
    %487 = vector.broadcast %486 : vector<18x1xf32> to vector<18x18xf32>
    %488 = arith.mulf %483, %487 : vector<18x18xf32>
    %cst_303 = arith.constant dense<0.000000e+00> : vector<18x5xf32>
    %489 = tpu.matmul %488, %476, %cst_303 {dimension_numbers = #tpu.dot_dimension_numbers<[1], [0], [0], [1], [0, 0, 1, 1], [], []>} : vector<18x18xf32>, vector<18x5xf32>, vector<18x5xf32> -> vector<18x5xf32>
    %c0_304 = arith.constant 0 : index
    %c0_305 = arith.constant 0 : index
    %490 = vector.load %arg28[%c0_304, %c0_305] : memref<18x20xf32, #tpu.memory_space<vmem>>, vector<18x5xf32>
    tpu.vector_store %arg28[%c0_304, %c0_305], %489 {strides = array<i32>} : memref<18x20xf32, #tpu.memory_space<vmem>>, vector<18x5xf32>,
    %c0_306 = arith.constant 0 : index
    %c5_307 = arith.constant 5 : index
    %491 = vector.load %arg27[%c0_306, %c5_307] : memref<18x60xf32, #tpu.memory_space<vmem>>, vector<18x5xf32>
    %c0_308 = arith.constant 0 : index
    %c25_309 = arith.constant 25 : index
    %492 = vector.load %arg27[%c0_308, %c25_309] : memref<18x60xf32, #tpu.memory_space<vmem>>, vector<18x5xf32>
    %c0_310 = arith.constant 0 : index
    %c45_311 = arith.constant 45 : index
    %493 = vector.load %arg27[%c0_310, %c45_311] : memref<18x60xf32, #tpu.memory_space<vmem>>, vector<18x5xf32>
    "tpu.trace_start"() <{level = 10 : i32, message = "id,jd->ij"}> : () -> ()
    %cst_312 = arith.constant dense<0.000000e+00> : vector<18x18xf32>
    %494 = tpu.matmul %491, %492, %cst_312 {dimension_numbers = #tpu.dot_dimension_numbers<[1], [1], [0], [0], [0, 0, 1, 0], [], []>} : vector<18x5xf32>, vector<18x5xf32>, vector<18x18xf32> -> vector<18x18xf32>
    "tpu.trace_stop"() : () -> ()
    %495 = arith.addf %494, %53 : vector<18x18xf32>
    %cst_313 = arith.constant dense<0xFF800000> : vector<18xf32>
    %496 = vector.multi_reduction <maximumf>, %495, %cst_313 [1] : vector<18x18xf32> to vector<18xf32>
    %497 = vector.shape_cast %496 : vector<18xf32> to vector<18x1xf32>
    %498 = vector.broadcast %497 : vector<18x1xf32> to vector<18x18xf32>
    %499 = arith.subf %495, %498 : vector<18x18xf32>
    %500 = math.exp %499 : vector<18x18xf32>
    %cst_314 = arith.constant dense<0.000000e+00> : vector<18xf32>
    %501 = vector.multi_reduction <add>, %500, %cst_314 [1] : vector<18x18xf32> to vector<18xf32>
    %502 = vector.shape_cast %501 : vector<18xf32> to vector<18x1xf32>
    %503 = tpu.reciprocal %502 {approx = true} : vector<18x1xf32> -> vector<18x1xf32>
    %504 = vector.broadcast %503 : vector<18x1xf32> to vector<18x18xf32>
    %505 = arith.mulf %500, %504 : vector<18x18xf32>
    %cst_315 = arith.constant dense<0.000000e+00> : vector<18x5xf32>
    %506 = tpu.matmul %505, %493, %cst_315 {dimension_numbers = #tpu.dot_dimension_numbers<[1], [0], [0], [1], [0, 0, 1, 1], [], []>} : vector<18x18xf32>, vector<18x5xf32>, vector<18x5xf32> -> vector<18x5xf32>
    %c0_316 = arith.constant 0 : index
    %c5_317 = arith.constant 5 : index
    %507 = vector.load %arg28[%c0_316, %c5_317] : memref<18x20xf32, #tpu.memory_space<vmem>>, vector<18x5xf32>
    tpu.vector_store %arg28[%c0_316, %c5_317], %506 {strides = array<i32>} : memref<18x20xf32, #tpu.memory_space<vmem>>, vector<18x5xf32>,
    %c0_318 = arith.constant 0 : index
    %c10_319 = arith.constant 10 : index
    %508 = vector.load %arg27[%c0_318, %c10_319] : memref<18x60xf32, #tpu.memory_space<vmem>>, vector<18x5xf32>
    %c0_320 = arith.constant 0 : index
    %c30_321 = arith.constant 30 : index
    %509 = vector.load %arg27[%c0_320, %c30_321] : memref<18x60xf32, #tpu.memory_space<vmem>>, vector<18x5xf32>
    %c0_322 = arith.constant 0 : index
    %c50_323 = arith.constant 50 : index
    %510 = vector.load %arg27[%c0_322, %c50_323] : memref<18x60xf32, #tpu.memory_space<vmem>>, vector<18x5xf32>
    "tpu.trace_start"() <{level = 10 : i32, message = "id,jd->ij"}> : () -> ()
    %cst_324 = arith.constant dense<0.000000e+00> : vector<18x18xf32>
    %511 = tpu.matmul %508, %509, %cst_324 {dimension_numbers = #tpu.dot_dimension_numbers<[1], [1], [0], [0], [0, 0, 1, 0], [], []>} : vector<18x5xf32>, vector<18x5xf32>, vector<18x18xf32> -> vector<18x18xf32>
    "tpu.trace_stop"() : () -> ()
    %512 = arith.addf %511, %53 : vector<18x18xf32>
    %cst_325 = arith.constant dense<0xFF800000> : vector<18xf32>
    %513 = vector.multi_reduction <maximumf>, %512, %cst_325 [1] : vector<18x18xf32> to vector<18xf32>
    %514 = vector.shape_cast %513 : vector<18xf32> to vector<18x1xf32>
    %515 = vector.broadcast %514 : vector<18x1xf32> to vector<18x18xf32>
    %516 = arith.subf %512, %515 : vector<18x18xf32>
    %517 = math.exp %516 : vector<18x18xf32>
    %cst_326 = arith.constant dense<0.000000e+00> : vector<18xf32>
    %518 = vector.multi_reduction <add>, %517, %cst_326 [1] : vector<18x18xf32> to vector<18xf32>
    %519 = vector.shape_cast %518 : vector<18xf32> to vector<18x1xf32>
    %520 = tpu.reciprocal %519 {approx = true} : vector<18x1xf32> -> vector<18x1xf32>
    %521 = vector.broadcast %520 : vector<18x1xf32> to vector<18x18xf32>
    %522 = arith.mulf %517, %521 : vector<18x18xf32>
    %cst_327 = arith.constant dense<0.000000e+00> : vector<18x5xf32>
    %523 = tpu.matmul %522, %510, %cst_327 {dimension_numbers = #tpu.dot_dimension_numbers<[1], [0], [0], [1], [0, 0, 1, 1], [], []>} : vector<18x18xf32>, vector<18x5xf32>, vector<18x5xf32> -> vector<18x5xf32>
    %c0_328 = arith.constant 0 : index
    %c10_329 = arith.constant 10 : index
    %524 = vector.load %arg28[%c0_328, %c10_329] : memref<18x20xf32, #tpu.memory_space<vmem>>, vector<18x5xf32>
    tpu.vector_store %arg28[%c0_328, %c10_329], %523 {strides = array<i32>} : memref<18x20xf32, #tpu.memory_space<vmem>>, vector<18x5xf32>,
    %c0_330 = arith.constant 0 : index
    %c15_331 = arith.constant 15 : index
    %525 = vector.load %arg27[%c0_330, %c15_331] : memref<18x60xf32, #tpu.memory_space<vmem>>, vector<18x5xf32>
    %c0_332 = arith.constant 0 : index
    %c35_333 = arith.constant 35 : index
    %526 = vector.load %arg27[%c0_332, %c35_333] : memref<18x60xf32, #tpu.memory_space<vmem>>, vector<18x5xf32>
    %c0_334 = arith.constant 0 : index
    %c55_335 = arith.constant 55 : index
    %527 = vector.load %arg27[%c0_334, %c55_335] : memref<18x60xf32, #tpu.memory_space<vmem>>, vector<18x5xf32>
    "tpu.trace_start"() <{level = 10 : i32, message = "id,jd->ij"}> : () -> ()
    %cst_336 = arith.constant dense<0.000000e+00> : vector<18x18xf32>
    %528 = tpu.matmul %525, %526, %cst_336 {dimension_numbers = #tpu.dot_dimension_numbers<[1], [1], [0], [0], [0, 0, 1, 0], [], []>} : vector<18x5xf32>, vector<18x5xf32>, vector<18x18xf32> -> vector<18x18xf32>
    "tpu.trace_stop"() : () -> ()
    %529 = arith.addf %528, %53 : vector<18x18xf32>
    %cst_337 = arith.constant dense<0xFF800000> : vector<18xf32>
    %530 = vector.multi_reduction <maximumf>, %529, %cst_337 [1] : vector<18x18xf32> to vector<18xf32>
    %531 = vector.shape_cast %530 : vector<18xf32> to vector<18x1xf32>
    %532 = vector.broadcast %531 : vector<18x1xf32> to vector<18x18xf32>
    %533 = arith.subf %529, %532 : vector<18x18xf32>
    %534 = math.exp %533 : vector<18x18xf32>
    %cst_338 = arith.constant dense<0.000000e+00> : vector<18xf32>
    %535 = vector.multi_reduction <add>, %534, %cst_338 [1] : vector<18x18xf32> to vector<18xf32>
    %536 = vector.shape_cast %535 : vector<18xf32> to vector<18x1xf32>
    %537 = tpu.reciprocal %536 {approx = true} : vector<18x1xf32> -> vector<18x1xf32>
    %538 = vector.broadcast %537 : vector<18x1xf32> to vector<18x18xf32>
    %539 = arith.mulf %534, %538 : vector<18x18xf32>
    %cst_339 = arith.constant dense<0.000000e+00> : vector<18x5xf32>
    %540 = tpu.matmul %539, %527, %cst_339 {dimension_numbers = #tpu.dot_dimension_numbers<[1], [0], [0], [1], [0, 0, 1, 1], [], []>} : vector<18x18xf32>, vector<18x5xf32>, vector<18x5xf32> -> vector<18x5xf32>
    %c0_340 = arith.constant 0 : index
    %c15_341 = arith.constant 15 : index
    %541 = vector.load %arg28[%c0_340, %c15_341] : memref<18x20xf32, #tpu.memory_space<vmem>>, vector<18x5xf32>
    tpu.vector_store %arg28[%c0_340, %c15_341], %540 {strides = array<i32>} : memref<18x20xf32, #tpu.memory_space<vmem>>, vector<18x5xf32>,
    %c0_342 = arith.constant 0 : index
    %c0_343 = arith.constant 0 : index
    %542 = vector.load %arg28[%c0_342, %c0_343] : memref<18x20xf32, #tpu.memory_space<vmem>>, vector<18x20xf32>
    %c2_344 = arith.constant 2 : index
    %c0_345 = arith.constant 0 : index
    %c0_346 = arith.constant 0 : index
    %543 = vector.load %arg11[%c2_344, %c0_345, %c0_346] : memref<3x20x20xf32, #tpu.memory_space<vmem>>, vector<1x20x20xf32>
    %544 = vector.shape_cast %543 : vector<1x20x20xf32> to vector<20x20xf32>
    %cst_347 = arith.constant dense<0.000000e+00> : vector<18x20xf32>
    %545 = tpu.matmul %542, %544, %cst_347 {dimension_numbers = #tpu.dot_dimension_numbers<[1], [0], [0], [1], [0, 0, 1, 1], [], []>} : vector<18x20xf32>, vector<20x20xf32>, vector<18x20xf32> -> vector<18x20xf32>
    %c2_348 = arith.constant 2 : index
    %c0_349 = arith.constant 0 : index
    %c0_350 = arith.constant 0 : index
    %546 = vector.load %arg12[%c2_348, %c0_349, %c0_350] : memref<3x1x20xf32, #tpu.memory_space<vmem>>, vector<1x1x20xf32>
    %547 = vector.shape_cast %546 : vector<1x1x20xf32> to vector<1x20xf32>
    %548 = vector.broadcast %547 : vector<1x20xf32> to vector<18x20xf32>
    %549 = arith.addf %545, %548 : vector<18x20xf32>
    %550 = arith.addf %439, %549 : vector<18x20xf32>
    %c2_351 = arith.constant 2 : index
    %c0_352 = arith.constant 0 : index
    %c0_353 = arith.constant 0 : index
    %551 = vector.load %arg13[%c2_351, %c0_352, %c0_353] : memref<3x1x20xf32, #tpu.memory_space<vmem>>, vector<1x1x20xf32>
    %552 = vector.shape_cast %551 : vector<1x1x20xf32> to vector<1x20xf32>
    %c2_354 = arith.constant 2 : index
    %c0_355 = arith.constant 0 : index
    %c0_356 = arith.constant 0 : index
    %553 = vector.load %arg14[%c2_354, %c0_355, %c0_356] : memref<3x1x20xf32, #tpu.memory_space<vmem>>, vector<1x1x20xf32>
    %554 = vector.shape_cast %553 : vector<1x1x20xf32> to vector<1x20xf32>
    %cst_357 = arith.constant dense<0.000000e+00> : vector<18xf32>
    %555 = vector.multi_reduction <add>, %550, %cst_357 [1] : vector<18x20xf32> to vector<18xf32>
    %556 = vector.shape_cast %555 : vector<18xf32> to vector<18x1xf32>
    %cst_358 = arith.constant 2.000000e+01 : f32
    %557 = vector.broadcast %cst_358 : f32 to vector<18x1xf32>
    %558 = arith.divf %556, %557 : vector<18x1xf32>
    %559 = vector.broadcast %558 : vector<18x1xf32> to vector<18x20xf32>
    %560 = arith.subf %550, %559 : vector<18x20xf32>
    %561 = arith.mulf %560, %560 : vector<18x20xf32>
    %cst_359 = arith.constant dense<0.000000e+00> : vector<18xf32>
    %562 = vector.multi_reduction <add>, %561, %cst_359 [1] : vector<18x20xf32> to vector<18xf32>
    %563 = vector.shape_cast %562 : vector<18xf32> to vector<18x1xf32>
    %cst_360 = arith.constant 2.000000e+01 : f32
    %564 = vector.broadcast %cst_360 : f32 to vector<18x1xf32>
    %565 = arith.divf %563, %564 : vector<18x1xf32>
    %566 = vector.broadcast %558 : vector<18x1xf32> to vector<18x20xf32>
    %567 = arith.subf %550, %566 : vector<18x20xf32>
    %cst_361 = arith.constant 9.99999974E-6 : f32
    %568 = vector.broadcast %cst_361 : f32 to vector<18x1xf32>
    %569 = arith.addf %565, %568 : vector<18x1xf32>
    %570 = math.rsqrt %569 : vector<18x1xf32>
    %571 = vector.broadcast %570 : vector<18x1xf32> to vector<18x20xf32>
    %572 = arith.mulf %567, %571 : vector<18x20xf32>
    %573 = vector.broadcast %552 : vector<1x20xf32> to vector<18x20xf32>
    %574 = arith.mulf %572, %573 : vector<18x20xf32>
    %575 = vector.broadcast %554 : vector<1x20xf32> to vector<18x20xf32>
    %576 = arith.addf %574, %575 : vector<18x20xf32>
    %c2_362 = arith.constant 2 : index
    %c0_363 = arith.constant 0 : index
    %c0_364 = arith.constant 0 : index
    %577 = vector.load %arg15[%c2_362, %c0_363, %c0_364] : memref<3x20x64xf32, #tpu.memory_space<vmem>>, vector<1x20x64xf32>
    %578 = vector.shape_cast %577 : vector<1x20x64xf32> to vector<20x64xf32>
    %cst_365 = arith.constant dense<0.000000e+00> : vector<18x64xf32>
    %579 = tpu.matmul %576, %578, %cst_365 {dimension_numbers = #tpu.dot_dimension_numbers<[1], [0], [0], [1], [0, 0, 1, 1], [], []>} : vector<18x20xf32>, vector<20x64xf32>, vector<18x64xf32> -> vector<18x64xf32>
    %c2_366 = arith.constant 2 : index
    %c0_367 = arith.constant 0 : index
    %c0_368 = arith.constant 0 : index
    %580 = vector.load %arg16[%c2_366, %c0_367, %c0_368] : memref<3x1x64xf32, #tpu.memory_space<vmem>>, vector<1x1x64xf32>
    %581 = vector.shape_cast %580 : vector<1x1x64xf32> to vector<1x64xf32>
    %582 = vector.broadcast %581 : vector<1x64xf32> to vector<18x64xf32>
    %583 = arith.addf %579, %582 : vector<18x64xf32>
    %cst_369 = arith.constant 5.000000e-01 : f32
    %584 = vector.broadcast %cst_369 : f32 to vector<18x64xf32>
    %585 = arith.mulf %584, %583 : vector<18x64xf32>
    %cst_370 = arith.constant 0.707106769 : f32
    %586 = vector.broadcast %cst_370 : f32 to vector<18x64xf32>
    %587 = arith.mulf %583, %586 : vector<18x64xf32>
    %cst_371 = arith.constant 0.000000e+00 : f32
    %588 = vector.broadcast %cst_371 : f32 to vector<18x64xf32>
    %589 = arith.cmpf oge, %587, %588 : vector<18x64xf32>
    %cst_372 = arith.constant 1.000000e+00 : f32
    %cst_373 = arith.constant -1.000000e+00 : f32
    %590 = vector.broadcast %cst_372 : f32 to vector<18x64xf32>
    %591 = vector.broadcast %cst_373 : f32 to vector<18x64xf32>
    %592 = arith.select %589, %590, %591 : vector<18x64xi1>, vector<18x64xf32>
    %593 = math.absf %587 : vector<18x64xf32>
    %cst_374 = arith.constant 0.327591091 : f32
    %594 = vector.broadcast %cst_374 : f32 to vector<18x64xf32>
    %595 = arith.mulf %594, %593 : vector<18x64xf32>
    %cst_375 = arith.constant 1.000000e+00 : f32
    %596 = vector.broadcast %cst_375 : f32 to vector<18x64xf32>
    %597 = arith.addf %596, %595 : vector<18x64xf32>
    %cst_376 = arith.constant 1.000000e+00 : f32
    %598 = vector.broadcast %cst_376 : f32 to vector<18x64xf32>
    %599 = arith.divf %598, %597 : vector<18x64xf32>
    %cst_377 = arith.constant 1.06140542 : f32
    %600 = vector.broadcast %cst_377 : f32 to vector<18x64xf32>
    %601 = arith.mulf %600, %599 : vector<18x64xf32>
    %cst_378 = arith.constant -1.45315206 : f32
    %602 = vector.broadcast %cst_378 : f32 to vector<18x64xf32>
    %603 = arith.addf %601, %602 : vector<18x64xf32>
    %604 = arith.mulf %603, %599 : vector<18x64xf32>
    %cst_379 = arith.constant 1.42141378 : f32
    %605 = vector.broadcast %cst_379 : f32 to vector<18x64xf32>
    %606 = arith.addf %604, %605 : vector<18x64xf32>
    %607 = arith.mulf %606, %599 : vector<18x64xf32>
    %cst_380 = arith.constant -0.284496725 : f32
    %608 = vector.broadcast %cst_380 : f32 to vector<18x64xf32>
    %609 = arith.addf %607, %608 : vector<18x64xf32>
    %610 = arith.mulf %609, %599 : vector<18x64xf32>
    %cst_381 = arith.constant 0.254829586 : f32
    %611 = vector.broadcast %cst_381 : f32 to vector<18x64xf32>
    %612 = arith.addf %610, %611 : vector<18x64xf32>
    %613 = arith.mulf %612, %599 : vector<18x64xf32>
    %cst_382 = arith.constant 0.000000e+00 : f32
    %614 = vector.broadcast %cst_382 : f32 to vector<18x64xf32>
    %615 = arith.subf %614, %593 : vector<18x64xf32>
    %616 = arith.mulf %615, %593 : vector<18x64xf32>
    %617 = math.exp %616 : vector<18x64xf32>
    %618 = arith.mulf %613, %617 : vector<18x64xf32>
    %cst_383 = arith.constant 1.000000e+00 : f32
    %619 = vector.broadcast %cst_383 : f32 to vector<18x64xf32>
    %620 = arith.subf %619, %618 : vector<18x64xf32>
    %621 = arith.mulf %592, %620 : vector<18x64xf32>
    %cst_384 = arith.constant 1.000000e+00 : f32
    %622 = vector.broadcast %cst_384 : f32 to vector<18x64xf32>
    %623 = arith.addf %622, %621 : vector<18x64xf32>
    %624 = arith.mulf %585, %623 : vector<18x64xf32>
    %c2_385 = arith.constant 2 : index
    %c0_386 = arith.constant 0 : index
    %c0_387 = arith.constant 0 : index
    %625 = vector.load %arg17[%c2_385, %c0_386, %c0_387] : memref<3x64x20xf32, #tpu.memory_space<vmem>>, vector<1x64x20xf32>
    %626 = vector.shape_cast %625 : vector<1x64x20xf32> to vector<64x20xf32>
    %cst_388 = arith.constant dense<0.000000e+00> : vector<18x20xf32>
    %627 = tpu.matmul %624, %626, %cst_388 {dimension_numbers = #tpu.dot_dimension_numbers<[1], [0], [0], [1], [0, 0, 1, 1], [], []>} : vector<18x64xf32>, vector<64x20xf32>, vector<18x20xf32> -> vector<18x20xf32>
    %c2_389 = arith.constant 2 : index
    %c0_390 = arith.constant 0 : index
    %c0_391 = arith.constant 0 : index
    %628 = vector.load %arg18[%c2_389, %c0_390, %c0_391] : memref<3x1x20xf32, #tpu.memory_space<vmem>>, vector<1x1x20xf32>
    %629 = vector.shape_cast %628 : vector<1x1x20xf32> to vector<1x20xf32>
    %630 = vector.broadcast %629 : vector<1x20xf32> to vector<18x20xf32>
    %631 = arith.addf %627, %630 : vector<18x20xf32>
    %632 = arith.addf %550, %631 : vector<18x20xf32>
    %633 = vector.extract_strided_slice %632 {offsets = [0, 0], sizes = [2, 20], strides = [1, 1]} : vector<18x20xf32> to vector<2x20xf32>
    %c0_392 = arith.constant 0 : index
    %c0_393 = arith.constant 0 : index
    %634 = vector.load %arg19[%c0_392, %c0_393] : memref<1x20xf32, #tpu.memory_space<vmem>>, vector<1x20xf32>
    %c0_394 = arith.constant 0 : index
    %c0_395 = arith.constant 0 : index
    %635 = vector.load %arg20[%c0_394, %c0_395] : memref<1x20xf32, #tpu.memory_space<vmem>>, vector<1x20xf32>
    %cst_396 = arith.constant dense<0.000000e+00> : vector<2xf32>
    %636 = vector.multi_reduction <add>, %633, %cst_396 [1] : vector<2x20xf32> to vector<2xf32>
    %637 = vector.shape_cast %636 : vector<2xf32> to vector<2x1xf32>
    %cst_397 = arith.constant 2.000000e+01 : f32
    %638 = vector.broadcast %cst_397 : f32 to vector<2x1xf32>
    %639 = arith.divf %637, %638 : vector<2x1xf32>
    %640 = vector.broadcast %639 : vector<2x1xf32> to vector<2x20xf32>
    %641 = arith.subf %633, %640 : vector<2x20xf32>
    %642 = arith.mulf %641, %641 : vector<2x20xf32>
    %cst_398 = arith.constant dense<0.000000e+00> : vector<2xf32>
    %643 = vector.multi_reduction <add>, %642, %cst_398 [1] : vector<2x20xf32> to vector<2xf32>
    %644 = vector.shape_cast %643 : vector<2xf32> to vector<2x1xf32>
    %cst_399 = arith.constant 2.000000e+01 : f32
    %645 = vector.broadcast %cst_399 : f32 to vector<2x1xf32>
    %646 = arith.divf %644, %645 : vector<2x1xf32>
    %647 = vector.broadcast %639 : vector<2x1xf32> to vector<2x20xf32>
    %648 = arith.subf %633, %647 : vector<2x20xf32>
    %cst_400 = arith.constant 9.99999974E-6 : f32
    %649 = vector.broadcast %cst_400 : f32 to vector<2x1xf32>
    %650 = arith.addf %646, %649 : vector<2x1xf32>
    %651 = math.rsqrt %650 : vector<2x1xf32>
    %652 = vector.broadcast %651 : vector<2x1xf32> to vector<2x20xf32>
    %653 = arith.mulf %648, %652 : vector<2x20xf32>
    %654 = vector.broadcast %634 : vector<1x20xf32> to vector<2x20xf32>
    %655 = arith.mulf %653, %654 : vector<2x20xf32>
    %656 = vector.broadcast %635 : vector<1x20xf32> to vector<2x20xf32>
    %657 = arith.addf %655, %656 : vector<2x20xf32>
    %c0_401 = arith.constant 0 : index
    %c0_402 = arith.constant 0 : index
    %658 = vector.load %arg21[%c0_401, %c0_402] : memref<20x2xf32, #tpu.memory_space<vmem>>, vector<20x2xf32>
    %cst_403 = arith.constant dense<0.000000e+00> : vector<2x2xf32>
    %659 = tpu.matmul %657, %658, %cst_403 {dimension_numbers = #tpu.dot_dimension_numbers<[1], [0], [0], [1], [0, 0, 1, 1], [], []>} : vector<2x20xf32>, vector<20x2xf32>, vector<2x2xf32> -> vector<2x2xf32>
    %c0_404 = arith.constant 0 : index
    %c0_405 = arith.constant 0 : index
    %660 = vector.load %arg22[%c0_404, %c0_405] : memref<1x2xf32, #tpu.memory_space<vmem>>, vector<1x2xf32>
    %661 = vector.broadcast %660 : vector<1x2xf32> to vector<2x2xf32>
    %662 = arith.addf %659, %661 : vector<2x2xf32>
    %c0_406 = arith.constant 0 : index
    %c0_407 = arith.constant 0 : index
    %663 = vector.load %arg23[%c0_406, %c0_407] : memref<2x2xf32, #tpu.memory_space<vmem>>, vector<2x2xf32>
    tpu.vector_store %arg23[%c0_406, %c0_407], %662 {strides = array<i32>} : memref<2x2xf32, #tpu.memory_space<vmem>>, vector<2x2xf32>,
    return
  }
}

</mosaic_0001>

<llo_original>
// kernel: tpu_custom_call.1
$region0: #{tpu_custom_call.1}
  #allocation0 [shape = 'u32[]', space=smem, size = 0x4, offset = 0x4, fixed_abs, tag = 'smem constant byte address 0x4 - core index']
  #allocation1 [shape = 'u32[144,128]{1,0:T(1,128)}', space=vmem, size = 0x12000, scoped, tag = 'internal scratch']
  #allocation2 [shape = 'f32[2,160]{1,0:T(2,128)}', space=vmem, size = 0x800, scoped, tag = 'scratch operand']
  #allocation3 [shape = 'f32[2,160]{1,0:T(2,128)}', space=vmem, size = 0x800, scoped, tag = 'scratch operand']
  #allocation4 [shape = 'f32[18,20]{1,0:T(8,128)}', space=vmem, size = 0x3000, scoped, tag = 'scratch operand']
  #allocation5 [shape = 'f32[18,60]{1,0:T(8,128)}', space=vmem, size = 0x3000, scoped, tag = 'scratch operand']
  #allocation6 [shape = 'f32[18,20]{1,0:T(8,128)}', space=vmem, size = 0x3000, scoped, tag = 'scratch operand']
  %s0 = inlined_call_operand.vmem [shape: f32[2,160], index: 0, kind: input, shape index: {}]
  %s1 = inlined_call_operand.hbm [shape: f32[160,160], index: 1, kind: input, shape index: {}]
  %s2 = inlined_call_operand.hbm [shape: f32[1,160], index: 2, kind: input, shape index: {}]
  %s3 = inlined_call_operand.hbm [shape: f32[1,160], index: 3, kind: input, shape index: {}]
  %s4 = inlined_call_operand.hbm [shape: f32[160,160], index: 4, kind: input, shape index: {}]
  %s5 = inlined_call_operand.vmem [shape: f32[18,20], index: 5, kind: input, shape index: {}]
  %s6 = inlined_call_operand.vmem [shape: f32[18,18], index: 6, kind: input, shape index: {}]
  %s7 = inlined_call_operand.vmem [shape: f32[3,1,20], index: 7, kind: input, shape index: {}]
  %s8 = inlined_call_operand.vmem [shape: f32[3,1,20], index: 8, kind: input, shape index: {}]
  %s9 = inlined_call_operand.vmem [shape: f32[3,20,60], index: 9, kind: input, shape index: {}]
  %s10 = inlined_call_operand.vmem [shape: f32[3,1,60], index: 10, kind: input, shape index: {}]
  %s11 = inlined_call_operand.vmem [shape: f32[3,20,20], index: 11, kind: input, shape index: {}]
  %s12 = inlined_call_operand.vmem [shape: f32[3,1,20], index: 12, kind: input, shape index: {}]
  %s13 = inlined_call_operand.vmem [shape: f32[3,1,20], index: 13, kind: input, shape index: {}]
  %s14 = inlined_call_operand.vmem [shape: f32[3,1,20], index: 14, kind: input, shape index: {}]
  %s15 = inlined_call_operand.vmem [shape: f32[3,20,64], index: 15, kind: input, shape index: {}]
  %s16 = inlined_call_operand.vmem [shape: f32[3,1,64], index: 16, kind: input, shape index: {}]
  %s17 = inlined_call_operand.vmem [shape: f32[3,64,20], index: 17, kind: input, shape index: {}]
  %s18 = inlined_call_operand.vmem [shape: f32[3,1,20], index: 18, kind: input, shape index: {}]
  %s19 = inlined_call_operand.vmem [shape: f32[1,20], index: 19, kind: input, shape index: {}]
  %s20 = inlined_call_operand.vmem [shape: f32[1,20], index: 20, kind: input, shape index: {}]
  %s21 = inlined_call_operand.vmem [shape: f32[20,2], index: 21, kind: input, shape index: {}]
  %s22 = inlined_call_operand.vmem [shape: f32[1,2], index: 22, kind: input, shape index: {}]
  %s23 = inlined_call_operand.hbm [shape: f32[2,2], index: 23, kind: output, shape index: {}]
  %s24 = sld [smem:[#allocation0]]
  $region118: #{tpu_custom_call.1} parent=0
    _
  %s26 = ssub.s32 1, %s24
  %s27 = scalar_select 0, %s26, %s24
  $region1: #{tpu_custom_call.1} parent=0
    #allocation7 [shape = 'u8[163840]{0}', space=vmem, size = 0x28000, scoped, tag = 'input window, operand 1, single buffered']
    #allocation8 [shape = 's32[1]{0}', space=sflag, size = 0x4, scoped, tag = 'scoped memory for tpu_custom_call.1']
    #allocation9 [shape = 's32[1]{0}', space=sflag, size = 0x4, scoped, tag = 'scoped memory for tpu_custom_call.1']
    #allocation10 [shape = 'u8[1024]{0}', space=vmem, size = 0x400, scoped, tag = 'input window, operand 2, single buffered']
    #allocation11 [shape = 's32[1]{0}', space=sflag, size = 0x4, scoped, tag = 'scoped memory for tpu_custom_call.1']
    #allocation12 [shape = 'u8[1024]{0}', space=vmem, size = 0x400, scoped, tag = 'input window, operand 3, single buffered']
    #allocation13 [shape = 'u8[163840]{0}', space=vmem, size = 0x28000, scoped, tag = 'input window, operand 4, single buffered']
    #allocation14 [shape = 's32[1]{0}', space=sflag, size = 0x4, scoped, tag = 'scoped memory for tpu_custom_call.1']
    #allocation15 [shape = 'u8[1024]{0}', space=vmem, size = 0x400, scoped, tag = 'output window, operand 0, single buffered']
    %28 = vsyncpa [#allocation8], 0
    %29 = vsyncpa [#allocation11], 0
    %30 = vsyncpa [#allocation14], 0
    %31 = vsyncpa [#allocation9], 0
    // Predicated region
    $region2: #{tpu_custom_call.1} parent=1 // pred_check
      _
    $region3: #{tpu_custom_call.1} parent=1 // pred_check_branch
      %33 = sbr.rel (0) target = $region5
    $region4: #{tpu_custom_call.1} parent=1 // pred_region
      _
    $region5: #{tpu_custom_call.1} parent=1 // pred_fallthru
      _
    // Predicated region
    $region6: #{tpu_custom_call.1} parent=1 // pred_check
      _
    $region7: #{tpu_custom_call.1} parent=1 // pred_check_branch
      %35 = sbr.rel (0) target = $region9
    $region8: #{tpu_custom_call.1} parent=1 // pred_region
      %s37 = ssub.s32 5120, 5120
      %38 = vsyncadd [#allocation8], %s37
      %s39 = sshll.u32 [#allocation7], 4
      %s40 = int_to_ptr.vmem [resolvable:$true] %s39
      %45 = dma.hbm_to_vmem [thread:$0]  %s1, 5120, %s40, [#allocation8], 256, 256, 16
    $region9: #{tpu_custom_call.1} parent=1 // pred_fallthru
      _
    // Predicated region
    $region10: #{tpu_custom_call.1} parent=1 // pred_check
      _
    $region11: #{tpu_custom_call.1} parent=1 // pred_check_branch
      %47 = sbr.rel (0) target = $region13
    $region12: #{tpu_custom_call.1} parent=1 // pred_region
      %s49 = ssub.s32 32, 32
      %50 = vsyncadd [#allocation11], %s49
      %s52 = sshll.u32 [#allocation10], 4
      %s53 = int_to_ptr.vmem [resolvable:$true] %s52
      %55 = dma.hbm_to_vmem [thread:$0]  %s2, 32, %s53, [#allocation11]
    $region13: #{tpu_custom_call.1} parent=1 // pred_fallthru
      _
    // Predicated region
    $region14: #{tpu_custom_call.1} parent=1 // pred_check
      _
    $region15: #{tpu_custom_call.1} parent=1 // pred_check_branch
      %57 = sbr.rel (0) target = $region17
    $region16: #{tpu_custom_call.1} parent=1 // pred_region
      %s59 = ssub.s32 32, 32
      %60 = vsyncadd [#allocation11], %s59
      %s62 = sshll.u32 [#allocation12], 4
      %s63 = int_to_ptr.vmem [resolvable:$true] %s62
      %65 = dma.hbm_to_vmem [thread:$0]  %s3, 32, %s63, [#allocation11]
    $region17: #{tpu_custom_call.1} parent=1 // pred_fallthru
      _
    // Predicated region
    $region18: #{tpu_custom_call.1} parent=1 // pred_check
      _
    $region19: #{tpu_custom_call.1} parent=1 // pred_check_branch
      %67 = sbr.rel (0) target = $region21
    $region20: #{tpu_custom_call.1} parent=1 // pred_region
      %s69 = ssub.s32 5120, 5120
      %70 = vsyncadd [#allocation14], %s69
      %s71 = sshll.u32 [#allocation13], 4
      %s72 = int_to_ptr.vmem [resolvable:$true] %s71
      %77 = dma.hbm_to_vmem [thread:$0]  %s4, 5120, %s72, [#allocation14], 256, 256, 16
    $region21: #{tpu_custom_call.1} parent=1 // pred_fallthru
      _
    // Predicated region
    $region22: #{tpu_custom_call.1} parent=1 // pred_check
      _
    $region23: #{tpu_custom_call.1} parent=1 // pred_check_branch
      %79 = sbr.rel (0) target = $region25
    $region24: #{tpu_custom_call.1} parent=1 // pred_region
      _
    $region25: #{tpu_custom_call.1} parent=1 // pred_fallthru
      _
    // Predicated region
    $region26: #{tpu_custom_call.1} parent=1 // pred_check
      _
    $region27: #{tpu_custom_call.1} parent=1 // pred_check_branch
      %81 = sbr.rel (0) target = $region29
    $region28: #{tpu_custom_call.1} parent=1 // pred_region
      _
    $region29: #{tpu_custom_call.1} parent=1 // pred_fallthru
      _
    // Predicated region
    $region30: #{tpu_custom_call.1} parent=1 // pred_check
      _
    $region31: #{tpu_custom_call.1} parent=1 // pred_check_branch
      %83 = sbr.rel (0) target = $region33
    $region32: #{tpu_custom_call.1} parent=1 // pred_region
      _
    $region33: #{tpu_custom_call.1} parent=1 // pred_fallthru
      _
    // Predicated region
    $region34: #{tpu_custom_call.1} parent=1 // pred_check
      _
    $region35: #{tpu_custom_call.1} parent=1 // pred_check_branch
      %85 = sbr.rel (0) target = $region37
    $region36: #{tpu_custom_call.1} parent=1 // pred_region
      _
    $region37: #{tpu_custom_call.1} parent=1 // pred_fallthru
      _
    // Predicated region
    $region38: #{tpu_custom_call.1} parent=1 // pred_check
      _
    $region39: #{tpu_custom_call.1} parent=1 // pred_check_branch
      %87 = sbr.rel (0) target = $region41
    $region40: #{tpu_custom_call.1} parent=1 // pred_region
      _
    $region41: #{tpu_custom_call.1} parent=1 // pred_fallthru
      _
    // Predicated region
    $region42: #{tpu_custom_call.1} parent=1 // pred_check
      _
    $region43: #{tpu_custom_call.1} parent=1 // pred_check_branch
      %89 = sbr.rel (0) target = $region45
    $region44: #{tpu_custom_call.1} parent=1 // pred_region
      _
    $region45: #{tpu_custom_call.1} parent=1 // pred_fallthru
      _
    // Predicated region
    $region46: #{tpu_custom_call.1} parent=1 // pred_check
      _
    $region47: #{tpu_custom_call.1} parent=1 // pred_check_branch
      %91 = sbr.rel (0) target = $region49
    $region48: #{tpu_custom_call.1} parent=1 // pred_region
      _
    $region49: #{tpu_custom_call.1} parent=1 // pred_fallthru
      _
    // Predicated region
    $region50: #{tpu_custom_call.1} parent=1 // pred_check
      _
    $region51: #{tpu_custom_call.1} parent=1 // pred_check_branch
      %93 = sbr.rel (0) target = $region53
    $region52: #{tpu_custom_call.1} parent=1 // pred_region
      _
    $region53: #{tpu_custom_call.1} parent=1 // pred_fallthru
      _
    // Predicated region
    $region54: #{tpu_custom_call.1} parent=1 // pred_check
      _
    $region55: #{tpu_custom_call.1} parent=1 // pred_check_branch
      %95 = sbr.rel (0) target = $region57
    $region56: #{tpu_custom_call.1} parent=1 // pred_region
      _
    $region57: #{tpu_custom_call.1} parent=1 // pred_fallthru
      _
    // Predicated region
    $region58: #{tpu_custom_call.1} parent=1 // pred_check
      _
    $region59: #{tpu_custom_call.1} parent=1 // pred_check_branch
      %97 = sbr.rel (0) target = $region61
    $region60: #{tpu_custom_call.1} parent=1 // pred_region
      _
    $region61: #{tpu_custom_call.1} parent=1 // pred_fallthru
      _
    // Predicated region
    $region62: #{tpu_custom_call.1} parent=1 // pred_check
      _
    $region63: #{tpu_custom_call.1} parent=1 // pred_check_branch
      %99 = sbr.rel (0) target = $region65
    $region64: #{tpu_custom_call.1} parent=1 // pred_region
      _
    $region65: #{tpu_custom_call.1} parent=1 // pred_fallthru
      _
    // Predicated region
    $region66: #{tpu_custom_call.1} parent=1 // pred_check
      _
    $region67: #{tpu_custom_call.1} parent=1 // pred_check_branch
      %101 = sbr.rel (0) target = $region69
    $region68: #{tpu_custom_call.1} parent=1 // pred_region
      _
    $region69: #{tpu_custom_call.1} parent=1 // pred_fallthru
      _
    // Predicated region
    $region70: #{tpu_custom_call.1} parent=1 // pred_check
      _
    $region71: #{tpu_custom_call.1} parent=1 // pred_check_branch
      %103 = sbr.rel (0) target = $region73
    $region72: #{tpu_custom_call.1} parent=1 // pred_region
      _
    $region73: #{tpu_custom_call.1} parent=1 // pred_fallthru
      _
    // Predicated region
    $region74: #{tpu_custom_call.1} parent=1 // pred_check
      _
    $region75: #{tpu_custom_call.1} parent=1 // pred_check_branch
      %105 = sbr.rel (0) target = $region77
    $region76: #{tpu_custom_call.1} parent=1 // pred_region
      _
    $region77: #{tpu_custom_call.1} parent=1 // pred_fallthru
      _
    // Predicated region
    $region78: #{tpu_custom_call.1} parent=1 // pred_check
      _
    $region79: #{tpu_custom_call.1} parent=1 // pred_check_branch
      %107 = sbr.rel (0) target = $region81
    $region80: #{tpu_custom_call.1} parent=1 // pred_region
      _
    $region81: #{tpu_custom_call.1} parent=1 // pred_fallthru
      _
    // Predicated region
    $region82: #{tpu_custom_call.1} parent=1 // pred_check
      _
    $region83: #{tpu_custom_call.1} parent=1 // pred_check_branch
      %109 = sbr.rel (0) target = $region85
    $region84: #{tpu_custom_call.1} parent=1 // pred_region
      _
    $region85: #{tpu_custom_call.1} parent=1 // pred_fallthru
      _
    // Predicated region
    $region86: #{tpu_custom_call.1} parent=1 // pred_check
      _
    $region87: #{tpu_custom_call.1} parent=1 // pred_check_branch
      %111 = sbr.rel (0) target = $region89
    $region88: #{tpu_custom_call.1} parent=1 // pred_region
      _
    $region89: #{tpu_custom_call.1} parent=1 // pred_fallthru
      _
    // Predicated region
    $region90: #{tpu_custom_call.1} parent=1 // pred_check
      _
    $region91: #{tpu_custom_call.1} parent=1 // pred_check_branch
      %113 = sbr.rel (0) target = $region93
    $region92: #{tpu_custom_call.1} parent=1 // pred_region
      _
    $region93: #{tpu_custom_call.1} parent=1 // pred_fallthru
      _
    // Predicated region
    $region94: #{tpu_custom_call.1} parent=1 // pred_check
      _
    $region95: #{tpu_custom_call.1} parent=1 // pred_check_branch
      %115 = sbr.rel (0) target = $region97
    $region96: #{tpu_custom_call.1} parent=1 // pred_region
      %116 = dma.done [#allocation8], 5120
    $region97: #{tpu_custom_call.1} parent=1 // pred_fallthru
      _
    // Predicated region
    $region98: #{tpu_custom_call.1} parent=1 // pred_check
      _
    $region99: #{tpu_custom_call.1} parent=1 // pred_check_branch
      %118 = sbr.rel (0) target = $region101
    $region100: #{tpu_custom_call.1} parent=1 // pred_region
      %119 = dma.done [#allocation11], 32
    $region101: #{tpu_custom_call.1} parent=1 // pred_fallthru
      _
    // Predicated region
    $region102: #{tpu_custom_call.1} parent=1 // pred_check
      _
    $region103: #{tpu_custom_call.1} parent=1 // pred_check_branch
      %121 = sbr.rel (0) target = $region105
    $region104: #{tpu_custom_call.1} parent=1 // pred_region
      %122 = dma.done [#allocation11], 32
    $region105: #{tpu_custom_call.1} parent=1 // pred_fallthru
      _
    // Predicated region
    $region106: #{tpu_custom_call.1} parent=1 // pred_check
      _
    $region107: #{tpu_custom_call.1} parent=1 // pred_check_branch
      %124 = sbr.rel (0) target = $region109
    $region108: #{tpu_custom_call.1} parent=1 // pred_region
      %125 = dma.done [#allocation14], 5120
    $region109: #{tpu_custom_call.1} parent=1 // pred_fallthru
      _
    %v126 = vld [vmem:[%s0] sm:$0xf]
    %v127 = vld [vmem:[#allocation7] sm:$0xff]
    %v128 = vld [vmem:[#allocation7 + $0x8] sm:$0xff]
    %v129 = vld [vmem:[#allocation7 + $0x10] sm:$0xff]
    %v130 = vld [vmem:[#allocation7 + $0x18] sm:$0xff]
    %v131 = vld [vmem:[#allocation7 + $0x20] sm:$0xff]
    %v132 = vld [vmem:[#allocation7 + $0x28] sm:$0xff]
    %v133 = vld [vmem:[#allocation7 + $0x30] sm:$0xff]
    %v134 = vld [vmem:[#allocation7 + $0x38] sm:$0xff]
    %v135 = vld [vmem:[#allocation7 + $0x40] sm:$0xff]
    %v136 = vld [vmem:[#allocation7 + $0x48] sm:$0xff]
    %v137 = vld [vmem:[#allocation7 + $0x50] sm:$0xff]
    %v138 = vld [vmem:[#allocation7 + $0x58] sm:$0xff]
    %v139 = vld [vmem:[#allocation7 + $0x60] sm:$0xff]
    %v140 = vld [vmem:[#allocation7 + $0x68] sm:$0xff]
    %v141 = vld [vmem:[#allocation7 + $0x70] sm:$0xff]
    %v142 = vld [vmem:[#allocation7 + $0x78] sm:$0xff]
    %v143 = vld [vmem:[#allocation7 + $0x80] sm:$0xff]
    %v144 = vld [vmem:[#allocation7 + $0x88] sm:$0xff]
    %v145 = vld [vmem:[#allocation7 + $0x90] sm:$0xff]
    %v146 = vld [vmem:[#allocation7 + $0x98] sm:$0xff]
    %v147 = vld [vmem:[#allocation7 + $0xa0] sm:$0xff]
    %v148 = vld [vmem:[#allocation7 + $0xa8] sm:$0xff]
    %v149 = vld [vmem:[#allocation7 + $0xb0] sm:$0xff]
    %v150 = vld [vmem:[#allocation7 + $0xb8] sm:$0xff]
    %v151 = vld [vmem:[#allocation7 + $0xc0] sm:$0xff]
    %v152 = vld [vmem:[#allocation7 + $0xc8] sm:$0xff]
    %v153 = vld [vmem:[#allocation7 + $0xd0] sm:$0xff]
    %v154 = vld [vmem:[#allocation7 + $0xd8] sm:$0xff]
    %v155 = vld [vmem:[#allocation7 + $0xe0] sm:$0xff]
    %v156 = vld [vmem:[#allocation7 + $0xe8] sm:$0xff]
    %v157 = vld [vmem:[#allocation7 + $0xf0] sm:$0xff]
    %v158 = vld [vmem:[#allocation7 + $0xf8] sm:$0xff]
    %v159 = vld [vmem:[#allocation7 + $0x100] sm:$0xff]
    %v160 = vld [vmem:[#allocation7 + $0x108] sm:$0xff]
    %v161 = vld [vmem:[#allocation7 + $0x110] sm:$0xff]
    %v162 = vld [vmem:[#allocation7 + $0x118] sm:$0xff]
    %v163 = vld [vmem:[#allocation7 + $0x120] sm:$0xff]
    %v164 = vld [vmem:[#allocation7 + $0x128] sm:$0xff]
    %v165 = vld [vmem:[#allocation7 + $0x130] sm:$0xff]
    %v166 = vld [vmem:[#allocation7 + $0x138] sm:$0xff]
    %v169 = vunpack.c.l.s4 1983009808
    %v170 = vunpack.c.0.s8 %v169
    %v171 = vlaneseq
    %v172 = vshrl.u32 %v171, 7
    %v173 = vsub.s32 %v170, %v172
    %v174 = vrot.slane %v126, %v173
    %v175 = vcombine.high %v174, %v174
    %vm177 = vcmask 261120
    %v178 = vsel %vm177, %v175, 0
    %180 = vmatprep.subr.mxu0 %v158
    %181 = vmatpush1.msra.mxu0 %v157
    %182 = vmatprep.subr.mxu0 %v156
    %183 = vmatpush1.msra.mxu0 %v155
    %184 = vmatprep.subr.mxu0 %v154
    %185 = vmatpush1.msra.mxu0 %v153
    %186 = vmatprep.subr.mxu0 %v152
    %187 = vmatpush1.msra.mxu0 %v151
    %188 = vmatprep.subr.mxu0 %v150
    %189 = vmatpush1.msra.mxu0 %v149
    %190 = vmatprep.subr.mxu0 %v148
    %191 = vmatpush1.msra.mxu0 %v147
    %192 = vmatprep.subr.mxu0 %v146
    %193 = vmatpush1.msra.mxu0 %v145
    %194 = vmatprep.subr.mxu0 %v144
    %195 = vmatpush1.msra.mxu0 %v143
    %196 = vmatprep.subr.mxu0 %v142
    %197 = vmatpush1.msra.mxu0 %v141
    %198 = vmatprep.subr.mxu0 %v140
    %199 = vmatpush1.msra.mxu0 %v139
    %200 = vmatprep.subr.mxu0 %v138
    %201 = vmatpush1.msra.mxu0 %v137
    %202 = vmatprep.subr.mxu0 %v136
    %203 = vmatpush1.msra.mxu0 %v135
    %204 = vmatprep.subr.mxu0 %v134
    %205 = vmatpush1.msra.mxu0 %v133
    %206 = vmatprep.subr.mxu0 %v132
    %207 = vmatpush1.msra.mxu0 %v131
    %208 = vmatprep.subr.mxu0 %v130
    %209 = vmatpush1.msra.mxu0 %v129
    %210 = vmatprep.subr.mxu0 %v128
    %211 = vmatpush1.msra.mxu0 %v127
    %212 = vmatprep.subr.mxu0 0.0
    %213 = vmatpush2.msra.mxu0 0.0
    %214 = vmatprep.subr.mxu0 0.0
    %215 = vmatpush2.msra.mxu0 0.0
    %216 = vmatprep.subr.mxu0 0.0
    %217 = vmatpush2.msra.mxu0 0.0
    %218 = vmatprep.subr.mxu0 0.0
    %219 = vmatpush2.msra.mxu0 0.0
    %220 = vmatprep.subr.mxu0 0.0
    %221 = vmatpush2.msra.mxu0 0.0
    %222 = vmatprep.subr.mxu0 0.0
    %223 = vmatpush2.msra.mxu0 0.0
    %224 = vmatprep.subr.mxu0 0.0
    %225 = vmatpush2.msra.mxu0 0.0
    %226 = vmatprep.subr.mxu0 0.0
    %227 = vmatpush2.msra.mxu0 0.0
    %228 = vmatprep.subr.mxu0 0.0
    %229 = vmatpush2.msra.mxu0 0.0
    %230 = vmatprep.subr.mxu0 0.0
    %231 = vmatpush2.msra.mxu0 0.0
    %232 = vmatprep.subr.mxu0 0.0
    %233 = vmatpush2.msra.mxu0 0.0
    %234 = vmatprep.subr.mxu0 0.0
    %235 = vmatpush2.msra.mxu0 0.0
    %236 = vmatprep.subr.mxu0 %v166
    %237 = vmatpush2.msra.mxu0 %v165
    %238 = vmatprep.subr.mxu0 %v164
    %239 = vmatpush2.msra.mxu0 %v163
    %240 = vmatprep.subr.mxu0 %v162
    %241 = vmatpush2.msra.mxu0 %v161
    %242 = vmatprep.subr.mxu0 %v160
    %243 = vmatpush2.msra.mxu0 %v159
    %244 = vmatprep.mubr.f32.mxu0 %v178
    %245 = vmatmul.mubr.f32.gmra.mxu0 %v174
    %v246 = vpop.f32.mrf.mxu0
    %v247 = vadd.f32 0.0, %v246
    %v248 = vpop.f32.mrf.mxu0
    %v249 = vadd.f32 0.0, %v248
    %250 = vdwg.mxu0
    %v251 = vld [vmem:[#allocation10] sm:$0x3]
    %v252 = vld [vmem:[#allocation12] sm:$0x3]
    %vm253 = vcmask 1041408
    %v254 = vsel %vm253, %v247, 0.0
    %vm255 = vcmask 254976
    %v256 = vsel %vm255, %v249, 0.0
    %v257 = vadd.f32 %v254, %v256
    %258 = vadd.xlane.f32.xlu0 %v257
    %v259 = vpop.xlane.xlu0 %258
    %v260 = vrcp.pop 160.0
    %v261 = vmul.f32 %v259, %v260
    %v262 = vsub.f32 %v247, %v261
    %v263 = vsub.f32 %v249, %v261
    %v264 = vmul.f32 %v262, %v262
    %v265 = vmul.f32 %v263, %v263
    %v266 = vsel %vm253, %v264, 0.0
    %v267 = vsel %vm255, %v265, 0.0
    %v268 = vadd.f32 %v266, %v267
    %269 = vadd.xlane.f32.xlu0 %v268
    %v270 = vpop.xlane.xlu0 %269
    %v271 = vmul.f32 %v270, %v260
    %v272 = vadd.f32 %v271, 1e-05
    %v273 = vrsqrt.pop %v272
    %v274 = vmul.f32 %v262, %v273
    %v275 = vmul.f32 %v263, %v273
    %v277 = vlaneseq
    %v278 = vshrl.u32 %v277, 7
    %v279 = vsub.s32 0, %v278
    %v280 = vrot.slane %v251, %v279
    %v281 = vlaneseq
    %v282 = vshrl.u32 %v281, 7
    %v283 = vsub.s32 1, %v282
    %v284 = vrot.slane %v251, %v283
    %v287 = vmul.f32 %v274, %v280
    %v288 = vmul.f32 %v275, %v284
    %v290 = vlaneseq
    %v291 = vshrl.u32 %v290, 7
    %v292 = vsub.s32 0, %v291
    %v293 = vrot.slane %v252, %v292
    %v294 = vlaneseq
    %v295 = vshrl.u32 %v294, 7
    %v296 = vsub.s32 1, %v295
    %v297 = vrot.slane %v252, %v296
    %v300 = vadd.f32 %v287, %v293
    %v301 = vadd.f32 %v288, %v297
    %v304 = vcombine.low %v300, %v301
    %v306 = vunpack.c.l.s4 1983009808
    %v307 = vunpack.c.0.s8 %v306
    %v308 = vlaneseq
    %v309 = vshrl.u32 %v308, 7
    %v310 = vsub.s32 %v307, %v309
    %v311 = vrot.slane %v304, %v310
    %vm313 = vcmask 257026
    %vm314 = vmor %vm313, %vm253
    %315 = vst.msk [vmem:[#allocation2] sm:$0xf] %vm314, %v311
    %v316 = vld [vmem:[#allocation2] sm:$0xf]
    %v317 = vld [vmem:[#allocation13] sm:$0xff]
    %v318 = vld [vmem:[#allocation13 + $0x8] sm:$0xff]
    %v319 = vld [vmem:[#allocation13 + $0x10] sm:$0xff]
    %v320 = vld [vmem:[#allocation13 + $0x18] sm:$0xff]
    %v321 = vld [vmem:[#allocation13 + $0x20] sm:$0xff]
    %v322 = vld [vmem:[#allocation13 + $0x28] sm:$0xff]
    %v323 = vld [vmem:[#allocation13 + $0x30] sm:$0xff]
    %v324 = vld [vmem:[#allocation13 + $0x38] sm:$0xff]
    %v325 = vld [vmem:[#allocation13 + $0x40] sm:$0xff]
    %v326 = vld [vmem:[#allocation13 + $0x48] sm:$0xff]
    %v327 = vld [vmem:[#allocation13 + $0x50] sm:$0xff]
    %v328 = vld [vmem:[#allocation13 + $0x58] sm:$0xff]
    %v329 = vld [vmem:[#allocation13 + $0x60] sm:$0xff]
    %v330 = vld [vmem:[#allocation13 + $0x68] sm:$0xff]
    %v331 = vld [vmem:[#allocation13 + $0x70] sm:$0xff]
    %v332 = vld [vmem:[#allocation13 + $0x78] sm:$0xff]
    %v333 = vld [vmem:[#allocation13 + $0x80] sm:$0xff]
    %v334 = vld [vmem:[#allocation13 + $0x88] sm:$0xff]
    %v335 = vld [vmem:[#allocation13 + $0x90] sm:$0xff]
    %v336 = vld [vmem:[#allocation13 + $0x98] sm:$0xff]
    %v337 = vld [vmem:[#allocation13 + $0xa0] sm:$0xff]
    %v338 = vld [vmem:[#allocation13 + $0xa8] sm:$0xff]
    %v339 = vld [vmem:[#allocation13 + $0xb0] sm:$0xff]
    %v340 = vld [vmem:[#allocation13 + $0xb8] sm:$0xff]
    %v341 = vld [vmem:[#allocation13 + $0xc0] sm:$0xff]
    %v342 = vld [vmem:[#allocation13 + $0xc8] sm:$0xff]
    %v343 = vld [vmem:[#allocation13 + $0xd0] sm:$0xff]
    %v344 = vld [vmem:[#allocation13 + $0xd8] sm:$0xff]
    %v345 = vld [vmem:[#allocation13 + $0xe0] sm:$0xff]
    %v346 = vld [vmem:[#allocation13 + $0xe8] sm:$0xff]
    %v347 = vld [vmem:[#allocation13 + $0xf0] sm:$0xff]
    %v348 = vld [vmem:[#allocation13 + $0xf8] sm:$0xff]
    %v349 = vld [vmem:[#allocation13 + $0x100] sm:$0xff]
    %v350 = vld [vmem:[#allocation13 + $0x108] sm:$0xff]
    %v351 = vld [vmem:[#allocation13 + $0x110] sm:$0xff]
    %v352 = vld [vmem:[#allocation13 + $0x118] sm:$0xff]
    %v353 = vld [vmem:[#allocation13 + $0x120] sm:$0xff]
    %v354 = vld [vmem:[#allocation13 + $0x128] sm:$0xff]
    %v355 = vld [vmem:[#allocation13 + $0x130] sm:$0xff]
    %v356 = vld [vmem:[#allocation13 + $0x138] sm:$0xff]
    %v359 = vunpack.c.l.s4 1983009808
    %v360 = vunpack.c.0.s8 %v359
    %v361 = vlaneseq
    %v362 = vshrl.u32 %v361, 7
    %v363 = vsub.s32 %v360, %v362
    %v364 = vrot.slane %v316, %v363
    %v365 = vcombine.high %v364, %v364
    %v367 = vsel %vm177, %v365, 0
    %369 = vmatprep.subr.mxu0 %v348
    %370 = vmatpush1.msra.mxu0 %v347
    %371 = vmatprep.subr.mxu0 %v346
    %372 = vmatpush1.msra.mxu0 %v345
    %373 = vmatprep.subr.mxu0 %v344
    %374 = vmatpush1.msra.mxu0 %v343
    %375 = vmatprep.subr.mxu0 %v342
    %376 = vmatpush1.msra.mxu0 %v341
    %377 = vmatprep.subr.mxu0 %v340
    %378 = vmatpush1.msra.mxu0 %v339
    %379 = vmatprep.subr.mxu0 %v338
    %380 = vmatpush1.msra.mxu0 %v337
    %381 = vmatprep.subr.mxu0 %v336
    %382 = vmatpush1.msra.mxu0 %v335
    %383 = vmatprep.subr.mxu0 %v334
    %384 = vmatpush1.msra.mxu0 %v333
    %385 = vmatprep.subr.mxu0 %v332
    %386 = vmatpush1.msra.mxu0 %v331
    %387 = vmatprep.subr.mxu0 %v330
    %388 = vmatpush1.msra.mxu0 %v329
    %389 = vmatprep.subr.mxu0 %v328
    %390 = vmatpush1.msra.mxu0 %v327
    %391 = vmatprep.subr.mxu0 %v326
    %392 = vmatpush1.msra.mxu0 %v325
    %393 = vmatprep.subr.mxu0 %v324
    %394 = vmatpush1.msra.mxu0 %v323
    %395 = vmatprep.subr.mxu0 %v322
    %396 = vmatpush1.msra.mxu0 %v321
    %397 = vmatprep.subr.mxu0 %v320
    %398 = vmatpush1.msra.mxu0 %v319
    %399 = vmatprep.subr.mxu0 %v318
    %400 = vmatpush1.msra.mxu0 %v317
    %401 = vmatprep.subr.mxu0 0.0
    %402 = vmatpush2.msra.mxu0 0.0
    %403 = vmatprep.subr.mxu0 0.0
    %404 = vmatpush2.msra.mxu0 0.0
    %405 = vmatprep.subr.mxu0 0.0
    %406 = vmatpush2.msra.mxu0 0.0
    %407 = vmatprep.subr.mxu0 0.0
    %408 = vmatpush2.msra.mxu0 0.0
    %409 = vmatprep.subr.mxu0 0.0
    %410 = vmatpush2.msra.mxu0 0.0
    %411 = vmatprep.subr.mxu0 0.0
    %412 = vmatpush2.msra.mxu0 0.0
    %413 = vmatprep.subr.mxu0 0.0
    %414 = vmatpush2.msra.mxu0 0.0
    %415 = vmatprep.subr.mxu0 0.0
    %416 = vmatpush2.msra.mxu0 0.0
    %417 = vmatprep.subr.mxu0 0.0
    %418 = vmatpush2.msra.mxu0 0.0
    %419 = vmatprep.subr.mxu0 0.0
    %420 = vmatpush2.msra.mxu0 0.0
    %421 = vmatprep.subr.mxu0 0.0
    %422 = vmatpush2.msra.mxu0 0.0
    %423 = vmatprep.subr.mxu0 0.0
    %424 = vmatpush2.msra.mxu0 0.0
    %425 = vmatprep.subr.mxu0 %v356
    %426 = vmatpush2.msra.mxu0 %v355
    %427 = vmatprep.subr.mxu0 %v354
    %428 = vmatpush2.msra.mxu0 %v353
    %429 = vmatprep.subr.mxu0 %v352
    %430 = vmatpush2.msra.mxu0 %v351
    %431 = vmatprep.subr.mxu0 %v350
    %432 = vmatpush2.msra.mxu0 %v349
    %433 = vmatprep.mubr.f32.mxu0 %v367
    %434 = vmatmul.mubr.f32.gmra.mxu0 %v364
    %v435 = vpop.f32.mrf.mxu0
    %v436 = vadd.f32 0.0, %v435
    %v437 = vpop.f32.mrf.mxu0
    %v438 = vadd.f32 0.0, %v437
    %439 = vdwg.mxu0
    %v442 = vcombine.low %v436, %v438
    %v444 = vunpack.c.l.s4 1983009808
    %v445 = vunpack.c.0.s8 %v444
    %v446 = vlaneseq
    %v447 = vshrl.u32 %v446, 7
    %v448 = vsub.s32 %v445, %v447
    %v449 = vrot.slane %v442, %v448
    %451 = vst.msk [vmem:[#allocation3] sm:$0xf] %vm314, %v449
    %vm452 = vcmask 156672
    %453 = vst.msk [vmem:[#allocation4] sm:$0x3] %vm452, 0.0
    %v454 = vld [vmem:[#allocation3] sm:$0x3]
    %455 = vst.msk [vmem:[#allocation4 + $0x2] sm:$0x3] %vm452, %v454
    %v456 = vld [vmem:[#allocation3] sm:$0x3]
    %v459 = vunpack.c.l.s4 1983009808
    %v460 = vunpack.c.0.s8 %v459
    %v461 = vlaneseq
    %v462 = vshrl.u32 %v461, 7
    %v463 = vsub.s32 %v460, %v462
    %v464 = vrot.slane %v456, %v463
    %465 = vrot.lane.b32.xlu0 %v464, 108
    %v466 = vpop.permute.xlu0 %465
    %468 = vst.msk [vmem:[#allocation4 + $0x4] sm:$0x3] %vm452, %v466
    %v469 = vld [vmem:[#allocation3] sm:$0x3]
    %v472 = vunpack.c.l.s4 1983009808
    %v473 = vunpack.c.0.s8 %v472
    %v474 = vlaneseq
    %v475 = vshrl.u32 %v474, 7
    %v476 = vsub.s32 %v473, %v475
    %v477 = vrot.slane %v469, %v476
    %478 = vrot.lane.b32.xlu0 %v477, 88
    %v479 = vpop.permute.xlu0 %478
    %481 = vst.msk [vmem:[#allocation4 + $0x6] sm:$0x3] %vm452, %v479
    %v482 = vld [vmem:[#allocation3] sm:$0x3]
    %v485 = vunpack.c.l.s4 1983009808
    %v486 = vunpack.c.0.s8 %v485
    %v487 = vlaneseq
    %v488 = vshrl.u32 %v487, 7
    %v489 = vsub.s32 %v486, %v488
    %v490 = vrot.slane %v482, %v489
    %491 = vrot.lane.b32.xlu0 %v490, 68
    %v492 = vpop.permute.xlu0 %491
    %494 = vst.msk [vmem:[#allocation4 + $0x8] sm:$0x3] %vm452, %v492
    %v495 = vld [vmem:[#allocation3] sm:$0x3]
    %v498 = vunpack.c.l.s4 1983009808
    %v499 = vunpack.c.0.s8 %v498
    %v500 = vlaneseq
    %v501 = vshrl.u32 %v500, 7
    %v502 = vsub.s32 %v499, %v501
    %v503 = vrot.slane %v495, %v502
    %504 = vrot.lane.b32.xlu0 %v503, 48
    %v505 = vpop.permute.xlu0 %504
    %507 = vst.msk [vmem:[#allocation4 + $0xa] sm:$0x3] %vm452, %v505
    %v508 = vld [vmem:[#allocation3] sm:$0x3]
    %v511 = vunpack.c.l.s4 1983009808
    %v512 = vunpack.c.0.s8 %v511
    %v513 = vlaneseq
    %v514 = vshrl.u32 %v513, 7
    %v515 = vsub.s32 %v512, %v514
    %v516 = vrot.slane %v508, %v515
    %517 = vrot.lane.b32.xlu0 %v516, 28
    %v518 = vpop.permute.xlu0 %517
    %520 = vst.msk [vmem:[#allocation4 + $0xc] sm:$0x3] %vm452, %v518
    %v521 = vld [vmem:[#allocation3] sm:$0xf]
    %v524 = vunpack.c.l.s4 1983009808
    %v525 = vunpack.c.0.s8 %v524
    %v526 = vlaneseq
    %v527 = vshrl.u32 %v526, 7
    %v528 = vsub.s32 %v525, %v527
    %v529 = vrot.slane %v521, %v528
    %v530 = vcombine.high %v529, %v529
    %531 = vrot.lane.b32.xlu0 %v529, 8
    %v532 = vpop.permute.xlu0 %531
    %533 = vrot.lane.b32.xlu0 %v530, 8
    %v534 = vpop.permute.xlu0 %533
    %vm535 = vcmask 64512
    %v536 = vsel %vm535, %v532, %v534
    %538 = vst.msk [vmem:[#allocation4 + $0xe] sm:$0x3] %vm452, %v536
    %v539 = vld [vmem:[#allocation3 + $0x2] sm:$0x3]
    %v542 = vunpack.c.l.s4 1983009808
    %v543 = vunpack.c.0.s8 %v542
    %v544 = vlaneseq
    %v545 = vshrl.u32 %v544, 7
    %v546 = vsub.s32 %v543, %v545
    %v547 = vrot.slane %v539, %v546
    %548 = vrot.lane.b32.xlu0 %v547, 116
    %v549 = vpop.permute.xlu0 %548
    %551 = vst.msk [vmem:[#allocation4 + $0x10] sm:$0x3] %vm452, %v549
    %v552 = vld [vmem:[#allocation4] sm:$0xff]
    %v553 = vld [vmem:[#allocation4 + $0x8] sm:$0xff]
    %v554 = vld [vmem:[#allocation4 + $0x10] sm:$0x3]
    %v555 = vld [vmem:[%s5] sm:$0xff]
    %v556 = vld [vmem:[%s5 + $0x8] sm:$0xff]
    %v557 = vld [vmem:[%s5 + $0x10] sm:$0x3]
    %v558 = vadd.f32 %v552, %v555
    %v559 = vadd.f32 %v553, %v556
    %v560 = vadd.f32 %v554, %v557
    %v561 = vld [vmem:[%s6] sm:$0xff]
    %v562 = vld [vmem:[%s6 + $0x8] sm:$0xff]
    %v563 = vld [vmem:[%s6 + $0x10] sm:$0x3]
    %v564 = vld [vmem:[%s7] sm:$0x1]
    %v565 = vld [vmem:[%s8] sm:$0x1]
    %vm566 = vcmask 162816
    %v567 = vsel %vm566, %v558, 0.0
    %568 = vadd.xlane.f32.xlu0 %v567
    %v569 = vpop.xlane.xlu0 %568
    %v570 = vsel %vm566, %v559, 0.0
    %571 = vadd.xlane.f32.xlu0 %v570
    %v572 = vpop.xlane.xlu0 %571
    %v573 = vsel %vm452, %v560, 0.0
    %574 = vadd.xlane.f32.xlu0 %v573
    %v575 = vpop.xlane.xlu0 %574
    %v576 = vrcp.pop 20.0
    %v577 = vmul.f32 %v569, %v576
    %v578 = vmul.f32 %v572, %v576
    %v579 = vmul.f32 %v575, %v576
    %v580 = vsub.f32 %v558, %v577
    %v581 = vsub.f32 %v559, %v578
    %v582 = vsub.f32 %v560, %v579
    %v583 = vmul.f32 %v580, %v580
    %v584 = vmul.f32 %v581, %v581
    %v585 = vmul.f32 %v582, %v582
    %v586 = vsel %vm566, %v583, 0.0
    %587 = vadd.xlane.f32.xlu0 %v586
    %v588 = vpop.xlane.xlu0 %587
    %v589 = vsel %vm566, %v584, 0.0
    %590 = vadd.xlane.f32.xlu0 %v589
    %v591 = vpop.xlane.xlu0 %590
    %v592 = vsel %vm452, %v585, 0.0
    %593 = vadd.xlane.f32.xlu0 %v592
    %v594 = vpop.xlane.xlu0 %593
    %v595 = vmul.f32 %v588, %v576
    %v596 = vmul.f32 %v591, %v576
    %v597 = vmul.f32 %v594, %v576
    %v598 = vadd.f32 %v595, 1e-05
    %v599 = vadd.f32 %v596, 1e-05
    %v600 = vadd.f32 %v597, 1e-05
    %v601 = vrsqrt.pop %v598
    %v602 = vrsqrt.pop %v599
    %v603 = vrsqrt.pop %v600
    %v604 = vmul.f32 %v580, %v601
    %v605 = vmul.f32 %v581, %v602
    %v606 = vmul.f32 %v582, %v603
    %v608 = vlaneseq
    %v609 = vshrl.u32 %v608, 7
    %v610 = vsub.s32 0, %v609
    %v611 = vrot.slane %v564, %v610
    %v613 = vmul.f32 %v604, %v611
    %v614 = vmul.f32 %v605, %v611
    %v615 = vmul.f32 %v606, %v611
    %v617 = vlaneseq
    %v618 = vshrl.u32 %v617, 7
    %v619 = vsub.s32 0, %v618
    %v620 = vrot.slane %v565, %v619
    %v622 = vadd.f32 %v613, %v620
    %v623 = vadd.f32 %v614, %v620
    %v624 = vadd.f32 %v615, %v620
    %v625 = vld [vmem:[%s9] sm:$0xff]
    %v626 = vld [vmem:[%s9 + $0x8] sm:$0xff]
    %v627 = vld [vmem:[%s9 + $0x10] sm:$0xf]
    %v628 = vld [vmem:[%s10] sm:$0x1]
    %v630 = vlaneseq
    %v631 = vshrl.u32 %v630, 7
    %v632 = vsub.s32 0, %v631
    %v633 = vrot.slane %v628, %v632
    %v636 = vsel %vm566, %v622, 0
    %v639 = vsel %vm566, %v623, 0
    %v642 = vsel %vm566, %v624, 0
    %vm644 = vcmask 1043456
    %v646 = vsel %vm644, %v627, 0
    %648 = vmatprep.subr.mxu0 0.0
    %649 = vmatpush1.msra.mxu0 0.0
    %650 = vmatprep.subr.mxu0 0.0
    %651 = vmatpush1.msra.mxu0 0.0
    %652 = vmatprep.subr.mxu0 0.0
    %653 = vmatpush1.msra.mxu0 0.0
    %654 = vmatprep.subr.mxu0 0.0
    %655 = vmatpush1.msra.mxu0 0.0
    %656 = vmatprep.subr.mxu0 0.0
    %657 = vmatpush1.msra.mxu0 0.0
    %658 = vmatprep.subr.mxu0 0.0
    %659 = vmatpush1.msra.mxu0 0.0
    %660 = vmatprep.subr.mxu0 0.0
    %661 = vmatpush1.msra.mxu0 0.0
    %662 = vmatprep.subr.mxu0 0.0
    %663 = vmatpush1.msra.mxu0 0.0
    %664 = vmatprep.subr.mxu0 0.0
    %665 = vmatpush1.msra.mxu0 0.0
    %666 = vmatprep.subr.mxu0 0.0
    %667 = vmatpush1.msra.mxu0 0.0
    %668 = vmatprep.subr.mxu0 0.0
    %669 = vmatpush1.msra.mxu0 0.0
    %670 = vmatprep.subr.mxu0 0.0
    %671 = vmatpush1.msra.mxu0 0.0
    %672 = vmatprep.subr.mxu0 0.0
    %673 = vmatpush1.msra.mxu0 0.0
    %674 = vmatprep.subr.mxu0 0.0
    %675 = vmatpush1.msra.mxu0 %v646
    %676 = vmatprep.subr.mxu0 0.0
    %677 = vmatpush1.msra.mxu0 %v626
    %678 = vmatprep.subr.mxu0 0.0
    %679 = vmatpush1.msra.mxu0 %v625
    %680 = vmatprep.subr.mxu0 0.0
    %681 = vmatpush2.msra.mxu0 0.0
    %682 = vmatprep.subr.mxu0 0.0
    %683 = vmatpush2.msra.mxu0 0.0
    %684 = vmatprep.subr.mxu0 0.0
    %685 = vmatpush2.msra.mxu0 0.0
    %686 = vmatprep.subr.mxu0 0.0
    %687 = vmatpush2.msra.mxu0 0.0
    %688 = vmatprep.subr.mxu0 0.0
    %689 = vmatpush2.msra.mxu0 0.0
    %690 = vmatprep.subr.mxu0 0.0
    %691 = vmatpush2.msra.mxu0 0.0
    %692 = vmatprep.subr.mxu0 0.0
    %693 = vmatpush2.msra.mxu0 0.0
    %694 = vmatprep.subr.mxu0 0.0
    %695 = vmatpush2.msra.mxu0 0.0
    %696 = vmatprep.subr.mxu0 0.0
    %697 = vmatpush2.msra.mxu0 0.0
    %698 = vmatprep.subr.mxu0 0.0
    %699 = vmatpush2.msra.mxu0 0.0
    %700 = vmatprep.subr.mxu0 0.0
    %701 = vmatpush2.msra.mxu0 0.0
    %702 = vmatprep.subr.mxu0 0.0
    %703 = vmatpush2.msra.mxu0 0.0
    %704 = vmatprep.subr.mxu0 0.0
    %705 = vmatpush2.msra.mxu0 0.0
    %706 = vmatprep.subr.mxu0 0.0
    %707 = vmatpush2.msra.mxu0 0.0
    %708 = vmatprep.subr.mxu0 0.0
    %709 = vmatpush2.msra.mxu0 0.0
    %710 = vmatprep.subr.mxu0 0.0
    %711 = vmatpush2.msra.mxu0 0.0
    %712 = vmatprep.mubr.f32.mxu0 0.0
    %713 = vmatmul.mubr.f32.gmra.mxu0 %v636
    %v714 = vpop.f32.mrf.mxu0
    %v715 = vadd.f32 %v633, %v714
    %v716 = vpop.f32.mrf.mxu0
    %717 = vmatprep.mubr.f32.mxu0 0.0
    %718 = vmatmul.mubr.f32.gmra.mxu0 %v639
    %v719 = vpop.f32.mrf.mxu0
    %v720 = vadd.f32 %v633, %v719
    %v721 = vpop.f32.mrf.mxu0
    %722 = vmatprep.mubr.f32.mxu0 0.0
    %723 = vmatmul.mubr.f32.gmra.mxu0 %v642
    %v724 = vpop.f32.mrf.mxu0
    %v725 = vadd.f32 %v633, %v724
    %v726 = vpop.f32.mrf.mxu0
    %727 = vdwg.mxu0
    %vm728 = vcmask 490496
    %729 = vst.msk [vmem:[#allocation5] sm:$0xff] %vm728, %v715
    %730 = vst.msk [vmem:[#allocation5 + $0x8] sm:$0xff] %vm728, %v720
    %vm731 = vcmask 484352
    %732 = vst.msk [vmem:[#allocation5 + $0x10] sm:$0x3] %vm731, %v725
    %v733 = vld [vmem:[#allocation5] sm:$0xff]
    %v734 = vld [vmem:[#allocation5 + $0x8] sm:$0xff]
    %v735 = vld [vmem:[#allocation5 + $0x10] sm:$0x3]
    %739 = vrot.lane.b32.xlu0 %v733, 108
    %v740 = vpop.permute.xlu0 %739
    %741 = vrot.lane.b32.xlu0 %v734, 108
    %v742 = vpop.permute.xlu0 %741
    %743 = vrot.lane.b32.xlu0 %v735, 108
    %v744 = vpop.permute.xlu0 %743
    %vm745 = vcmask 39936
    %v746 = vsel %vm745, %v733, 0
    %v748 = vsel %vm745, %v734, 0
    %v750 = vsel %vm745, %v735, 0
    %v752 = vsel %vm745, %v740, 0
    %v754 = vsel %vm745, %v742, 0
    %v756 = vsel %vm745, %v744, 0
    %758 = vmatprep.subr.mxu0 0.0
    %759 = vmatpush1.xpose.msra.mxu0 0.0
    %760 = vmatprep.subr.mxu0 0.0
    %761 = vmatpush1.xpose.msra.mxu0 0.0
    %762 = vmatprep.subr.mxu0 0.0
    %763 = vmatpush1.xpose.msra.mxu0 0.0
    %764 = vmatprep.subr.mxu0 0.0
    %765 = vmatpush1.xpose.msra.mxu0 0.0
    %766 = vmatprep.subr.mxu0 0.0
    %767 = vmatpush1.xpose.msra.mxu0 0.0
    %768 = vmatprep.subr.mxu0 0.0
    %769 = vmatpush1.xpose.msra.mxu0 0.0
    %770 = vmatprep.subr.mxu0 0.0
    %771 = vmatpush1.xpose.msra.mxu0 0.0
    %772 = vmatprep.subr.mxu0 0.0
    %773 = vmatpush1.xpose.msra.mxu0 0.0
    %774 = vmatprep.subr.mxu0 0.0
    %775 = vmatpush1.xpose.msra.mxu0 0.0
    %776 = vmatprep.subr.mxu0 0.0
    %777 = vmatpush1.xpose.msra.mxu0 0.0
    %778 = vmatprep.subr.mxu0 0.0
    %779 = vmatpush1.xpose.msra.mxu0 0.0
    %780 = vmatprep.subr.mxu0 0.0
    %781 = vmatpush1.xpose.msra.mxu0 0.0
    %782 = vmatprep.subr.mxu0 0.0
    %783 = vmatpush1.xpose.msra.mxu0 0.0
    %784 = vmatprep.subr.mxu0 0.0
    %785 = vmatpush1.xpose.msra.mxu0 %v756
    %786 = vmatprep.subr.mxu0 0.0
    %787 = vmatpush1.xpose.msra.mxu0 %v754
    %788 = vmatprep.subr.mxu0 0.0
    %789 = vmatpush1.xpose.msra.mxu0 %v752
    %790 = vmatprep.subr.mxu0 0.0
    %791 = vmatpush2.xpose.msra.mxu0 0.0
    %792 = vmatprep.subr.mxu0 0.0
    %793 = vmatpush2.xpose.msra.mxu0 0.0
    %794 = vmatprep.subr.mxu0 0.0
    %795 = vmatpush2.xpose.msra.mxu0 0.0
    %796 = vmatprep.subr.mxu0 0.0
    %797 = vmatpush2.xpose.msra.mxu0 0.0
    %798 = vmatprep.subr.mxu0 0.0
    %799 = vmatpush2.xpose.msra.mxu0 0.0
    %800 = vmatprep.subr.mxu0 0.0
    %801 = vmatpush2.xpose.msra.mxu0 0.0
    %802 = vmatprep.subr.mxu0 0.0
    %803 = vmatpush2.xpose.msra.mxu0 0.0
    %804 = vmatprep.subr.mxu0 0.0
    %805 = vmatpush2.xpose.msra.mxu0 0.0
    %806 = vmatprep.subr.mxu0 0.0
    %807 = vmatpush2.xpose.msra.mxu0 0.0
    %808 = vmatprep.subr.mxu0 0.0
    %809 = vmatpush2.xpose.msra.mxu0 0.0
    %810 = vmatprep.subr.mxu0 0.0
    %811 = vmatpush2.xpose.msra.mxu0 0.0
    %812 = vmatprep.subr.mxu0 0.0
    %813 = vmatpush2.xpose.msra.mxu0 0.0
    %814 = vmatprep.subr.mxu0 0.0
    %815 = vmatpush2.xpose.msra.mxu0 0.0
    %816 = vmatprep.subr.mxu0 0.0
    %817 = vmatpush2.xpose.msra.mxu0 0.0
    %818 = vmatprep.subr.mxu0 0.0
    %819 = vmatpush2.xpose.msra.mxu0 0.0
    %820 = vmatprep.subr.mxu0 0.0
    %821 = vmatpush2.xpose.msra.mxu0 0.0
    %822 = vmatprep.mubr.f32.mxu0 0.0
    %823 = vmatmul.mubr.f32.gmra.mxu0 %v746
    %v824 = vpop.f32.mrf.mxu0
    %v825 = vadd.f32 %v561, %v824
    %v826 = vpop.f32.mrf.mxu0
    %827 = vmatprep.mubr.f32.mxu0 0.0
    %828 = vmatmul.mubr.f32.gmra.mxu0 %v748
    %v829 = vpop.f32.mrf.mxu0
    %v830 = vadd.f32 %v562, %v829
    %v831 = vpop.f32.mrf.mxu0
    %832 = vmatprep.mubr.f32.mxu0 0.0
    %833 = vmatmul.mubr.f32.gmra.mxu0 %v750
    %v834 = vpop.f32.mrf.mxu0
    %v835 = vadd.f32 %v563, %v834
    %v836 = vpop.f32.mrf.mxu0
    %837 = vdwg.mxu0
    %vm838 = vcmask 146432
    %v839 = vsel %vm838, %v825, -inf
    %840 = vmax.xlane.f32.xlu0 %v839
    %v841 = vpop.xlane.xlu0 %840
    %v842 = vsel %vm838, %v830, -inf
    %843 = vmax.xlane.f32.xlu0 %v842
    %v844 = vpop.xlane.xlu0 %843
    %vm845 = vcmask 140288
    %v846 = vsel %vm845, %v835, -inf
    %847 = vmax.xlane.f32.xlu0 %v846
    %v848 = vpop.xlane.xlu0 %847
    %v849 = vsub.f32 %v825, %v841
    %v850 = vsub.f32 %v830, %v844
    %v851 = vsub.f32 %v835, %v848
    %v852 = vmul.f32 %v849, 1.442695
    %v853 = vpow.pop %v852
    %v854 = vmul.f32 %v850, 1.442695
    %v855 = vpow.pop %v854
    %v856 = vmul.f32 %v851, 1.442695
    %v857 = vpow.pop %v856
    %v858 = vsel %vm838, %v853, 0.0
    %859 = vadd.xlane.f32.xlu0 %v858
    %v860 = vpop.xlane.xlu0 %859
    %v861 = vsel %vm838, %v855, 0.0
    %862 = vadd.xlane.f32.xlu0 %v861
    %v863 = vpop.xlane.xlu0 %862
    %v864 = vsel %vm845, %v857, 0.0
    %865 = vadd.xlane.f32.xlu0 %v864
    %v866 = vpop.xlane.xlu0 %865
    %v867 = vrcp.pop %v860
    %v868 = vrcp.pop %v863
    %v869 = vrcp.pop %v866
    %v870 = vmul.f32 %v853, %v867
    %v871 = vmul.f32 %v855, %v868
    %v872 = vmul.f32 %v857, %v869
    %873 = vrot.lane.b32.xlu0 %v733, 88
    %v874 = vpop.permute.xlu0 %873
    %875 = vrot.lane.b32.xlu0 %v734, 88
    %v876 = vpop.permute.xlu0 %875
    %877 = vrot.lane.b32.xlu0 %v735, 88
    %v878 = vpop.permute.xlu0 %877
    %v882 = vsel %vm838, %v870, 0
    %v885 = vsel %vm838, %v871, 0
    %v888 = vsel %vm838, %v872, 0
    %v890 = vsel %vm253, %v878, 0
    %892 = vmatprep.subr.mxu0 0.0
    %893 = vmatpush1.msra.mxu0 0.0
    %894 = vmatprep.subr.mxu0 0.0
    %895 = vmatpush1.msra.mxu0 0.0
    %896 = vmatprep.subr.mxu0 0.0
    %897 = vmatpush1.msra.mxu0 0.0
    %898 = vmatprep.subr.mxu0 0.0
    %899 = vmatpush1.msra.mxu0 0.0
    %900 = vmatprep.subr.mxu0 0.0
    %901 = vmatpush1.msra.mxu0 0.0
    %902 = vmatprep.subr.mxu0 0.0
    %903 = vmatpush1.msra.mxu0 0.0
    %904 = vmatprep.subr.mxu0 0.0
    %905 = vmatpush1.msra.mxu0 0.0
    %906 = vmatprep.subr.mxu0 0.0
    %907 = vmatpush1.msra.mxu0 0.0
    %908 = vmatprep.subr.mxu0 0.0
    %909 = vmatpush1.msra.mxu0 0.0
    %910 = vmatprep.subr.mxu0 0.0
    %911 = vmatpush1.msra.mxu0 0.0
    %912 = vmatprep.subr.mxu0 0.0
    %913 = vmatpush1.msra.mxu0 0.0
    %914 = vmatprep.subr.mxu0 0.0
    %915 = vmatpush1.msra.mxu0 0.0
    %916 = vmatprep.subr.mxu0 0.0
    %917 = vmatpush1.msra.mxu0 0.0
    %918 = vmatprep.subr.mxu0 0.0
    %919 = vmatpush1.msra.mxu0 %v890
    %920 = vmatprep.subr.mxu0 0.0
    %921 = vmatpush1.msra.mxu0 %v876
    %922 = vmatprep.subr.mxu0 0.0
    %923 = vmatpush1.msra.mxu0 %v874
    %924 = vmatprep.subr.mxu0 0.0
    %925 = vmatpush2.msra.mxu0 0.0
    %926 = vmatprep.subr.mxu0 0.0
    %927 = vmatpush2.msra.mxu0 0.0
    %928 = vmatprep.subr.mxu0 0.0
    %929 = vmatpush2.msra.mxu0 0.0
    %930 = vmatprep.subr.mxu0 0.0
    %931 = vmatpush2.msra.mxu0 0.0
    %932 = vmatprep.subr.mxu0 0.0
    %933 = vmatpush2.msra.mxu0 0.0
    %934 = vmatprep.subr.mxu0 0.0
    %935 = vmatpush2.msra.mxu0 0.0
    %936 = vmatprep.subr.mxu0 0.0
    %937 = vmatpush2.msra.mxu0 0.0
    %938 = vmatprep.subr.mxu0 0.0
    %939 = vmatpush2.msra.mxu0 0.0
    %940 = vmatprep.subr.mxu0 0.0
    %941 = vmatpush2.msra.mxu0 0.0
    %942 = vmatprep.subr.mxu0 0.0
    %943 = vmatpush2.msra.mxu0 0.0
    %944 = vmatprep.subr.mxu0 0.0
    %945 = vmatpush2.msra.mxu0 0.0
    %946 = vmatprep.subr.mxu0 0.0
    %947 = vmatpush2.msra.mxu0 0.0
    %948 = vmatprep.subr.mxu0 0.0
    %949 = vmatpush2.msra.mxu0 0.0
    %950 = vmatprep.subr.mxu0 0.0
    %951 = vmatpush2.msra.mxu0 0.0
    %952 = vmatprep.subr.mxu0 0.0
    %953 = vmatpush2.msra.mxu0 0.0
    %954 = vmatprep.subr.mxu0 0.0
    %955 = vmatpush2.msra.mxu0 0.0
    %956 = vmatprep.mubr.f32.mxu0 0.0
    %957 = vmatmul.mubr.f32.gmra.mxu0 %v882
    %v958 = vpop.f32.mrf.mxu0
    %v959 = vadd.f32 0.0, %v958
    %v960 = vpop.f32.mrf.mxu0
    %961 = vmatprep.mubr.f32.mxu0 0.0
    %962 = vmatmul.mubr.f32.gmra.mxu0 %v885
    %v963 = vpop.f32.mrf.mxu0
    %v964 = vadd.f32 0.0, %v963
    %v965 = vpop.f32.mrf.mxu0
    %966 = vmatprep.mubr.f32.mxu0 0.0
    %967 = vmatmul.mubr.f32.gmra.mxu0 %v888
    %v968 = vpop.f32.mrf.mxu0
    %v969 = vadd.f32 0.0, %v968
    %v970 = vpop.f32.mrf.mxu0
    %971 = vdwg.mxu0
    %972 = vst.msk [vmem:[#allocation6] sm:$0xff] %vm745, %v959
    %973 = vst.msk [vmem:[#allocation6 + $0x8] sm:$0xff] %vm745, %v964
    %vm974 = vcmask 33792
    %975 = vst.msk [vmem:[#allocation6 + $0x10] sm:$0x3] %vm974, %v969
    %v976 = vld [vmem:[#allocation5] sm:$0xff]
    %v977 = vld [vmem:[#allocation5 + $0x8] sm:$0xff]
    %v978 = vld [vmem:[#allocation5 + $0x10] sm:$0x3]
    %982 = vrot.lane.b32.xlu0 %v976, 123
    %v983 = vpop.permute.xlu0 %982
    %984 = vrot.lane.b32.xlu0 %v977, 123
    %v985 = vpop.permute.xlu0 %984
    %986 = vrot.lane.b32.xlu0 %v978, 123
    %v987 = vpop.permute.xlu0 %986
    %988 = vrot.lane.b32.xlu0 %v976, 103
    %v989 = vpop.permute.xlu0 %988
    %990 = vrot.lane.b32.xlu0 %v977, 103
    %v991 = vpop.permute.xlu0 %990
    %992 = vrot.lane.b32.xlu0 %v978, 103
    %v993 = vpop.permute.xlu0 %992
    %v994 = vsel %vm745, %v983, 0
    %v996 = vsel %vm745, %v985, 0
    %v998 = vsel %vm745, %v987, 0
    %v1000 = vsel %vm745, %v989, 0
    %v1002 = vsel %vm745, %v991, 0
    %v1004 = vsel %vm745, %v993, 0
    %1006 = vmatprep.subr.mxu0 0.0
    %1007 = vmatpush1.xpose.msra.mxu0 0.0
    %1008 = vmatprep.subr.mxu0 0.0
    %1009 = vmatpush1.xpose.msra.mxu0 0.0
    %1010 = vmatprep.subr.mxu0 0.0
    %1011 = vmatpush1.xpose.msra.mxu0 0.0
    %1012 = vmatprep.subr.mxu0 0.0
    %1013 = vmatpush1.xpose.msra.mxu0 0.0
    %1014 = vmatprep.subr.mxu0 0.0
    %1015 = vmatpush1.xpose.msra.mxu0 0.0
    %1016 = vmatprep.subr.mxu0 0.0
    %1017 = vmatpush1.xpose.msra.mxu0 0.0
    %1018 = vmatprep.subr.mxu0 0.0
    %1019 = vmatpush1.xpose.msra.mxu0 0.0
    %1020 = vmatprep.subr.mxu0 0.0
    %1021 = vmatpush1.xpose.msra.mxu0 0.0
    %1022 = vmatprep.subr.mxu0 0.0
    %1023 = vmatpush1.xpose.msra.mxu0 0.0
    %1024 = vmatprep.subr.mxu0 0.0
    %1025 = vmatpush1.xpose.msra.mxu0 0.0
    %1026 = vmatprep.subr.mxu0 0.0
    %1027 = vmatpush1.xpose.msra.mxu0 0.0
    %1028 = vmatprep.subr.mxu0 0.0
    %1029 = vmatpush1.xpose.msra.mxu0 0.0
    %1030 = vmatprep.subr.mxu0 0.0
    %1031 = vmatpush1.xpose.msra.mxu0 0.0
    %1032 = vmatprep.subr.mxu0 0.0
    %1033 = vmatpush1.xpose.msra.mxu0 %v1004
    %1034 = vmatprep.subr.mxu0 0.0
    %1035 = vmatpush1.xpose.msra.mxu0 %v1002
    %1036 = vmatprep.subr.mxu0 0.0
    %1037 = vmatpush1.xpose.msra.mxu0 %v1000
    %1038 = vmatprep.subr.mxu0 0.0
    %1039 = vmatpush2.xpose.msra.mxu0 0.0
    %1040 = vmatprep.subr.mxu0 0.0
    %1041 = vmatpush2.xpose.msra.mxu0 0.0
    %1042 = vmatprep.subr.mxu0 0.0
    %1043 = vmatpush2.xpose.msra.mxu0 0.0
    %1044 = vmatprep.subr.mxu0 0.0
    %1045 = vmatpush2.xpose.msra.mxu0 0.0
    %1046 = vmatprep.subr.mxu0 0.0
    %1047 = vmatpush2.xpose.msra.mxu0 0.0
    %1048 = vmatprep.subr.mxu0 0.0
    %1049 = vmatpush2.xpose.msra.mxu0 0.0
    %1050 = vmatprep.subr.mxu0 0.0
    %1051 = vmatpush2.xpose.msra.mxu0 0.0
    %1052 = vmatprep.subr.mxu0 0.0
    %1053 = vmatpush2.xpose.msra.mxu0 0.0
    %1054 = vmatprep.subr.mxu0 0.0
    %1055 = vmatpush2.xpose.msra.mxu0 0.0
    %1056 = vmatprep.subr.mxu0 0.0
    %1057 = vmatpush2.xpose.msra.mxu0 0.0
    %1058 = vmatprep.subr.mxu0 0.0
    %1059 = vmatpush2.xpose.msra.mxu0 0.0
    %1060 = vmatprep.subr.mxu0 0.0
    %1061 = vmatpush2.xpose.msra.mxu0 0.0
    %1062 = vmatprep.subr.mxu0 0.0
    %1063 = vmatpush2.xpose.msra.mxu0 0.0
    %1064 = vmatprep.subr.mxu0 0.0
    %1065 = vmatpush2.xpose.msra.mxu0 0.0
    %1066 = vmatprep.subr.mxu0 0.0
    %1067 = vmatpush2.xpose.msra.mxu0 0.0
    %1068 = vmatprep.subr.mxu0 0.0
    %1069 = vmatpush2.xpose.msra.mxu0 0.0
    %1070 = vmatprep.mubr.f32.mxu0 0.0
    %1071 = vmatmul.mubr.f32.gmra.mxu0 %v994
    %v1072 = vpop.f32.mrf.mxu0
    %v1073 = vadd.f32 %v561, %v1072
    %v1074 = vpop.f32.mrf.mxu0
    %1075 = vmatprep.mubr.f32.mxu0 0.0
    %1076 = vmatmul.mubr.f32.gmra.mxu0 %v996
    %v1077 = vpop.f32.mrf.mxu0
    %v1078 = vadd.f32 %v562, %v1077
    %v1079 = vpop.f32.mrf.mxu0
    %1080 = vmatprep.mubr.f32.mxu0 0.0
    %1081 = vmatmul.mubr.f32.gmra.mxu0 %v998
    %v1082 = vpop.f32.mrf.mxu0
    %v1083 = vadd.f32 %v563, %v1082
    %v1084 = vpop.f32.mrf.mxu0
    %1085 = vdwg.mxu0
    %v1086 = vsel %vm838, %v1073, -inf
    %1087 = vmax.xlane.f32.xlu0 %v1086
    %v1088 = vpop.xlane.xlu0 %1087
    %v1089 = vsel %vm838, %v1078, -inf
    %1090 = vmax.xlane.f32.xlu0 %v1089
    %v1091 = vpop.xlane.xlu0 %1090
    %v1092 = vsel %vm845, %v1083, -inf
    %1093 = vmax.xlane.f32.xlu0 %v1092
    %v1094 = vpop.xlane.xlu0 %1093
    %v1095 = vsub.f32 %v1073, %v1088
    %v1096 = vsub.f32 %v1078, %v1091
    %v1097 = vsub.f32 %v1083, %v1094
    %v1098 = vmul.f32 %v1095, 1.442695
    %v1099 = vpow.pop %v1098
    %v1100 = vmul.f32 %v1096, 1.442695
    %v1101 = vpow.pop %v1100
    %v1102 = vmul.f32 %v1097, 1.442695
    %v1103 = vpow.pop %v1102
    %v1104 = vsel %vm838, %v1099, 0.0
    %1105 = vadd.xlane.f32.xlu0 %v1104
    %v1106 = vpop.xlane.xlu0 %1105
    %v1107 = vsel %vm838, %v1101, 0.0
    %1108 = vadd.xlane.f32.xlu0 %v1107
    %v1109 = vpop.xlane.xlu0 %1108
    %v1110 = vsel %vm845, %v1103, 0.0
    %1111 = vadd.xlane.f32.xlu0 %v1110
    %v1112 = vpop.xlane.xlu0 %1111
    %v1113 = vrcp.pop %v1106
    %v1114 = vrcp.pop %v1109
    %v1115 = vrcp.pop %v1112
    %v1116 = vmul.f32 %v1099, %v1113
    %v1117 = vmul.f32 %v1101, %v1114
    %v1118 = vmul.f32 %v1103, %v1115
    %1119 = vrot.lane.b32.xlu0 %v976, 83
    %v1120 = vpop.permute.xlu0 %1119
    %1121 = vrot.lane.b32.xlu0 %v977, 83
    %v1122 = vpop.permute.xlu0 %1121
    %1123 = vrot.lane.b32.xlu0 %v978, 83
    %v1124 = vpop.permute.xlu0 %1123
    %v1128 = vsel %vm838, %v1116, 0
    %v1131 = vsel %vm838, %v1117, 0
    %v1134 = vsel %vm838, %v1118, 0
    %v1136 = vsel %vm253, %v1124, 0
    %1138 = vmatprep.subr.mxu0 0.0
    %1139 = vmatpush1.msra.mxu0 0.0
    %1140 = vmatprep.subr.mxu0 0.0
    %1141 = vmatpush1.msra.mxu0 0.0
    %1142 = vmatprep.subr.mxu0 0.0
    %1143 = vmatpush1.msra.mxu0 0.0
    %1144 = vmatprep.subr.mxu0 0.0
    %1145 = vmatpush1.msra.mxu0 0.0
    %1146 = vmatprep.subr.mxu0 0.0
    %1147 = vmatpush1.msra.mxu0 0.0
    %1148 = vmatprep.subr.mxu0 0.0
    %1149 = vmatpush1.msra.mxu0 0.0
    %1150 = vmatprep.subr.mxu0 0.0
    %1151 = vmatpush1.msra.mxu0 0.0
    %1152 = vmatprep.subr.mxu0 0.0
    %1153 = vmatpush1.msra.mxu0 0.0
    %1154 = vmatprep.subr.mxu0 0.0
    %1155 = vmatpush1.msra.mxu0 0.0
    %1156 = vmatprep.subr.mxu0 0.0
    %1157 = vmatpush1.msra.mxu0 0.0
    %1158 = vmatprep.subr.mxu0 0.0
    %1159 = vmatpush1.msra.mxu0 0.0
    %1160 = vmatprep.subr.mxu0 0.0
    %1161 = vmatpush1.msra.mxu0 0.0
    %1162 = vmatprep.subr.mxu0 0.0
    %1163 = vmatpush1.msra.mxu0 0.0
    %1164 = vmatprep.subr.mxu0 0.0
    %1165 = vmatpush1.msra.mxu0 %v1136
    %1166 = vmatprep.subr.mxu0 0.0
    %1167 = vmatpush1.msra.mxu0 %v1122
    %1168 = vmatprep.subr.mxu0 0.0
    %1169 = vmatpush1.msra.mxu0 %v1120
    %1170 = vmatprep.subr.mxu0 0.0
    %1171 = vmatpush2.msra.mxu0 0.0
    %1172 = vmatprep.subr.mxu0 0.0
    %1173 = vmatpush2.msra.mxu0 0.0
    %1174 = vmatprep.subr.mxu0 0.0
    %1175 = vmatpush2.msra.mxu0 0.0
    %1176 = vmatprep.subr.mxu0 0.0
    %1177 = vmatpush2.msra.mxu0 0.0
    %1178 = vmatprep.subr.mxu0 0.0
    %1179 = vmatpush2.msra.mxu0 0.0
    %1180 = vmatprep.subr.mxu0 0.0
    %1181 = vmatpush2.msra.mxu0 0.0
    %1182 = vmatprep.subr.mxu0 0.0
    %1183 = vmatpush2.msra.mxu0 0.0
    %1184 = vmatprep.subr.mxu0 0.0
    %1185 = vmatpush2.msra.mxu0 0.0
    %1186 = vmatprep.subr.mxu0 0.0
    %1187 = vmatpush2.msra.mxu0 0.0
    %1188 = vmatprep.subr.mxu0 0.0
    %1189 = vmatpush2.msra.mxu0 0.0
    %1190 = vmatprep.subr.mxu0 0.0
    %1191 = vmatpush2.msra.mxu0 0.0
    %1192 = vmatprep.subr.mxu0 0.0
    %1193 = vmatpush2.msra.mxu0 0.0
    %1194 = vmatprep.subr.mxu0 0.0
    %1195 = vmatpush2.msra.mxu0 0.0
    %1196 = vmatprep.subr.mxu0 0.0
    %1197 = vmatpush2.msra.mxu0 0.0
    %1198 = vmatprep.subr.mxu0 0.0
    %1199 = vmatpush2.msra.mxu0 0.0
    %1200 = vmatprep.subr.mxu0 0.0
    %1201 = vmatpush2.msra.mxu0 0.0
    %1202 = vmatprep.mubr.f32.mxu0 0.0
    %1203 = vmatmul.mubr.f32.gmra.mxu0 %v1128
    %v1204 = vpop.f32.mrf.mxu0
    %v1205 = vadd.f32 0.0, %v1204
    %v1206 = vpop.f32.mrf.mxu0
    %1207 = vmatprep.mubr.f32.mxu0 0.0
    %1208 = vmatmul.mubr.f32.gmra.mxu0 %v1131
    %v1209 = vpop.f32.mrf.mxu0
    %v1210 = vadd.f32 0.0, %v1209
    %v1211 = vpop.f32.mrf.mxu0
    %1212 = vmatprep.mubr.f32.mxu0 0.0
    %1213 = vmatmul.mubr.f32.gmra.mxu0 %v1134
    %v1214 = vpop.f32.mrf.mxu0
    %v1215 = vadd.f32 0.0, %v1214
    %v1216 = vpop.f32.mrf.mxu0
    %1217 = vdwg.mxu0
    %1221 = vrot.lane.b32.xlu0 %v1205, 5
    %v1222 = vpop.permute.xlu0 %1221
    %1223 = vrot.lane.b32.xlu0 %v1210, 5
    %v1224 = vpop.permute.xlu0 %1223
    %1225 = vrot.lane.b32.xlu0 %v1215, 5
    %v1226 = vpop.permute.xlu0 %1225
    %vm1230 = vcmask 80936
    %1231 = vst.msk [vmem:[#allocation6] sm:$0xff] %vm1230, %v1222
    %1232 = vst.msk [vmem:[#allocation6 + $0x8] sm:$0xff] %vm1230, %v1224
    %vm1233 = vcmask 74792
    %1234 = vst.msk [vmem:[#allocation6 + $0x10] sm:$0x3] %vm1233, %v1226
    %v1235 = vld [vmem:[#allocation5] sm:$0xff]
    %v1236 = vld [vmem:[#allocation5 + $0x8] sm:$0xff]
    %v1237 = vld [vmem:[#allocation5 + $0x10] sm:$0x3]
    %1241 = vrot.lane.b32.xlu0 %v1235, 118
    %v1242 = vpop.permute.xlu0 %1241
    %1243 = vrot.lane.b32.xlu0 %v1236, 118
    %v1244 = vpop.permute.xlu0 %1243
    %1245 = vrot.lane.b32.xlu0 %v1237, 118
    %v1246 = vpop.permute.xlu0 %1245
    %1247 = vrot.lane.b32.xlu0 %v1235, 98
    %v1248 = vpop.permute.xlu0 %1247
    %1249 = vrot.lane.b32.xlu0 %v1236, 98
    %v1250 = vpop.permute.xlu0 %1249
    %1251 = vrot.lane.b32.xlu0 %v1237, 98
    %v1252 = vpop.permute.xlu0 %1251
    %v1253 = vsel %vm745, %v1242, 0
    %v1255 = vsel %vm745, %v1244, 0
    %v1257 = vsel %vm745, %v1246, 0
    %v1259 = vsel %vm745, %v1248, 0
    %v1261 = vsel %vm745, %v1250, 0
    %v1263 = vsel %vm745, %v1252, 0
    %1265 = vmatprep.subr.mxu0 0.0
    %1266 = vmatpush1.xpose.msra.mxu0 0.0
    %1267 = vmatprep.subr.mxu0 0.0
    %1268 = vmatpush1.xpose.msra.mxu0 0.0
    %1269 = vmatprep.subr.mxu0 0.0
    %1270 = vmatpush1.xpose.msra.mxu0 0.0
    %1271 = vmatprep.subr.mxu0 0.0
    %1272 = vmatpush1.xpose.msra.mxu0 0.0
    %1273 = vmatprep.subr.mxu0 0.0
    %1274 = vmatpush1.xpose.msra.mxu0 0.0
    %1275 = vmatprep.subr.mxu0 0.0
    %1276 = vmatpush1.xpose.msra.mxu0 0.0
    %1277 = vmatprep.subr.mxu0 0.0
    %1278 = vmatpush1.xpose.msra.mxu0 0.0
    %1279 = vmatprep.subr.mxu0 0.0
    %1280 = vmatpush1.xpose.msra.mxu0 0.0
    %1281 = vmatprep.subr.mxu0 0.0
    %1282 = vmatpush1.xpose.msra.mxu0 0.0
    %1283 = vmatprep.subr.mxu0 0.0
    %1284 = vmatpush1.xpose.msra.mxu0 0.0
    %1285 = vmatprep.subr.mxu0 0.0
    %1286 = vmatpush1.xpose.msra.mxu0 0.0
    %1287 = vmatprep.subr.mxu0 0.0
    %1288 = vmatpush1.xpose.msra.mxu0 0.0
    %1289 = vmatprep.subr.mxu0 0.0
    %1290 = vmatpush1.xpose.msra.mxu0 0.0
    %1291 = vmatprep.subr.mxu0 0.0
    %1292 = vmatpush1.xpose.msra.mxu0 %v1263
    %1293 = vmatprep.subr.mxu0 0.0
    %1294 = vmatpush1.xpose.msra.mxu0 %v1261
    %1295 = vmatprep.subr.mxu0 0.0
    %1296 = vmatpush1.xpose.msra.mxu0 %v1259
    %1297 = vmatprep.subr.mxu0 0.0
    %1298 = vmatpush2.xpose.msra.mxu0 0.0
    %1299 = vmatprep.subr.mxu0 0.0
    %1300 = vmatpush2.xpose.msra.mxu0 0.0
    %1301 = vmatprep.subr.mxu0 0.0
    %1302 = vmatpush2.xpose.msra.mxu0 0.0
    %1303 = vmatprep.subr.mxu0 0.0
    %1304 = vmatpush2.xpose.msra.mxu0 0.0
    %1305 = vmatprep.subr.mxu0 0.0
    %1306 = vmatpush2.xpose.msra.mxu0 0.0
    %1307 = vmatprep.subr.mxu0 0.0
    %1308 = vmatpush2.xpose.msra.mxu0 0.0
    %1309 = vmatprep.subr.mxu0 0.0
    %1310 = vmatpush2.xpose.msra.mxu0 0.0
    %1311 = vmatprep.subr.mxu0 0.0
    %1312 = vmatpush2.xpose.msra.mxu0 0.0
    %1313 = vmatprep.subr.mxu0 0.0
    %1314 = vmatpush2.xpose.msra.mxu0 0.0
    %1315 = vmatprep.subr.mxu0 0.0
    %1316 = vmatpush2.xpose.msra.mxu0 0.0
    %1317 = vmatprep.subr.mxu0 0.0
    %1318 = vmatpush2.xpose.msra.mxu0 0.0
    %1319 = vmatprep.subr.mxu0 0.0
    %1320 = vmatpush2.xpose.msra.mxu0 0.0
    %1321 = vmatprep.subr.mxu0 0.0
    %1322 = vmatpush2.xpose.msra.mxu0 0.0
    %1323 = vmatprep.subr.mxu0 0.0
    %1324 = vmatpush2.xpose.msra.mxu0 0.0
    %1325 = vmatprep.subr.mxu0 0.0
    %1326 = vmatpush2.xpose.msra.mxu0 0.0
    %1327 = vmatprep.subr.mxu0 0.0
    %1328 = vmatpush2.xpose.msra.mxu0 0.0
    %1329 = vmatprep.mubr.f32.mxu0 0.0
    %1330 = vmatmul.mubr.f32.gmra.mxu0 %v1253
    %v1331 = vpop.f32.mrf.mxu0
    %v1332 = vadd.f32 %v561, %v1331
    %v1333 = vpop.f32.mrf.mxu0
    %1334 = vmatprep.mubr.f32.mxu0 0.0
    %1335 = vmatmul.mubr.f32.gmra.mxu0 %v1255
    %v1336 = vpop.f32.mrf.mxu0
    %v1337 = vadd.f32 %v562, %v1336
    %v1338 = vpop.f32.mrf.mxu0
    %1339 = vmatprep.mubr.f32.mxu0 0.0
    %1340 = vmatmul.mubr.f32.gmra.mxu0 %v1257
    %v1341 = vpop.f32.mrf.mxu0
    %v1342 = vadd.f32 %v563, %v1341
    %v1343 = vpop.f32.mrf.mxu0
    %1344 = vdwg.mxu0
    %v1345 = vsel %vm838, %v1332, -inf
    %1346 = vmax.xlane.f32.xlu0 %v1345
    %v1347 = vpop.xlane.xlu0 %1346
    %v1348 = vsel %vm838, %v1337, -inf
    %1349 = vmax.xlane.f32.xlu0 %v1348
    %v1350 = vpop.xlane.xlu0 %1349
    %v1351 = vsel %vm845, %v1342, -inf
    %1352 = vmax.xlane.f32.xlu0 %v1351
    %v1353 = vpop.xlane.xlu0 %1352
    %v1354 = vsub.f32 %v1332, %v1347
    %v1355 = vsub.f32 %v1337, %v1350
    %v1356 = vsub.f32 %v1342, %v1353
    %v1357 = vmul.f32 %v1354, 1.442695
    %v1358 = vpow.pop %v1357
    %v1359 = vmul.f32 %v1355, 1.442695
    %v1360 = vpow.pop %v1359
    %v1361 = vmul.f32 %v1356, 1.442695
    %v1362 = vpow.pop %v1361
    %v1363 = vsel %vm838, %v1358, 0.0
    %1364 = vadd.xlane.f32.xlu0 %v1363
    %v1365 = vpop.xlane.xlu0 %1364
    %v1366 = vsel %vm838, %v1360, 0.0
    %1367 = vadd.xlane.f32.xlu0 %v1366
    %v1368 = vpop.xlane.xlu0 %1367
    %v1369 = vsel %vm845, %v1362, 0.0
    %1370 = vadd.xlane.f32.xlu0 %v1369
    %v1371 = vpop.xlane.xlu0 %1370
    %v1372 = vrcp.pop %v1365
    %v1373 = vrcp.pop %v1368
    %v1374 = vrcp.pop %v1371
    %v1375 = vmul.f32 %v1358, %v1372
    %v1376 = vmul.f32 %v1360, %v1373
    %v1377 = vmul.f32 %v1362, %v1374
    %1378 = vrot.lane.b32.xlu0 %v1235, 78
    %v1379 = vpop.permute.xlu0 %1378
    %1380 = vrot.lane.b32.xlu0 %v1236, 78
    %v1381 = vpop.permute.xlu0 %1380
    %1382 = vrot.lane.b32.xlu0 %v1237, 78
    %v1383 = vpop.permute.xlu0 %1382
    %v1387 = vsel %vm838, %v1375, 0
    %v1390 = vsel %vm838, %v1376, 0
    %v1393 = vsel %vm838, %v1377, 0
    %v1395 = vsel %vm253, %v1383, 0
    %1397 = vmatprep.subr.mxu0 0.0
    %1398 = vmatpush1.msra.mxu0 0.0
    %1399 = vmatprep.subr.mxu0 0.0
    %1400 = vmatpush1.msra.mxu0 0.0
    %1401 = vmatprep.subr.mxu0 0.0
    %1402 = vmatpush1.msra.mxu0 0.0
    %1403 = vmatprep.subr.mxu0 0.0
    %1404 = vmatpush1.msra.mxu0 0.0
    %1405 = vmatprep.subr.mxu0 0.0
    %1406 = vmatpush1.msra.mxu0 0.0
    %1407 = vmatprep.subr.mxu0 0.0
    %1408 = vmatpush1.msra.mxu0 0.0
    %1409 = vmatprep.subr.mxu0 0.0
    %1410 = vmatpush1.msra.mxu0 0.0
    %1411 = vmatprep.subr.mxu0 0.0
    %1412 = vmatpush1.msra.mxu0 0.0
    %1413 = vmatprep.subr.mxu0 0.0
    %1414 = vmatpush1.msra.mxu0 0.0
    %1415 = vmatprep.subr.mxu0 0.0
    %1416 = vmatpush1.msra.mxu0 0.0
    %1417 = vmatprep.subr.mxu0 0.0
    %1418 = vmatpush1.msra.mxu0 0.0
    %1419 = vmatprep.subr.mxu0 0.0
    %1420 = vmatpush1.msra.mxu0 0.0
    %1421 = vmatprep.subr.mxu0 0.0
    %1422 = vmatpush1.msra.mxu0 0.0
    %1423 = vmatprep.subr.mxu0 0.0
    %1424 = vmatpush1.msra.mxu0 %v1395
    %1425 = vmatprep.subr.mxu0 0.0
    %1426 = vmatpush1.msra.mxu0 %v1381
    %1427 = vmatprep.subr.mxu0 0.0
    %1428 = vmatpush1.msra.mxu0 %v1379
    %1429 = vmatprep.subr.mxu0 0.0
    %1430 = vmatpush2.msra.mxu0 0.0
    %1431 = vmatprep.subr.mxu0 0.0
    %1432 = vmatpush2.msra.mxu0 0.0
    %1433 = vmatprep.subr.mxu0 0.0
    %1434 = vmatpush2.msra.mxu0 0.0
    %1435 = vmatprep.subr.mxu0 0.0
    %1436 = vmatpush2.msra.mxu0 0.0
    %1437 = vmatprep.subr.mxu0 0.0
    %1438 = vmatpush2.msra.mxu0 0.0
    %1439 = vmatprep.subr.mxu0 0.0
    %1440 = vmatpush2.msra.mxu0 0.0
    %1441 = vmatprep.subr.mxu0 0.0
    %1442 = vmatpush2.msra.mxu0 0.0
    %1443 = vmatprep.subr.mxu0 0.0
    %1444 = vmatpush2.msra.mxu0 0.0
    %1445 = vmatprep.subr.mxu0 0.0
    %1446 = vmatpush2.msra.mxu0 0.0
    %1447 = vmatprep.subr.mxu0 0.0
    %1448 = vmatpush2.msra.mxu0 0.0
    %1449 = vmatprep.subr.mxu0 0.0
    %1450 = vmatpush2.msra.mxu0 0.0
    %1451 = vmatprep.subr.mxu0 0.0
    %1452 = vmatpush2.msra.mxu0 0.0
    %1453 = vmatprep.subr.mxu0 0.0
    %1454 = vmatpush2.msra.mxu0 0.0
    %1455 = vmatprep.subr.mxu0 0.0
    %1456 = vmatpush2.msra.mxu0 0.0
    %1457 = vmatprep.subr.mxu0 0.0
    %1458 = vmatpush2.msra.mxu0 0.0
    %1459 = vmatprep.subr.mxu0 0.0
    %1460 = vmatpush2.msra.mxu0 0.0
    %1461 = vmatprep.mubr.f32.mxu0 0.0
    %1462 = vmatmul.mubr.f32.gmra.mxu0 %v1387
    %v1463 = vpop.f32.mrf.mxu0
    %v1464 = vadd.f32 0.0, %v1463
    %v1465 = vpop.f32.mrf.mxu0
    %1466 = vmatprep.mubr.f32.mxu0 0.0
    %1467 = vmatmul.mubr.f32.gmra.mxu0 %v1390
    %v1468 = vpop.f32.mrf.mxu0
    %v1469 = vadd.f32 0.0, %v1468
    %v1470 = vpop.f32.mrf.mxu0
    %1471 = vmatprep.mubr.f32.mxu0 0.0
    %1472 = vmatmul.mubr.f32.gmra.mxu0 %v1393
    %v1473 = vpop.f32.mrf.mxu0
    %v1474 = vadd.f32 0.0, %v1473
    %v1475 = vpop.f32.mrf.mxu0
    %1476 = vdwg.mxu0
    %1480 = vrot.lane.b32.xlu0 %v1464, 10
    %v1481 = vpop.permute.xlu0 %1480
    %1482 = vrot.lane.b32.xlu0 %v1469, 10
    %v1483 = vpop.permute.xlu0 %1482
    %1484 = vrot.lane.b32.xlu0 %v1474, 10
    %v1485 = vpop.permute.xlu0 %1484
    %vm1489 = vcmask 121936
    %1490 = vst.msk [vmem:[#allocation6] sm:$0xff] %vm1489, %v1481
    %1491 = vst.msk [vmem:[#allocation6 + $0x8] sm:$0xff] %vm1489, %v1483
    %vm1492 = vcmask 115792
    %1493 = vst.msk [vmem:[#allocation6 + $0x10] sm:$0x3] %vm1492, %v1485
    %v1494 = vld [vmem:[#allocation5] sm:$0xff]
    %v1495 = vld [vmem:[#allocation5 + $0x8] sm:$0xff]
    %v1496 = vld [vmem:[#allocation5 + $0x10] sm:$0x3]
    %1500 = vrot.lane.b32.xlu0 %v1494, 113
    %v1501 = vpop.permute.xlu0 %1500
    %1502 = vrot.lane.b32.xlu0 %v1495, 113
    %v1503 = vpop.permute.xlu0 %1502
    %1504 = vrot.lane.b32.xlu0 %v1496, 113
    %v1505 = vpop.permute.xlu0 %1504
    %1506 = vrot.lane.b32.xlu0 %v1494, 93
    %v1507 = vpop.permute.xlu0 %1506
    %1508 = vrot.lane.b32.xlu0 %v1495, 93
    %v1509 = vpop.permute.xlu0 %1508
    %1510 = vrot.lane.b32.xlu0 %v1496, 93
    %v1511 = vpop.permute.xlu0 %1510
    %v1512 = vsel %vm745, %v1501, 0
    %v1514 = vsel %vm745, %v1503, 0
    %v1516 = vsel %vm745, %v1505, 0
    %v1518 = vsel %vm745, %v1507, 0
    %v1520 = vsel %vm745, %v1509, 0
    %v1522 = vsel %vm745, %v1511, 0
    %1524 = vmatprep.subr.mxu0 0.0
    %1525 = vmatpush1.xpose.msra.mxu0 0.0
    %1526 = vmatprep.subr.mxu0 0.0
    %1527 = vmatpush1.xpose.msra.mxu0 0.0
    %1528 = vmatprep.subr.mxu0 0.0
    %1529 = vmatpush1.xpose.msra.mxu0 0.0
    %1530 = vmatprep.subr.mxu0 0.0
    %1531 = vmatpush1.xpose.msra.mxu0 0.0
    %1532 = vmatprep.subr.mxu0 0.0
    %1533 = vmatpush1.xpose.msra.mxu0 0.0
    %1534 = vmatprep.subr.mxu0 0.0
    %1535 = vmatpush1.xpose.msra.mxu0 0.0
    %1536 = vmatprep.subr.mxu0 0.0
    %1537 = vmatpush1.xpose.msra.mxu0 0.0
    %1538 = vmatprep.subr.mxu0 0.0
    %1539 = vmatpush1.xpose.msra.mxu0 0.0
    %1540 = vmatprep.subr.mxu0 0.0
    %1541 = vmatpush1.xpose.msra.mxu0 0.0
    %1542 = vmatprep.subr.mxu0 0.0
    %1543 = vmatpush1.xpose.msra.mxu0 0.0
    %1544 = vmatprep.subr.mxu0 0.0
    %1545 = vmatpush1.xpose.msra.mxu0 0.0
    %1546 = vmatprep.subr.mxu0 0.0
    %1547 = vmatpush1.xpose.msra.mxu0 0.0
    %1548 = vmatprep.subr.mxu0 0.0
    %1549 = vmatpush1.xpose.msra.mxu0 0.0
    %1550 = vmatprep.subr.mxu0 0.0
    %1551 = vmatpush1.xpose.msra.mxu0 %v1522
    %1552 = vmatprep.subr.mxu0 0.0
    %1553 = vmatpush1.xpose.msra.mxu0 %v1520
    %1554 = vmatprep.subr.mxu0 0.0
    %1555 = vmatpush1.xpose.msra.mxu0 %v1518
    %1556 = vmatprep.subr.mxu0 0.0
    %1557 = vmatpush2.xpose.msra.mxu0 0.0
    %1558 = vmatprep.subr.mxu0 0.0
    %1559 = vmatpush2.xpose.msra.mxu0 0.0
    %1560 = vmatprep.subr.mxu0 0.0
    %1561 = vmatpush2.xpose.msra.mxu0 0.0
    %1562 = vmatprep.subr.mxu0 0.0
    %1563 = vmatpush2.xpose.msra.mxu0 0.0
    %1564 = vmatprep.subr.mxu0 0.0
    %1565 = vmatpush2.xpose.msra.mxu0 0.0
    %1566 = vmatprep.subr.mxu0 0.0
    %1567 = vmatpush2.xpose.msra.mxu0 0.0
    %1568 = vmatprep.subr.mxu0 0.0
    %1569 = vmatpush2.xpose.msra.mxu0 0.0
    %1570 = vmatprep.subr.mxu0 0.0
    %1571 = vmatpush2.xpose.msra.mxu0 0.0
    %1572 = vmatprep.subr.mxu0 0.0
    %1573 = vmatpush2.xpose.msra.mxu0 0.0
    %1574 = vmatprep.subr.mxu0 0.0
    %1575 = vmatpush2.xpose.msra.mxu0 0.0
    %1576 = vmatprep.subr.mxu0 0.0
    %1577 = vmatpush2.xpose.msra.mxu0 0.0
    %1578 = vmatprep.subr.mxu0 0.0
    %1579 = vmatpush2.xpose.msra.mxu0 0.0
    %1580 = vmatprep.subr.mxu0 0.0
    %1581 = vmatpush2.xpose.msra.mxu0 0.0
    %1582 = vmatprep.subr.mxu0 0.0
    %1583 = vmatpush2.xpose.msra.mxu0 0.0
    %1584 = vmatprep.subr.mxu0 0.0
    %1585 = vmatpush2.xpose.msra.mxu0 0.0
    %1586 = vmatprep.subr.mxu0 0.0
    %1587 = vmatpush2.xpose.msra.mxu0 0.0
    %1588 = vmatprep.mubr.f32.mxu0 0.0
    %1589 = vmatmul.mubr.f32.gmra.mxu0 %v1512
    %v1590 = vpop.f32.mrf.mxu0
    %v1591 = vadd.f32 %v561, %v1590
    %v1592 = vpop.f32.mrf.mxu0
    %1593 = vmatprep.mubr.f32.mxu0 0.0
    %1594 = vmatmul.mubr.f32.gmra.mxu0 %v1514
    %v1595 = vpop.f32.mrf.mxu0
    %v1596 = vadd.f32 %v562, %v1595
    %v1597 = vpop.f32.mrf.mxu0
    %1598 = vmatprep.mubr.f32.mxu0 0.0
    %1599 = vmatmul.mubr.f32.gmra.mxu0 %v1516
    %v1600 = vpop.f32.mrf.mxu0
    %v1601 = vadd.f32 %v563, %v1600
    %v1602 = vpop.f32.mrf.mxu0
    %1603 = vdwg.mxu0
    %v1604 = vsel %vm838, %v1591, -inf
    %1605 = vmax.xlane.f32.xlu0 %v1604
    %v1606 = vpop.xlane.xlu0 %1605
    %v1607 = vsel %vm838, %v1596, -inf
    %1608 = vmax.xlane.f32.xlu0 %v1607
    %v1609 = vpop.xlane.xlu0 %1608
    %v1610 = vsel %vm845, %v1601, -inf
    %1611 = vmax.xlane.f32.xlu0 %v1610
    %v1612 = vpop.xlane.xlu0 %1611
    %v1613 = vsub.f32 %v1591, %v1606
    %v1614 = vsub.f32 %v1596, %v1609
    %v1615 = vsub.f32 %v1601, %v1612
    %v1616 = vmul.f32 %v1613, 1.442695
    %v1617 = vpow.pop %v1616
    %v1618 = vmul.f32 %v1614, 1.442695
    %v1619 = vpow.pop %v1618
    %v1620 = vmul.f32 %v1615, 1.442695
    %v1621 = vpow.pop %v1620
    %v1622 = vsel %vm838, %v1617, 0.0
    %1623 = vadd.xlane.f32.xlu0 %v1622
    %v1624 = vpop.xlane.xlu0 %1623
    %v1625 = vsel %vm838, %v1619, 0.0
    %1626 = vadd.xlane.f32.xlu0 %v1625
    %v1627 = vpop.xlane.xlu0 %1626
    %v1628 = vsel %vm845, %v1621, 0.0
    %1629 = vadd.xlane.f32.xlu0 %v1628
    %v1630 = vpop.xlane.xlu0 %1629
    %v1631 = vrcp.pop %v1624
    %v1632 = vrcp.pop %v1627
    %v1633 = vrcp.pop %v1630
    %v1634 = vmul.f32 %v1617, %v1631
    %v1635 = vmul.f32 %v1619, %v1632
    %v1636 = vmul.f32 %v1621, %v1633
    %1637 = vrot.lane.b32.xlu0 %v1494, 73
    %v1638 = vpop.permute.xlu0 %1637
    %1639 = vrot.lane.b32.xlu0 %v1495, 73
    %v1640 = vpop.permute.xlu0 %1639
    %1641 = vrot.lane.b32.xlu0 %v1496, 73
    %v1642 = vpop.permute.xlu0 %1641
    %v1646 = vsel %vm838, %v1634, 0
    %v1649 = vsel %vm838, %v1635, 0
    %v1652 = vsel %vm838, %v1636, 0
    %v1654 = vsel %vm253, %v1642, 0
    %1656 = vmatprep.subr.mxu0 0.0
    %1657 = vmatpush1.msra.mxu0 0.0
    %1658 = vmatprep.subr.mxu0 0.0
    %1659 = vmatpush1.msra.mxu0 0.0
    %1660 = vmatprep.subr.mxu0 0.0
    %1661 = vmatpush1.msra.mxu0 0.0
    %1662 = vmatprep.subr.mxu0 0.0
    %1663 = vmatpush1.msra.mxu0 0.0
    %1664 = vmatprep.subr.mxu0 0.0
    %1665 = vmatpush1.msra.mxu0 0.0
    %1666 = vmatprep.subr.mxu0 0.0
    %1667 = vmatpush1.msra.mxu0 0.0
    %1668 = vmatprep.subr.mxu0 0.0
    %1669 = vmatpush1.msra.mxu0 0.0
    %1670 = vmatprep.subr.mxu0 0.0
    %1671 = vmatpush1.msra.mxu0 0.0
    %1672 = vmatprep.subr.mxu0 0.0
    %1673 = vmatpush1.msra.mxu0 0.0
    %1674 = vmatprep.subr.mxu0 0.0
    %1675 = vmatpush1.msra.mxu0 0.0
    %1676 = vmatprep.subr.mxu0 0.0
    %1677 = vmatpush1.msra.mxu0 0.0
    %1678 = vmatprep.subr.mxu0 0.0
    %1679 = vmatpush1.msra.mxu0 0.0
    %1680 = vmatprep.subr.mxu0 0.0
    %1681 = vmatpush1.msra.mxu0 0.0
    %1682 = vmatprep.subr.mxu0 0.0
    %1683 = vmatpush1.msra.mxu0 %v1654
    %1684 = vmatprep.subr.mxu0 0.0
    %1685 = vmatpush1.msra.mxu0 %v1640
    %1686 = vmatprep.subr.mxu0 0.0
    %1687 = vmatpush1.msra.mxu0 %v1638
    %1688 = vmatprep.subr.mxu0 0.0
    %1689 = vmatpush2.msra.mxu0 0.0
    %1690 = vmatprep.subr.mxu0 0.0
    %1691 = vmatpush2.msra.mxu0 0.0
    %1692 = vmatprep.subr.mxu0 0.0
    %1693 = vmatpush2.msra.mxu0 0.0
    %1694 = vmatprep.subr.mxu0 0.0
    %1695 = vmatpush2.msra.mxu0 0.0
    %1696 = vmatprep.subr.mxu0 0.0
    %1697 = vmatpush2.msra.mxu0 0.0
    %1698 = vmatprep.subr.mxu0 0.0
    %1699 = vmatpush2.msra.mxu0 0.0
    %1700 = vmatprep.subr.mxu0 0.0
    %1701 = vmatpush2.msra.mxu0 0.0
    %1702 = vmatprep.subr.mxu0 0.0
    %1703 = vmatpush2.msra.mxu0 0.0
    %1704 = vmatprep.subr.mxu0 0.0
    %1705 = vmatpush2.msra.mxu0 0.0
    %1706 = vmatprep.subr.mxu0 0.0
    %1707 = vmatpush2.msra.mxu0 0.0
    %1708 = vmatprep.subr.mxu0 0.0
    %1709 = vmatpush2.msra.mxu0 0.0
    %1710 = vmatprep.subr.mxu0 0.0
    %1711 = vmatpush2.msra.mxu0 0.0
    %1712 = vmatprep.subr.mxu0 0.0
    %1713 = vmatpush2.msra.mxu0 0.0
    %1714 = vmatprep.subr.mxu0 0.0
    %1715 = vmatpush2.msra.mxu0 0.0
    %1716 = vmatprep.subr.mxu0 0.0
    %1717 = vmatpush2.msra.mxu0 0.0
    %1718 = vmatprep.subr.mxu0 0.0
    %1719 = vmatpush2.msra.mxu0 0.0
    %1720 = vmatprep.mubr.f32.mxu0 0.0
    %1721 = vmatmul.mubr.f32.gmra.mxu0 %v1646
    %v1722 = vpop.f32.mrf.mxu0
    %v1723 = vadd.f32 0.0, %v1722
    %v1724 = vpop.f32.mrf.mxu0
    %1725 = vmatprep.mubr.f32.mxu0 0.0
    %1726 = vmatmul.mubr.f32.gmra.mxu0 %v1649
    %v1727 = vpop.f32.mrf.mxu0
    %v1728 = vadd.f32 0.0, %v1727
    %v1729 = vpop.f32.mrf.mxu0
    %1730 = vmatprep.mubr.f32.mxu0 0.0
    %1731 = vmatmul.mubr.f32.gmra.mxu0 %v1652
    %v1732 = vpop.f32.mrf.mxu0
    %v1733 = vadd.f32 0.0, %v1732
    %v1734 = vpop.f32.mrf.mxu0
    %1735 = vdwg.mxu0
    %1739 = vrot.lane.b32.xlu0 %v1723, 15
    %v1740 = vpop.permute.xlu0 %1739
    %1741 = vrot.lane.b32.xlu0 %v1728, 15
    %v1742 = vpop.permute.xlu0 %1741
    %1743 = vrot.lane.b32.xlu0 %v1733, 15
    %v1744 = vpop.permute.xlu0 %1743
    %vm1748 = vcmask 162936
    %1749 = vst.msk [vmem:[#allocation6] sm:$0xff] %vm1748, %v1740
    %1750 = vst.msk [vmem:[#allocation6 + $0x8] sm:$0xff] %vm1748, %v1742
    %vm1751 = vcmask 156792
    %1752 = vst.msk [vmem:[#allocation6 + $0x10] sm:$0x3] %vm1751, %v1744
    %v1753 = vld [vmem:[#allocation6] sm:$0xff]
    %v1754 = vld [vmem:[#allocation6 + $0x8] sm:$0xff]
    %v1755 = vld [vmem:[#allocation6 + $0x10] sm:$0x3]
    %v1756 = vld [vmem:[%s11] sm:$0xff]
    %v1757 = vld [vmem:[%s11 + $0x8] sm:$0xff]
    %v1758 = vld [vmem:[%s11 + $0x10] sm:$0xf]
    %v1759 = vld [vmem:[%s12] sm:$0x1]
    %v1761 = vlaneseq
    %v1762 = vshrl.u32 %v1761, 7
    %v1763 = vsub.s32 0, %v1762
    %v1764 = vrot.slane %v1759, %v1763
    %v1767 = vsel %vm566, %v1753, 0
    %v1770 = vsel %vm566, %v1754, 0
    %v1773 = vsel %vm566, %v1755, 0
    %v1776 = vsel %vm644, %v1758, 0
    %1778 = vmatprep.subr.mxu0 0.0
    %1779 = vmatpush1.msra.mxu0 0.0
    %1780 = vmatprep.subr.mxu0 0.0
    %1781 = vmatpush1.msra.mxu0 0.0
    %1782 = vmatprep.subr.mxu0 0.0
    %1783 = vmatpush1.msra.mxu0 0.0
    %1784 = vmatprep.subr.mxu0 0.0
    %1785 = vmatpush1.msra.mxu0 0.0
    %1786 = vmatprep.subr.mxu0 0.0
    %1787 = vmatpush1.msra.mxu0 0.0
    %1788 = vmatprep.subr.mxu0 0.0
    %1789 = vmatpush1.msra.mxu0 0.0
    %1790 = vmatprep.subr.mxu0 0.0
    %1791 = vmatpush1.msra.mxu0 0.0
    %1792 = vmatprep.subr.mxu0 0.0
    %1793 = vmatpush1.msra.mxu0 0.0
    %1794 = vmatprep.subr.mxu0 0.0
    %1795 = vmatpush1.msra.mxu0 0.0
    %1796 = vmatprep.subr.mxu0 0.0
    %1797 = vmatpush1.msra.mxu0 0.0
    %1798 = vmatprep.subr.mxu0 0.0
    %1799 = vmatpush1.msra.mxu0 0.0
    %1800 = vmatprep.subr.mxu0 0.0
    %1801 = vmatpush1.msra.mxu0 0.0
    %1802 = vmatprep.subr.mxu0 0.0
    %1803 = vmatpush1.msra.mxu0 0.0
    %1804 = vmatprep.subr.mxu0 0.0
    %1805 = vmatpush1.msra.mxu0 %v1776
    %1806 = vmatprep.subr.mxu0 0.0
    %1807 = vmatpush1.msra.mxu0 %v1757
    %1808 = vmatprep.subr.mxu0 0.0
    %1809 = vmatpush1.msra.mxu0 %v1756
    %1810 = vmatprep.subr.mxu0 0.0
    %1811 = vmatpush2.msra.mxu0 0.0
    %1812 = vmatprep.subr.mxu0 0.0
    %1813 = vmatpush2.msra.mxu0 0.0
    %1814 = vmatprep.subr.mxu0 0.0
    %1815 = vmatpush2.msra.mxu0 0.0
    %1816 = vmatprep.subr.mxu0 0.0
    %1817 = vmatpush2.msra.mxu0 0.0
    %1818 = vmatprep.subr.mxu0 0.0
    %1819 = vmatpush2.msra.mxu0 0.0
    %1820 = vmatprep.subr.mxu0 0.0
    %1821 = vmatpush2.msra.mxu0 0.0
    %1822 = vmatprep.subr.mxu0 0.0
    %1823 = vmatpush2.msra.mxu0 0.0
    %1824 = vmatprep.subr.mxu0 0.0
    %1825 = vmatpush2.msra.mxu0 0.0
    %1826 = vmatprep.subr.mxu0 0.0
    %1827 = vmatpush2.msra.mxu0 0.0
    %1828 = vmatprep.subr.mxu0 0.0
    %1829 = vmatpush2.msra.mxu0 0.0
    %1830 = vmatprep.subr.mxu0 0.0
    %1831 = vmatpush2.msra.mxu0 0.0
    %1832 = vmatprep.subr.mxu0 0.0
    %1833 = vmatpush2.msra.mxu0 0.0
    %1834 = vmatprep.subr.mxu0 0.0
    %1835 = vmatpush2.msra.mxu0 0.0
    %1836 = vmatprep.subr.mxu0 0.0
    %1837 = vmatpush2.msra.mxu0 0.0
    %1838 = vmatprep.subr.mxu0 0.0
    %1839 = vmatpush2.msra.mxu0 0.0
    %1840 = vmatprep.subr.mxu0 0.0
    %1841 = vmatpush2.msra.mxu0 0.0
    %1842 = vmatprep.mubr.f32.mxu0 0.0
    %1843 = vmatmul.mubr.f32.gmra.mxu0 %v1767
    %v1844 = vpop.f32.mrf.mxu0
    %v1845 = vadd.f32 %v1764, %v1844
    %v1846 = vpop.f32.mrf.mxu0
    %1847 = vmatprep.mubr.f32.mxu0 0.0
    %1848 = vmatmul.mubr.f32.gmra.mxu0 %v1770
    %v1849 = vpop.f32.mrf.mxu0
    %v1850 = vadd.f32 %v1764, %v1849
    %v1851 = vpop.f32.mrf.mxu0
    %1852 = vmatprep.mubr.f32.mxu0 0.0
    %1853 = vmatmul.mubr.f32.gmra.mxu0 %v1773
    %v1854 = vpop.f32.mrf.mxu0
    %v1855 = vadd.f32 %v1764, %v1854
    %v1856 = vpop.f32.mrf.mxu0
    %1857 = vdwg.mxu0
    %v1858 = vadd.f32 %v558, %v1845
    %v1859 = vadd.f32 %v559, %v1850
    %v1860 = vadd.f32 %v560, %v1855
    %v1861 = vld [vmem:[%s13] sm:$0x1]
    %v1862 = vld [vmem:[%s14] sm:$0x1]
    %v1863 = vsel %vm566, %v1858, 0.0
    %1864 = vadd.xlane.f32.xlu0 %v1863
    %v1865 = vpop.xlane.xlu0 %1864
    %v1866 = vsel %vm566, %v1859, 0.0
    %1867 = vadd.xlane.f32.xlu0 %v1866
    %v1868 = vpop.xlane.xlu0 %1867
    %v1869 = vsel %vm452, %v1860, 0.0
    %1870 = vadd.xlane.f32.xlu0 %v1869
    %v1871 = vpop.xlane.xlu0 %1870
    %v1872 = vmul.f32 %v1865, %v576
    %v1873 = vmul.f32 %v1868, %v576
    %v1874 = vmul.f32 %v1871, %v576
    %v1875 = vsub.f32 %v1858, %v1872
    %v1876 = vsub.f32 %v1859, %v1873
    %v1877 = vsub.f32 %v1860, %v1874
    %v1878 = vmul.f32 %v1875, %v1875
    %v1879 = vmul.f32 %v1876, %v1876
    %v1880 = vmul.f32 %v1877, %v1877
    %v1881 = vsel %vm566, %v1878, 0.0
    %1882 = vadd.xlane.f32.xlu0 %v1881
    %v1883 = vpop.xlane.xlu0 %1882
    %v1884 = vsel %vm566, %v1879, 0.0
    %1885 = vadd.xlane.f32.xlu0 %v1884
    %v1886 = vpop.xlane.xlu0 %1885
    %v1887 = vsel %vm452, %v1880, 0.0
    %1888 = vadd.xlane.f32.xlu0 %v1887
    %v1889 = vpop.xlane.xlu0 %1888
    %v1890 = vmul.f32 %v1883, %v576
    %v1891 = vmul.f32 %v1886, %v576
    %v1892 = vmul.f32 %v1889, %v576
    %v1893 = vadd.f32 %v1890, 1e-05
    %v1894 = vadd.f32 %v1891, 1e-05
    %v1895 = vadd.f32 %v1892, 1e-05
    %v1896 = vrsqrt.pop %v1893
    %v1897 = vrsqrt.pop %v1894
    %v1898 = vrsqrt.pop %v1895
    %v1899 = vmul.f32 %v1875, %v1896
    %v1900 = vmul.f32 %v1876, %v1897
    %v1901 = vmul.f32 %v1877, %v1898
    %v1903 = vlaneseq
    %v1904 = vshrl.u32 %v1903, 7
    %v1905 = vsub.s32 0, %v1904
    %v1906 = vrot.slane %v1861, %v1905
    %v1908 = vmul.f32 %v1899, %v1906
    %v1909 = vmul.f32 %v1900, %v1906
    %v1910 = vmul.f32 %v1901, %v1906
    %v1912 = vlaneseq
    %v1913 = vshrl.u32 %v1912, 7
    %v1914 = vsub.s32 0, %v1913
    %v1915 = vrot.slane %v1862, %v1914
    %v1917 = vadd.f32 %v1908, %v1915
    %v1918 = vadd.f32 %v1909, %v1915
    %v1919 = vadd.f32 %v1910, %v1915
    %v1920 = vld [vmem:[%s15] sm:$0xff]
    %v1921 = vld [vmem:[%s15 + $0x8] sm:$0xff]
    %v1922 = vld [vmem:[%s15 + $0x10] sm:$0xf]
    %v1923 = vld [vmem:[%s16] sm:$0x1]
    %v1925 = vlaneseq
    %v1926 = vshrl.u32 %v1925, 7
    %v1927 = vsub.s32 0, %v1926
    %v1928 = vrot.slane %v1923, %v1927
    %v1931 = vsel %vm566, %v1917, 0
    %v1934 = vsel %vm566, %v1918, 0
    %v1937 = vsel %vm566, %v1919, 0
    %v1940 = vsel %vm644, %v1922, 0
    %1942 = vmatprep.subr.mxu0 0.0
    %1943 = vmatpush1.msra.mxu0 0.0
    %1944 = vmatprep.subr.mxu0 0.0
    %1945 = vmatpush1.msra.mxu0 0.0
    %1946 = vmatprep.subr.mxu0 0.0
    %1947 = vmatpush1.msra.mxu0 0.0
    %1948 = vmatprep.subr.mxu0 0.0
    %1949 = vmatpush1.msra.mxu0 0.0
    %1950 = vmatprep.subr.mxu0 0.0
    %1951 = vmatpush1.msra.mxu0 0.0
    %1952 = vmatprep.subr.mxu0 0.0
    %1953 = vmatpush1.msra.mxu0 0.0
    %1954 = vmatprep.subr.mxu0 0.0
    %1955 = vmatpush1.msra.mxu0 0.0
    %1956 = vmatprep.subr.mxu0 0.0
    %1957 = vmatpush1.msra.mxu0 0.0
    %1958 = vmatprep.subr.mxu0 0.0
    %1959 = vmatpush1.msra.mxu0 0.0
    %1960 = vmatprep.subr.mxu0 0.0
    %1961 = vmatpush1.msra.mxu0 0.0
    %1962 = vmatprep.subr.mxu0 0.0
    %1963 = vmatpush1.msra.mxu0 0.0
    %1964 = vmatprep.subr.mxu0 0.0
    %1965 = vmatpush1.msra.mxu0 0.0
    %1966 = vmatprep.subr.mxu0 0.0
    %1967 = vmatpush1.msra.mxu0 0.0
    %1968 = vmatprep.subr.mxu0 0.0
    %1969 = vmatpush1.msra.mxu0 %v1940
    %1970 = vmatprep.subr.mxu0 0.0
    %1971 = vmatpush1.msra.mxu0 %v1921
    %1972 = vmatprep.subr.mxu0 0.0
    %1973 = vmatpush1.msra.mxu0 %v1920
    %1974 = vmatprep.subr.mxu0 0.0
    %1975 = vmatpush2.msra.mxu0 0.0
    %1976 = vmatprep.subr.mxu0 0.0
    %1977 = vmatpush2.msra.mxu0 0.0
    %1978 = vmatprep.subr.mxu0 0.0
    %1979 = vmatpush2.msra.mxu0 0.0
    %1980 = vmatprep.subr.mxu0 0.0
    %1981 = vmatpush2.msra.mxu0 0.0
    %1982 = vmatprep.subr.mxu0 0.0
    %1983 = vmatpush2.msra.mxu0 0.0
    %1984 = vmatprep.subr.mxu0 0.0
    %1985 = vmatpush2.msra.mxu0 0.0
    %1986 = vmatprep.subr.mxu0 0.0
    %1987 = vmatpush2.msra.mxu0 0.0
    %1988 = vmatprep.subr.mxu0 0.0
    %1989 = vmatpush2.msra.mxu0 0.0
    %1990 = vmatprep.subr.mxu0 0.0
    %1991 = vmatpush2.msra.mxu0 0.0
    %1992 = vmatprep.subr.mxu0 0.0
    %1993 = vmatpush2.msra.mxu0 0.0
    %1994 = vmatprep.subr.mxu0 0.0
    %1995 = vmatpush2.msra.mxu0 0.0
    %1996 = vmatprep.subr.mxu0 0.0
    %1997 = vmatpush2.msra.mxu0 0.0
    %1998 = vmatprep.subr.mxu0 0.0
    %1999 = vmatpush2.msra.mxu0 0.0
    %2000 = vmatprep.subr.mxu0 0.0
    %2001 = vmatpush2.msra.mxu0 0.0
    %2002 = vmatprep.subr.mxu0 0.0
    %2003 = vmatpush2.msra.mxu0 0.0
    %2004 = vmatprep.subr.mxu0 0.0
    %2005 = vmatpush2.msra.mxu0 0.0
    %2006 = vmatprep.mubr.f32.mxu0 0.0
    %2007 = vmatmul.mubr.f32.gmra.mxu0 %v1931
    %v2008 = vpop.f32.mrf.mxu0
    %v2009 = vadd.f32 %v1928, %v2008
    %v2010 = vpop.f32.mrf.mxu0
    %2011 = vmatprep.mubr.f32.mxu0 0.0
    %2012 = vmatmul.mubr.f32.gmra.mxu0 %v1934
    %v2013 = vpop.f32.mrf.mxu0
    %v2014 = vadd.f32 %v1928, %v2013
    %v2015 = vpop.f32.mrf.mxu0
    %2016 = vmatprep.mubr.f32.mxu0 0.0
    %2017 = vmatmul.mubr.f32.gmra.mxu0 %v1937
    %v2018 = vpop.f32.mrf.mxu0
    %v2019 = vadd.f32 %v1928, %v2018
    %v2020 = vpop.f32.mrf.mxu0
    %2021 = vdwg.mxu0
    %v2022 = vmul.f32 %v2009, 0.5
    %v2023 = vmul.f32 %v2014, 0.5
    %v2024 = vmul.f32 %v2019, 0.5
    %v2025 = vmul.f32 %v2009, 0.70710677
    %v2026 = vmul.f32 %v2014, 0.70710677
    %v2027 = vmul.f32 %v2019, 0.70710677
    %vm2028 = vcmp.ge.f32.partialorder %v2025, 0.0
    %vm2029 = vcmp.ge.f32.partialorder %v2026, 0.0
    %vm2030 = vcmp.ge.f32.partialorder %v2027, 0.0
    %v2031 = vsel %vm2028, 1.0, -1.0
    %v2032 = vsel %vm2029, 1.0, -1.0
    %v2033 = vsel %vm2030, 1.0, -1.0
    %v2034 = vand.u32 2147483647, %v2025
    %v2035 = vand.u32 2147483647, %v2026
    %v2036 = vand.u32 2147483647, %v2027
    %v2037 = vmul.f32 %v2034, 0.3275911
    %v2038 = vmul.f32 %v2035, 0.3275911
    %v2039 = vmul.f32 %v2036, 0.3275911
    %v2040 = vadd.f32 %v2037, 1.0
    %v2041 = vadd.f32 %v2038, 1.0
    %v2042 = vadd.f32 %v2039, 1.0
    %v2043 = vrcp.pop %v2040
    %v2044 = vmul.f32 1.0, %v2043
    %v2045 = vrcp.pop %v2041
    %v2046 = vmul.f32 1.0, %v2045
    %v2047 = vrcp.pop %v2042
    %v2048 = vmul.f32 1.0, %v2047
    %v2049 = vmul.f32 %v2044, 1.0614054
    %v2050 = vmul.f32 %v2046, 1.0614054
    %v2051 = vmul.f32 %v2048, 1.0614054
    %v2052 = vadd.f32 %v2049, -1.4531521
    %v2053 = vadd.f32 %v2050, -1.4531521
    %v2054 = vadd.f32 %v2051, -1.4531521
    %v2055 = vmul.f32 %v2052, %v2044
    %v2056 = vmul.f32 %v2053, %v2046
    %v2057 = vmul.f32 %v2054, %v2048
    %v2058 = vadd.f32 %v2055, 1.4214138
    %v2059 = vadd.f32 %v2056, 1.4214138
    %v2060 = vadd.f32 %v2057, 1.4214138
    %v2061 = vmul.f32 %v2058, %v2044
    %v2062 = vmul.f32 %v2059, %v2046
    %v2063 = vmul.f32 %v2060, %v2048
    %v2064 = vadd.f32 %v2061, -0.28449672
    %v2065 = vadd.f32 %v2062, -0.28449672
    %v2066 = vadd.f32 %v2063, -0.28449672
    %v2067 = vmul.f32 %v2064, %v2044
    %v2068 = vmul.f32 %v2065, %v2046
    %v2069 = vmul.f32 %v2066, %v2048
    %v2070 = vadd.f32 %v2067, 0.2548296
    %v2071 = vadd.f32 %v2068, 0.2548296
    %v2072 = vadd.f32 %v2069, 0.2548296
    %v2073 = vmul.f32 %v2070, %v2044
    %v2074 = vmul.f32 %v2071, %v2046
    %v2075 = vmul.f32 %v2072, %v2048
    %v2076 = vsub.f32 0.0, %v2034
    %v2077 = vsub.f32 0.0, %v2035
    %v2078 = vsub.f32 0.0, %v2036
    %v2079 = vmul.f32 %v2076, %v2034
    %v2080 = vmul.f32 %v2077, %v2035
    %v2081 = vmul.f32 %v2078, %v2036
    %v2082 = vmul.f32 %v2079, 1.442695
    %v2083 = vpow.pop %v2082
    %v2084 = vmul.f32 %v2080, 1.442695
    %v2085 = vpow.pop %v2084
    %v2086 = vmul.f32 %v2081, 1.442695
    %v2087 = vpow.pop %v2086
    %v2088 = vmul.f32 %v2073, %v2083
    %v2089 = vmul.f32 %v2074, %v2085
    %v2090 = vmul.f32 %v2075, %v2087
    %v2091 = vsub.f32 1.0, %v2088
    %v2092 = vsub.f32 1.0, %v2089
    %v2093 = vsub.f32 1.0, %v2090
    %v2094 = vmul.f32 %v2031, %v2091
    %v2095 = vmul.f32 %v2032, %v2092
    %v2096 = vmul.f32 %v2033, %v2093
    %v2097 = vadd.f32 %v2094, 1.0
    %v2098 = vadd.f32 %v2095, 1.0
    %v2099 = vadd.f32 %v2096, 1.0
    %v2100 = vmul.f32 %v2022, %v2097
    %v2101 = vmul.f32 %v2023, %v2098
    %v2102 = vmul.f32 %v2024, %v2099
    %v2103 = vld [vmem:[%s17] sm:$0xff]
    %v2104 = vld [vmem:[%s17 + $0x8] sm:$0xff]
    %v2105 = vld [vmem:[%s17 + $0x10] sm:$0xff]
    %v2106 = vld [vmem:[%s17 + $0x18] sm:$0xff]
    %v2107 = vld [vmem:[%s17 + $0x20] sm:$0xff]
    %v2108 = vld [vmem:[%s17 + $0x28] sm:$0xff]
    %v2109 = vld [vmem:[%s17 + $0x30] sm:$0xff]
    %v2110 = vld [vmem:[%s17 + $0x38] sm:$0xff]
    %v2111 = vld [vmem:[%s18] sm:$0x1]
    %v2113 = vlaneseq
    %v2114 = vshrl.u32 %v2113, 7
    %v2115 = vsub.s32 0, %v2114
    %v2116 = vrot.slane %v2111, %v2115
    %vm2118 = vcmask 523264
    %v2120 = vsel %vm2118, %v2100, 0
    %v2123 = vsel %vm2118, %v2101, 0
    %v2126 = vsel %vm2118, %v2102, 0
    %2128 = vmatprep.subr.mxu0 0.0
    %2129 = vmatpush1.msra.mxu0 0.0
    %2130 = vmatprep.subr.mxu0 0.0
    %2131 = vmatpush1.msra.mxu0 0.0
    %2132 = vmatprep.subr.mxu0 0.0
    %2133 = vmatpush1.msra.mxu0 0.0
    %2134 = vmatprep.subr.mxu0 0.0
    %2135 = vmatpush1.msra.mxu0 0.0
    %2136 = vmatprep.subr.mxu0 0.0
    %2137 = vmatpush1.msra.mxu0 0.0
    %2138 = vmatprep.subr.mxu0 0.0
    %2139 = vmatpush1.msra.mxu0 0.0
    %2140 = vmatprep.subr.mxu0 0.0
    %2141 = vmatpush1.msra.mxu0 0.0
    %2142 = vmatprep.subr.mxu0 0.0
    %2143 = vmatpush1.msra.mxu0 0.0
    %2144 = vmatprep.subr.mxu0 0.0
    %2145 = vmatpush1.msra.mxu0 %v2110
    %2146 = vmatprep.subr.mxu0 0.0
    %2147 = vmatpush1.msra.mxu0 %v2109
    %2148 = vmatprep.subr.mxu0 0.0
    %2149 = vmatpush1.msra.mxu0 %v2108
    %2150 = vmatprep.subr.mxu0 0.0
    %2151 = vmatpush1.msra.mxu0 %v2107
    %2152 = vmatprep.subr.mxu0 0.0
    %2153 = vmatpush1.msra.mxu0 %v2106
    %2154 = vmatprep.subr.mxu0 0.0
    %2155 = vmatpush1.msra.mxu0 %v2105
    %2156 = vmatprep.subr.mxu0 0.0
    %2157 = vmatpush1.msra.mxu0 %v2104
    %2158 = vmatprep.subr.mxu0 0.0
    %2159 = vmatpush1.msra.mxu0 %v2103
    %2160 = vmatprep.subr.mxu0 0.0
    %2161 = vmatpush2.msra.mxu0 0.0
    %2162 = vmatprep.subr.mxu0 0.0
    %2163 = vmatpush2.msra.mxu0 0.0
    %2164 = vmatprep.subr.mxu0 0.0
    %2165 = vmatpush2.msra.mxu0 0.0
    %2166 = vmatprep.subr.mxu0 0.0
    %2167 = vmatpush2.msra.mxu0 0.0
    %2168 = vmatprep.subr.mxu0 0.0
    %2169 = vmatpush2.msra.mxu0 0.0
    %2170 = vmatprep.subr.mxu0 0.0
    %2171 = vmatpush2.msra.mxu0 0.0
    %2172 = vmatprep.subr.mxu0 0.0
    %2173 = vmatpush2.msra.mxu0 0.0
    %2174 = vmatprep.subr.mxu0 0.0
    %2175 = vmatpush2.msra.mxu0 0.0
    %2176 = vmatprep.subr.mxu0 0.0
    %2177 = vmatpush2.msra.mxu0 0.0
    %2178 = vmatprep.subr.mxu0 0.0
    %2179 = vmatpush2.msra.mxu0 0.0
    %2180 = vmatprep.subr.mxu0 0.0
    %2181 = vmatpush2.msra.mxu0 0.0
    %2182 = vmatprep.subr.mxu0 0.0
    %2183 = vmatpush2.msra.mxu0 0.0
    %2184 = vmatprep.subr.mxu0 0.0
    %2185 = vmatpush2.msra.mxu0 0.0
    %2186 = vmatprep.subr.mxu0 0.0
    %2187 = vmatpush2.msra.mxu0 0.0
    %2188 = vmatprep.subr.mxu0 0.0
    %2189 = vmatpush2.msra.mxu0 0.0
    %2190 = vmatprep.subr.mxu0 0.0
    %2191 = vmatpush2.msra.mxu0 0.0
    %2192 = vmatprep.mubr.f32.mxu0 0.0
    %2193 = vmatmul.mubr.f32.gmra.mxu0 %v2120
    %v2194 = vpop.f32.mrf.mxu0
    %v2195 = vadd.f32 %v2116, %v2194
    %v2196 = vpop.f32.mrf.mxu0
    %2197 = vmatprep.mubr.f32.mxu0 0.0
    %2198 = vmatmul.mubr.f32.gmra.mxu0 %v2123
    %v2199 = vpop.f32.mrf.mxu0
    %v2200 = vadd.f32 %v2116, %v2199
    %v2201 = vpop.f32.mrf.mxu0
    %2202 = vmatprep.mubr.f32.mxu0 0.0
    %2203 = vmatmul.mubr.f32.gmra.mxu0 %v2126
    %v2204 = vpop.f32.mrf.mxu0
    %v2205 = vadd.f32 %v2116, %v2204
    %v2206 = vpop.f32.mrf.mxu0
    %2207 = vdwg.mxu0
    %v2208 = vadd.f32 %v1858, %v2195
    %v2209 = vadd.f32 %v1859, %v2200
    %v2210 = vadd.f32 %v1860, %v2205
    %s2211 = scalar_lea.vmem %s7, 1
    %v2212 = vld [vmem:[%s2211] sm:$0x1]
    %s2213 = scalar_lea.vmem %s8, 1
    %v2214 = vld [vmem:[%s2213] sm:$0x1]
    %v2215 = vsel %vm566, %v2208, 0.0
    %2216 = vadd.xlane.f32.xlu0 %v2215
    %v2217 = vpop.xlane.xlu0 %2216
    %v2218 = vsel %vm566, %v2209, 0.0
    %2219 = vadd.xlane.f32.xlu0 %v2218
    %v2220 = vpop.xlane.xlu0 %2219
    %v2221 = vsel %vm452, %v2210, 0.0
    %2222 = vadd.xlane.f32.xlu0 %v2221
    %v2223 = vpop.xlane.xlu0 %2222
    %v2224 = vmul.f32 %v2217, %v576
    %v2225 = vmul.f32 %v2220, %v576
    %v2226 = vmul.f32 %v2223, %v576
    %v2227 = vsub.f32 %v2208, %v2224
    %v2228 = vsub.f32 %v2209, %v2225
    %v2229 = vsub.f32 %v2210, %v2226
    %v2230 = vmul.f32 %v2227, %v2227
    %v2231 = vmul.f32 %v2228, %v2228
    %v2232 = vmul.f32 %v2229, %v2229
    %v2233 = vsel %vm566, %v2230, 0.0
    %2234 = vadd.xlane.f32.xlu0 %v2233
    %v2235 = vpop.xlane.xlu0 %2234
    %v2236 = vsel %vm566, %v2231, 0.0
    %2237 = vadd.xlane.f32.xlu0 %v2236
    %v2238 = vpop.xlane.xlu0 %2237
    %v2239 = vsel %vm452, %v2232, 0.0
    %2240 = vadd.xlane.f32.xlu0 %v2239
    %v2241 = vpop.xlane.xlu0 %2240
    %v2242 = vmul.f32 %v2235, %v576
    %v2243 = vmul.f32 %v2238, %v576
    %v2244 = vmul.f32 %v2241, %v576
    %v2245 = vadd.f32 %v2242, 1e-05
    %v2246 = vadd.f32 %v2243, 1e-05
    %v2247 = vadd.f32 %v2244, 1e-05
    %v2248 = vrsqrt.pop %v2245
    %v2249 = vrsqrt.pop %v2246
    %v2250 = vrsqrt.pop %v2247
    %v2251 = vmul.f32 %v2227, %v2248
    %v2252 = vmul.f32 %v2228, %v2249
    %v2253 = vmul.f32 %v2229, %v2250
    %v2255 = vlaneseq
    %v2256 = vshrl.u32 %v2255, 7
    %v2257 = vsub.s32 0, %v2256
    %v2258 = vrot.slane %v2212, %v2257
    %v2260 = vmul.f32 %v2251, %v2258
    %v2261 = vmul.f32 %v2252, %v2258
    %v2262 = vmul.f32 %v2253, %v2258
    %v2264 = vlaneseq
    %v2265 = vshrl.u32 %v2264, 7
    %v2266 = vsub.s32 0, %v2265
    %v2267 = vrot.slane %v2214, %v2266
    %v2269 = vadd.f32 %v2260, %v2267
    %v2270 = vadd.f32 %v2261, %v2267
    %v2271 = vadd.f32 %v2262, %v2267
    %s2272 = scalar_lea.vmem %s9, 24
    %v2273 = vld [vmem:[%s2272] sm:$0xff]
    %v2274 = vld [vmem:[%s2272 + $0x8] sm:$0xff]
    %v2275 = vld [vmem:[%s2272 + $0x10] sm:$0xf]
    %s2276 = scalar_lea.vmem %s10, 1
    %v2277 = vld [vmem:[%s2276] sm:$0x1]
    %v2279 = vlaneseq
    %v2280 = vshrl.u32 %v2279, 7
    %v2281 = vsub.s32 0, %v2280
    %v2282 = vrot.slane %v2277, %v2281
    %v2285 = vsel %vm566, %v2269, 0
    %v2288 = vsel %vm566, %v2270, 0
    %v2291 = vsel %vm566, %v2271, 0
    %v2294 = vsel %vm644, %v2275, 0
    %2296 = vmatprep.subr.mxu0 0.0
    %2297 = vmatpush1.msra.mxu0 0.0
    %2298 = vmatprep.subr.mxu0 0.0
    %2299 = vmatpush1.msra.mxu0 0.0
    %2300 = vmatprep.subr.mxu0 0.0
    %2301 = vmatpush1.msra.mxu0 0.0
    %2302 = vmatprep.subr.mxu0 0.0
    %2303 = vmatpush1.msra.mxu0 0.0
    %2304 = vmatprep.subr.mxu0 0.0
    %2305 = vmatpush1.msra.mxu0 0.0
    %2306 = vmatprep.subr.mxu0 0.0
    %2307 = vmatpush1.msra.mxu0 0.0
    %2308 = vmatprep.subr.mxu0 0.0
    %2309 = vmatpush1.msra.mxu0 0.0
    %2310 = vmatprep.subr.mxu0 0.0
    %2311 = vmatpush1.msra.mxu0 0.0
    %2312 = vmatprep.subr.mxu0 0.0
    %2313 = vmatpush1.msra.mxu0 0.0
    %2314 = vmatprep.subr.mxu0 0.0
    %2315 = vmatpush1.msra.mxu0 0.0
    %2316 = vmatprep.subr.mxu0 0.0
    %2317 = vmatpush1.msra.mxu0 0.0
    %2318 = vmatprep.subr.mxu0 0.0
    %2319 = vmatpush1.msra.mxu0 0.0
    %2320 = vmatprep.subr.mxu0 0.0
    %2321 = vmatpush1.msra.mxu0 0.0
    %2322 = vmatprep.subr.mxu0 0.0
    %2323 = vmatpush1.msra.mxu0 %v2294
    %2324 = vmatprep.subr.mxu0 0.0
    %2325 = vmatpush1.msra.mxu0 %v2274
    %2326 = vmatprep.subr.mxu0 0.0
    %2327 = vmatpush1.msra.mxu0 %v2273
    %2328 = vmatprep.subr.mxu0 0.0
    %2329 = vmatpush2.msra.mxu0 0.0
    %2330 = vmatprep.subr.mxu0 0.0
    %2331 = vmatpush2.msra.mxu0 0.0
    %2332 = vmatprep.subr.mxu0 0.0
    %2333 = vmatpush2.msra.mxu0 0.0
    %2334 = vmatprep.subr.mxu0 0.0
    %2335 = vmatpush2.msra.mxu0 0.0
    %2336 = vmatprep.subr.mxu0 0.0
    %2337 = vmatpush2.msra.mxu0 0.0
    %2338 = vmatprep.subr.mxu0 0.0
    %2339 = vmatpush2.msra.mxu0 0.0
    %2340 = vmatprep.subr.mxu0 0.0
    %2341 = vmatpush2.msra.mxu0 0.0
    %2342 = vmatprep.subr.mxu0 0.0
    %2343 = vmatpush2.msra.mxu0 0.0
    %2344 = vmatprep.subr.mxu0 0.0
    %2345 = vmatpush2.msra.mxu0 0.0
    %2346 = vmatprep.subr.mxu0 0.0
    %2347 = vmatpush2.msra.mxu0 0.0
    %2348 = vmatprep.subr.mxu0 0.0
    %2349 = vmatpush2.msra.mxu0 0.0
    %2350 = vmatprep.subr.mxu0 0.0
    %2351 = vmatpush2.msra.mxu0 0.0
    %2352 = vmatprep.subr.mxu0 0.0
    %2353 = vmatpush2.msra.mxu0 0.0
    %2354 = vmatprep.subr.mxu0 0.0
    %2355 = vmatpush2.msra.mxu0 0.0
    %2356 = vmatprep.subr.mxu0 0.0
    %2357 = vmatpush2.msra.mxu0 0.0
    %2358 = vmatprep.subr.mxu0 0.0
    %2359 = vmatpush2.msra.mxu0 0.0
    %2360 = vmatprep.mubr.f32.mxu0 0.0
    %2361 = vmatmul.mubr.f32.gmra.mxu0 %v2285
    %v2362 = vpop.f32.mrf.mxu0
    %v2363 = vadd.f32 %v2282, %v2362
    %v2364 = vpop.f32.mrf.mxu0
    %2365 = vmatprep.mubr.f32.mxu0 0.0
    %2366 = vmatmul.mubr.f32.gmra.mxu0 %v2288
    %v2367 = vpop.f32.mrf.mxu0
    %v2368 = vadd.f32 %v2282, %v2367
    %v2369 = vpop.f32.mrf.mxu0
    %2370 = vmatprep.mubr.f32.mxu0 0.0
    %2371 = vmatmul.mubr.f32.gmra.mxu0 %v2291
    %v2372 = vpop.f32.mrf.mxu0
    %v2373 = vadd.f32 %v2282, %v2372
    %v2374 = vpop.f32.mrf.mxu0
    %2375 = vdwg.mxu0
    %2376 = vst.msk [vmem:[#allocation5] sm:$0xff] %vm728, %v2363
    %2377 = vst.msk [vmem:[#allocation5 + $0x8] sm:$0xff] %vm728, %v2368
    %2378 = vst.msk [vmem:[#allocation5 + $0x10] sm:$0x3] %vm731, %v2373
    %v2379 = vld [vmem:[#allocation5] sm:$0xff]
    %v2380 = vld [vmem:[#allocation5 + $0x8] sm:$0xff]
    %v2381 = vld [vmem:[#allocation5 + $0x10] sm:$0x3]
    %2385 = vrot.lane.b32.xlu0 %v2379, 108
    %v2386 = vpop.permute.xlu0 %2385
    %2387 = vrot.lane.b32.xlu0 %v2380, 108
    %v2388 = vpop.permute.xlu0 %2387
    %2389 = vrot.lane.b32.xlu0 %v2381, 108
    %v2390 = vpop.permute.xlu0 %2389
    %v2391 = vsel %vm745, %v2379, 0
    %v2393 = vsel %vm745, %v2380, 0
    %v2395 = vsel %vm745, %v2381, 0
    %v2397 = vsel %vm745, %v2386, 0
    %v2399 = vsel %vm745, %v2388, 0
    %v2401 = vsel %vm745, %v2390, 0
    %2403 = vmatprep.subr.mxu0 0.0
    %2404 = vmatpush1.xpose.msra.mxu0 0.0
    %2405 = vmatprep.subr.mxu0 0.0
    %2406 = vmatpush1.xpose.msra.mxu0 0.0
    %2407 = vmatprep.subr.mxu0 0.0
    %2408 = vmatpush1.xpose.msra.mxu0 0.0
    %2409 = vmatprep.subr.mxu0 0.0
    %2410 = vmatpush1.xpose.msra.mxu0 0.0
    %2411 = vmatprep.subr.mxu0 0.0
    %2412 = vmatpush1.xpose.msra.mxu0 0.0
    %2413 = vmatprep.subr.mxu0 0.0
    %2414 = vmatpush1.xpose.msra.mxu0 0.0
    %2415 = vmatprep.subr.mxu0 0.0
    %2416 = vmatpush1.xpose.msra.mxu0 0.0
    %2417 = vmatprep.subr.mxu0 0.0
    %2418 = vmatpush1.xpose.msra.mxu0 0.0
    %2419 = vmatprep.subr.mxu0 0.0
    %2420 = vmatpush1.xpose.msra.mxu0 0.0
    %2421 = vmatprep.subr.mxu0 0.0
    %2422 = vmatpush1.xpose.msra.mxu0 0.0
    %2423 = vmatprep.subr.mxu0 0.0
    %2424 = vmatpush1.xpose.msra.mxu0 0.0
    %2425 = vmatprep.subr.mxu0 0.0
    %2426 = vmatpush1.xpose.msra.mxu0 0.0
    %2427 = vmatprep.subr.mxu0 0.0
    %2428 = vmatpush1.xpose.msra.mxu0 0.0
    %2429 = vmatprep.subr.mxu0 0.0
    %2430 = vmatpush1.xpose.msra.mxu0 %v2401
    %2431 = vmatprep.subr.mxu0 0.0
    %2432 = vmatpush1.xpose.msra.mxu0 %v2399
    %2433 = vmatprep.subr.mxu0 0.0
    %2434 = vmatpush1.xpose.msra.mxu0 %v2397
    %2435 = vmatprep.subr.mxu0 0.0
    %2436 = vmatpush2.xpose.msra.mxu0 0.0
    %2437 = vmatprep.subr.mxu0 0.0
    %2438 = vmatpush2.xpose.msra.mxu0 0.0
    %2439 = vmatprep.subr.mxu0 0.0
    %2440 = vmatpush2.xpose.msra.mxu0 0.0
    %2441 = vmatprep.subr.mxu0 0.0
    %2442 = vmatpush2.xpose.msra.mxu0 0.0
    %2443 = vmatprep.subr.mxu0 0.0
    %2444 = vmatpush2.xpose.msra.mxu0 0.0
    %2445 = vmatprep.subr.mxu0 0.0
    %2446 = vmatpush2.xpose.msra.mxu0 0.0
    %2447 = vmatprep.subr.mxu0 0.0
    %2448 = vmatpush2.xpose.msra.mxu0 0.0
    %2449 = vmatprep.subr.mxu0 0.0
    %2450 = vmatpush2.xpose.msra.mxu0 0.0
    %2451 = vmatprep.subr.mxu0 0.0
    %2452 = vmatpush2.xpose.msra.mxu0 0.0
    %2453 = vmatprep.subr.mxu0 0.0
    %2454 = vmatpush2.xpose.msra.mxu0 0.0
    %2455 = vmatprep.subr.mxu0 0.0
    %2456 = vmatpush2.xpose.msra.mxu0 0.0
    %2457 = vmatprep.subr.mxu0 0.0
    %2458 = vmatpush2.xpose.msra.mxu0 0.0
    %2459 = vmatprep.subr.mxu0 0.0
    %2460 = vmatpush2.xpose.msra.mxu0 0.0
    %2461 = vmatprep.subr.mxu0 0.0
    %2462 = vmatpush2.xpose.msra.mxu0 0.0
    %2463 = vmatprep.subr.mxu0 0.0
    %2464 = vmatpush2.xpose.msra.mxu0 0.0
    %2465 = vmatprep.subr.mxu0 0.0
    %2466 = vmatpush2.xpose.msra.mxu0 0.0
    %2467 = vmatprep.mubr.f32.mxu0 0.0
    %2468 = vmatmul.mubr.f32.gmra.mxu0 %v2391
    %v2469 = vpop.f32.mrf.mxu0
    %v2470 = vadd.f32 %v561, %v2469
    %v2471 = vpop.f32.mrf.mxu0
    %2472 = vmatprep.mubr.f32.mxu0 0.0
    %2473 = vmatmul.mubr.f32.gmra.mxu0 %v2393
    %v2474 = vpop.f32.mrf.mxu0
    %v2475 = vadd.f32 %v562, %v2474
    %v2476 = vpop.f32.mrf.mxu0
    %2477 = vmatprep.mubr.f32.mxu0 0.0
    %2478 = vmatmul.mubr.f32.gmra.mxu0 %v2395
    %v2479 = vpop.f32.mrf.mxu0
    %v2480 = vadd.f32 %v563, %v2479
    %v2481 = vpop.f32.mrf.mxu0
    %2482 = vdwg.mxu0
    %v2483 = vsel %vm838, %v2470, -inf
    %2484 = vmax.xlane.f32.xlu0 %v2483
    %v2485 = vpop.xlane.xlu0 %2484
    %v2486 = vsel %vm838, %v2475, -inf
    %2487 = vmax.xlane.f32.xlu0 %v2486
    %v2488 = vpop.xlane.xlu0 %2487
    %v2489 = vsel %vm845, %v2480, -inf
    %2490 = vmax.xlane.f32.xlu0 %v2489
    %v2491 = vpop.xlane.xlu0 %2490
    %v2492 = vsub.f32 %v2470, %v2485
    %v2493 = vsub.f32 %v2475, %v2488
    %v2494 = vsub.f32 %v2480, %v2491
    %v2495 = vmul.f32 %v2492, 1.442695
    %v2496 = vpow.pop %v2495
    %v2497 = vmul.f32 %v2493, 1.442695
    %v2498 = vpow.pop %v2497
    %v2499 = vmul.f32 %v2494, 1.442695
    %v2500 = vpow.pop %v2499
    %v2501 = vsel %vm838, %v2496, 0.0
    %2502 = vadd.xlane.f32.xlu0 %v2501
    %v2503 = vpop.xlane.xlu0 %2502
    %v2504 = vsel %vm838, %v2498, 0.0
    %2505 = vadd.xlane.f32.xlu0 %v2504
    %v2506 = vpop.xlane.xlu0 %2505
    %v2507 = vsel %vm845, %v2500, 0.0
    %2508 = vadd.xlane.f32.xlu0 %v2507
    %v2509 = vpop.xlane.xlu0 %2508
    %v2510 = vrcp.pop %v2503
    %v2511 = vrcp.pop %v2506
    %v2512 = vrcp.pop %v2509
    %v2513 = vmul.f32 %v2496, %v2510
    %v2514 = vmul.f32 %v2498, %v2511
    %v2515 = vmul.f32 %v2500, %v2512
    %2516 = vrot.lane.b32.xlu0 %v2379, 88
    %v2517 = vpop.permute.xlu0 %2516
    %2518 = vrot.lane.b32.xlu0 %v2380, 88
    %v2519 = vpop.permute.xlu0 %2518
    %2520 = vrot.lane.b32.xlu0 %v2381, 88
    %v2521 = vpop.permute.xlu0 %2520
    %v2525 = vsel %vm838, %v2513, 0
    %v2528 = vsel %vm838, %v2514, 0
    %v2531 = vsel %vm838, %v2515, 0
    %v2533 = vsel %vm253, %v2521, 0
    %2535 = vmatprep.subr.mxu0 0.0
    %2536 = vmatpush1.msra.mxu0 0.0
    %2537 = vmatprep.subr.mxu0 0.0
    %2538 = vmatpush1.msra.mxu0 0.0
    %2539 = vmatprep.subr.mxu0 0.0
    %2540 = vmatpush1.msra.mxu0 0.0
    %2541 = vmatprep.subr.mxu0 0.0
    %2542 = vmatpush1.msra.mxu0 0.0
    %2543 = vmatprep.subr.mxu0 0.0
    %2544 = vmatpush1.msra.mxu0 0.0
    %2545 = vmatprep.subr.mxu0 0.0
    %2546 = vmatpush1.msra.mxu0 0.0
    %2547 = vmatprep.subr.mxu0 0.0
    %2548 = vmatpush1.msra.mxu0 0.0
    %2549 = vmatprep.subr.mxu0 0.0
    %2550 = vmatpush1.msra.mxu0 0.0
    %2551 = vmatprep.subr.mxu0 0.0
    %2552 = vmatpush1.msra.mxu0 0.0
    %2553 = vmatprep.subr.mxu0 0.0
    %2554 = vmatpush1.msra.mxu0 0.0
    %2555 = vmatprep.subr.mxu0 0.0
    %2556 = vmatpush1.msra.mxu0 0.0
    %2557 = vmatprep.subr.mxu0 0.0
    %2558 = vmatpush1.msra.mxu0 0.0
    %2559 = vmatprep.subr.mxu0 0.0
    %2560 = vmatpush1.msra.mxu0 0.0
    %2561 = vmatprep.subr.mxu0 0.0
    %2562 = vmatpush1.msra.mxu0 %v2533
    %2563 = vmatprep.subr.mxu0 0.0
    %2564 = vmatpush1.msra.mxu0 %v2519
    %2565 = vmatprep.subr.mxu0 0.0
    %2566 = vmatpush1.msra.mxu0 %v2517
    %2567 = vmatprep.subr.mxu0 0.0
    %2568 = vmatpush2.msra.mxu0 0.0
    %2569 = vmatprep.subr.mxu0 0.0
    %2570 = vmatpush2.msra.mxu0 0.0
    %2571 = vmatprep.subr.mxu0 0.0
    %2572 = vmatpush2.msra.mxu0 0.0
    %2573 = vmatprep.subr.mxu0 0.0
    %2574 = vmatpush2.msra.mxu0 0.0
    %2575 = vmatprep.subr.mxu0 0.0
    %2576 = vmatpush2.msra.mxu0 0.0
    %2577 = vmatprep.subr.mxu0 0.0
    %2578 = vmatpush2.msra.mxu0 0.0
    %2579 = vmatprep.subr.mxu0 0.0
    %2580 = vmatpush2.msra.mxu0 0.0
    %2581 = vmatprep.subr.mxu0 0.0
    %2582 = vmatpush2.msra.mxu0 0.0
    %2583 = vmatprep.subr.mxu0 0.0
    %2584 = vmatpush2.msra.mxu0 0.0
    %2585 = vmatprep.subr.mxu0 0.0
    %2586 = vmatpush2.msra.mxu0 0.0
    %2587 = vmatprep.subr.mxu0 0.0
    %2588 = vmatpush2.msra.mxu0 0.0
    %2589 = vmatprep.subr.mxu0 0.0
    %2590 = vmatpush2.msra.mxu0 0.0
    %2591 = vmatprep.subr.mxu0 0.0
    %2592 = vmatpush2.msra.mxu0 0.0
    %2593 = vmatprep.subr.mxu0 0.0
    %2594 = vmatpush2.msra.mxu0 0.0
    %2595 = vmatprep.subr.mxu0 0.0
    %2596 = vmatpush2.msra.mxu0 0.0
    %2597 = vmatprep.subr.mxu0 0.0
    %2598 = vmatpush2.msra.mxu0 0.0
    %2599 = vmatprep.mubr.f32.mxu0 0.0
    %2600 = vmatmul.mubr.f32.gmra.mxu0 %v2525
    %v2601 = vpop.f32.mrf.mxu0
    %v2602 = vadd.f32 0.0, %v2601
    %v2603 = vpop.f32.mrf.mxu0
    %2604 = vmatprep.mubr.f32.mxu0 0.0
    %2605 = vmatmul.mubr.f32.gmra.mxu0 %v2528
    %v2606 = vpop.f32.mrf.mxu0
    %v2607 = vadd.f32 0.0, %v2606
    %v2608 = vpop.f32.mrf.mxu0
    %2609 = vmatprep.mubr.f32.mxu0 0.0
    %2610 = vmatmul.mubr.f32.gmra.mxu0 %v2531
    %v2611 = vpop.f32.mrf.mxu0
    %v2612 = vadd.f32 0.0, %v2611
    %v2613 = vpop.f32.mrf.mxu0
    %2614 = vdwg.mxu0
    %2615 = vst.msk [vmem:[#allocation6] sm:$0xff] %vm745, %v2602
    %2616 = vst.msk [vmem:[#allocation6 + $0x8] sm:$0xff] %vm745, %v2607
    %2617 = vst.msk [vmem:[#allocation6 + $0x10] sm:$0x3] %vm974, %v2612
    %v2618 = vld [vmem:[#allocation5] sm:$0xff]
    %v2619 = vld [vmem:[#allocation5 + $0x8] sm:$0xff]
    %v2620 = vld [vmem:[#allocation5 + $0x10] sm:$0x3]
    %2624 = vrot.lane.b32.xlu0 %v2618, 123
    %v2625 = vpop.permute.xlu0 %2624
    %2626 = vrot.lane.b32.xlu0 %v2619, 123
    %v2627 = vpop.permute.xlu0 %2626
    %2628 = vrot.lane.b32.xlu0 %v2620, 123
    %v2629 = vpop.permute.xlu0 %2628
    %2630 = vrot.lane.b32.xlu0 %v2618, 103
    %v2631 = vpop.permute.xlu0 %2630
    %2632 = vrot.lane.b32.xlu0 %v2619, 103
    %v2633 = vpop.permute.xlu0 %2632
    %2634 = vrot.lane.b32.xlu0 %v2620, 103
    %v2635 = vpop.permute.xlu0 %2634
    %v2636 = vsel %vm745, %v2625, 0
    %v2638 = vsel %vm745, %v2627, 0
    %v2640 = vsel %vm745, %v2629, 0
    %v2642 = vsel %vm745, %v2631, 0
    %v2644 = vsel %vm745, %v2633, 0
    %v2646 = vsel %vm745, %v2635, 0
    %2648 = vmatprep.subr.mxu0 0.0
    %2649 = vmatpush1.xpose.msra.mxu0 0.0
    %2650 = vmatprep.subr.mxu0 0.0
    %2651 = vmatpush1.xpose.msra.mxu0 0.0
    %2652 = vmatprep.subr.mxu0 0.0
    %2653 = vmatpush1.xpose.msra.mxu0 0.0
    %2654 = vmatprep.subr.mxu0 0.0
    %2655 = vmatpush1.xpose.msra.mxu0 0.0
    %2656 = vmatprep.subr.mxu0 0.0
    %2657 = vmatpush1.xpose.msra.mxu0 0.0
    %2658 = vmatprep.subr.mxu0 0.0
    %2659 = vmatpush1.xpose.msra.mxu0 0.0
    %2660 = vmatprep.subr.mxu0 0.0
    %2661 = vmatpush1.xpose.msra.mxu0 0.0
    %2662 = vmatprep.subr.mxu0 0.0
    %2663 = vmatpush1.xpose.msra.mxu0 0.0
    %2664 = vmatprep.subr.mxu0 0.0
    %2665 = vmatpush1.xpose.msra.mxu0 0.0
    %2666 = vmatprep.subr.mxu0 0.0
    %2667 = vmatpush1.xpose.msra.mxu0 0.0
    %2668 = vmatprep.subr.mxu0 0.0
    %2669 = vmatpush1.xpose.msra.mxu0 0.0
    %2670 = vmatprep.subr.mxu0 0.0
    %2671 = vmatpush1.xpose.msra.mxu0 0.0
    %2672 = vmatprep.subr.mxu0 0.0
    %2673 = vmatpush1.xpose.msra.mxu0 0.0
    %2674 = vmatprep.subr.mxu0 0.0
    %2675 = vmatpush1.xpose.msra.mxu0 %v2646
    %2676 = vmatprep.subr.mxu0 0.0
    %2677 = vmatpush1.xpose.msra.mxu0 %v2644
    %2678 = vmatprep.subr.mxu0 0.0
    %2679 = vmatpush1.xpose.msra.mxu0 %v2642
    %2680 = vmatprep.subr.mxu0 0.0
    %2681 = vmatpush2.xpose.msra.mxu0 0.0
    %2682 = vmatprep.subr.mxu0 0.0
    %2683 = vmatpush2.xpose.msra.mxu0 0.0
    %2684 = vmatprep.subr.mxu0 0.0
    %2685 = vmatpush2.xpose.msra.mxu0 0.0
    %2686 = vmatprep.subr.mxu0 0.0
    %2687 = vmatpush2.xpose.msra.mxu0 0.0
    %2688 = vmatprep.subr.mxu0 0.0
    %2689 = vmatpush2.xpose.msra.mxu0 0.0
    %2690 = vmatprep.subr.mxu0 0.0
    %2691 = vmatpush2.xpose.msra.mxu0 0.0
    %2692 = vmatprep.subr.mxu0 0.0
    %2693 = vmatpush2.xpose.msra.mxu0 0.0
    %2694 = vmatprep.subr.mxu0 0.0
    %2695 = vmatpush2.xpose.msra.mxu0 0.0
    %2696 = vmatprep.subr.mxu0 0.0
    %2697 = vmatpush2.xpose.msra.mxu0 0.0
    %2698 = vmatprep.subr.mxu0 0.0
    %2699 = vmatpush2.xpose.msra.mxu0 0.0
    %2700 = vmatprep.subr.mxu0 0.0
    %2701 = vmatpush2.xpose.msra.mxu0 0.0
    %2702 = vmatprep.subr.mxu0 0.0
    %2703 = vmatpush2.xpose.msra.mxu0 0.0
    %2704 = vmatprep.subr.mxu0 0.0
    %2705 = vmatpush2.xpose.msra.mxu0 0.0
    %2706 = vmatprep.subr.mxu0 0.0
    %2707 = vmatpush2.xpose.msra.mxu0 0.0
    %2708 = vmatprep.subr.mxu0 0.0
    %2709 = vmatpush2.xpose.msra.mxu0 0.0
    %2710 = vmatprep.subr.mxu0 0.0
    %2711 = vmatpush2.xpose.msra.mxu0 0.0
    %2712 = vmatprep.mubr.f32.mxu0 0.0
    %2713 = vmatmul.mubr.f32.gmra.mxu0 %v2636
    %v2714 = vpop.f32.mrf.mxu0
    %v2715 = vadd.f32 %v561, %v2714
    %v2716 = vpop.f32.mrf.mxu0
    %2717 = vmatprep.mubr.f32.mxu0 0.0
    %2718 = vmatmul.mubr.f32.gmra.mxu0 %v2638
    %v2719 = vpop.f32.mrf.mxu0
    %v2720 = vadd.f32 %v562, %v2719
    %v2721 = vpop.f32.mrf.mxu0
    %2722 = vmatprep.mubr.f32.mxu0 0.0
    %2723 = vmatmul.mubr.f32.gmra.mxu0 %v2640
    %v2724 = vpop.f32.mrf.mxu0
    %v2725 = vadd.f32 %v563, %v2724
    %v2726 = vpop.f32.mrf.mxu0
    %2727 = vdwg.mxu0
    %v2728 = vsel %vm838, %v2715, -inf
    %2729 = vmax.xlane.f32.xlu0 %v2728
    %v2730 = vpop.xlane.xlu0 %2729
    %v2731 = vsel %vm838, %v2720, -inf
    %2732 = vmax.xlane.f32.xlu0 %v2731
    %v2733 = vpop.xlane.xlu0 %2732
    %v2734 = vsel %vm845, %v2725, -inf
    %2735 = vmax.xlane.f32.xlu0 %v2734
    %v2736 = vpop.xlane.xlu0 %2735
    %v2737 = vsub.f32 %v2715, %v2730
    %v2738 = vsub.f32 %v2720, %v2733
    %v2739 = vsub.f32 %v2725, %v2736
    %v2740 = vmul.f32 %v2737, 1.442695
    %v2741 = vpow.pop %v2740
    %v2742 = vmul.f32 %v2738, 1.442695
    %v2743 = vpow.pop %v2742
    %v2744 = vmul.f32 %v2739, 1.442695
    %v2745 = vpow.pop %v2744
    %v2746 = vsel %vm838, %v2741, 0.0
    %2747 = vadd.xlane.f32.xlu0 %v2746
    %v2748 = vpop.xlane.xlu0 %2747
    %v2749 = vsel %vm838, %v2743, 0.0
    %2750 = vadd.xlane.f32.xlu0 %v2749
    %v2751 = vpop.xlane.xlu0 %2750
    %v2752 = vsel %vm845, %v2745, 0.0
    %2753 = vadd.xlane.f32.xlu0 %v2752
    %v2754 = vpop.xlane.xlu0 %2753
    %v2755 = vrcp.pop %v2748
    %v2756 = vrcp.pop %v2751
    %v2757 = vrcp.pop %v2754
    %v2758 = vmul.f32 %v2741, %v2755
    %v2759 = vmul.f32 %v2743, %v2756
    %v2760 = vmul.f32 %v2745, %v2757
    %2761 = vrot.lane.b32.xlu0 %v2618, 83
    %v2762 = vpop.permute.xlu0 %2761
    %2763 = vrot.lane.b32.xlu0 %v2619, 83
    %v2764 = vpop.permute.xlu0 %2763
    %2765 = vrot.lane.b32.xlu0 %v2620, 83
    %v2766 = vpop.permute.xlu0 %2765
    %v2770 = vsel %vm838, %v2758, 0
    %v2773 = vsel %vm838, %v2759, 0
    %v2776 = vsel %vm838, %v2760, 0
    %v2778 = vsel %vm253, %v2766, 0
    %2780 = vmatprep.subr.mxu0 0.0
    %2781 = vmatpush1.msra.mxu0 0.0
    %2782 = vmatprep.subr.mxu0 0.0
    %2783 = vmatpush1.msra.mxu0 0.0
    %2784 = vmatprep.subr.mxu0 0.0
    %2785 = vmatpush1.msra.mxu0 0.0
    %2786 = vmatprep.subr.mxu0 0.0
    %2787 = vmatpush1.msra.mxu0 0.0
    %2788 = vmatprep.subr.mxu0 0.0
    %2789 = vmatpush1.msra.mxu0 0.0
    %2790 = vmatprep.subr.mxu0 0.0
    %2791 = vmatpush1.msra.mxu0 0.0
    %2792 = vmatprep.subr.mxu0 0.0
    %2793 = vmatpush1.msra.mxu0 0.0
    %2794 = vmatprep.subr.mxu0 0.0
    %2795 = vmatpush1.msra.mxu0 0.0
    %2796 = vmatprep.subr.mxu0 0.0
    %2797 = vmatpush1.msra.mxu0 0.0
    %2798 = vmatprep.subr.mxu0 0.0
    %2799 = vmatpush1.msra.mxu0 0.0
    %2800 = vmatprep.subr.mxu0 0.0
    %2801 = vmatpush1.msra.mxu0 0.0
    %2802 = vmatprep.subr.mxu0 0.0
    %2803 = vmatpush1.msra.mxu0 0.0
    %2804 = vmatprep.subr.mxu0 0.0
    %2805 = vmatpush1.msra.mxu0 0.0
    %2806 = vmatprep.subr.mxu0 0.0
    %2807 = vmatpush1.msra.mxu0 %v2778
    %2808 = vmatprep.subr.mxu0 0.0
    %2809 = vmatpush1.msra.mxu0 %v2764
    %2810 = vmatprep.subr.mxu0 0.0
    %2811 = vmatpush1.msra.mxu0 %v2762
    %2812 = vmatprep.subr.mxu0 0.0
    %2813 = vmatpush2.msra.mxu0 0.0
    %2814 = vmatprep.subr.mxu0 0.0
    %2815 = vmatpush2.msra.mxu0 0.0
    %2816 = vmatprep.subr.mxu0 0.0
    %2817 = vmatpush2.msra.mxu0 0.0
    %2818 = vmatprep.subr.mxu0 0.0
    %2819 = vmatpush2.msra.mxu0 0.0
    %2820 = vmatprep.subr.mxu0 0.0
    %2821 = vmatpush2.msra.mxu0 0.0
    %2822 = vmatprep.subr.mxu0 0.0
    %2823 = vmatpush2.msra.mxu0 0.0
    %2824 = vmatprep.subr.mxu0 0.0
    %2825 = vmatpush2.msra.mxu0 0.0
    %2826 = vmatprep.subr.mxu0 0.0
    %2827 = vmatpush2.msra.mxu0 0.0
    %2828 = vmatprep.subr.mxu0 0.0
    %2829 = vmatpush2.msra.mxu0 0.0
    %2830 = vmatprep.subr.mxu0 0.0
    %2831 = vmatpush2.msra.mxu0 0.0
    %2832 = vmatprep.subr.mxu0 0.0
    %2833 = vmatpush2.msra.mxu0 0.0
    %2834 = vmatprep.subr.mxu0 0.0
    %2835 = vmatpush2.msra.mxu0 0.0
    %2836 = vmatprep.subr.mxu0 0.0
    %2837 = vmatpush2.msra.mxu0 0.0
    %2838 = vmatprep.subr.mxu0 0.0
    %2839 = vmatpush2.msra.mxu0 0.0
    %2840 = vmatprep.subr.mxu0 0.0
    %2841 = vmatpush2.msra.mxu0 0.0
    %2842 = vmatprep.subr.mxu0 0.0
    %2843 = vmatpush2.msra.mxu0 0.0
    %2844 = vmatprep.mubr.f32.mxu0 0.0
    %2845 = vmatmul.mubr.f32.gmra.mxu0 %v2770
    %v2846 = vpop.f32.mrf.mxu0
    %v2847 = vadd.f32 0.0, %v2846
    %v2848 = vpop.f32.mrf.mxu0
    %2849 = vmatprep.mubr.f32.mxu0 0.0
    %2850 = vmatmul.mubr.f32.gmra.mxu0 %v2773
    %v2851 = vpop.f32.mrf.mxu0
    %v2852 = vadd.f32 0.0, %v2851
    %v2853 = vpop.f32.mrf.mxu0
    %2854 = vmatprep.mubr.f32.mxu0 0.0
    %2855 = vmatmul.mubr.f32.gmra.mxu0 %v2776
    %v2856 = vpop.f32.mrf.mxu0
    %v2857 = vadd.f32 0.0, %v2856
    %v2858 = vpop.f32.mrf.mxu0
    %2859 = vdwg.mxu0
    %2863 = vrot.lane.b32.xlu0 %v2847, 5
    %v2864 = vpop.permute.xlu0 %2863
    %2865 = vrot.lane.b32.xlu0 %v2852, 5
    %v2866 = vpop.permute.xlu0 %2865
    %2867 = vrot.lane.b32.xlu0 %v2857, 5
    %v2868 = vpop.permute.xlu0 %2867
    %2872 = vst.msk [vmem:[#allocation6] sm:$0xff] %vm1230, %v2864
    %2873 = vst.msk [vmem:[#allocation6 + $0x8] sm:$0xff] %vm1230, %v2866
    %2874 = vst.msk [vmem:[#allocation6 + $0x10] sm:$0x3] %vm1233, %v2868
    %v2875 = vld [vmem:[#allocation5] sm:$0xff]
    %v2876 = vld [vmem:[#allocation5 + $0x8] sm:$0xff]
    %v2877 = vld [vmem:[#allocation5 + $0x10] sm:$0x3]
    %2881 = vrot.lane.b32.xlu0 %v2875, 118
    %v2882 = vpop.permute.xlu0 %2881
    %2883 = vrot.lane.b32.xlu0 %v2876, 118
    %v2884 = vpop.permute.xlu0 %2883
    %2885 = vrot.lane.b32.xlu0 %v2877, 118
    %v2886 = vpop.permute.xlu0 %2885
    %2887 = vrot.lane.b32.xlu0 %v2875, 98
    %v2888 = vpop.permute.xlu0 %2887
    %2889 = vrot.lane.b32.xlu0 %v2876, 98
    %v2890 = vpop.permute.xlu0 %2889
    %2891 = vrot.lane.b32.xlu0 %v2877, 98
    %v2892 = vpop.permute.xlu0 %2891
    %v2893 = vsel %vm745, %v2882, 0
    %v2895 = vsel %vm745, %v2884, 0
    %v2897 = vsel %vm745, %v2886, 0
    %v2899 = vsel %vm745, %v2888, 0
    %v2901 = vsel %vm745, %v2890, 0
    %v2903 = vsel %vm745, %v2892, 0
    %2905 = vmatprep.subr.mxu0 0.0
    %2906 = vmatpush1.xpose.msra.mxu0 0.0
    %2907 = vmatprep.subr.mxu0 0.0
    %2908 = vmatpush1.xpose.msra.mxu0 0.0
    %2909 = vmatprep.subr.mxu0 0.0
    %2910 = vmatpush1.xpose.msra.mxu0 0.0
    %2911 = vmatprep.subr.mxu0 0.0
    %2912 = vmatpush1.xpose.msra.mxu0 0.0
    %2913 = vmatprep.subr.mxu0 0.0
    %2914 = vmatpush1.xpose.msra.mxu0 0.0
    %2915 = vmatprep.subr.mxu0 0.0
    %2916 = vmatpush1.xpose.msra.mxu0 0.0
    %2917 = vmatprep.subr.mxu0 0.0
    %2918 = vmatpush1.xpose.msra.mxu0 0.0
    %2919 = vmatprep.subr.mxu0 0.0
    %2920 = vmatpush1.xpose.msra.mxu0 0.0
    %2921 = vmatprep.subr.mxu0 0.0
    %2922 = vmatpush1.xpose.msra.mxu0 0.0
    %2923 = vmatprep.subr.mxu0 0.0
    %2924 = vmatpush1.xpose.msra.mxu0 0.0
    %2925 = vmatprep.subr.mxu0 0.0
    %2926 = vmatpush1.xpose.msra.mxu0 0.0
    %2927 = vmatprep.subr.mxu0 0.0
    %2928 = vmatpush1.xpose.msra.mxu0 0.0
    %2929 = vmatprep.subr.mxu0 0.0
    %2930 = vmatpush1.xpose.msra.mxu0 0.0
    %2931 = vmatprep.subr.mxu0 0.0
    %2932 = vmatpush1.xpose.msra.mxu0 %v2903
    %2933 = vmatprep.subr.mxu0 0.0
    %2934 = vmatpush1.xpose.msra.mxu0 %v2901
    %2935 = vmatprep.subr.mxu0 0.0
    %2936 = vmatpush1.xpose.msra.mxu0 %v2899
    %2937 = vmatprep.subr.mxu0 0.0
    %2938 = vmatpush2.xpose.msra.mxu0 0.0
    %2939 = vmatprep.subr.mxu0 0.0
    %2940 = vmatpush2.xpose.msra.mxu0 0.0
    %2941 = vmatprep.subr.mxu0 0.0
    %2942 = vmatpush2.xpose.msra.mxu0 0.0
    %2943 = vmatprep.subr.mxu0 0.0
    %2944 = vmatpush2.xpose.msra.mxu0 0.0
    %2945 = vmatprep.subr.mxu0 0.0
    %2946 = vmatpush2.xpose.msra.mxu0 0.0
    %2947 = vmatprep.subr.mxu0 0.0
    %2948 = vmatpush2.xpose.msra.mxu0 0.0
    %2949 = vmatprep.subr.mxu0 0.0
    %2950 = vmatpush2.xpose.msra.mxu0 0.0
    %2951 = vmatprep.subr.mxu0 0.0
    %2952 = vmatpush2.xpose.msra.mxu0 0.0
    %2953 = vmatprep.subr.mxu0 0.0
    %2954 = vmatpush2.xpose.msra.mxu0 0.0
    %2955 = vmatprep.subr.mxu0 0.0
    %2956 = vmatpush2.xpose.msra.mxu0 0.0
    %2957 = vmatprep.subr.mxu0 0.0
    %2958 = vmatpush2.xpose.msra.mxu0 0.0
    %2959 = vmatprep.subr.mxu0 0.0
    %2960 = vmatpush2.xpose.msra.mxu0 0.0
    %2961 = vmatprep.subr.mxu0 0.0
    %2962 = vmatpush2.xpose.msra.mxu0 0.0
    %2963 = vmatprep.subr.mxu0 0.0
    %2964 = vmatpush2.xpose.msra.mxu0 0.0
    %2965 = vmatprep.subr.mxu0 0.0
    %2966 = vmatpush2.xpose.msra.mxu0 0.0
    %2967 = vmatprep.subr.mxu0 0.0
    %2968 = vmatpush2.xpose.msra.mxu0 0.0
    %2969 = vmatprep.mubr.f32.mxu0 0.0
    %2970 = vmatmul.mubr.f32.gmra.mxu0 %v2893
    %v2971 = vpop.f32.mrf.mxu0
    %v2972 = vadd.f32 %v561, %v2971
    %v2973 = vpop.f32.mrf.mxu0
    %2974 = vmatprep.mubr.f32.mxu0 0.0
    %2975 = vmatmul.mubr.f32.gmra.mxu0 %v2895
    %v2976 = vpop.f32.mrf.mxu0
    %v2977 = vadd.f32 %v562, %v2976
    %v2978 = vpop.f32.mrf.mxu0
    %2979 = vmatprep.mubr.f32.mxu0 0.0
    %2980 = vmatmul.mubr.f32.gmra.mxu0 %v2897
    %v2981 = vpop.f32.mrf.mxu0
    %v2982 = vadd.f32 %v563, %v2981
    %v2983 = vpop.f32.mrf.mxu0
    %2984 = vdwg.mxu0
    %v2985 = vsel %vm838, %v2972, -inf
    %2986 = vmax.xlane.f32.xlu0 %v2985
    %v2987 = vpop.xlane.xlu0 %2986
    %v2988 = vsel %vm838, %v2977, -inf
    %2989 = vmax.xlane.f32.xlu0 %v2988
    %v2990 = vpop.xlane.xlu0 %2989
    %v2991 = vsel %vm845, %v2982, -inf
    %2992 = vmax.xlane.f32.xlu0 %v2991
    %v2993 = vpop.xlane.xlu0 %2992
    %v2994 = vsub.f32 %v2972, %v2987
    %v2995 = vsub.f32 %v2977, %v2990
    %v2996 = vsub.f32 %v2982, %v2993
    %v2997 = vmul.f32 %v2994, 1.442695
    %v2998 = vpow.pop %v2997
    %v2999 = vmul.f32 %v2995, 1.442695
    %v3000 = vpow.pop %v2999
    %v3001 = vmul.f32 %v2996, 1.442695
    %v3002 = vpow.pop %v3001
    %v3003 = vsel %vm838, %v2998, 0.0
    %3004 = vadd.xlane.f32.xlu0 %v3003
    %v3005 = vpop.xlane.xlu0 %3004
    %v3006 = vsel %vm838, %v3000, 0.0
    %3007 = vadd.xlane.f32.xlu0 %v3006
    %v3008 = vpop.xlane.xlu0 %3007
    %v3009 = vsel %vm845, %v3002, 0.0
    %3010 = vadd.xlane.f32.xlu0 %v3009
    %v3011 = vpop.xlane.xlu0 %3010
    %v3012 = vrcp.pop %v3005
    %v3013 = vrcp.pop %v3008
    %v3014 = vrcp.pop %v3011
    %v3015 = vmul.f32 %v2998, %v3012
    %v3016 = vmul.f32 %v3000, %v3013
    %v3017 = vmul.f32 %v3002, %v3014
    %3018 = vrot.lane.b32.xlu0 %v2875, 78
    %v3019 = vpop.permute.xlu0 %3018
    %3020 = vrot.lane.b32.xlu0 %v2876, 78
    %v3021 = vpop.permute.xlu0 %3020
    %3022 = vrot.lane.b32.xlu0 %v2877, 78
    %v3023 = vpop.permute.xlu0 %3022
    %v3027 = vsel %vm838, %v3015, 0
    %v3030 = vsel %vm838, %v3016, 0
    %v3033 = vsel %vm838, %v3017, 0
    %v3035 = vsel %vm253, %v3023, 0
    %3037 = vmatprep.subr.mxu0 0.0
    %3038 = vmatpush1.msra.mxu0 0.0
    %3039 = vmatprep.subr.mxu0 0.0
    %3040 = vmatpush1.msra.mxu0 0.0
    %3041 = vmatprep.subr.mxu0 0.0
    %3042 = vmatpush1.msra.mxu0 0.0
    %3043 = vmatprep.subr.mxu0 0.0
    %3044 = vmatpush1.msra.mxu0 0.0
    %3045 = vmatprep.subr.mxu0 0.0
    %3046 = vmatpush1.msra.mxu0 0.0
    %3047 = vmatprep.subr.mxu0 0.0
    %3048 = vmatpush1.msra.mxu0 0.0
    %3049 = vmatprep.subr.mxu0 0.0
    %3050 = vmatpush1.msra.mxu0 0.0
    %3051 = vmatprep.subr.mxu0 0.0
    %3052 = vmatpush1.msra.mxu0 0.0
    %3053 = vmatprep.subr.mxu0 0.0
    %3054 = vmatpush1.msra.mxu0 0.0
    %3055 = vmatprep.subr.mxu0 0.0
    %3056 = vmatpush1.msra.mxu0 0.0
    %3057 = vmatprep.subr.mxu0 0.0
    %3058 = vmatpush1.msra.mxu0 0.0
    %3059 = vmatprep.subr.mxu0 0.0
    %3060 = vmatpush1.msra.mxu0 0.0
    %3061 = vmatprep.subr.mxu0 0.0
    %3062 = vmatpush1.msra.mxu0 0.0
    %3063 = vmatprep.subr.mxu0 0.0
    %3064 = vmatpush1.msra.mxu0 %v3035
    %3065 = vmatprep.subr.mxu0 0.0
    %3066 = vmatpush1.msra.mxu0 %v3021
    %3067 = vmatprep.subr.mxu0 0.0
    %3068 = vmatpush1.msra.mxu0 %v3019
    %3069 = vmatprep.subr.mxu0 0.0
    %3070 = vmatpush2.msra.mxu0 0.0
    %3071 = vmatprep.subr.mxu0 0.0
    %3072 = vmatpush2.msra.mxu0 0.0
    %3073 = vmatprep.subr.mxu0 0.0
    %3074 = vmatpush2.msra.mxu0 0.0
    %3075 = vmatprep.subr.mxu0 0.0
    %3076 = vmatpush2.msra.mxu0 0.0
    %3077 = vmatprep.subr.mxu0 0.0
    %3078 = vmatpush2.msra.mxu0 0.0
    %3079 = vmatprep.subr.mxu0 0.0
    %3080 = vmatpush2.msra.mxu0 0.0
    %3081 = vmatprep.subr.mxu0 0.0
    %3082 = vmatpush2.msra.mxu0 0.0
    %3083 = vmatprep.subr.mxu0 0.0
    %3084 = vmatpush2.msra.mxu0 0.0
    %3085 = vmatprep.subr.mxu0 0.0
    %3086 = vmatpush2.msra.mxu0 0.0
    %3087 = vmatprep.subr.mxu0 0.0
    %3088 = vmatpush2.msra.mxu0 0.0
    %3089 = vmatprep.subr.mxu0 0.0
    %3090 = vmatpush2.msra.mxu0 0.0
    %3091 = vmatprep.subr.mxu0 0.0
    %3092 = vmatpush2.msra.mxu0 0.0
    %3093 = vmatprep.subr.mxu0 0.0
    %3094 = vmatpush2.msra.mxu0 0.0
    %3095 = vmatprep.subr.mxu0 0.0
    %3096 = vmatpush2.msra.mxu0 0.0
    %3097 = vmatprep.subr.mxu0 0.0
    %3098 = vmatpush2.msra.mxu0 0.0
    %3099 = vmatprep.subr.mxu0 0.0
    %3100 = vmatpush2.msra.mxu0 0.0
    %3101 = vmatprep.mubr.f32.mxu0 0.0
    %3102 = vmatmul.mubr.f32.gmra.mxu0 %v3027
    %v3103 = vpop.f32.mrf.mxu0
    %v3104 = vadd.f32 0.0, %v3103
    %v3105 = vpop.f32.mrf.mxu0
    %3106 = vmatprep.mubr.f32.mxu0 0.0
    %3107 = vmatmul.mubr.f32.gmra.mxu0 %v3030
    %v3108 = vpop.f32.mrf.mxu0
    %v3109 = vadd.f32 0.0, %v3108
    %v3110 = vpop.f32.mrf.mxu0
    %3111 = vmatprep.mubr.f32.mxu0 0.0
    %3112 = vmatmul.mubr.f32.gmra.mxu0 %v3033
    %v3113 = vpop.f32.mrf.mxu0
    %v3114 = vadd.f32 0.0, %v3113
    %v3115 = vpop.f32.mrf.mxu0
    %3116 = vdwg.mxu0
    %3120 = vrot.lane.b32.xlu0 %v3104, 10
    %v3121 = vpop.permute.xlu0 %3120
    %3122 = vrot.lane.b32.xlu0 %v3109, 10
    %v3123 = vpop.permute.xlu0 %3122
    %3124 = vrot.lane.b32.xlu0 %v3114, 10
    %v3125 = vpop.permute.xlu0 %3124
    %3129 = vst.msk [vmem:[#allocation6] sm:$0xff] %vm1489, %v3121
    %3130 = vst.msk [vmem:[#allocation6 + $0x8] sm:$0xff] %vm1489, %v3123
    %3131 = vst.msk [vmem:[#allocation6 + $0x10] sm:$0x3] %vm1492, %v3125
    %v3132 = vld [vmem:[#allocation5] sm:$0xff]
    %v3133 = vld [vmem:[#allocation5 + $0x8] sm:$0xff]
    %v3134 = vld [vmem:[#allocation5 + $0x10] sm:$0x3]
    %3138 = vrot.lane.b32.xlu0 %v3132, 113
    %v3139 = vpop.permute.xlu0 %3138
    %3140 = vrot.lane.b32.xlu0 %v3133, 113
    %v3141 = vpop.permute.xlu0 %3140
    %3142 = vrot.lane.b32.xlu0 %v3134, 113
    %v3143 = vpop.permute.xlu0 %3142
    %3144 = vrot.lane.b32.xlu0 %v3132, 93
    %v3145 = vpop.permute.xlu0 %3144
    %3146 = vrot.lane.b32.xlu0 %v3133, 93
    %v3147 = vpop.permute.xlu0 %3146
    %3148 = vrot.lane.b32.xlu0 %v3134, 93
    %v3149 = vpop.permute.xlu0 %3148
    %v3150 = vsel %vm745, %v3139, 0
    %v3152 = vsel %vm745, %v3141, 0
    %v3154 = vsel %vm745, %v3143, 0
    %v3156 = vsel %vm745, %v3145, 0
    %v3158 = vsel %vm745, %v3147, 0
    %v3160 = vsel %vm745, %v3149, 0
    %3162 = vmatprep.subr.mxu0 0.0
    %3163 = vmatpush1.xpose.msra.mxu0 0.0
    %3164 = vmatprep.subr.mxu0 0.0
    %3165 = vmatpush1.xpose.msra.mxu0 0.0
    %3166 = vmatprep.subr.mxu0 0.0
    %3167 = vmatpush1.xpose.msra.mxu0 0.0
    %3168 = vmatprep.subr.mxu0 0.0
    %3169 = vmatpush1.xpose.msra.mxu0 0.0
    %3170 = vmatprep.subr.mxu0 0.0
    %3171 = vmatpush1.xpose.msra.mxu0 0.0
    %3172 = vmatprep.subr.mxu0 0.0
    %3173 = vmatpush1.xpose.msra.mxu0 0.0
    %3174 = vmatprep.subr.mxu0 0.0
    %3175 = vmatpush1.xpose.msra.mxu0 0.0
    %3176 = vmatprep.subr.mxu0 0.0
    %3177 = vmatpush1.xpose.msra.mxu0 0.0
    %3178 = vmatprep.subr.mxu0 0.0
    %3179 = vmatpush1.xpose.msra.mxu0 0.0
    %3180 = vmatprep.subr.mxu0 0.0
    %3181 = vmatpush1.xpose.msra.mxu0 0.0
    %3182 = vmatprep.subr.mxu0 0.0
    %3183 = vmatpush1.xpose.msra.mxu0 0.0
    %3184 = vmatprep.subr.mxu0 0.0
    %3185 = vmatpush1.xpose.msra.mxu0 0.0
    %3186 = vmatprep.subr.mxu0 0.0
    %3187 = vmatpush1.xpose.msra.mxu0 0.0
    %3188 = vmatprep.subr.mxu0 0.0
    %3189 = vmatpush1.xpose.msra.mxu0 %v3160
    %3190 = vmatprep.subr.mxu0 0.0
    %3191 = vmatpush1.xpose.msra.mxu0 %v3158
    %3192 = vmatprep.subr.mxu0 0.0
    %3193 = vmatpush1.xpose.msra.mxu0 %v3156
    %3194 = vmatprep.subr.mxu0 0.0
    %3195 = vmatpush2.xpose.msra.mxu0 0.0
    %3196 = vmatprep.subr.mxu0 0.0
    %3197 = vmatpush2.xpose.msra.mxu0 0.0
    %3198 = vmatprep.subr.mxu0 0.0
    %3199 = vmatpush2.xpose.msra.mxu0 0.0
    %3200 = vmatprep.subr.mxu0 0.0
    %3201 = vmatpush2.xpose.msra.mxu0 0.0
    %3202 = vmatprep.subr.mxu0 0.0
    %3203 = vmatpush2.xpose.msra.mxu0 0.0
    %3204 = vmatprep.subr.mxu0 0.0
    %3205 = vmatpush2.xpose.msra.mxu0 0.0
    %3206 = vmatprep.subr.mxu0 0.0
    %3207 = vmatpush2.xpose.msra.mxu0 0.0
    %3208 = vmatprep.subr.mxu0 0.0
    %3209 = vmatpush2.xpose.msra.mxu0 0.0
    %3210 = vmatprep.subr.mxu0 0.0
    %3211 = vmatpush2.xpose.msra.mxu0 0.0
    %3212 = vmatprep.subr.mxu0 0.0
    %3213 = vmatpush2.xpose.msra.mxu0 0.0
    %3214 = vmatprep.subr.mxu0 0.0
    %3215 = vmatpush2.xpose.msra.mxu0 0.0
    %3216 = vmatprep.subr.mxu0 0.0
    %3217 = vmatpush2.xpose.msra.mxu0 0.0
    %3218 = vmatprep.subr.mxu0 0.0
    %3219 = vmatpush2.xpose.msra.mxu0 0.0
    %3220 = vmatprep.subr.mxu0 0.0
    %3221 = vmatpush2.xpose.msra.mxu0 0.0
    %3222 = vmatprep.subr.mxu0 0.0
    %3223 = vmatpush2.xpose.msra.mxu0 0.0
    %3224 = vmatprep.subr.mxu0 0.0
    %3225 = vmatpush2.xpose.msra.mxu0 0.0
    %3226 = vmatprep.mubr.f32.mxu0 0.0
    %3227 = vmatmul.mubr.f32.gmra.mxu0 %v3150
    %v3228 = vpop.f32.mrf.mxu0
    %v3229 = vadd.f32 %v561, %v3228
    %v3230 = vpop.f32.mrf.mxu0
    %3231 = vmatprep.mubr.f32.mxu0 0.0
    %3232 = vmatmul.mubr.f32.gmra.mxu0 %v3152
    %v3233 = vpop.f32.mrf.mxu0
    %v3234 = vadd.f32 %v562, %v3233
    %v3235 = vpop.f32.mrf.mxu0
    %3236 = vmatprep.mubr.f32.mxu0 0.0
    %3237 = vmatmul.mubr.f32.gmra.mxu0 %v3154
    %v3238 = vpop.f32.mrf.mxu0
    %v3239 = vadd.f32 %v563, %v3238
    %v3240 = vpop.f32.mrf.mxu0
    %3241 = vdwg.mxu0
    %v3242 = vsel %vm838, %v3229, -inf
    %3243 = vmax.xlane.f32.xlu0 %v3242
    %v3244 = vpop.xlane.xlu0 %3243
    %v3245 = vsel %vm838, %v3234, -inf
    %3246 = vmax.xlane.f32.xlu0 %v3245
    %v3247 = vpop.xlane.xlu0 %3246
    %v3248 = vsel %vm845, %v3239, -inf
    %3249 = vmax.xlane.f32.xlu0 %v3248
    %v3250 = vpop.xlane.xlu0 %3249
    %v3251 = vsub.f32 %v3229, %v3244
    %v3252 = vsub.f32 %v3234, %v3247
    %v3253 = vsub.f32 %v3239, %v3250
    %v3254 = vmul.f32 %v3251, 1.442695
    %v3255 = vpow.pop %v3254
    %v3256 = vmul.f32 %v3252, 1.442695
    %v3257 = vpow.pop %v3256
    %v3258 = vmul.f32 %v3253, 1.442695
    %v3259 = vpow.pop %v3258
    %v3260 = vsel %vm838, %v3255, 0.0
    %3261 = vadd.xlane.f32.xlu0 %v3260
    %v3262 = vpop.xlane.xlu0 %3261
    %v3263 = vsel %vm838, %v3257, 0.0
    %3264 = vadd.xlane.f32.xlu0 %v3263
    %v3265 = vpop.xlane.xlu0 %3264
    %v3266 = vsel %vm845, %v3259, 0.0
    %3267 = vadd.xlane.f32.xlu0 %v3266
    %v3268 = vpop.xlane.xlu0 %3267
    %v3269 = vrcp.pop %v3262
    %v3270 = vrcp.pop %v3265
    %v3271 = vrcp.pop %v3268
    %v3272 = vmul.f32 %v3255, %v3269
    %v3273 = vmul.f32 %v3257, %v3270
    %v3274 = vmul.f32 %v3259, %v3271
    %3275 = vrot.lane.b32.xlu0 %v3132, 73
    %v3276 = vpop.permute.xlu0 %3275
    %3277 = vrot.lane.b32.xlu0 %v3133, 73
    %v3278 = vpop.permute.xlu0 %3277
    %3279 = vrot.lane.b32.xlu0 %v3134, 73
    %v3280 = vpop.permute.xlu0 %3279
    %v3284 = vsel %vm838, %v3272, 0
    %v3287 = vsel %vm838, %v3273, 0
    %v3290 = vsel %vm838, %v3274, 0
    %v3292 = vsel %vm253, %v3280, 0
    %3294 = vmatprep.subr.mxu0 0.0
    %3295 = vmatpush1.msra.mxu0 0.0
    %3296 = vmatprep.subr.mxu0 0.0
    %3297 = vmatpush1.msra.mxu0 0.0
    %3298 = vmatprep.subr.mxu0 0.0
    %3299 = vmatpush1.msra.mxu0 0.0
    %3300 = vmatprep.subr.mxu0 0.0
    %3301 = vmatpush1.msra.mxu0 0.0
    %3302 = vmatprep.subr.mxu0 0.0
    %3303 = vmatpush1.msra.mxu0 0.0
    %3304 = vmatprep.subr.mxu0 0.0
    %3305 = vmatpush1.msra.mxu0 0.0
    %3306 = vmatprep.subr.mxu0 0.0
    %3307 = vmatpush1.msra.mxu0 0.0
    %3308 = vmatprep.subr.mxu0 0.0
    %3309 = vmatpush1.msra.mxu0 0.0
    %3310 = vmatprep.subr.mxu0 0.0
    %3311 = vmatpush1.msra.mxu0 0.0
    %3312 = vmatprep.subr.mxu0 0.0
    %3313 = vmatpush1.msra.mxu0 0.0
    %3314 = vmatprep.subr.mxu0 0.0
    %3315 = vmatpush1.msra.mxu0 0.0
    %3316 = vmatprep.subr.mxu0 0.0
    %3317 = vmatpush1.msra.mxu0 0.0
    %3318 = vmatprep.subr.mxu0 0.0
    %3319 = vmatpush1.msra.mxu0 0.0
    %3320 = vmatprep.subr.mxu0 0.0
    %3321 = vmatpush1.msra.mxu0 %v3292
    %3322 = vmatprep.subr.mxu0 0.0
    %3323 = vmatpush1.msra.mxu0 %v3278
    %3324 = vmatprep.subr.mxu0 0.0
    %3325 = vmatpush1.msra.mxu0 %v3276
    %3326 = vmatprep.subr.mxu0 0.0
    %3327 = vmatpush2.msra.mxu0 0.0
    %3328 = vmatprep.subr.mxu0 0.0
    %3329 = vmatpush2.msra.mxu0 0.0
    %3330 = vmatprep.subr.mxu0 0.0
    %3331 = vmatpush2.msra.mxu0 0.0
    %3332 = vmatprep.subr.mxu0 0.0
    %3333 = vmatpush2.msra.mxu0 0.0
    %3334 = vmatprep.subr.mxu0 0.0
    %3335 = vmatpush2.msra.mxu0 0.0
    %3336 = vmatprep.subr.mxu0 0.0
    %3337 = vmatpush2.msra.mxu0 0.0
    %3338 = vmatprep.subr.mxu0 0.0
    %3339 = vmatpush2.msra.mxu0 0.0
    %3340 = vmatprep.subr.mxu0 0.0
    %3341 = vmatpush2.msra.mxu0 0.0
    %3342 = vmatprep.subr.mxu0 0.0
    %3343 = vmatpush2.msra.mxu0 0.0
    %3344 = vmatprep.subr.mxu0 0.0
    %3345 = vmatpush2.msra.mxu0 0.0
    %3346 = vmatprep.subr.mxu0 0.0
    %3347 = vmatpush2.msra.mxu0 0.0
    %3348 = vmatprep.subr.mxu0 0.0
    %3349 = vmatpush2.msra.mxu0 0.0
    %3350 = vmatprep.subr.mxu0 0.0
    %3351 = vmatpush2.msra.mxu0 0.0
    %3352 = vmatprep.subr.mxu0 0.0
    %3353 = vmatpush2.msra.mxu0 0.0
    %3354 = vmatprep.subr.mxu0 0.0
    %3355 = vmatpush2.msra.mxu0 0.0
    %3356 = vmatprep.subr.mxu0 0.0
    %3357 = vmatpush2.msra.mxu0 0.0
    %3358 = vmatprep.mubr.f32.mxu0 0.0
    %3359 = vmatmul.mubr.f32.gmra.mxu0 %v3284
    %v3360 = vpop.f32.mrf.mxu0
    %v3361 = vadd.f32 0.0, %v3360
    %v3362 = vpop.f32.mrf.mxu0
    %3363 = vmatprep.mubr.f32.mxu0 0.0
    %3364 = vmatmul.mubr.f32.gmra.mxu0 %v3287
    %v3365 = vpop.f32.mrf.mxu0
    %v3366 = vadd.f32 0.0, %v3365
    %v3367 = vpop.f32.mrf.mxu0
    %3368 = vmatprep.mubr.f32.mxu0 0.0
    %3369 = vmatmul.mubr.f32.gmra.mxu0 %v3290
    %v3370 = vpop.f32.mrf.mxu0
    %v3371 = vadd.f32 0.0, %v3370
    %v3372 = vpop.f32.mrf.mxu0
    %3373 = vdwg.mxu0
    %3377 = vrot.lane.b32.xlu0 %v3361, 15
    %v3378 = vpop.permute.xlu0 %3377
    %3379 = vrot.lane.b32.xlu0 %v3366, 15
    %v3380 = vpop.permute.xlu0 %3379
    %3381 = vrot.lane.b32.xlu0 %v3371, 15
    %v3382 = vpop.permute.xlu0 %3381
    %3386 = vst.msk [vmem:[#allocation6] sm:$0xff] %vm1748, %v3378
    %3387 = vst.msk [vmem:[#allocation6 + $0x8] sm:$0xff] %vm1748, %v3380
    %3388 = vst.msk [vmem:[#allocation6 + $0x10] sm:$0x3] %vm1751, %v3382
    %v3389 = vld [vmem:[#allocation6] sm:$0xff]
    %v3390 = vld [vmem:[#allocation6 + $0x8] sm:$0xff]
    %v3391 = vld [vmem:[#allocation6 + $0x10] sm:$0x3]
    %s3392 = scalar_lea.vmem %s11, 24
    %v3393 = vld [vmem:[%s3392] sm:$0xff]
    %v3394 = vld [vmem:[%s3392 + $0x8] sm:$0xff]
    %v3395 = vld [vmem:[%s3392 + $0x10] sm:$0xf]
    %s3396 = scalar_lea.vmem %s12, 1
    %v3397 = vld [vmem:[%s3396] sm:$0x1]
    %v3399 = vlaneseq
    %v3400 = vshrl.u32 %v3399, 7
    %v3401 = vsub.s32 0, %v3400
    %v3402 = vrot.slane %v3397, %v3401
    %v3405 = vsel %vm566, %v3389, 0
    %v3408 = vsel %vm566, %v3390, 0
    %v3411 = vsel %vm566, %v3391, 0
    %v3414 = vsel %vm644, %v3395, 0
    %3416 = vmatprep.subr.mxu0 0.0
    %3417 = vmatpush1.msra.mxu0 0.0
    %3418 = vmatprep.subr.mxu0 0.0
    %3419 = vmatpush1.msra.mxu0 0.0
    %3420 = vmatprep.subr.mxu0 0.0
    %3421 = vmatpush1.msra.mxu0 0.0
    %3422 = vmatprep.subr.mxu0 0.0
    %3423 = vmatpush1.msra.mxu0 0.0
    %3424 = vmatprep.subr.mxu0 0.0
    %3425 = vmatpush1.msra.mxu0 0.0
    %3426 = vmatprep.subr.mxu0 0.0
    %3427 = vmatpush1.msra.mxu0 0.0
    %3428 = vmatprep.subr.mxu0 0.0
    %3429 = vmatpush1.msra.mxu0 0.0
    %3430 = vmatprep.subr.mxu0 0.0
    %3431 = vmatpush1.msra.mxu0 0.0
    %3432 = vmatprep.subr.mxu0 0.0
    %3433 = vmatpush1.msra.mxu0 0.0
    %3434 = vmatprep.subr.mxu0 0.0
    %3435 = vmatpush1.msra.mxu0 0.0
    %3436 = vmatprep.subr.mxu0 0.0
    %3437 = vmatpush1.msra.mxu0 0.0
    %3438 = vmatprep.subr.mxu0 0.0
    %3439 = vmatpush1.msra.mxu0 0.0
    %3440 = vmatprep.subr.mxu0 0.0
    %3441 = vmatpush1.msra.mxu0 0.0
    %3442 = vmatprep.subr.mxu0 0.0
    %3443 = vmatpush1.msra.mxu0 %v3414
    %3444 = vmatprep.subr.mxu0 0.0
    %3445 = vmatpush1.msra.mxu0 %v3394
    %3446 = vmatprep.subr.mxu0 0.0
    %3447 = vmatpush1.msra.mxu0 %v3393
    %3448 = vmatprep.subr.mxu0 0.0
    %3449 = vmatpush2.msra.mxu0 0.0
    %3450 = vmatprep.subr.mxu0 0.0
    %3451 = vmatpush2.msra.mxu0 0.0
    %3452 = vmatprep.subr.mxu0 0.0
    %3453 = vmatpush2.msra.mxu0 0.0
    %3454 = vmatprep.subr.mxu0 0.0
    %3455 = vmatpush2.msra.mxu0 0.0
    %3456 = vmatprep.subr.mxu0 0.0
    %3457 = vmatpush2.msra.mxu0 0.0
    %3458 = vmatprep.subr.mxu0 0.0
    %3459 = vmatpush2.msra.mxu0 0.0
    %3460 = vmatprep.subr.mxu0 0.0
    %3461 = vmatpush2.msra.mxu0 0.0
    %3462 = vmatprep.subr.mxu0 0.0
    %3463 = vmatpush2.msra.mxu0 0.0
    %3464 = vmatprep.subr.mxu0 0.0
    %3465 = vmatpush2.msra.mxu0 0.0
    %3466 = vmatprep.subr.mxu0 0.0
    %3467 = vmatpush2.msra.mxu0 0.0
    %3468 = vmatprep.subr.mxu0 0.0
    %3469 = vmatpush2.msra.mxu0 0.0
    %3470 = vmatprep.subr.mxu0 0.0
    %3471 = vmatpush2.msra.mxu0 0.0
    %3472 = vmatprep.subr.mxu0 0.0
    %3473 = vmatpush2.msra.mxu0 0.0
    %3474 = vmatprep.subr.mxu0 0.0
    %3475 = vmatpush2.msra.mxu0 0.0
    %3476 = vmatprep.subr.mxu0 0.0
    %3477 = vmatpush2.msra.mxu0 0.0
    %3478 = vmatprep.subr.mxu0 0.0
    %3479 = vmatpush2.msra.mxu0 0.0
    %3480 = vmatprep.mubr.f32.mxu0 0.0
    %3481 = vmatmul.mubr.f32.gmra.mxu0 %v3405
    %v3482 = vpop.f32.mrf.mxu0
    %v3483 = vadd.f32 %v3402, %v3482
    %v3484 = vpop.f32.mrf.mxu0
    %3485 = vmatprep.mubr.f32.mxu0 0.0
    %3486 = vmatmul.mubr.f32.gmra.mxu0 %v3408
    %v3487 = vpop.f32.mrf.mxu0
    %v3488 = vadd.f32 %v3402, %v3487
    %v3489 = vpop.f32.mrf.mxu0
    %3490 = vmatprep.mubr.f32.mxu0 0.0
    %3491 = vmatmul.mubr.f32.gmra.mxu0 %v3411
    %v3492 = vpop.f32.mrf.mxu0
    %v3493 = vadd.f32 %v3402, %v3492
    %v3494 = vpop.f32.mrf.mxu0
    %3495 = vdwg.mxu0
    %v3496 = vadd.f32 %v2208, %v3483
    %v3497 = vadd.f32 %v2209, %v3488
    %v3498 = vadd.f32 %v2210, %v3493
    %s3499 = scalar_lea.vmem %s13, 1
    %v3500 = vld [vmem:[%s3499] sm:$0x1]
    %s3501 = scalar_lea.vmem %s14, 1
    %v3502 = vld [vmem:[%s3501] sm:$0x1]
    %v3503 = vsel %vm566, %v3496, 0.0
    %3504 = vadd.xlane.f32.xlu0 %v3503
    %v3505 = vpop.xlane.xlu0 %3504
    %v3506 = vsel %vm566, %v3497, 0.0
    %3507 = vadd.xlane.f32.xlu0 %v3506
    %v3508 = vpop.xlane.xlu0 %3507
    %v3509 = vsel %vm452, %v3498, 0.0
    %3510 = vadd.xlane.f32.xlu0 %v3509
    %v3511 = vpop.xlane.xlu0 %3510
    %v3512 = vmul.f32 %v3505, %v576
    %v3513 = vmul.f32 %v3508, %v576
    %v3514 = vmul.f32 %v3511, %v576
    %v3515 = vsub.f32 %v3496, %v3512
    %v3516 = vsub.f32 %v3497, %v3513
    %v3517 = vsub.f32 %v3498, %v3514
    %v3518 = vmul.f32 %v3515, %v3515
    %v3519 = vmul.f32 %v3516, %v3516
    %v3520 = vmul.f32 %v3517, %v3517
    %v3521 = vsel %vm566, %v3518, 0.0
    %3522 = vadd.xlane.f32.xlu0 %v3521
    %v3523 = vpop.xlane.xlu0 %3522
    %v3524 = vsel %vm566, %v3519, 0.0
    %3525 = vadd.xlane.f32.xlu0 %v3524
    %v3526 = vpop.xlane.xlu0 %3525
    %v3527 = vsel %vm452, %v3520, 0.0
    %3528 = vadd.xlane.f32.xlu0 %v3527
    %v3529 = vpop.xlane.xlu0 %3528
    %v3530 = vmul.f32 %v3523, %v576
    %v3531 = vmul.f32 %v3526, %v576
    %v3532 = vmul.f32 %v3529, %v576
    %v3533 = vadd.f32 %v3530, 1e-05
    %v3534 = vadd.f32 %v3531, 1e-05
    %v3535 = vadd.f32 %v3532, 1e-05
    %v3536 = vrsqrt.pop %v3533
    %v3537 = vrsqrt.pop %v3534
    %v3538 = vrsqrt.pop %v3535
    %v3539 = vmul.f32 %v3515, %v3536
    %v3540 = vmul.f32 %v3516, %v3537
    %v3541 = vmul.f32 %v3517, %v3538
    %v3543 = vlaneseq
    %v3544 = vshrl.u32 %v3543, 7
    %v3545 = vsub.s32 0, %v3544
    %v3546 = vrot.slane %v3500, %v3545
    %v3548 = vmul.f32 %v3539, %v3546
    %v3549 = vmul.f32 %v3540, %v3546
    %v3550 = vmul.f32 %v3541, %v3546
    %v3552 = vlaneseq
    %v3553 = vshrl.u32 %v3552, 7
    %v3554 = vsub.s32 0, %v3553
    %v3555 = vrot.slane %v3502, %v3554
    %v3557 = vadd.f32 %v3548, %v3555
    %v3558 = vadd.f32 %v3549, %v3555
    %v3559 = vadd.f32 %v3550, %v3555
    %s3560 = scalar_lea.vmem %s15, 24
    %v3561 = vld [vmem:[%s3560] sm:$0xff]
    %v3562 = vld [vmem:[%s3560 + $0x8] sm:$0xff]
    %v3563 = vld [vmem:[%s3560 + $0x10] sm:$0xf]
    %s3564 = scalar_lea.vmem %s16, 1
    %v3565 = vld [vmem:[%s3564] sm:$0x1]
    %v3567 = vlaneseq
    %v3568 = vshrl.u32 %v3567, 7
    %v3569 = vsub.s32 0, %v3568
    %v3570 = vrot.slane %v3565, %v3569
    %v3573 = vsel %vm566, %v3557, 0
    %v3576 = vsel %vm566, %v3558, 0
    %v3579 = vsel %vm566, %v3559, 0
    %v3582 = vsel %vm644, %v3563, 0
    %3584 = vmatprep.subr.mxu0 0.0
    %3585 = vmatpush1.msra.mxu0 0.0
    %3586 = vmatprep.subr.mxu0 0.0
    %3587 = vmatpush1.msra.mxu0 0.0
    %3588 = vmatprep.subr.mxu0 0.0
    %3589 = vmatpush1.msra.mxu0 0.0
    %3590 = vmatprep.subr.mxu0 0.0
    %3591 = vmatpush1.msra.mxu0 0.0
    %3592 = vmatprep.subr.mxu0 0.0
    %3593 = vmatpush1.msra.mxu0 0.0
    %3594 = vmatprep.subr.mxu0 0.0
    %3595 = vmatpush1.msra.mxu0 0.0
    %3596 = vmatprep.subr.mxu0 0.0
    %3597 = vmatpush1.msra.mxu0 0.0
    %3598 = vmatprep.subr.mxu0 0.0
    %3599 = vmatpush1.msra.mxu0 0.0
    %3600 = vmatprep.subr.mxu0 0.0
    %3601 = vmatpush1.msra.mxu0 0.0
    %3602 = vmatprep.subr.mxu0 0.0
    %3603 = vmatpush1.msra.mxu0 0.0
    %3604 = vmatprep.subr.mxu0 0.0
    %3605 = vmatpush1.msra.mxu0 0.0
    %3606 = vmatprep.subr.mxu0 0.0
    %3607 = vmatpush1.msra.mxu0 0.0
    %3608 = vmatprep.subr.mxu0 0.0
    %3609 = vmatpush1.msra.mxu0 0.0
    %3610 = vmatprep.subr.mxu0 0.0
    %3611 = vmatpush1.msra.mxu0 %v3582
    %3612 = vmatprep.subr.mxu0 0.0
    %3613 = vmatpush1.msra.mxu0 %v3562
    %3614 = vmatprep.subr.mxu0 0.0
    %3615 = vmatpush1.msra.mxu0 %v3561
    %3616 = vmatprep.subr.mxu0 0.0
    %3617 = vmatpush2.msra.mxu0 0.0
    %3618 = vmatprep.subr.mxu0 0.0
    %3619 = vmatpush2.msra.mxu0 0.0
    %3620 = vmatprep.subr.mxu0 0.0
    %3621 = vmatpush2.msra.mxu0 0.0
    %3622 = vmatprep.subr.mxu0 0.0
    %3623 = vmatpush2.msra.mxu0 0.0
    %3624 = vmatprep.subr.mxu0 0.0
    %3625 = vmatpush2.msra.mxu0 0.0
    %3626 = vmatprep.subr.mxu0 0.0
    %3627 = vmatpush2.msra.mxu0 0.0
    %3628 = vmatprep.subr.mxu0 0.0
    %3629 = vmatpush2.msra.mxu0 0.0
    %3630 = vmatprep.subr.mxu0 0.0
    %3631 = vmatpush2.msra.mxu0 0.0
    %3632 = vmatprep.subr.mxu0 0.0
    %3633 = vmatpush2.msra.mxu0 0.0
    %3634 = vmatprep.subr.mxu0 0.0
    %3635 = vmatpush2.msra.mxu0 0.0
    %3636 = vmatprep.subr.mxu0 0.0
    %3637 = vmatpush2.msra.mxu0 0.0
    %3638 = vmatprep.subr.mxu0 0.0
    %3639 = vmatpush2.msra.mxu0 0.0
    %3640 = vmatprep.subr.mxu0 0.0
    %3641 = vmatpush2.msra.mxu0 0.0
    %3642 = vmatprep.subr.mxu0 0.0
    %3643 = vmatpush2.msra.mxu0 0.0
    %3644 = vmatprep.subr.mxu0 0.0
    %3645 = vmatpush2.msra.mxu0 0.0
    %3646 = vmatprep.subr.mxu0 0.0
    %3647 = vmatpush2.msra.mxu0 0.0
    %3648 = vmatprep.mubr.f32.mxu0 0.0
    %3649 = vmatmul.mubr.f32.gmra.mxu0 %v3573
    %v3650 = vpop.f32.mrf.mxu0
    %v3651 = vadd.f32 %v3570, %v3650
    %v3652 = vpop.f32.mrf.mxu0
    %3653 = vmatprep.mubr.f32.mxu0 0.0
    %3654 = vmatmul.mubr.f32.gmra.mxu0 %v3576
    %v3655 = vpop.f32.mrf.mxu0
    %v3656 = vadd.f32 %v3570, %v3655
    %v3657 = vpop.f32.mrf.mxu0
    %3658 = vmatprep.mubr.f32.mxu0 0.0
    %3659 = vmatmul.mubr.f32.gmra.mxu0 %v3579
    %v3660 = vpop.f32.mrf.mxu0
    %v3661 = vadd.f32 %v3570, %v3660
    %v3662 = vpop.f32.mrf.mxu0
    %3663 = vdwg.mxu0
    %v3664 = vmul.f32 %v3651, 0.5
    %v3665 = vmul.f32 %v3656, 0.5
    %v3666 = vmul.f32 %v3661, 0.5
    %v3667 = vmul.f32 %v3651, 0.70710677
    %v3668 = vmul.f32 %v3656, 0.70710677
    %v3669 = vmul.f32 %v3661, 0.70710677
    %vm3670 = vcmp.ge.f32.partialorder %v3667, 0.0
    %vm3671 = vcmp.ge.f32.partialorder %v3668, 0.0
    %vm3672 = vcmp.ge.f32.partialorder %v3669, 0.0
    %v3673 = vsel %vm3670, 1.0, -1.0
    %v3674 = vsel %vm3671, 1.0, -1.0
    %v3675 = vsel %vm3672, 1.0, -1.0
    %v3676 = vand.u32 2147483647, %v3667
    %v3677 = vand.u32 2147483647, %v3668
    %v3678 = vand.u32 2147483647, %v3669
    %v3679 = vmul.f32 %v3676, 0.3275911
    %v3680 = vmul.f32 %v3677, 0.3275911
    %v3681 = vmul.f32 %v3678, 0.3275911
    %v3682 = vadd.f32 %v3679, 1.0
    %v3683 = vadd.f32 %v3680, 1.0
    %v3684 = vadd.f32 %v3681, 1.0
    %v3685 = vrcp.pop %v3682
    %v3686 = vmul.f32 1.0, %v3685
    %v3687 = vrcp.pop %v3683
    %v3688 = vmul.f32 1.0, %v3687
    %v3689 = vrcp.pop %v3684
    %v3690 = vmul.f32 1.0, %v3689
    %v3691 = vmul.f32 %v3686, 1.0614054
    %v3692 = vmul.f32 %v3688, 1.0614054
    %v3693 = vmul.f32 %v3690, 1.0614054
    %v3694 = vadd.f32 %v3691, -1.4531521
    %v3695 = vadd.f32 %v3692, -1.4531521
    %v3696 = vadd.f32 %v3693, -1.4531521
    %v3697 = vmul.f32 %v3694, %v3686
    %v3698 = vmul.f32 %v3695, %v3688
    %v3699 = vmul.f32 %v3696, %v3690
    %v3700 = vadd.f32 %v3697, 1.4214138
    %v3701 = vadd.f32 %v3698, 1.4214138
    %v3702 = vadd.f32 %v3699, 1.4214138
    %v3703 = vmul.f32 %v3700, %v3686
    %v3704 = vmul.f32 %v3701, %v3688
    %v3705 = vmul.f32 %v3702, %v3690
    %v3706 = vadd.f32 %v3703, -0.28449672
    %v3707 = vadd.f32 %v3704, -0.28449672
    %v3708 = vadd.f32 %v3705, -0.28449672
    %v3709 = vmul.f32 %v3706, %v3686
    %v3710 = vmul.f32 %v3707, %v3688
    %v3711 = vmul.f32 %v3708, %v3690
    %v3712 = vadd.f32 %v3709, 0.2548296
    %v3713 = vadd.f32 %v3710, 0.2548296
    %v3714 = vadd.f32 %v3711, 0.2548296
    %v3715 = vmul.f32 %v3712, %v3686
    %v3716 = vmul.f32 %v3713, %v3688
    %v3717 = vmul.f32 %v3714, %v3690
    %v3718 = vsub.f32 0.0, %v3676
    %v3719 = vsub.f32 0.0, %v3677
    %v3720 = vsub.f32 0.0, %v3678
    %v3721 = vmul.f32 %v3718, %v3676
    %v3722 = vmul.f32 %v3719, %v3677
    %v3723 = vmul.f32 %v3720, %v3678
    %v3724 = vmul.f32 %v3721, 1.442695
    %v3725 = vpow.pop %v3724
    %v3726 = vmul.f32 %v3722, 1.442695
    %v3727 = vpow.pop %v3726
    %v3728 = vmul.f32 %v3723, 1.442695
    %v3729 = vpow.pop %v3728
    %v3730 = vmul.f32 %v3715, %v3725
    %v3731 = vmul.f32 %v3716, %v3727
    %v3732 = vmul.f32 %v3717, %v3729
    %v3733 = vsub.f32 1.0, %v3730
    %v3734 = vsub.f32 1.0, %v3731
    %v3735 = vsub.f32 1.0, %v3732
    %v3736 = vmul.f32 %v3673, %v3733
    %v3737 = vmul.f32 %v3674, %v3734
    %v3738 = vmul.f32 %v3675, %v3735
    %v3739 = vadd.f32 %v3736, 1.0
    %v3740 = vadd.f32 %v3737, 1.0
    %v3741 = vadd.f32 %v3738, 1.0
    %v3742 = vmul.f32 %v3664, %v3739
    %v3743 = vmul.f32 %v3665, %v3740
    %v3744 = vmul.f32 %v3666, %v3741
    %s3745 = scalar_lea.vmem %s17, 64
    %v3746 = vld [vmem:[%s3745] sm:$0xff]
    %v3747 = vld [vmem:[%s3745 + $0x8] sm:$0xff]
    %v3748 = vld [vmem:[%s3745 + $0x10] sm:$0xff]
    %v3749 = vld [vmem:[%s3745 + $0x18] sm:$0xff]
    %v3750 = vld [vmem:[%s3745 + $0x20] sm:$0xff]
    %v3751 = vld [vmem:[%s3745 + $0x28] sm:$0xff]
    %v3752 = vld [vmem:[%s3745 + $0x30] sm:$0xff]
    %v3753 = vld [vmem:[%s3745 + $0x38] sm:$0xff]
    %s3754 = scalar_lea.vmem %s18, 1
    %v3755 = vld [vmem:[%s3754] sm:$0x1]
    %v3757 = vlaneseq
    %v3758 = vshrl.u32 %v3757, 7
    %v3759 = vsub.s32 0, %v3758
    %v3760 = vrot.slane %v3755, %v3759
    %v3763 = vsel %vm2118, %v3742, 0
    %v3766 = vsel %vm2118, %v3743, 0
    %v3769 = vsel %vm2118, %v3744, 0
    %3771 = vmatprep.subr.mxu0 0.0
    %3772 = vmatpush1.msra.mxu0 0.0
    %3773 = vmatprep.subr.mxu0 0.0
    %3774 = vmatpush1.msra.mxu0 0.0
    %3775 = vmatprep.subr.mxu0 0.0
    %3776 = vmatpush1.msra.mxu0 0.0
    %3777 = vmatprep.subr.mxu0 0.0
    %3778 = vmatpush1.msra.mxu0 0.0
    %3779 = vmatprep.subr.mxu0 0.0
    %3780 = vmatpush1.msra.mxu0 0.0
    %3781 = vmatprep.subr.mxu0 0.0
    %3782 = vmatpush1.msra.mxu0 0.0
    %3783 = vmatprep.subr.mxu0 0.0
    %3784 = vmatpush1.msra.mxu0 0.0
    %3785 = vmatprep.subr.mxu0 0.0
    %3786 = vmatpush1.msra.mxu0 0.0
    %3787 = vmatprep.subr.mxu0 0.0
    %3788 = vmatpush1.msra.mxu0 %v3753
    %3789 = vmatprep.subr.mxu0 0.0
    %3790 = vmatpush1.msra.mxu0 %v3752
    %3791 = vmatprep.subr.mxu0 0.0
    %3792 = vmatpush1.msra.mxu0 %v3751
    %3793 = vmatprep.subr.mxu0 0.0
    %3794 = vmatpush1.msra.mxu0 %v3750
    %3795 = vmatprep.subr.mxu0 0.0
    %3796 = vmatpush1.msra.mxu0 %v3749
    %3797 = vmatprep.subr.mxu0 0.0
    %3798 = vmatpush1.msra.mxu0 %v3748
    %3799 = vmatprep.subr.mxu0 0.0
    %3800 = vmatpush1.msra.mxu0 %v3747
    %3801 = vmatprep.subr.mxu0 0.0
    %3802 = vmatpush1.msra.mxu0 %v3746
    %3803 = vmatprep.subr.mxu0 0.0
    %3804 = vmatpush2.msra.mxu0 0.0
    %3805 = vmatprep.subr.mxu0 0.0
    %3806 = vmatpush2.msra.mxu0 0.0
    %3807 = vmatprep.subr.mxu0 0.0
    %3808 = vmatpush2.msra.mxu0 0.0
    %3809 = vmatprep.subr.mxu0 0.0
    %3810 = vmatpush2.msra.mxu0 0.0
    %3811 = vmatprep.subr.mxu0 0.0
    %3812 = vmatpush2.msra.mxu0 0.0
    %3813 = vmatprep.subr.mxu0 0.0
    %3814 = vmatpush2.msra.mxu0 0.0
    %3815 = vmatprep.subr.mxu0 0.0
    %3816 = vmatpush2.msra.mxu0 0.0
    %3817 = vmatprep.subr.mxu0 0.0
    %3818 = vmatpush2.msra.mxu0 0.0
    %3819 = vmatprep.subr.mxu0 0.0
    %3820 = vmatpush2.msra.mxu0 0.0
    %3821 = vmatprep.subr.mxu0 0.0
    %3822 = vmatpush2.msra.mxu0 0.0
    %3823 = vmatprep.subr.mxu0 0.0
    %3824 = vmatpush2.msra.mxu0 0.0
    %3825 = vmatprep.subr.mxu0 0.0
    %3826 = vmatpush2.msra.mxu0 0.0
    %3827 = vmatprep.subr.mxu0 0.0
    %3828 = vmatpush2.msra.mxu0 0.0
    %3829 = vmatprep.subr.mxu0 0.0
    %3830 = vmatpush2.msra.mxu0 0.0
    %3831 = vmatprep.subr.mxu0 0.0
    %3832 = vmatpush2.msra.mxu0 0.0
    %3833 = vmatprep.subr.mxu0 0.0
    %3834 = vmatpush2.msra.mxu0 0.0
    %3835 = vmatprep.mubr.f32.mxu0 0.0
    %3836 = vmatmul.mubr.f32.gmra.mxu0 %v3763
    %v3837 = vpop.f32.mrf.mxu0
    %v3838 = vadd.f32 %v3760, %v3837
    %v3839 = vpop.f32.mrf.mxu0
    %3840 = vmatprep.mubr.f32.mxu0 0.0
    %3841 = vmatmul.mubr.f32.gmra.mxu0 %v3766
    %v3842 = vpop.f32.mrf.mxu0
    %v3843 = vadd.f32 %v3760, %v3842
    %v3844 = vpop.f32.mrf.mxu0
    %3845 = vmatprep.mubr.f32.mxu0 0.0
    %3846 = vmatmul.mubr.f32.gmra.mxu0 %v3769
    %v3847 = vpop.f32.mrf.mxu0
    %v3848 = vadd.f32 %v3760, %v3847
    %v3849 = vpop.f32.mrf.mxu0
    %3850 = vdwg.mxu0
    %v3851 = vadd.f32 %v3496, %v3838
    %v3852 = vadd.f32 %v3497, %v3843
    %v3853 = vadd.f32 %v3498, %v3848
    %s3854 = scalar_lea.vmem %s7, 2
    %v3855 = vld [vmem:[%s3854] sm:$0x1]
    %s3856 = scalar_lea.vmem %s8, 2
    %v3857 = vld [vmem:[%s3856] sm:$0x1]
    %v3858 = vsel %vm566, %v3851, 0.0
    %3859 = vadd.xlane.f32.xlu0 %v3858
    %v3860 = vpop.xlane.xlu0 %3859
    %v3861 = vsel %vm566, %v3852, 0.0
    %3862 = vadd.xlane.f32.xlu0 %v3861
    %v3863 = vpop.xlane.xlu0 %3862
    %v3864 = vsel %vm452, %v3853, 0.0
    %3865 = vadd.xlane.f32.xlu0 %v3864
    %v3866 = vpop.xlane.xlu0 %3865
    %v3867 = vmul.f32 %v3860, %v576
    %v3868 = vmul.f32 %v3863, %v576
    %v3869 = vmul.f32 %v3866, %v576
    %v3870 = vsub.f32 %v3851, %v3867
    %v3871 = vsub.f32 %v3852, %v3868
    %v3872 = vsub.f32 %v3853, %v3869
    %v3873 = vmul.f32 %v3870, %v3870
    %v3874 = vmul.f32 %v3871, %v3871
    %v3875 = vmul.f32 %v3872, %v3872
    %v3876 = vsel %vm566, %v3873, 0.0
    %3877 = vadd.xlane.f32.xlu0 %v3876
    %v3878 = vpop.xlane.xlu0 %3877
    %v3879 = vsel %vm566, %v3874, 0.0
    %3880 = vadd.xlane.f32.xlu0 %v3879
    %v3881 = vpop.xlane.xlu0 %3880
    %v3882 = vsel %vm452, %v3875, 0.0
    %3883 = vadd.xlane.f32.xlu0 %v3882
    %v3884 = vpop.xlane.xlu0 %3883
    %v3885 = vmul.f32 %v3878, %v576
    %v3886 = vmul.f32 %v3881, %v576
    %v3887 = vmul.f32 %v3884, %v576
    %v3888 = vadd.f32 %v3885, 1e-05
    %v3889 = vadd.f32 %v3886, 1e-05
    %v3890 = vadd.f32 %v3887, 1e-05
    %v3891 = vrsqrt.pop %v3888
    %v3892 = vrsqrt.pop %v3889
    %v3893 = vrsqrt.pop %v3890
    %v3894 = vmul.f32 %v3870, %v3891
    %v3895 = vmul.f32 %v3871, %v3892
    %v3896 = vmul.f32 %v3872, %v3893
    %v3898 = vlaneseq
    %v3899 = vshrl.u32 %v3898, 7
    %v3900 = vsub.s32 0, %v3899
    %v3901 = vrot.slane %v3855, %v3900
    %v3903 = vmul.f32 %v3894, %v3901
    %v3904 = vmul.f32 %v3895, %v3901
    %v3905 = vmul.f32 %v3896, %v3901
    %v3907 = vlaneseq
    %v3908 = vshrl.u32 %v3907, 7
    %v3909 = vsub.s32 0, %v3908
    %v3910 = vrot.slane %v3857, %v3909
    %v3912 = vadd.f32 %v3903, %v3910
    %v3913 = vadd.f32 %v3904, %v3910
    %v3914 = vadd.f32 %v3905, %v3910
    %s3915 = scalar_lea.vmem %s9, 48
    %v3916 = vld [vmem:[%s3915] sm:$0xff]
    %v3917 = vld [vmem:[%s3915 + $0x8] sm:$0xff]
    %v3918 = vld [vmem:[%s3915 + $0x10] sm:$0xf]
    %s3919 = scalar_lea.vmem %s10, 2
    %v3920 = vld [vmem:[%s3919] sm:$0x1]
    %v3922 = vlaneseq
    %v3923 = vshrl.u32 %v3922, 7
    %v3924 = vsub.s32 0, %v3923
    %v3925 = vrot.slane %v3920, %v3924
    %v3928 = vsel %vm566, %v3912, 0
    %v3931 = vsel %vm566, %v3913, 0
    %v3934 = vsel %vm566, %v3914, 0
    %v3937 = vsel %vm644, %v3918, 0
    %3939 = vmatprep.subr.mxu0 0.0
    %3940 = vmatpush1.msra.mxu0 0.0
    %3941 = vmatprep.subr.mxu0 0.0
    %3942 = vmatpush1.msra.mxu0 0.0
    %3943 = vmatprep.subr.mxu0 0.0
    %3944 = vmatpush1.msra.mxu0 0.0
    %3945 = vmatprep.subr.mxu0 0.0
    %3946 = vmatpush1.msra.mxu0 0.0
    %3947 = vmatprep.subr.mxu0 0.0
    %3948 = vmatpush1.msra.mxu0 0.0
    %3949 = vmatprep.subr.mxu0 0.0
    %3950 = vmatpush1.msra.mxu0 0.0
    %3951 = vmatprep.subr.mxu0 0.0
    %3952 = vmatpush1.msra.mxu0 0.0
    %3953 = vmatprep.subr.mxu0 0.0
    %3954 = vmatpush1.msra.mxu0 0.0
    %3955 = vmatprep.subr.mxu0 0.0
    %3956 = vmatpush1.msra.mxu0 0.0
    %3957 = vmatprep.subr.mxu0 0.0
    %3958 = vmatpush1.msra.mxu0 0.0
    %3959 = vmatprep.subr.mxu0 0.0
    %3960 = vmatpush1.msra.mxu0 0.0
    %3961 = vmatprep.subr.mxu0 0.0
    %3962 = vmatpush1.msra.mxu0 0.0
    %3963 = vmatprep.subr.mxu0 0.0
    %3964 = vmatpush1.msra.mxu0 0.0
    %3965 = vmatprep.subr.mxu0 0.0
    %3966 = vmatpush1.msra.mxu0 %v3937
    %3967 = vmatprep.subr.mxu0 0.0
    %3968 = vmatpush1.msra.mxu0 %v3917
    %3969 = vmatprep.subr.mxu0 0.0
    %3970 = vmatpush1.msra.mxu0 %v3916
    %3971 = vmatprep.subr.mxu0 0.0
    %3972 = vmatpush2.msra.mxu0 0.0
    %3973 = vmatprep.subr.mxu0 0.0
    %3974 = vmatpush2.msra.mxu0 0.0
    %3975 = vmatprep.subr.mxu0 0.0
    %3976 = vmatpush2.msra.mxu0 0.0
    %3977 = vmatprep.subr.mxu0 0.0
    %3978 = vmatpush2.msra.mxu0 0.0
    %3979 = vmatprep.subr.mxu0 0.0
    %3980 = vmatpush2.msra.mxu0 0.0
    %3981 = vmatprep.subr.mxu0 0.0
    %3982 = vmatpush2.msra.mxu0 0.0
    %3983 = vmatprep.subr.mxu0 0.0
    %3984 = vmatpush2.msra.mxu0 0.0
    %3985 = vmatprep.subr.mxu0 0.0
    %3986 = vmatpush2.msra.mxu0 0.0
    %3987 = vmatprep.subr.mxu0 0.0
    %3988 = vmatpush2.msra.mxu0 0.0
    %3989 = vmatprep.subr.mxu0 0.0
    %3990 = vmatpush2.msra.mxu0 0.0
    %3991 = vmatprep.subr.mxu0 0.0
    %3992 = vmatpush2.msra.mxu0 0.0
    %3993 = vmatprep.subr.mxu0 0.0
    %3994 = vmatpush2.msra.mxu0 0.0
    %3995 = vmatprep.subr.mxu0 0.0
    %3996 = vmatpush2.msra.mxu0 0.0
    %3997 = vmatprep.subr.mxu0 0.0
    %3998 = vmatpush2.msra.mxu0 0.0
    %3999 = vmatprep.subr.mxu0 0.0
    %4000 = vmatpush2.msra.mxu0 0.0
    %4001 = vmatprep.subr.mxu0 0.0
    %4002 = vmatpush2.msra.mxu0 0.0
    %4003 = vmatprep.mubr.f32.mxu0 0.0
    %4004 = vmatmul.mubr.f32.gmra.mxu0 %v3928
    %v4005 = vpop.f32.mrf.mxu0
    %v4006 = vadd.f32 %v3925, %v4005
    %v4007 = vpop.f32.mrf.mxu0
    %4008 = vmatprep.mubr.f32.mxu0 0.0
    %4009 = vmatmul.mubr.f32.gmra.mxu0 %v3931
    %v4010 = vpop.f32.mrf.mxu0
    %v4011 = vadd.f32 %v3925, %v4010
    %v4012 = vpop.f32.mrf.mxu0
    %4013 = vmatprep.mubr.f32.mxu0 0.0
    %4014 = vmatmul.mubr.f32.gmra.mxu0 %v3934
    %v4015 = vpop.f32.mrf.mxu0
    %v4016 = vadd.f32 %v3925, %v4015
    %v4017 = vpop.f32.mrf.mxu0
    %4018 = vdwg.mxu0
    %4019 = vst.msk [vmem:[#allocation5] sm:$0xff] %vm728, %v4006
    %4020 = vst.msk [vmem:[#allocation5 + $0x8] sm:$0xff] %vm728, %v4011
    %4021 = vst.msk [vmem:[#allocation5 + $0x10] sm:$0x3] %vm731, %v4016
    %v4022 = vld [vmem:[#allocation5] sm:$0xff]
    %v4023 = vld [vmem:[#allocation5 + $0x8] sm:$0xff]
    %v4024 = vld [vmem:[#allocation5 + $0x10] sm:$0x3]
    %4028 = vrot.lane.b32.xlu0 %v4022, 108
    %v4029 = vpop.permute.xlu0 %4028
    %4030 = vrot.lane.b32.xlu0 %v4023, 108
    %v4031 = vpop.permute.xlu0 %4030
    %4032 = vrot.lane.b32.xlu0 %v4024, 108
    %v4033 = vpop.permute.xlu0 %4032
    %v4034 = vsel %vm745, %v4022, 0
    %v4036 = vsel %vm745, %v4023, 0
    %v4038 = vsel %vm745, %v4024, 0
    %v4040 = vsel %vm745, %v4029, 0
    %v4042 = vsel %vm745, %v4031, 0
    %v4044 = vsel %vm745, %v4033, 0
    %4046 = vmatprep.subr.mxu0 0.0
    %4047 = vmatpush1.xpose.msra.mxu0 0.0
    %4048 = vmatprep.subr.mxu0 0.0
    %4049 = vmatpush1.xpose.msra.mxu0 0.0
    %4050 = vmatprep.subr.mxu0 0.0
    %4051 = vmatpush1.xpose.msra.mxu0 0.0
    %4052 = vmatprep.subr.mxu0 0.0
    %4053 = vmatpush1.xpose.msra.mxu0 0.0
    %4054 = vmatprep.subr.mxu0 0.0
    %4055 = vmatpush1.xpose.msra.mxu0 0.0
    %4056 = vmatprep.subr.mxu0 0.0
    %4057 = vmatpush1.xpose.msra.mxu0 0.0
    %4058 = vmatprep.subr.mxu0 0.0
    %4059 = vmatpush1.xpose.msra.mxu0 0.0
    %4060 = vmatprep.subr.mxu0 0.0
    %4061 = vmatpush1.xpose.msra.mxu0 0.0
    %4062 = vmatprep.subr.mxu0 0.0
    %4063 = vmatpush1.xpose.msra.mxu0 0.0
    %4064 = vmatprep.subr.mxu0 0.0
    %4065 = vmatpush1.xpose.msra.mxu0 0.0
    %4066 = vmatprep.subr.mxu0 0.0
    %4067 = vmatpush1.xpose.msra.mxu0 0.0
    %4068 = vmatprep.subr.mxu0 0.0
    %4069 = vmatpush1.xpose.msra.mxu0 0.0
    %4070 = vmatprep.subr.mxu0 0.0
    %4071 = vmatpush1.xpose.msra.mxu0 0.0
    %4072 = vmatprep.subr.mxu0 0.0
    %4073 = vmatpush1.xpose.msra.mxu0 %v4044
    %4074 = vmatprep.subr.mxu0 0.0
    %4075 = vmatpush1.xpose.msra.mxu0 %v4042
    %4076 = vmatprep.subr.mxu0 0.0
    %4077 = vmatpush1.xpose.msra.mxu0 %v4040
    %4078 = vmatprep.subr.mxu0 0.0
    %4079 = vmatpush2.xpose.msra.mxu0 0.0
    %4080 = vmatprep.subr.mxu0 0.0
    %4081 = vmatpush2.xpose.msra.mxu0 0.0
    %4082 = vmatprep.subr.mxu0 0.0
    %4083 = vmatpush2.xpose.msra.mxu0 0.0
    %4084 = vmatprep.subr.mxu0 0.0
    %4085 = vmatpush2.xpose.msra.mxu0 0.0
    %4086 = vmatprep.subr.mxu0 0.0
    %4087 = vmatpush2.xpose.msra.mxu0 0.0
    %4088 = vmatprep.subr.mxu0 0.0
    %4089 = vmatpush2.xpose.msra.mxu0 0.0
    %4090 = vmatprep.subr.mxu0 0.0
    %4091 = vmatpush2.xpose.msra.mxu0 0.0
    %4092 = vmatprep.subr.mxu0 0.0
    %4093 = vmatpush2.xpose.msra.mxu0 0.0
    %4094 = vmatprep.subr.mxu0 0.0
    %4095 = vmatpush2.xpose.msra.mxu0 0.0
    %4096 = vmatprep.subr.mxu0 0.0
    %4097 = vmatpush2.xpose.msra.mxu0 0.0
    %4098 = vmatprep.subr.mxu0 0.0
    %4099 = vmatpush2.xpose.msra.mxu0 0.0
    %4100 = vmatprep.subr.mxu0 0.0
    %4101 = vmatpush2.xpose.msra.mxu0 0.0
    %4102 = vmatprep.subr.mxu0 0.0
    %4103 = vmatpush2.xpose.msra.mxu0 0.0
    %4104 = vmatprep.subr.mxu0 0.0
    %4105 = vmatpush2.xpose.msra.mxu0 0.0
    %4106 = vmatprep.subr.mxu0 0.0
    %4107 = vmatpush2.xpose.msra.mxu0 0.0
    %4108 = vmatprep.subr.mxu0 0.0
    %4109 = vmatpush2.xpose.msra.mxu0 0.0
    %4110 = vmatprep.mubr.f32.mxu0 0.0
    %4111 = vmatmul.mubr.f32.gmra.mxu0 %v4034
    %v4112 = vpop.f32.mrf.mxu0
    %v4113 = vadd.f32 %v561, %v4112
    %v4114 = vpop.f32.mrf.mxu0
    %4115 = vmatprep.mubr.f32.mxu0 0.0
    %4116 = vmatmul.mubr.f32.gmra.mxu0 %v4036
    %v4117 = vpop.f32.mrf.mxu0
    %v4118 = vadd.f32 %v562, %v4117
    %v4119 = vpop.f32.mrf.mxu0
    %4120 = vmatprep.mubr.f32.mxu0 0.0
    %4121 = vmatmul.mubr.f32.gmra.mxu0 %v4038
    %v4122 = vpop.f32.mrf.mxu0
    %v4123 = vadd.f32 %v563, %v4122
    %v4124 = vpop.f32.mrf.mxu0
    %4125 = vdwg.mxu0
    %v4126 = vsel %vm838, %v4113, -inf
    %4127 = vmax.xlane.f32.xlu0 %v4126
    %v4128 = vpop.xlane.xlu0 %4127
    %v4129 = vsel %vm838, %v4118, -inf
    %4130 = vmax.xlane.f32.xlu0 %v4129
    %v4131 = vpop.xlane.xlu0 %4130
    %v4132 = vsel %vm845, %v4123, -inf
    %4133 = vmax.xlane.f32.xlu0 %v4132
    %v4134 = vpop.xlane.xlu0 %4133
    %v4135 = vsub.f32 %v4113, %v4128
    %v4136 = vsub.f32 %v4118, %v4131
    %v4137 = vsub.f32 %v4123, %v4134
    %v4138 = vmul.f32 %v4135, 1.442695
    %v4139 = vpow.pop %v4138
    %v4140 = vmul.f32 %v4136, 1.442695
    %v4141 = vpow.pop %v4140
    %v4142 = vmul.f32 %v4137, 1.442695
    %v4143 = vpow.pop %v4142
    %v4144 = vsel %vm838, %v4139, 0.0
    %4145 = vadd.xlane.f32.xlu0 %v4144
    %v4146 = vpop.xlane.xlu0 %4145
    %v4147 = vsel %vm838, %v4141, 0.0
    %4148 = vadd.xlane.f32.xlu0 %v4147
    %v4149 = vpop.xlane.xlu0 %4148
    %v4150 = vsel %vm845, %v4143, 0.0
    %4151 = vadd.xlane.f32.xlu0 %v4150
    %v4152 = vpop.xlane.xlu0 %4151
    %v4153 = vrcp.pop %v4146
    %v4154 = vrcp.pop %v4149
    %v4155 = vrcp.pop %v4152
    %v4156 = vmul.f32 %v4139, %v4153
    %v4157 = vmul.f32 %v4141, %v4154
    %v4158 = vmul.f32 %v4143, %v4155
    %4159 = vrot.lane.b32.xlu0 %v4022, 88
    %v4160 = vpop.permute.xlu0 %4159
    %4161 = vrot.lane.b32.xlu0 %v4023, 88
    %v4162 = vpop.permute.xlu0 %4161
    %4163 = vrot.lane.b32.xlu0 %v4024, 88
    %v4164 = vpop.permute.xlu0 %4163
    %v4168 = vsel %vm838, %v4156, 0
    %v4171 = vsel %vm838, %v4157, 0
    %v4174 = vsel %vm838, %v4158, 0
    %v4176 = vsel %vm253, %v4164, 0
    %4178 = vmatprep.subr.mxu0 0.0
    %4179 = vmatpush1.msra.mxu0 0.0
    %4180 = vmatprep.subr.mxu0 0.0
    %4181 = vmatpush1.msra.mxu0 0.0
    %4182 = vmatprep.subr.mxu0 0.0
    %4183 = vmatpush1.msra.mxu0 0.0
    %4184 = vmatprep.subr.mxu0 0.0
    %4185 = vmatpush1.msra.mxu0 0.0
    %4186 = vmatprep.subr.mxu0 0.0
    %4187 = vmatpush1.msra.mxu0 0.0
    %4188 = vmatprep.subr.mxu0 0.0
    %4189 = vmatpush1.msra.mxu0 0.0
    %4190 = vmatprep.subr.mxu0 0.0
    %4191 = vmatpush1.msra.mxu0 0.0
    %4192 = vmatprep.subr.mxu0 0.0
    %4193 = vmatpush1.msra.mxu0 0.0
    %4194 = vmatprep.subr.mxu0 0.0
    %4195 = vmatpush1.msra.mxu0 0.0
    %4196 = vmatprep.subr.mxu0 0.0
    %4197 = vmatpush1.msra.mxu0 0.0
    %4198 = vmatprep.subr.mxu0 0.0
    %4199 = vmatpush1.msra.mxu0 0.0
    %4200 = vmatprep.subr.mxu0 0.0
    %4201 = vmatpush1.msra.mxu0 0.0
    %4202 = vmatprep.subr.mxu0 0.0
    %4203 = vmatpush1.msra.mxu0 0.0
    %4204 = vmatprep.subr.mxu0 0.0
    %4205 = vmatpush1.msra.mxu0 %v4176
    %4206 = vmatprep.subr.mxu0 0.0
    %4207 = vmatpush1.msra.mxu0 %v4162
    %4208 = vmatprep.subr.mxu0 0.0
    %4209 = vmatpush1.msra.mxu0 %v4160
    %4210 = vmatprep.subr.mxu0 0.0
    %4211 = vmatpush2.msra.mxu0 0.0
    %4212 = vmatprep.subr.mxu0 0.0
    %4213 = vmatpush2.msra.mxu0 0.0
    %4214 = vmatprep.subr.mxu0 0.0
    %4215 = vmatpush2.msra.mxu0 0.0
    %4216 = vmatprep.subr.mxu0 0.0
    %4217 = vmatpush2.msra.mxu0 0.0
    %4218 = vmatprep.subr.mxu0 0.0
    %4219 = vmatpush2.msra.mxu0 0.0
    %4220 = vmatprep.subr.mxu0 0.0
    %4221 = vmatpush2.msra.mxu0 0.0
    %4222 = vmatprep.subr.mxu0 0.0
    %4223 = vmatpush2.msra.mxu0 0.0
    %4224 = vmatprep.subr.mxu0 0.0
    %4225 = vmatpush2.msra.mxu0 0.0
    %4226 = vmatprep.subr.mxu0 0.0
    %4227 = vmatpush2.msra.mxu0 0.0
    %4228 = vmatprep.subr.mxu0 0.0
    %4229 = vmatpush2.msra.mxu0 0.0
    %4230 = vmatprep.subr.mxu0 0.0
    %4231 = vmatpush2.msra.mxu0 0.0
    %4232 = vmatprep.subr.mxu0 0.0
    %4233 = vmatpush2.msra.mxu0 0.0
    %4234 = vmatprep.subr.mxu0 0.0
    %4235 = vmatpush2.msra.mxu0 0.0
    %4236 = vmatprep.subr.mxu0 0.0
    %4237 = vmatpush2.msra.mxu0 0.0
    %4238 = vmatprep.subr.mxu0 0.0
    %4239 = vmatpush2.msra.mxu0 0.0
    %4240 = vmatprep.subr.mxu0 0.0
    %4241 = vmatpush2.msra.mxu0 0.0
    %4242 = vmatprep.mubr.f32.mxu0 0.0
    %4243 = vmatmul.mubr.f32.gmra.mxu0 %v4168
    %v4244 = vpop.f32.mrf.mxu0
    %v4245 = vadd.f32 0.0, %v4244
    %v4246 = vpop.f32.mrf.mxu0
    %4247 = vmatprep.mubr.f32.mxu0 0.0
    %4248 = vmatmul.mubr.f32.gmra.mxu0 %v4171
    %v4249 = vpop.f32.mrf.mxu0
    %v4250 = vadd.f32 0.0, %v4249
    %v4251 = vpop.f32.mrf.mxu0
    %4252 = vmatprep.mubr.f32.mxu0 0.0
    %4253 = vmatmul.mubr.f32.gmra.mxu0 %v4174
    %v4254 = vpop.f32.mrf.mxu0
    %v4255 = vadd.f32 0.0, %v4254
    %v4256 = vpop.f32.mrf.mxu0
    %4257 = vdwg.mxu0
    %4258 = vst.msk [vmem:[#allocation6] sm:$0xff] %vm745, %v4245
    %4259 = vst.msk [vmem:[#allocation6 + $0x8] sm:$0xff] %vm745, %v4250
    %4260 = vst.msk [vmem:[#allocation6 + $0x10] sm:$0x3] %vm974, %v4255
    %v4261 = vld [vmem:[#allocation5] sm:$0xff]
    %v4262 = vld [vmem:[#allocation5 + $0x8] sm:$0xff]
    %v4263 = vld [vmem:[#allocation5 + $0x10] sm:$0x3]
    %4267 = vrot.lane.b32.xlu0 %v4261, 123
    %v4268 = vpop.permute.xlu0 %4267
    %4269 = vrot.lane.b32.xlu0 %v4262, 123
    %v4270 = vpop.permute.xlu0 %4269
    %4271 = vrot.lane.b32.xlu0 %v4263, 123
    %v4272 = vpop.permute.xlu0 %4271
    %4273 = vrot.lane.b32.xlu0 %v4261, 103
    %v4274 = vpop.permute.xlu0 %4273
    %4275 = vrot.lane.b32.xlu0 %v4262, 103
    %v4276 = vpop.permute.xlu0 %4275
    %4277 = vrot.lane.b32.xlu0 %v4263, 103
    %v4278 = vpop.permute.xlu0 %4277
    %v4279 = vsel %vm745, %v4268, 0
    %v4281 = vsel %vm745, %v4270, 0
    %v4283 = vsel %vm745, %v4272, 0
    %v4285 = vsel %vm745, %v4274, 0
    %v4287 = vsel %vm745, %v4276, 0
    %v4289 = vsel %vm745, %v4278, 0
    %4291 = vmatprep.subr.mxu0 0.0
    %4292 = vmatpush1.xpose.msra.mxu0 0.0
    %4293 = vmatprep.subr.mxu0 0.0
    %4294 = vmatpush1.xpose.msra.mxu0 0.0
    %4295 = vmatprep.subr.mxu0 0.0
    %4296 = vmatpush1.xpose.msra.mxu0 0.0
    %4297 = vmatprep.subr.mxu0 0.0
    %4298 = vmatpush1.xpose.msra.mxu0 0.0
    %4299 = vmatprep.subr.mxu0 0.0
    %4300 = vmatpush1.xpose.msra.mxu0 0.0
    %4301 = vmatprep.subr.mxu0 0.0
    %4302 = vmatpush1.xpose.msra.mxu0 0.0
    %4303 = vmatprep.subr.mxu0 0.0
    %4304 = vmatpush1.xpose.msra.mxu0 0.0
    %4305 = vmatprep.subr.mxu0 0.0
    %4306 = vmatpush1.xpose.msra.mxu0 0.0
    %4307 = vmatprep.subr.mxu0 0.0
    %4308 = vmatpush1.xpose.msra.mxu0 0.0
    %4309 = vmatprep.subr.mxu0 0.0
    %4310 = vmatpush1.xpose.msra.mxu0 0.0
    %4311 = vmatprep.subr.mxu0 0.0
    %4312 = vmatpush1.xpose.msra.mxu0 0.0
    %4313 = vmatprep.subr.mxu0 0.0
    %4314 = vmatpush1.xpose.msra.mxu0 0.0
    %4315 = vmatprep.subr.mxu0 0.0
    %4316 = vmatpush1.xpose.msra.mxu0 0.0
    %4317 = vmatprep.subr.mxu0 0.0
    %4318 = vmatpush1.xpose.msra.mxu0 %v4289
    %4319 = vmatprep.subr.mxu0 0.0
    %4320 = vmatpush1.xpose.msra.mxu0 %v4287
    %4321 = vmatprep.subr.mxu0 0.0
    %4322 = vmatpush1.xpose.msra.mxu0 %v4285
    %4323 = vmatprep.subr.mxu0 0.0
    %4324 = vmatpush2.xpose.msra.mxu0 0.0
    %4325 = vmatprep.subr.mxu0 0.0
    %4326 = vmatpush2.xpose.msra.mxu0 0.0
    %4327 = vmatprep.subr.mxu0 0.0
    %4328 = vmatpush2.xpose.msra.mxu0 0.0
    %4329 = vmatprep.subr.mxu0 0.0
    %4330 = vmatpush2.xpose.msra.mxu0 0.0
    %4331 = vmatprep.subr.mxu0 0.0
    %4332 = vmatpush2.xpose.msra.mxu0 0.0
    %4333 = vmatprep.subr.mxu0 0.0
    %4334 = vmatpush2.xpose.msra.mxu0 0.0
    %4335 = vmatprep.subr.mxu0 0.0
    %4336 = vmatpush2.xpose.msra.mxu0 0.0
    %4337 = vmatprep.subr.mxu0 0.0
    %4338 = vmatpush2.xpose.msra.mxu0 0.0
    %4339 = vmatprep.subr.mxu0 0.0
    %4340 = vmatpush2.xpose.msra.mxu0 0.0
    %4341 = vmatprep.subr.mxu0 0.0
    %4342 = vmatpush2.xpose.msra.mxu0 0.0
    %4343 = vmatprep.subr.mxu0 0.0
    %4344 = vmatpush2.xpose.msra.mxu0 0.0
    %4345 = vmatprep.subr.mxu0 0.0
    %4346 = vmatpush2.xpose.msra.mxu0 0.0
    %4347 = vmatprep.subr.mxu0 0.0
    %4348 = vmatpush2.xpose.msra.mxu0 0.0
    %4349 = vmatprep.subr.mxu0 0.0
    %4350 = vmatpush2.xpose.msra.mxu0 0.0
    %4351 = vmatprep.subr.mxu0 0.0
    %4352 = vmatpush2.xpose.msra.mxu0 0.0
    %4353 = vmatprep.subr.mxu0 0.0
    %4354 = vmatpush2.xpose.msra.mxu0 0.0
    %4355 = vmatprep.mubr.f32.mxu0 0.0
    %4356 = vmatmul.mubr.f32.gmra.mxu0 %v4279
    %v4357 = vpop.f32.mrf.mxu0
    %v4358 = vadd.f32 %v561, %v4357
    %v4359 = vpop.f32.mrf.mxu0
    %4360 = vmatprep.mubr.f32.mxu0 0.0
    %4361 = vmatmul.mubr.f32.gmra.mxu0 %v4281
    %v4362 = vpop.f32.mrf.mxu0
    %v4363 = vadd.f32 %v562, %v4362
    %v4364 = vpop.f32.mrf.mxu0
    %4365 = vmatprep.mubr.f32.mxu0 0.0
    %4366 = vmatmul.mubr.f32.gmra.mxu0 %v4283
    %v4367 = vpop.f32.mrf.mxu0
    %v4368 = vadd.f32 %v563, %v4367
    %v4369 = vpop.f32.mrf.mxu0
    %4370 = vdwg.mxu0
    %v4371 = vsel %vm838, %v4358, -inf
    %4372 = vmax.xlane.f32.xlu0 %v4371
    %v4373 = vpop.xlane.xlu0 %4372
    %v4374 = vsel %vm838, %v4363, -inf
    %4375 = vmax.xlane.f32.xlu0 %v4374
    %v4376 = vpop.xlane.xlu0 %4375
    %v4377 = vsel %vm845, %v4368, -inf
    %4378 = vmax.xlane.f32.xlu0 %v4377
    %v4379 = vpop.xlane.xlu0 %4378
    %v4380 = vsub.f32 %v4358, %v4373
    %v4381 = vsub.f32 %v4363, %v4376
    %v4382 = vsub.f32 %v4368, %v4379
    %v4383 = vmul.f32 %v4380, 1.442695
    %v4384 = vpow.pop %v4383
    %v4385 = vmul.f32 %v4381, 1.442695
    %v4386 = vpow.pop %v4385
    %v4387 = vmul.f32 %v4382, 1.442695
    %v4388 = vpow.pop %v4387
    %v4389 = vsel %vm838, %v4384, 0.0
    %4390 = vadd.xlane.f32.xlu0 %v4389
    %v4391 = vpop.xlane.xlu0 %4390
    %v4392 = vsel %vm838, %v4386, 0.0
    %4393 = vadd.xlane.f32.xlu0 %v4392
    %v4394 = vpop.xlane.xlu0 %4393
    %v4395 = vsel %vm845, %v4388, 0.0
    %4396 = vadd.xlane.f32.xlu0 %v4395
    %v4397 = vpop.xlane.xlu0 %4396
    %v4398 = vrcp.pop %v4391
    %v4399 = vrcp.pop %v4394
    %v4400 = vrcp.pop %v4397
    %v4401 = vmul.f32 %v4384, %v4398
    %v4402 = vmul.f32 %v4386, %v4399
    %v4403 = vmul.f32 %v4388, %v4400
    %4404 = vrot.lane.b32.xlu0 %v4261, 83
    %v4405 = vpop.permute.xlu0 %4404
    %4406 = vrot.lane.b32.xlu0 %v4262, 83
    %v4407 = vpop.permute.xlu0 %4406
    %4408 = vrot.lane.b32.xlu0 %v4263, 83
    %v4409 = vpop.permute.xlu0 %4408
    %v4413 = vsel %vm838, %v4401, 0
    %v4416 = vsel %vm838, %v4402, 0
    %v4419 = vsel %vm838, %v4403, 0
    %v4421 = vsel %vm253, %v4409, 0
    %4423 = vmatprep.subr.mxu0 0.0
    %4424 = vmatpush1.msra.mxu0 0.0
    %4425 = vmatprep.subr.mxu0 0.0
    %4426 = vmatpush1.msra.mxu0 0.0
    %4427 = vmatprep.subr.mxu0 0.0
    %4428 = vmatpush1.msra.mxu0 0.0
    %4429 = vmatprep.subr.mxu0 0.0
    %4430 = vmatpush1.msra.mxu0 0.0
    %4431 = vmatprep.subr.mxu0 0.0
    %4432 = vmatpush1.msra.mxu0 0.0
    %4433 = vmatprep.subr.mxu0 0.0
    %4434 = vmatpush1.msra.mxu0 0.0
    %4435 = vmatprep.subr.mxu0 0.0
    %4436 = vmatpush1.msra.mxu0 0.0
    %4437 = vmatprep.subr.mxu0 0.0
    %4438 = vmatpush1.msra.mxu0 0.0
    %4439 = vmatprep.subr.mxu0 0.0
    %4440 = vmatpush1.msra.mxu0 0.0
    %4441 = vmatprep.subr.mxu0 0.0
    %4442 = vmatpush1.msra.mxu0 0.0
    %4443 = vmatprep.subr.mxu0 0.0
    %4444 = vmatpush1.msra.mxu0 0.0
    %4445 = vmatprep.subr.mxu0 0.0
    %4446 = vmatpush1.msra.mxu0 0.0
    %4447 = vmatprep.subr.mxu0 0.0
    %4448 = vmatpush1.msra.mxu0 0.0
    %4449 = vmatprep.subr.mxu0 0.0
    %4450 = vmatpush1.msra.mxu0 %v4421
    %4451 = vmatprep.subr.mxu0 0.0
    %4452 = vmatpush1.msra.mxu0 %v4407
    %4453 = vmatprep.subr.mxu0 0.0
    %4454 = vmatpush1.msra.mxu0 %v4405
    %4455 = vmatprep.subr.mxu0 0.0
    %4456 = vmatpush2.msra.mxu0 0.0
    %4457 = vmatprep.subr.mxu0 0.0
    %4458 = vmatpush2.msra.mxu0 0.0
    %4459 = vmatprep.subr.mxu0 0.0
    %4460 = vmatpush2.msra.mxu0 0.0
    %4461 = vmatprep.subr.mxu0 0.0
    %4462 = vmatpush2.msra.mxu0 0.0
    %4463 = vmatprep.subr.mxu0 0.0
    %4464 = vmatpush2.msra.mxu0 0.0
    %4465 = vmatprep.subr.mxu0 0.0
    %4466 = vmatpush2.msra.mxu0 0.0
    %4467 = vmatprep.subr.mxu0 0.0
    %4468 = vmatpush2.msra.mxu0 0.0
    %4469 = vmatprep.subr.mxu0 0.0
    %4470 = vmatpush2.msra.mxu0 0.0
    %4471 = vmatprep.subr.mxu0 0.0
    %4472 = vmatpush2.msra.mxu0 0.0
    %4473 = vmatprep.subr.mxu0 0.0
    %4474 = vmatpush2.msra.mxu0 0.0
    %4475 = vmatprep.subr.mxu0 0.0
    %4476 = vmatpush2.msra.mxu0 0.0
    %4477 = vmatprep.subr.mxu0 0.0
    %4478 = vmatpush2.msra.mxu0 0.0
    %4479 = vmatprep.subr.mxu0 0.0
    %4480 = vmatpush2.msra.mxu0 0.0
    %4481 = vmatprep.subr.mxu0 0.0
    %4482 = vmatpush2.msra.mxu0 0.0
    %4483 = vmatprep.subr.mxu0 0.0
    %4484 = vmatpush2.msra.mxu0 0.0
    %4485 = vmatprep.subr.mxu0 0.0
    %4486 = vmatpush2.msra.mxu0 0.0
    %4487 = vmatprep.mubr.f32.mxu0 0.0
    %4488 = vmatmul.mubr.f32.gmra.mxu0 %v4413
    %v4489 = vpop.f32.mrf.mxu0
    %v4490 = vadd.f32 0.0, %v4489
    %v4491 = vpop.f32.mrf.mxu0
    %4492 = vmatprep.mubr.f32.mxu0 0.0
    %4493 = vmatmul.mubr.f32.gmra.mxu0 %v4416
    %v4494 = vpop.f32.mrf.mxu0
    %v4495 = vadd.f32 0.0, %v4494
    %v4496 = vpop.f32.mrf.mxu0
    %4497 = vmatprep.mubr.f32.mxu0 0.0
    %4498 = vmatmul.mubr.f32.gmra.mxu0 %v4419
    %v4499 = vpop.f32.mrf.mxu0
    %v4500 = vadd.f32 0.0, %v4499
    %v4501 = vpop.f32.mrf.mxu0
    %4502 = vdwg.mxu0
    %4506 = vrot.lane.b32.xlu0 %v4490, 5
    %v4507 = vpop.permute.xlu0 %4506
    %4508 = vrot.lane.b32.xlu0 %v4495, 5
    %v4509 = vpop.permute.xlu0 %4508
    %4510 = vrot.lane.b32.xlu0 %v4500, 5
    %v4511 = vpop.permute.xlu0 %4510
    %4515 = vst.msk [vmem:[#allocation6] sm:$0xff] %vm1230, %v4507
    %4516 = vst.msk [vmem:[#allocation6 + $0x8] sm:$0xff] %vm1230, %v4509
    %4517 = vst.msk [vmem:[#allocation6 + $0x10] sm:$0x3] %vm1233, %v4511
    %v4518 = vld [vmem:[#allocation5] sm:$0xff]
    %v4519 = vld [vmem:[#allocation5 + $0x8] sm:$0xff]
    %v4520 = vld [vmem:[#allocation5 + $0x10] sm:$0x3]
    %4524 = vrot.lane.b32.xlu0 %v4518, 118
    %v4525 = vpop.permute.xlu0 %4524
    %4526 = vrot.lane.b32.xlu0 %v4519, 118
    %v4527 = vpop.permute.xlu0 %4526
    %4528 = vrot.lane.b32.xlu0 %v4520, 118
    %v4529 = vpop.permute.xlu0 %4528
    %4530 = vrot.lane.b32.xlu0 %v4518, 98
    %v4531 = vpop.permute.xlu0 %4530
    %4532 = vrot.lane.b32.xlu0 %v4519, 98
    %v4533 = vpop.permute.xlu0 %4532
    %4534 = vrot.lane.b32.xlu0 %v4520, 98
    %v4535 = vpop.permute.xlu0 %4534
    %v4536 = vsel %vm745, %v4525, 0
    %v4538 = vsel %vm745, %v4527, 0
    %v4540 = vsel %vm745, %v4529, 0
    %v4542 = vsel %vm745, %v4531, 0
    %v4544 = vsel %vm745, %v4533, 0
    %v4546 = vsel %vm745, %v4535, 0
    %4548 = vmatprep.subr.mxu0 0.0
    %4549 = vmatpush1.xpose.msra.mxu0 0.0
    %4550 = vmatprep.subr.mxu0 0.0
    %4551 = vmatpush1.xpose.msra.mxu0 0.0
    %4552 = vmatprep.subr.mxu0 0.0
    %4553 = vmatpush1.xpose.msra.mxu0 0.0
    %4554 = vmatprep.subr.mxu0 0.0
    %4555 = vmatpush1.xpose.msra.mxu0 0.0
    %4556 = vmatprep.subr.mxu0 0.0
    %4557 = vmatpush1.xpose.msra.mxu0 0.0
    %4558 = vmatprep.subr.mxu0 0.0
    %4559 = vmatpush1.xpose.msra.mxu0 0.0
    %4560 = vmatprep.subr.mxu0 0.0
    %4561 = vmatpush1.xpose.msra.mxu0 0.0
    %4562 = vmatprep.subr.mxu0 0.0
    %4563 = vmatpush1.xpose.msra.mxu0 0.0
    %4564 = vmatprep.subr.mxu0 0.0
    %4565 = vmatpush1.xpose.msra.mxu0 0.0
    %4566 = vmatprep.subr.mxu0 0.0
    %4567 = vmatpush1.xpose.msra.mxu0 0.0
    %4568 = vmatprep.subr.mxu0 0.0
    %4569 = vmatpush1.xpose.msra.mxu0 0.0
    %4570 = vmatprep.subr.mxu0 0.0
    %4571 = vmatpush1.xpose.msra.mxu0 0.0
    %4572 = vmatprep.subr.mxu0 0.0
    %4573 = vmatpush1.xpose.msra.mxu0 0.0
    %4574 = vmatprep.subr.mxu0 0.0
    %4575 = vmatpush1.xpose.msra.mxu0 %v4546
    %4576 = vmatprep.subr.mxu0 0.0
    %4577 = vmatpush1.xpose.msra.mxu0 %v4544
    %4578 = vmatprep.subr.mxu0 0.0
    %4579 = vmatpush1.xpose.msra.mxu0 %v4542
    %4580 = vmatprep.subr.mxu0 0.0
    %4581 = vmatpush2.xpose.msra.mxu0 0.0
    %4582 = vmatprep.subr.mxu0 0.0
    %4583 = vmatpush2.xpose.msra.mxu0 0.0
    %4584 = vmatprep.subr.mxu0 0.0
    %4585 = vmatpush2.xpose.msra.mxu0 0.0
    %4586 = vmatprep.subr.mxu0 0.0
    %4587 = vmatpush2.xpose.msra.mxu0 0.0
    %4588 = vmatprep.subr.mxu0 0.0
    %4589 = vmatpush2.xpose.msra.mxu0 0.0
    %4590 = vmatprep.subr.mxu0 0.0
    %4591 = vmatpush2.xpose.msra.mxu0 0.0
    %4592 = vmatprep.subr.mxu0 0.0
    %4593 = vmatpush2.xpose.msra.mxu0 0.0
    %4594 = vmatprep.subr.mxu0 0.0
    %4595 = vmatpush2.xpose.msra.mxu0 0.0
    %4596 = vmatprep.subr.mxu0 0.0
    %4597 = vmatpush2.xpose.msra.mxu0 0.0
    %4598 = vmatprep.subr.mxu0 0.0
    %4599 = vmatpush2.xpose.msra.mxu0 0.0
    %4600 = vmatprep.subr.mxu0 0.0
    %4601 = vmatpush2.xpose.msra.mxu0 0.0
    %4602 = vmatprep.subr.mxu0 0.0
    %4603 = vmatpush2.xpose.msra.mxu0 0.0
    %4604 = vmatprep.subr.mxu0 0.0
    %4605 = vmatpush2.xpose.msra.mxu0 0.0
    %4606 = vmatprep.subr.mxu0 0.0
    %4607 = vmatpush2.xpose.msra.mxu0 0.0
    %4608 = vmatprep.subr.mxu0 0.0
    %4609 = vmatpush2.xpose.msra.mxu0 0.0
    %4610 = vmatprep.subr.mxu0 0.0
    %4611 = vmatpush2.xpose.msra.mxu0 0.0
    %4612 = vmatprep.mubr.f32.mxu0 0.0
    %4613 = vmatmul.mubr.f32.gmra.mxu0 %v4536
    %v4614 = vpop.f32.mrf.mxu0
    %v4615 = vadd.f32 %v561, %v4614
    %v4616 = vpop.f32.mrf.mxu0
    %4617 = vmatprep.mubr.f32.mxu0 0.0
    %4618 = vmatmul.mubr.f32.gmra.mxu0 %v4538
    %v4619 = vpop.f32.mrf.mxu0
    %v4620 = vadd.f32 %v562, %v4619
    %v4621 = vpop.f32.mrf.mxu0
    %4622 = vmatprep.mubr.f32.mxu0 0.0
    %4623 = vmatmul.mubr.f32.gmra.mxu0 %v4540
    %v4624 = vpop.f32.mrf.mxu0
    %v4625 = vadd.f32 %v563, %v4624
    %v4626 = vpop.f32.mrf.mxu0
    %4627 = vdwg.mxu0
    %v4628 = vsel %vm838, %v4615, -inf
    %4629 = vmax.xlane.f32.xlu0 %v4628
    %v4630 = vpop.xlane.xlu0 %4629
    %v4631 = vsel %vm838, %v4620, -inf
    %4632 = vmax.xlane.f32.xlu0 %v4631
    %v4633 = vpop.xlane.xlu0 %4632
    %v4634 = vsel %vm845, %v4625, -inf
    %4635 = vmax.xlane.f32.xlu0 %v4634
    %v4636 = vpop.xlane.xlu0 %4635
    %v4637 = vsub.f32 %v4615, %v4630
    %v4638 = vsub.f32 %v4620, %v4633
    %v4639 = vsub.f32 %v4625, %v4636
    %v4640 = vmul.f32 %v4637, 1.442695
    %v4641 = vpow.pop %v4640
    %v4642 = vmul.f32 %v4638, 1.442695
    %v4643 = vpow.pop %v4642
    %v4644 = vmul.f32 %v4639, 1.442695
    %v4645 = vpow.pop %v4644
    %v4646 = vsel %vm838, %v4641, 0.0
    %4647 = vadd.xlane.f32.xlu0 %v4646
    %v4648 = vpop.xlane.xlu0 %4647
    %v4649 = vsel %vm838, %v4643, 0.0
    %4650 = vadd.xlane.f32.xlu0 %v4649
    %v4651 = vpop.xlane.xlu0 %4650
    %v4652 = vsel %vm845, %v4645, 0.0
    %4653 = vadd.xlane.f32.xlu0 %v4652
    %v4654 = vpop.xlane.xlu0 %4653
    %v4655 = vrcp.pop %v4648
    %v4656 = vrcp.pop %v4651
    %v4657 = vrcp.pop %v4654
    %v4658 = vmul.f32 %v4641, %v4655
    %v4659 = vmul.f32 %v4643, %v4656
    %v4660 = vmul.f32 %v4645, %v4657
    %4661 = vrot.lane.b32.xlu0 %v4518, 78
    %v4662 = vpop.permute.xlu0 %4661
    %4663 = vrot.lane.b32.xlu0 %v4519, 78
    %v4664 = vpop.permute.xlu0 %4663
    %4665 = vrot.lane.b32.xlu0 %v4520, 78
    %v4666 = vpop.permute.xlu0 %4665
    %v4670 = vsel %vm838, %v4658, 0
    %v4673 = vsel %vm838, %v4659, 0
    %v4676 = vsel %vm838, %v4660, 0
    %v4678 = vsel %vm253, %v4666, 0
    %4680 = vmatprep.subr.mxu0 0.0
    %4681 = vmatpush1.msra.mxu0 0.0
    %4682 = vmatprep.subr.mxu0 0.0
    %4683 = vmatpush1.msra.mxu0 0.0
    %4684 = vmatprep.subr.mxu0 0.0
    %4685 = vmatpush1.msra.mxu0 0.0
    %4686 = vmatprep.subr.mxu0 0.0
    %4687 = vmatpush1.msra.mxu0 0.0
    %4688 = vmatprep.subr.mxu0 0.0
    %4689 = vmatpush1.msra.mxu0 0.0
    %4690 = vmatprep.subr.mxu0 0.0
    %4691 = vmatpush1.msra.mxu0 0.0
    %4692 = vmatprep.subr.mxu0 0.0
    %4693 = vmatpush1.msra.mxu0 0.0
    %4694 = vmatprep.subr.mxu0 0.0
    %4695 = vmatpush1.msra.mxu0 0.0
    %4696 = vmatprep.subr.mxu0 0.0
    %4697 = vmatpush1.msra.mxu0 0.0
    %4698 = vmatprep.subr.mxu0 0.0
    %4699 = vmatpush1.msra.mxu0 0.0
    %4700 = vmatprep.subr.mxu0 0.0
    %4701 = vmatpush1.msra.mxu0 0.0
    %4702 = vmatprep.subr.mxu0 0.0
    %4703 = vmatpush1.msra.mxu0 0.0
    %4704 = vmatprep.subr.mxu0 0.0
    %4705 = vmatpush1.msra.mxu0 0.0
    %4706 = vmatprep.subr.mxu0 0.0
    %4707 = vmatpush1.msra.mxu0 %v4678
    %4708 = vmatprep.subr.mxu0 0.0
    %4709 = vmatpush1.msra.mxu0 %v4664
    %4710 = vmatprep.subr.mxu0 0.0
    %4711 = vmatpush1.msra.mxu0 %v4662
    %4712 = vmatprep.subr.mxu0 0.0
    %4713 = vmatpush2.msra.mxu0 0.0
    %4714 = vmatprep.subr.mxu0 0.0
    %4715 = vmatpush2.msra.mxu0 0.0
    %4716 = vmatprep.subr.mxu0 0.0
    %4717 = vmatpush2.msra.mxu0 0.0
    %4718 = vmatprep.subr.mxu0 0.0
    %4719 = vmatpush2.msra.mxu0 0.0
    %4720 = vmatprep.subr.mxu0 0.0
    %4721 = vmatpush2.msra.mxu0 0.0
    %4722 = vmatprep.subr.mxu0 0.0
    %4723 = vmatpush2.msra.mxu0 0.0
    %4724 = vmatprep.subr.mxu0 0.0
    %4725 = vmatpush2.msra.mxu0 0.0
    %4726 = vmatprep.subr.mxu0 0.0
    %4727 = vmatpush2.msra.mxu0 0.0
    %4728 = vmatprep.subr.mxu0 0.0
    %4729 = vmatpush2.msra.mxu0 0.0
    %4730 = vmatprep.subr.mxu0 0.0
    %4731 = vmatpush2.msra.mxu0 0.0
    %4732 = vmatprep.subr.mxu0 0.0
    %4733 = vmatpush2.msra.mxu0 0.0
    %4734 = vmatprep.subr.mxu0 0.0
    %4735 = vmatpush2.msra.mxu0 0.0
    %4736 = vmatprep.subr.mxu0 0.0
    %4737 = vmatpush2.msra.mxu0 0.0
    %4738 = vmatprep.subr.mxu0 0.0
    %4739 = vmatpush2.msra.mxu0 0.0
    %4740 = vmatprep.subr.mxu0 0.0
    %4741 = vmatpush2.msra.mxu0 0.0
    %4742 = vmatprep.subr.mxu0 0.0
    %4743 = vmatpush2.msra.mxu0 0.0
    %4744 = vmatprep.mubr.f32.mxu0 0.0
    %4745 = vmatmul.mubr.f32.gmra.mxu0 %v4670
    %v4746 = vpop.f32.mrf.mxu0
    %v4747 = vadd.f32 0.0, %v4746
    %v4748 = vpop.f32.mrf.mxu0
    %4749 = vmatprep.mubr.f32.mxu0 0.0
    %4750 = vmatmul.mubr.f32.gmra.mxu0 %v4673
    %v4751 = vpop.f32.mrf.mxu0
    %v4752 = vadd.f32 0.0, %v4751
    %v4753 = vpop.f32.mrf.mxu0
    %4754 = vmatprep.mubr.f32.mxu0 0.0
    %4755 = vmatmul.mubr.f32.gmra.mxu0 %v4676
    %v4756 = vpop.f32.mrf.mxu0
    %v4757 = vadd.f32 0.0, %v4756
    %v4758 = vpop.f32.mrf.mxu0
    %4759 = vdwg.mxu0
    %4763 = vrot.lane.b32.xlu0 %v4747, 10
    %v4764 = vpop.permute.xlu0 %4763
    %4765 = vrot.lane.b32.xlu0 %v4752, 10
    %v4766 = vpop.permute.xlu0 %4765
    %4767 = vrot.lane.b32.xlu0 %v4757, 10
    %v4768 = vpop.permute.xlu0 %4767
    %4772 = vst.msk [vmem:[#allocation6] sm:$0xff] %vm1489, %v4764
    %4773 = vst.msk [vmem:[#allocation6 + $0x8] sm:$0xff] %vm1489, %v4766
    %4774 = vst.msk [vmem:[#allocation6 + $0x10] sm:$0x3] %vm1492, %v4768
    %v4775 = vld [vmem:[#allocation5] sm:$0xff]
    %v4776 = vld [vmem:[#allocation5 + $0x8] sm:$0xff]
    %v4777 = vld [vmem:[#allocation5 + $0x10] sm:$0x3]
    %4781 = vrot.lane.b32.xlu0 %v4775, 113
    %v4782 = vpop.permute.xlu0 %4781
    %4783 = vrot.lane.b32.xlu0 %v4776, 113
    %v4784 = vpop.permute.xlu0 %4783
    %4785 = vrot.lane.b32.xlu0 %v4777, 113
    %v4786 = vpop.permute.xlu0 %4785
    %4787 = vrot.lane.b32.xlu0 %v4775, 93
    %v4788 = vpop.permute.xlu0 %4787
    %4789 = vrot.lane.b32.xlu0 %v4776, 93
    %v4790 = vpop.permute.xlu0 %4789
    %4791 = vrot.lane.b32.xlu0 %v4777, 93
    %v4792 = vpop.permute.xlu0 %4791
    %v4793 = vsel %vm745, %v4782, 0
    %v4795 = vsel %vm745, %v4784, 0
    %v4797 = vsel %vm745, %v4786, 0
    %v4799 = vsel %vm745, %v4788, 0
    %v4801 = vsel %vm745, %v4790, 0
    %v4803 = vsel %vm745, %v4792, 0
    %4805 = vmatprep.subr.mxu0 0.0
    %4806 = vmatpush1.xpose.msra.mxu0 0.0
    %4807 = vmatprep.subr.mxu0 0.0
    %4808 = vmatpush1.xpose.msra.mxu0 0.0
    %4809 = vmatprep.subr.mxu0 0.0
    %4810 = vmatpush1.xpose.msra.mxu0 0.0
    %4811 = vmatprep.subr.mxu0 0.0
    %4812 = vmatpush1.xpose.msra.mxu0 0.0
    %4813 = vmatprep.subr.mxu0 0.0
    %4814 = vmatpush1.xpose.msra.mxu0 0.0
    %4815 = vmatprep.subr.mxu0 0.0
    %4816 = vmatpush1.xpose.msra.mxu0 0.0
    %4817 = vmatprep.subr.mxu0 0.0
    %4818 = vmatpush1.xpose.msra.mxu0 0.0
    %4819 = vmatprep.subr.mxu0 0.0
    %4820 = vmatpush1.xpose.msra.mxu0 0.0
    %4821 = vmatprep.subr.mxu0 0.0
    %4822 = vmatpush1.xpose.msra.mxu0 0.0
    %4823 = vmatprep.subr.mxu0 0.0
    %4824 = vmatpush1.xpose.msra.mxu0 0.0
    %4825 = vmatprep.subr.mxu0 0.0
    %4826 = vmatpush1.xpose.msra.mxu0 0.0
    %4827 = vmatprep.subr.mxu0 0.0
    %4828 = vmatpush1.xpose.msra.mxu0 0.0
    %4829 = vmatprep.subr.mxu0 0.0
    %4830 = vmatpush1.xpose.msra.mxu0 0.0
    %4831 = vmatprep.subr.mxu0 0.0
    %4832 = vmatpush1.xpose.msra.mxu0 %v4803
    %4833 = vmatprep.subr.mxu0 0.0
    %4834 = vmatpush1.xpose.msra.mxu0 %v4801
    %4835 = vmatprep.subr.mxu0 0.0
    %4836 = vmatpush1.xpose.msra.mxu0 %v4799
    %4837 = vmatprep.subr.mxu0 0.0
    %4838 = vmatpush2.xpose.msra.mxu0 0.0
    %4839 = vmatprep.subr.mxu0 0.0
    %4840 = vmatpush2.xpose.msra.mxu0 0.0
    %4841 = vmatprep.subr.mxu0 0.0
    %4842 = vmatpush2.xpose.msra.mxu0 0.0
    %4843 = vmatprep.subr.mxu0 0.0
    %4844 = vmatpush2.xpose.msra.mxu0 0.0
    %4845 = vmatprep.subr.mxu0 0.0
    %4846 = vmatpush2.xpose.msra.mxu0 0.0
    %4847 = vmatprep.subr.mxu0 0.0
    %4848 = vmatpush2.xpose.msra.mxu0 0.0
    %4849 = vmatprep.subr.mxu0 0.0
    %4850 = vmatpush2.xpose.msra.mxu0 0.0
    %4851 = vmatprep.subr.mxu0 0.0
    %4852 = vmatpush2.xpose.msra.mxu0 0.0
    %4853 = vmatprep.subr.mxu0 0.0
    %4854 = vmatpush2.xpose.msra.mxu0 0.0
    %4855 = vmatprep.subr.mxu0 0.0
    %4856 = vmatpush2.xpose.msra.mxu0 0.0
    %4857 = vmatprep.subr.mxu0 0.0
    %4858 = vmatpush2.xpose.msra.mxu0 0.0
    %4859 = vmatprep.subr.mxu0 0.0
    %4860 = vmatpush2.xpose.msra.mxu0 0.0
    %4861 = vmatprep.subr.mxu0 0.0
    %4862 = vmatpush2.xpose.msra.mxu0 0.0
    %4863 = vmatprep.subr.mxu0 0.0
    %4864 = vmatpush2.xpose.msra.mxu0 0.0
    %4865 = vmatprep.subr.mxu0 0.0
    %4866 = vmatpush2.xpose.msra.mxu0 0.0
    %4867 = vmatprep.subr.mxu0 0.0
    %4868 = vmatpush2.xpose.msra.mxu0 0.0
    %4869 = vmatprep.mubr.f32.mxu0 0.0
    %4870 = vmatmul.mubr.f32.gmra.mxu0 %v4793
    %v4871 = vpop.f32.mrf.mxu0
    %v4872 = vadd.f32 %v561, %v4871
    %v4873 = vpop.f32.mrf.mxu0
    %4874 = vmatprep.mubr.f32.mxu0 0.0
    %4875 = vmatmul.mubr.f32.gmra.mxu0 %v4795
    %v4876 = vpop.f32.mrf.mxu0
    %v4877 = vadd.f32 %v562, %v4876
    %v4878 = vpop.f32.mrf.mxu0
    %4879 = vmatprep.mubr.f32.mxu0 0.0
    %4880 = vmatmul.mubr.f32.gmra.mxu0 %v4797
    %v4881 = vpop.f32.mrf.mxu0
    %v4882 = vadd.f32 %v563, %v4881
    %v4883 = vpop.f32.mrf.mxu0
    %4884 = vdwg.mxu0
    %v4885 = vsel %vm838, %v4872, -inf
    %4886 = vmax.xlane.f32.xlu0 %v4885
    %v4887 = vpop.xlane.xlu0 %4886
    %v4888 = vsel %vm838, %v4877, -inf
    %4889 = vmax.xlane.f32.xlu0 %v4888
    %v4890 = vpop.xlane.xlu0 %4889
    %v4891 = vsel %vm845, %v4882, -inf
    %4892 = vmax.xlane.f32.xlu0 %v4891
    %v4893 = vpop.xlane.xlu0 %4892
    %v4894 = vsub.f32 %v4872, %v4887
    %v4895 = vsub.f32 %v4877, %v4890
    %v4896 = vsub.f32 %v4882, %v4893
    %v4897 = vmul.f32 %v4894, 1.442695
    %v4898 = vpow.pop %v4897
    %v4899 = vmul.f32 %v4895, 1.442695
    %v4900 = vpow.pop %v4899
    %v4901 = vmul.f32 %v4896, 1.442695
    %v4902 = vpow.pop %v4901
    %v4903 = vsel %vm838, %v4898, 0.0
    %4904 = vadd.xlane.f32.xlu0 %v4903
    %v4905 = vpop.xlane.xlu0 %4904
    %v4906 = vsel %vm838, %v4900, 0.0
    %4907 = vadd.xlane.f32.xlu0 %v4906
    %v4908 = vpop.xlane.xlu0 %4907
    %v4909 = vsel %vm845, %v4902, 0.0
    %4910 = vadd.xlane.f32.xlu0 %v4909
    %v4911 = vpop.xlane.xlu0 %4910
    %v4912 = vrcp.pop %v4905
    %v4913 = vrcp.pop %v4908
    %v4914 = vrcp.pop %v4911
    %v4915 = vmul.f32 %v4898, %v4912
    %v4916 = vmul.f32 %v4900, %v4913
    %v4917 = vmul.f32 %v4902, %v4914
    %4918 = vrot.lane.b32.xlu0 %v4775, 73
    %v4919 = vpop.permute.xlu0 %4918
    %4920 = vrot.lane.b32.xlu0 %v4776, 73
    %v4921 = vpop.permute.xlu0 %4920
    %4922 = vrot.lane.b32.xlu0 %v4777, 73
    %v4923 = vpop.permute.xlu0 %4922
    %v4927 = vsel %vm838, %v4915, 0
    %v4930 = vsel %vm838, %v4916, 0
    %v4933 = vsel %vm838, %v4917, 0
    %v4935 = vsel %vm253, %v4923, 0
    %4937 = vmatprep.subr.mxu0 0.0
    %4938 = vmatpush1.msra.mxu0 0.0
    %4939 = vmatprep.subr.mxu0 0.0
    %4940 = vmatpush1.msra.mxu0 0.0
    %4941 = vmatprep.subr.mxu0 0.0
    %4942 = vmatpush1.msra.mxu0 0.0
    %4943 = vmatprep.subr.mxu0 0.0
    %4944 = vmatpush1.msra.mxu0 0.0
    %4945 = vmatprep.subr.mxu0 0.0
    %4946 = vmatpush1.msra.mxu0 0.0
    %4947 = vmatprep.subr.mxu0 0.0
    %4948 = vmatpush1.msra.mxu0 0.0
    %4949 = vmatprep.subr.mxu0 0.0
    %4950 = vmatpush1.msra.mxu0 0.0
    %4951 = vmatprep.subr.mxu0 0.0
    %4952 = vmatpush1.msra.mxu0 0.0
    %4953 = vmatprep.subr.mxu0 0.0
    %4954 = vmatpush1.msra.mxu0 0.0
    %4955 = vmatprep.subr.mxu0 0.0
    %4956 = vmatpush1.msra.mxu0 0.0
    %4957 = vmatprep.subr.mxu0 0.0
    %4958 = vmatpush1.msra.mxu0 0.0
    %4959 = vmatprep.subr.mxu0 0.0
    %4960 = vmatpush1.msra.mxu0 0.0
    %4961 = vmatprep.subr.mxu0 0.0
    %4962 = vmatpush1.msra.mxu0 0.0
    %4963 = vmatprep.subr.mxu0 0.0
    %4964 = vmatpush1.msra.mxu0 %v4935
    %4965 = vmatprep.subr.mxu0 0.0
    %4966 = vmatpush1.msra.mxu0 %v4921
    %4967 = vmatprep.subr.mxu0 0.0
    %4968 = vmatpush1.msra.mxu0 %v4919
    %4969 = vmatprep.subr.mxu0 0.0
    %4970 = vmatpush2.msra.mxu0 0.0
    %4971 = vmatprep.subr.mxu0 0.0
    %4972 = vmatpush2.msra.mxu0 0.0
    %4973 = vmatprep.subr.mxu0 0.0
    %4974 = vmatpush2.msra.mxu0 0.0
    %4975 = vmatprep.subr.mxu0 0.0
    %4976 = vmatpush2.msra.mxu0 0.0
    %4977 = vmatprep.subr.mxu0 0.0
    %4978 = vmatpush2.msra.mxu0 0.0
    %4979 = vmatprep.subr.mxu0 0.0
    %4980 = vmatpush2.msra.mxu0 0.0
    %4981 = vmatprep.subr.mxu0 0.0
    %4982 = vmatpush2.msra.mxu0 0.0
    %4983 = vmatprep.subr.mxu0 0.0
    %4984 = vmatpush2.msra.mxu0 0.0
    %4985 = vmatprep.subr.mxu0 0.0
    %4986 = vmatpush2.msra.mxu0 0.0
    %4987 = vmatprep.subr.mxu0 0.0
    %4988 = vmatpush2.msra.mxu0 0.0
    %4989 = vmatprep.subr.mxu0 0.0
    %4990 = vmatpush2.msra.mxu0 0.0
    %4991 = vmatprep.subr.mxu0 0.0
    %4992 = vmatpush2.msra.mxu0 0.0
    %4993 = vmatprep.subr.mxu0 0.0
    %4994 = vmatpush2.msra.mxu0 0.0
    %4995 = vmatprep.subr.mxu0 0.0
    %4996 = vmatpush2.msra.mxu0 0.0
    %4997 = vmatprep.subr.mxu0 0.0
    %4998 = vmatpush2.msra.mxu0 0.0
    %4999 = vmatprep.subr.mxu0 0.0
    %5000 = vmatpush2.msra.mxu0 0.0
    %5001 = vmatprep.mubr.f32.mxu0 0.0
    %5002 = vmatmul.mubr.f32.gmra.mxu0 %v4927
    %v5003 = vpop.f32.mrf.mxu0
    %v5004 = vadd.f32 0.0, %v5003
    %v5005 = vpop.f32.mrf.mxu0
    %5006 = vmatprep.mubr.f32.mxu0 0.0
    %5007 = vmatmul.mubr.f32.gmra.mxu0 %v4930
    %v5008 = vpop.f32.mrf.mxu0
    %v5009 = vadd.f32 0.0, %v5008
    %v5010 = vpop.f32.mrf.mxu0
    %5011 = vmatprep.mubr.f32.mxu0 0.0
    %5012 = vmatmul.mubr.f32.gmra.mxu0 %v4933
    %v5013 = vpop.f32.mrf.mxu0
    %v5014 = vadd.f32 0.0, %v5013
    %v5015 = vpop.f32.mrf.mxu0
    %5016 = vdwg.mxu0
    %5020 = vrot.lane.b32.xlu0 %v5004, 15
    %v5021 = vpop.permute.xlu0 %5020
    %5022 = vrot.lane.b32.xlu0 %v5009, 15
    %v5023 = vpop.permute.xlu0 %5022
    %5024 = vrot.lane.b32.xlu0 %v5014, 15
    %v5025 = vpop.permute.xlu0 %5024
    %5029 = vst.msk [vmem:[#allocation6] sm:$0xff] %vm1748, %v5021
    %5030 = vst.msk [vmem:[#allocation6 + $0x8] sm:$0xff] %vm1748, %v5023
    %5031 = vst.msk [vmem:[#allocation6 + $0x10] sm:$0x3] %vm1751, %v5025
    %v5032 = vld [vmem:[#allocation6] sm:$0xff]
    %v5033 = vld [vmem:[#allocation6 + $0x8] sm:$0xff]
    %v5034 = vld [vmem:[#allocation6 + $0x10] sm:$0x3]
    %s5035 = scalar_lea.vmem %s11, 48
    %v5036 = vld [vmem:[%s5035] sm:$0xff]
    %v5037 = vld [vmem:[%s5035 + $0x8] sm:$0xff]
    %v5038 = vld [vmem:[%s5035 + $0x10] sm:$0xf]
    %s5039 = scalar_lea.vmem %s12, 2
    %v5040 = vld [vmem:[%s5039] sm:$0x1]
    %v5042 = vlaneseq
    %v5043 = vshrl.u32 %v5042, 7
    %v5044 = vsub.s32 0, %v5043
    %v5045 = vrot.slane %v5040, %v5044
    %v5048 = vsel %vm566, %v5032, 0
    %v5051 = vsel %vm566, %v5033, 0
    %v5054 = vsel %vm566, %v5034, 0
    %v5057 = vsel %vm644, %v5038, 0
    %5059 = vmatprep.subr.mxu0 0.0
    %5060 = vmatpush1.msra.mxu0 0.0
    %5061 = vmatprep.subr.mxu0 0.0
    %5062 = vmatpush1.msra.mxu0 0.0
    %5063 = vmatprep.subr.mxu0 0.0
    %5064 = vmatpush1.msra.mxu0 0.0
    %5065 = vmatprep.subr.mxu0 0.0
    %5066 = vmatpush1.msra.mxu0 0.0
    %5067 = vmatprep.subr.mxu0 0.0
    %5068 = vmatpush1.msra.mxu0 0.0
    %5069 = vmatprep.subr.mxu0 0.0
    %5070 = vmatpush1.msra.mxu0 0.0
    %5071 = vmatprep.subr.mxu0 0.0
    %5072 = vmatpush1.msra.mxu0 0.0
    %5073 = vmatprep.subr.mxu0 0.0
    %5074 = vmatpush1.msra.mxu0 0.0
    %5075 = vmatprep.subr.mxu0 0.0
    %5076 = vmatpush1.msra.mxu0 0.0
    %5077 = vmatprep.subr.mxu0 0.0
    %5078 = vmatpush1.msra.mxu0 0.0
    %5079 = vmatprep.subr.mxu0 0.0
    %5080 = vmatpush1.msra.mxu0 0.0
    %5081 = vmatprep.subr.mxu0 0.0
    %5082 = vmatpush1.msra.mxu0 0.0
    %5083 = vmatprep.subr.mxu0 0.0
    %5084 = vmatpush1.msra.mxu0 0.0
    %5085 = vmatprep.subr.mxu0 0.0
    %5086 = vmatpush1.msra.mxu0 %v5057
    %5087 = vmatprep.subr.mxu0 0.0
    %5088 = vmatpush1.msra.mxu0 %v5037
    %5089 = vmatprep.subr.mxu0 0.0
    %5090 = vmatpush1.msra.mxu0 %v5036
    %5091 = vmatprep.subr.mxu0 0.0
    %5092 = vmatpush2.msra.mxu0 0.0
    %5093 = vmatprep.subr.mxu0 0.0
    %5094 = vmatpush2.msra.mxu0 0.0
    %5095 = vmatprep.subr.mxu0 0.0
    %5096 = vmatpush2.msra.mxu0 0.0
    %5097 = vmatprep.subr.mxu0 0.0
    %5098 = vmatpush2.msra.mxu0 0.0
    %5099 = vmatprep.subr.mxu0 0.0
    %5100 = vmatpush2.msra.mxu0 0.0
    %5101 = vmatprep.subr.mxu0 0.0
    %5102 = vmatpush2.msra.mxu0 0.0
    %5103 = vmatprep.subr.mxu0 0.0
    %5104 = vmatpush2.msra.mxu0 0.0
    %5105 = vmatprep.subr.mxu0 0.0
    %5106 = vmatpush2.msra.mxu0 0.0
    %5107 = vmatprep.subr.mxu0 0.0
    %5108 = vmatpush2.msra.mxu0 0.0
    %5109 = vmatprep.subr.mxu0 0.0
    %5110 = vmatpush2.msra.mxu0 0.0
    %5111 = vmatprep.subr.mxu0 0.0
    %5112 = vmatpush2.msra.mxu0 0.0
    %5113 = vmatprep.subr.mxu0 0.0
    %5114 = vmatpush2.msra.mxu0 0.0
    %5115 = vmatprep.subr.mxu0 0.0
    %5116 = vmatpush2.msra.mxu0 0.0
    %5117 = vmatprep.subr.mxu0 0.0
    %5118 = vmatpush2.msra.mxu0 0.0
    %5119 = vmatprep.subr.mxu0 0.0
    %5120 = vmatpush2.msra.mxu0 0.0
    %5121 = vmatprep.subr.mxu0 0.0
    %5122 = vmatpush2.msra.mxu0 0.0
    %5123 = vmatprep.mubr.f32.mxu0 0.0
    %5124 = vmatmul.mubr.f32.gmra.mxu0 %v5048
    %v5125 = vpop.f32.mrf.mxu0
    %v5126 = vadd.f32 %v5045, %v5125
    %v5127 = vpop.f32.mrf.mxu0
    %5128 = vmatprep.mubr.f32.mxu0 0.0
    %5129 = vmatmul.mubr.f32.gmra.mxu0 %v5051
    %v5130 = vpop.f32.mrf.mxu0
    %v5131 = vadd.f32 %v5045, %v5130
    %v5132 = vpop.f32.mrf.mxu0
    %5133 = vmatprep.mubr.f32.mxu0 0.0
    %5134 = vmatmul.mubr.f32.gmra.mxu0 %v5054
    %v5135 = vpop.f32.mrf.mxu0
    %v5136 = vadd.f32 %v5045, %v5135
    %v5137 = vpop.f32.mrf.mxu0
    %5138 = vdwg.mxu0
    %v5139 = vadd.f32 %v3851, %v5126
    %v5140 = vadd.f32 %v3852, %v5131
    %v5141 = vadd.f32 %v3853, %v5136
    %s5142 = scalar_lea.vmem %s13, 2
    %v5143 = vld [vmem:[%s5142] sm:$0x1]
    %s5144 = scalar_lea.vmem %s14, 2
    %v5145 = vld [vmem:[%s5144] sm:$0x1]
    %v5146 = vsel %vm566, %v5139, 0.0
    %5147 = vadd.xlane.f32.xlu0 %v5146
    %v5148 = vpop.xlane.xlu0 %5147
    %v5149 = vsel %vm566, %v5140, 0.0
    %5150 = vadd.xlane.f32.xlu0 %v5149
    %v5151 = vpop.xlane.xlu0 %5150
    %v5152 = vsel %vm452, %v5141, 0.0
    %5153 = vadd.xlane.f32.xlu0 %v5152
    %v5154 = vpop.xlane.xlu0 %5153
    %v5155 = vmul.f32 %v5148, %v576
    %v5156 = vmul.f32 %v5151, %v576
    %v5157 = vmul.f32 %v5154, %v576
    %v5158 = vsub.f32 %v5139, %v5155
    %v5159 = vsub.f32 %v5140, %v5156
    %v5160 = vsub.f32 %v5141, %v5157
    %v5161 = vmul.f32 %v5158, %v5158
    %v5162 = vmul.f32 %v5159, %v5159
    %v5163 = vmul.f32 %v5160, %v5160
    %v5164 = vsel %vm566, %v5161, 0.0
    %5165 = vadd.xlane.f32.xlu0 %v5164
    %v5166 = vpop.xlane.xlu0 %5165
    %v5167 = vsel %vm566, %v5162, 0.0
    %5168 = vadd.xlane.f32.xlu0 %v5167
    %v5169 = vpop.xlane.xlu0 %5168
    %v5170 = vsel %vm452, %v5163, 0.0
    %5171 = vadd.xlane.f32.xlu0 %v5170
    %v5172 = vpop.xlane.xlu0 %5171
    %v5173 = vmul.f32 %v5166, %v576
    %v5174 = vmul.f32 %v5169, %v576
    %v5175 = vmul.f32 %v5172, %v576
    %v5176 = vadd.f32 %v5173, 1e-05
    %v5177 = vadd.f32 %v5174, 1e-05
    %v5178 = vadd.f32 %v5175, 1e-05
    %v5179 = vrsqrt.pop %v5176
    %v5180 = vrsqrt.pop %v5177
    %v5181 = vrsqrt.pop %v5178
    %v5182 = vmul.f32 %v5158, %v5179
    %v5183 = vmul.f32 %v5159, %v5180
    %v5184 = vmul.f32 %v5160, %v5181
    %v5186 = vlaneseq
    %v5187 = vshrl.u32 %v5186, 7
    %v5188 = vsub.s32 0, %v5187
    %v5189 = vrot.slane %v5143, %v5188
    %v5191 = vmul.f32 %v5182, %v5189
    %v5192 = vmul.f32 %v5183, %v5189
    %v5193 = vmul.f32 %v5184, %v5189
    %v5195 = vlaneseq
    %v5196 = vshrl.u32 %v5195, 7
    %v5197 = vsub.s32 0, %v5196
    %v5198 = vrot.slane %v5145, %v5197
    %v5200 = vadd.f32 %v5191, %v5198
    %v5201 = vadd.f32 %v5192, %v5198
    %v5202 = vadd.f32 %v5193, %v5198
    %s5203 = scalar_lea.vmem %s15, 48
    %v5204 = vld [vmem:[%s5203] sm:$0xff]
    %v5205 = vld [vmem:[%s5203 + $0x8] sm:$0xff]
    %v5206 = vld [vmem:[%s5203 + $0x10] sm:$0xf]
    %s5207 = scalar_lea.vmem %s16, 2
    %v5208 = vld [vmem:[%s5207] sm:$0x1]
    %v5210 = vlaneseq
    %v5211 = vshrl.u32 %v5210, 7
    %v5212 = vsub.s32 0, %v5211
    %v5213 = vrot.slane %v5208, %v5212
    %v5216 = vsel %vm566, %v5200, 0
    %v5219 = vsel %vm566, %v5201, 0
    %v5222 = vsel %vm566, %v5202, 0
    %v5225 = vsel %vm644, %v5206, 0
    %5227 = vmatprep.subr.mxu0 0.0
    %5228 = vmatpush1.msra.mxu0 0.0
    %5229 = vmatprep.subr.mxu0 0.0
    %5230 = vmatpush1.msra.mxu0 0.0
    %5231 = vmatprep.subr.mxu0 0.0
    %5232 = vmatpush1.msra.mxu0 0.0
    %5233 = vmatprep.subr.mxu0 0.0
    %5234 = vmatpush1.msra.mxu0 0.0
    %5235 = vmatprep.subr.mxu0 0.0
    %5236 = vmatpush1.msra.mxu0 0.0
    %5237 = vmatprep.subr.mxu0 0.0
    %5238 = vmatpush1.msra.mxu0 0.0
    %5239 = vmatprep.subr.mxu0 0.0
    %5240 = vmatpush1.msra.mxu0 0.0
    %5241 = vmatprep.subr.mxu0 0.0
    %5242 = vmatpush1.msra.mxu0 0.0
    %5243 = vmatprep.subr.mxu0 0.0
    %5244 = vmatpush1.msra.mxu0 0.0
    %5245 = vmatprep.subr.mxu0 0.0
    %5246 = vmatpush1.msra.mxu0 0.0
    %5247 = vmatprep.subr.mxu0 0.0
    %5248 = vmatpush1.msra.mxu0 0.0
    %5249 = vmatprep.subr.mxu0 0.0
    %5250 = vmatpush1.msra.mxu0 0.0
    %5251 = vmatprep.subr.mxu0 0.0
    %5252 = vmatpush1.msra.mxu0 0.0
    %5253 = vmatprep.subr.mxu0 0.0
    %5254 = vmatpush1.msra.mxu0 %v5225
    %5255 = vmatprep.subr.mxu0 0.0
    %5256 = vmatpush1.msra.mxu0 %v5205
    %5257 = vmatprep.subr.mxu0 0.0
    %5258 = vmatpush1.msra.mxu0 %v5204
    %5259 = vmatprep.subr.mxu0 0.0
    %5260 = vmatpush2.msra.mxu0 0.0
    %5261 = vmatprep.subr.mxu0 0.0
    %5262 = vmatpush2.msra.mxu0 0.0
    %5263 = vmatprep.subr.mxu0 0.0
    %5264 = vmatpush2.msra.mxu0 0.0
    %5265 = vmatprep.subr.mxu0 0.0
    %5266 = vmatpush2.msra.mxu0 0.0
    %5267 = vmatprep.subr.mxu0 0.0
    %5268 = vmatpush2.msra.mxu0 0.0
    %5269 = vmatprep.subr.mxu0 0.0
    %5270 = vmatpush2.msra.mxu0 0.0
    %5271 = vmatprep.subr.mxu0 0.0
    %5272 = vmatpush2.msra.mxu0 0.0
    %5273 = vmatprep.subr.mxu0 0.0
    %5274 = vmatpush2.msra.mxu0 0.0
    %5275 = vmatprep.subr.mxu0 0.0
    %5276 = vmatpush2.msra.mxu0 0.0
    %5277 = vmatprep.subr.mxu0 0.0
    %5278 = vmatpush2.msra.mxu0 0.0
    %5279 = vmatprep.subr.mxu0 0.0
    %5280 = vmatpush2.msra.mxu0 0.0
    %5281 = vmatprep.subr.mxu0 0.0
    %5282 = vmatpush2.msra.mxu0 0.0
    %5283 = vmatprep.subr.mxu0 0.0
    %5284 = vmatpush2.msra.mxu0 0.0
    %5285 = vmatprep.subr.mxu0 0.0
    %5286 = vmatpush2.msra.mxu0 0.0
    %5287 = vmatprep.subr.mxu0 0.0
    %5288 = vmatpush2.msra.mxu0 0.0
    %5289 = vmatprep.subr.mxu0 0.0
    %5290 = vmatpush2.msra.mxu0 0.0
    %5291 = vmatprep.mubr.f32.mxu0 0.0
    %5292 = vmatmul.mubr.f32.gmra.mxu0 %v5216
    %v5293 = vpop.f32.mrf.mxu0
    %v5294 = vadd.f32 %v5213, %v5293
    %v5295 = vpop.f32.mrf.mxu0
    %5296 = vmatprep.mubr.f32.mxu0 0.0
    %5297 = vmatmul.mubr.f32.gmra.mxu0 %v5219
    %v5298 = vpop.f32.mrf.mxu0
    %v5299 = vadd.f32 %v5213, %v5298
    %v5300 = vpop.f32.mrf.mxu0
    %5301 = vmatprep.mubr.f32.mxu0 0.0
    %5302 = vmatmul.mubr.f32.gmra.mxu0 %v5222
    %v5303 = vpop.f32.mrf.mxu0
    %v5304 = vadd.f32 %v5213, %v5303
    %v5305 = vpop.f32.mrf.mxu0
    %5306 = vdwg.mxu0
    %v5307 = vmul.f32 %v5294, 0.5
    %v5308 = vmul.f32 %v5299, 0.5
    %v5309 = vmul.f32 %v5304, 0.5
    %v5310 = vmul.f32 %v5294, 0.70710677
    %v5311 = vmul.f32 %v5299, 0.70710677
    %v5312 = vmul.f32 %v5304, 0.70710677
    %vm5313 = vcmp.ge.f32.partialorder %v5310, 0.0
    %vm5314 = vcmp.ge.f32.partialorder %v5311, 0.0
    %vm5315 = vcmp.ge.f32.partialorder %v5312, 0.0
    %v5316 = vsel %vm5313, 1.0, -1.0
    %v5317 = vsel %vm5314, 1.0, -1.0
    %v5318 = vsel %vm5315, 1.0, -1.0
    %v5319 = vand.u32 2147483647, %v5310
    %v5320 = vand.u32 2147483647, %v5311
    %v5321 = vand.u32 2147483647, %v5312
    %v5322 = vmul.f32 %v5319, 0.3275911
    %v5323 = vmul.f32 %v5320, 0.3275911
    %v5324 = vmul.f32 %v5321, 0.3275911
    %v5325 = vadd.f32 %v5322, 1.0
    %v5326 = vadd.f32 %v5323, 1.0
    %v5327 = vadd.f32 %v5324, 1.0
    %v5328 = vrcp.pop %v5325
    %v5329 = vmul.f32 1.0, %v5328
    %v5330 = vrcp.pop %v5326
    %v5331 = vmul.f32 1.0, %v5330
    %v5332 = vrcp.pop %v5327
    %v5333 = vmul.f32 1.0, %v5332
    %v5334 = vmul.f32 %v5329, 1.0614054
    %v5335 = vmul.f32 %v5331, 1.0614054
    %v5336 = vmul.f32 %v5333, 1.0614054
    %v5337 = vadd.f32 %v5334, -1.4531521
    %v5338 = vadd.f32 %v5335, -1.4531521
    %v5339 = vadd.f32 %v5336, -1.4531521
    %v5340 = vmul.f32 %v5337, %v5329
    %v5341 = vmul.f32 %v5338, %v5331
    %v5342 = vmul.f32 %v5339, %v5333
    %v5343 = vadd.f32 %v5340, 1.4214138
    %v5344 = vadd.f32 %v5341, 1.4214138
    %v5345 = vadd.f32 %v5342, 1.4214138
    %v5346 = vmul.f32 %v5343, %v5329
    %v5347 = vmul.f32 %v5344, %v5331
    %v5348 = vmul.f32 %v5345, %v5333
    %v5349 = vadd.f32 %v5346, -0.28449672
    %v5350 = vadd.f32 %v5347, -0.28449672
    %v5351 = vadd.f32 %v5348, -0.28449672
    %v5352 = vmul.f32 %v5349, %v5329
    %v5353 = vmul.f32 %v5350, %v5331
    %v5354 = vmul.f32 %v5351, %v5333
    %v5355 = vadd.f32 %v5352, 0.2548296
    %v5356 = vadd.f32 %v5353, 0.2548296
    %v5357 = vadd.f32 %v5354, 0.2548296
    %v5358 = vmul.f32 %v5355, %v5329
    %v5359 = vmul.f32 %v5356, %v5331
    %v5360 = vmul.f32 %v5357, %v5333
    %v5361 = vsub.f32 0.0, %v5319
    %v5362 = vsub.f32 0.0, %v5320
    %v5363 = vsub.f32 0.0, %v5321
    %v5364 = vmul.f32 %v5361, %v5319
    %v5365 = vmul.f32 %v5362, %v5320
    %v5366 = vmul.f32 %v5363, %v5321
    %v5367 = vmul.f32 %v5364, 1.442695
    %v5368 = vpow.pop %v5367
    %v5369 = vmul.f32 %v5365, 1.442695
    %v5370 = vpow.pop %v5369
    %v5371 = vmul.f32 %v5366, 1.442695
    %v5372 = vpow.pop %v5371
    %v5373 = vmul.f32 %v5358, %v5368
    %v5374 = vmul.f32 %v5359, %v5370
    %v5375 = vmul.f32 %v5360, %v5372
    %v5376 = vsub.f32 1.0, %v5373
    %v5377 = vsub.f32 1.0, %v5374
    %v5378 = vsub.f32 1.0, %v5375
    %v5379 = vmul.f32 %v5316, %v5376
    %v5380 = vmul.f32 %v5317, %v5377
    %v5381 = vmul.f32 %v5318, %v5378
    %v5382 = vadd.f32 %v5379, 1.0
    %v5383 = vadd.f32 %v5380, 1.0
    %v5384 = vadd.f32 %v5381, 1.0
    %v5385 = vmul.f32 %v5307, %v5382
    %v5386 = vmul.f32 %v5308, %v5383
    %v5387 = vmul.f32 %v5309, %v5384
    %s5388 = scalar_lea.vmem %s17, 128
    %v5389 = vld [vmem:[%s5388] sm:$0xff]
    %v5390 = vld [vmem:[%s5388 + $0x8] sm:$0xff]
    %v5391 = vld [vmem:[%s5388 + $0x10] sm:$0xff]
    %v5392 = vld [vmem:[%s5388 + $0x18] sm:$0xff]
    %v5393 = vld [vmem:[%s5388 + $0x20] sm:$0xff]
    %v5394 = vld [vmem:[%s5388 + $0x28] sm:$0xff]
    %v5395 = vld [vmem:[%s5388 + $0x30] sm:$0xff]
    %v5396 = vld [vmem:[%s5388 + $0x38] sm:$0xff]
    %s5397 = scalar_lea.vmem %s18, 2
    %v5398 = vld [vmem:[%s5397] sm:$0x1]
    %v5400 = vlaneseq
    %v5401 = vshrl.u32 %v5400, 7
    %v5402 = vsub.s32 0, %v5401
    %v5403 = vrot.slane %v5398, %v5402
    %v5406 = vsel %vm2118, %v5385, 0
    %v5409 = vsel %vm2118, %v5386, 0
    %v5412 = vsel %vm2118, %v5387, 0
    %5414 = vmatprep.subr.mxu0 0.0
    %5415 = vmatpush1.msra.mxu0 0.0
    %5416 = vmatprep.subr.mxu0 0.0
    %5417 = vmatpush1.msra.mxu0 0.0
    %5418 = vmatprep.subr.mxu0 0.0
    %5419 = vmatpush1.msra.mxu0 0.0
    %5420 = vmatprep.subr.mxu0 0.0
    %5421 = vmatpush1.msra.mxu0 0.0
    %5422 = vmatprep.subr.mxu0 0.0
    %5423 = vmatpush1.msra.mxu0 0.0
    %5424 = vmatprep.subr.mxu0 0.0
    %5425 = vmatpush1.msra.mxu0 0.0
    %5426 = vmatprep.subr.mxu0 0.0
    %5427 = vmatpush1.msra.mxu0 0.0
    %5428 = vmatprep.subr.mxu0 0.0
    %5429 = vmatpush1.msra.mxu0 0.0
    %5430 = vmatprep.subr.mxu0 0.0
    %5431 = vmatpush1.msra.mxu0 %v5396
    %5432 = vmatprep.subr.mxu0 0.0
    %5433 = vmatpush1.msra.mxu0 %v5395
    %5434 = vmatprep.subr.mxu0 0.0
    %5435 = vmatpush1.msra.mxu0 %v5394
    %5436 = vmatprep.subr.mxu0 0.0
    %5437 = vmatpush1.msra.mxu0 %v5393
    %5438 = vmatprep.subr.mxu0 0.0
    %5439 = vmatpush1.msra.mxu0 %v5392
    %5440 = vmatprep.subr.mxu0 0.0
    %5441 = vmatpush1.msra.mxu0 %v5391
    %5442 = vmatprep.subr.mxu0 0.0
    %5443 = vmatpush1.msra.mxu0 %v5390
    %5444 = vmatprep.subr.mxu0 0.0
    %5445 = vmatpush1.msra.mxu0 %v5389
    %5446 = vmatprep.subr.mxu0 0.0
    %5447 = vmatpush2.msra.mxu0 0.0
    %5448 = vmatprep.subr.mxu0 0.0
    %5449 = vmatpush2.msra.mxu0 0.0
    %5450 = vmatprep.subr.mxu0 0.0
    %5451 = vmatpush2.msra.mxu0 0.0
    %5452 = vmatprep.subr.mxu0 0.0
    %5453 = vmatpush2.msra.mxu0 0.0
    %5454 = vmatprep.subr.mxu0 0.0
    %5455 = vmatpush2.msra.mxu0 0.0
    %5456 = vmatprep.subr.mxu0 0.0
    %5457 = vmatpush2.msra.mxu0 0.0
    %5458 = vmatprep.subr.mxu0 0.0
    %5459 = vmatpush2.msra.mxu0 0.0
    %5460 = vmatprep.subr.mxu0 0.0
    %5461 = vmatpush2.msra.mxu0 0.0
    %5462 = vmatprep.subr.mxu0 0.0
    %5463 = vmatpush2.msra.mxu0 0.0
    %5464 = vmatprep.subr.mxu0 0.0
    %5465 = vmatpush2.msra.mxu0 0.0
    %5466 = vmatprep.subr.mxu0 0.0
    %5467 = vmatpush2.msra.mxu0 0.0
    %5468 = vmatprep.subr.mxu0 0.0
    %5469 = vmatpush2.msra.mxu0 0.0
    %5470 = vmatprep.subr.mxu0 0.0
    %5471 = vmatpush2.msra.mxu0 0.0
    %5472 = vmatprep.subr.mxu0 0.0
    %5473 = vmatpush2.msra.mxu0 0.0
    %5474 = vmatprep.subr.mxu0 0.0
    %5475 = vmatpush2.msra.mxu0 0.0
    %5476 = vmatprep.subr.mxu0 0.0
    %5477 = vmatpush2.msra.mxu0 0.0
    %5478 = vmatprep.mubr.f32.mxu0 0.0
    %5479 = vmatmul.mubr.f32.gmra.mxu0 %v5406
    %v5480 = vpop.f32.mrf.mxu0
    %v5481 = vadd.f32 %v5403, %v5480
    %v5482 = vpop.f32.mrf.mxu0
    %5483 = vmatprep.mubr.f32.mxu0 0.0
    %5484 = vmatmul.mubr.f32.gmra.mxu0 %v5409
    %v5485 = vpop.f32.mrf.mxu0
    %v5486 = vpop.f32.mrf.mxu0
    %5487 = vmatprep.mubr.f32.mxu0 0.0
    %5488 = vmatmul.mubr.f32.gmra.mxu0 %v5412
    %v5489 = vpop.f32.mrf.mxu0
    %v5490 = vpop.f32.mrf.mxu0
    %5491 = vdwg.mxu0
    %v5492 = vadd.f32 %v5139, %v5481
    %v5493 = vld [vmem:[%s19] sm:$0x1]
    %v5494 = vld [vmem:[%s20] sm:$0x1]
    %v5495 = vsel %vm452, %v5492, 0.0
    %5496 = vadd.xlane.f32.xlu0 %v5495
    %v5497 = vpop.xlane.xlu0 %5496
    %v5498 = vmul.f32 %v5497, %v576
    %v5499 = vsub.f32 %v5492, %v5498
    %v5500 = vmul.f32 %v5499, %v5499
    %v5501 = vsel %vm452, %v5500, 0.0
    %5502 = vadd.xlane.f32.xlu0 %v5501
    %v5503 = vpop.xlane.xlu0 %5502
    %v5504 = vmul.f32 %v5503, %v576
    %v5505 = vadd.f32 %v5504, 1e-05
    %v5506 = vrsqrt.pop %v5505
    %v5507 = vmul.f32 %v5499, %v5506
    %v5509 = vlaneseq
    %v5510 = vshrl.u32 %v5509, 7
    %v5511 = vsub.s32 0, %v5510
    %v5512 = vrot.slane %v5493, %v5511
    %v5514 = vmul.f32 %v5507, %v5512
    %v5516 = vlaneseq
    %v5517 = vshrl.u32 %v5516, 7
    %v5518 = vsub.s32 0, %v5517
    %v5519 = vrot.slane %v5494, %v5518
    %v5521 = vadd.f32 %v5514, %v5519
    %v5522 = vld [vmem:[%s21] sm:$0xff]
    %v5523 = vld [vmem:[%s21 + $0x8] sm:$0xff]
    %v5524 = vld [vmem:[%s21 + $0x10] sm:$0xf]
    %v5525 = vld [vmem:[%s22] sm:$0x1]
    %v5527 = vlaneseq
    %v5528 = vshrl.u32 %v5527, 7
    %v5529 = vsub.s32 0, %v5528
    %v5530 = vrot.slane %v5525, %v5529
    %v5533 = vsel %vm566, %v5521, 0
    %v5536 = vsel %vm644, %v5524, 0
    %5538 = vmatprep.subr.mxu0 0.0
    %5539 = vmatpush1.msra.mxu0 0.0
    %5540 = vmatprep.subr.mxu0 0.0
    %5541 = vmatpush1.msra.mxu0 0.0
    %5542 = vmatprep.subr.mxu0 0.0
    %5543 = vmatpush1.msra.mxu0 0.0
    %5544 = vmatprep.subr.mxu0 0.0
    %5545 = vmatpush1.msra.mxu0 0.0
    %5546 = vmatprep.subr.mxu0 0.0
    %5547 = vmatpush1.msra.mxu0 0.0
    %5548 = vmatprep.subr.mxu0 0.0
    %5549 = vmatpush1.msra.mxu0 0.0
    %5550 = vmatprep.subr.mxu0 0.0
    %5551 = vmatpush1.msra.mxu0 0.0
    %5552 = vmatprep.subr.mxu0 0.0
    %5553 = vmatpush1.msra.mxu0 0.0
    %5554 = vmatprep.subr.mxu0 0.0
    %5555 = vmatpush1.msra.mxu0 0.0
    %5556 = vmatprep.subr.mxu0 0.0
    %5557 = vmatpush1.msra.mxu0 0.0
    %5558 = vmatprep.subr.mxu0 0.0
    %5559 = vmatpush1.msra.mxu0 0.0
    %5560 = vmatprep.subr.mxu0 0.0
    %5561 = vmatpush1.msra.mxu0 0.0
    %5562 = vmatprep.subr.mxu0 0.0
    %5563 = vmatpush1.msra.mxu0 0.0
    %5564 = vmatprep.subr.mxu0 0.0
    %5565 = vmatpush1.msra.mxu0 %v5536
    %5566 = vmatprep.subr.mxu0 0.0
    %5567 = vmatpush1.msra.mxu0 %v5523
    %5568 = vmatprep.subr.mxu0 0.0
    %5569 = vmatpush1.msra.mxu0 %v5522
    %5570 = vmatprep.subr.mxu0 0.0
    %5571 = vmatpush2.msra.mxu0 0.0
    %5572 = vmatprep.subr.mxu0 0.0
    %5573 = vmatpush2.msra.mxu0 0.0
    %5574 = vmatprep.subr.mxu0 0.0
    %5575 = vmatpush2.msra.mxu0 0.0
    %5576 = vmatprep.subr.mxu0 0.0
    %5577 = vmatpush2.msra.mxu0 0.0
    %5578 = vmatprep.subr.mxu0 0.0
    %5579 = vmatpush2.msra.mxu0 0.0
    %5580 = vmatprep.subr.mxu0 0.0
    %5581 = vmatpush2.msra.mxu0 0.0
    %5582 = vmatprep.subr.mxu0 0.0
    %5583 = vmatpush2.msra.mxu0 0.0
    %5584 = vmatprep.subr.mxu0 0.0
    %5585 = vmatpush2.msra.mxu0 0.0
    %5586 = vmatprep.subr.mxu0 0.0
    %5587 = vmatpush2.msra.mxu0 0.0
    %5588 = vmatprep.subr.mxu0 0.0
    %5589 = vmatpush2.msra.mxu0 0.0
    %5590 = vmatprep.subr.mxu0 0.0
    %5591 = vmatpush2.msra.mxu0 0.0
    %5592 = vmatprep.subr.mxu0 0.0
    %5593 = vmatpush2.msra.mxu0 0.0
    %5594 = vmatprep.subr.mxu0 0.0
    %5595 = vmatpush2.msra.mxu0 0.0
    %5596 = vmatprep.subr.mxu0 0.0
    %5597 = vmatpush2.msra.mxu0 0.0
    %5598 = vmatprep.subr.mxu0 0.0
    %5599 = vmatpush2.msra.mxu0 0.0
    %5600 = vmatprep.subr.mxu0 0.0
    %5601 = vmatpush2.msra.mxu0 0.0
    %5602 = vmatprep.mubr.f32.mxu0 0.0
    %5603 = vmatmul.mubr.f32.gmra.mxu0 %v5533
    %v5604 = vpop.f32.mrf.mxu0
    %v5605 = vadd.f32 %v5530, %v5604
    %v5606 = vpop.f32.mrf.mxu0
    %5607 = vdwg.mxu0
    %vm5608 = vcmask 9216
    %5609 = vst.msk [vmem:[#allocation15] sm:$0x3] %vm5608, %v5605
    // Predicated region
    $region110: #{tpu_custom_call.1} parent=1 // pred_check
      _
    $region111: #{tpu_custom_call.1} parent=1 // pred_check_branch
      %5611 = sbr.rel (0) target = $region113
    $region112: #{tpu_custom_call.1} parent=1 // pred_region
      %s5613 = ssub.s32 32, 32
      %5614 = vsyncadd [#allocation9], %s5613
      %s5616 = sshll.u32 [#allocation15], 4
      %s5617 = int_to_ptr.vmem [resolvable:$true] %s5616
      %5619 = dma.vmem_to_hbm [thread:$0]  %s5617, 32, %s23, [#allocation9]
    $region113: #{tpu_custom_call.1} parent=1 // pred_fallthru
      _
    // Predicated region
    $region114: #{tpu_custom_call.1} parent=1 // pred_check
      _
    $region115: #{tpu_custom_call.1} parent=1 // pred_check_branch
      %5621 = sbr.rel (0) target = $region117
    $region116: #{tpu_custom_call.1} parent=1 // pred_region
      %5622 = dma.done [#allocation9], 32
    $region117: #{tpu_custom_call.1} parent=1 // pred_fallthru
      _
    %5623 = vsyncpa [#allocation8], 1
    %5624 = vsyncpa [#allocation11], 1
    %5625 = vsyncpa [#allocation14], 1
    %5626 = vsyncpa [#allocation9], 1

</llo_original>
